<compile_context>
chip_gen: v5e
topology: v5e:2x2
jax: 0.10.0
libtpu: 0.0.40
codegen_flags: <defaults>
</compile_context>

<pallas_src>
import functools

import jax
import jax.numpy as jnp
from jax import lax
from jax.experimental import pallas as pl
from jax.experimental.pallas import tpu as pltpu


def _decoder_kernel(emb_t_ref, inv_norm_ref, g0_ref, w_x_ref, w_h_ref,
                    gconst_ref, res_ref, dec_ref, len_ref, cbuf_ref,
                    *, end_idx, max_len, chunk):
    """Greedy LSTMCell decoder.

    emb_t_ref:    (E, V)    f32  transposed embedding table (decode side)
    inv_norm_ref: (1, V)    f32  1 / max(||embed_row||, 1e-8)
    g0_ref:       (1, 4H)   f32  precomputed step-0 gates (x0@Wx + inp@Wi + b)
    w_x_ref:      (E, 4H)   bf16 W_ih[:, :E].T   (acts on x == C)
    w_h_ref:      (H, 4H)   bf16 W_hh.T          (acts on h)
    gconst_ref:   (1, 4H)   f32  inp @ W_ih[:, E:].T + b_ih + b_hh
    res_ref:      (max_len, H) f32 cell states C (zero padded past length)
    dec_ref:      (max_len, 1) i32 greedy token ids (-1 padded past length)
    len_ref:      (1,)         i32 number of emitted steps
    cbuf_ref:     (chunk, H)   f32 scratch: C rows of the current chunk
    """
    H = res_ref.shape[1]
    V = emb_t_ref.shape[1]
    num_chunks = max_len // chunk
    w_dtype = w_x_ref.dtype

    # Zero-init so chunks skipped by early exit already hold the padding value
    # (and decode deterministically in the post-loop pass).
    res_ref[...] = jnp.zeros_like(res_ref)

    # Loop-invariant VMEM reads, hoisted once.
    gconst = gconst_ref[...]          # (1, 4H) f32
    inv_norm = inv_norm_ref[...]      # (1, V)  f32

    def sigmoid(z):
        # sigma(z) = 0.5*tanh(0.5*z) + 0.5 : single EUP op per gate.
        return 0.5 * jnp.tanh(0.5 * z) + 0.5

    def gates_to_state(gates, C):
        # PyTorch LSTMCell gate order: i, f, g, o.
        i_g = sigmoid(gates[:, 0:H])
        f_g = sigmoid(gates[:, H:2 * H])
        g_g = jnp.tanh(gates[:, 2 * H:3 * H])
        o_g = sigmoid(gates[:, 3 * H:4 * H])
        C_new = f_g * C + i_g * g_g
        h_new = o_g * jnp.tanh(C_new)
        return h_new, C_new

    def step(h, C, j):
        # x == C for every step after the first (PyTorch: `x = C`), so
        # gates = C@Wx + h@Wh + const.  Two K=H matmuls avoid the per-step
        # lane concat/repack and let the C-matmul start before h is ready.
        gates = (jnp.dot(C.astype(w_dtype), w_x_ref[...],
                         preferred_element_type=jnp.float32)
                 + jnp.dot(h.astype(w_dtype), w_h_ref[...],
                           preferred_element_type=jnp.float32)
                 + gconst)                                                 # (1, 4H) f32
        h, C = gates_to_state(gates, C)
        cbuf_ref[pl.ds(j, 1), :] = C
        return h, C

    def decode_has_end(rows):
        # argmax(cosine) == argmax(dots * 1/||emb||): the 1/||C|| factor is a
        # positive per-row scalar and cannot change the argmax.
        dots = jnp.dot(rows, emb_t_ref[...],
                       preferred_element_type=jnp.float32)                # (chunk, V)
        scaled = dots * inv_norm
        rmax = jnp.max(scaled, axis=1, keepdims=True)
        iota_v = lax.broadcasted_iota(jnp.int32, scaled.shape, 1)
        dec_rows = jnp.min(jnp.where(scaled == rmax, iota_v, V),
                           axis=1, keepdims=True)
        return jnp.sum((dec_rows == end_idx).astype(jnp.int32)) > 0

    # ---- chunk 0, peeled ---------------------------------------------------
    # Step 0's gates are fully precomputed in the wrapper (h0 = C0 = 0,
    # x0 = <start> embedding): no matmul needed for it in the kernel.
    h, C = gates_to_state(g0_ref[...], jnp.zeros((1, H), jnp.float32))
    cbuf_ref[0:1, :] = C
    for j in range(1, chunk):
        h, C = step(h, C, j)
    res_ref[0:chunk, :] = cbuf_ref[...]

    # ---- chunks 1..num_chunks-1, deferred '<end>' check ---------------------
    def run_chunk(carry):
        c, h, C, done = carry
        # Check the *previous* chunk: reads res_ref only, so it is independent
        # of this chunk's recurrence and can be overlapped by the scheduler.
        prev_base = pl.multiple_of((c - 1) * chunk, chunk)
        prev_hit = decode_has_end(res_ref[pl.ds(prev_base, chunk), :])

        # `chunk` fully unrolled recurrence steps (LLO visibility).
        for j in range(chunk):
            h, C = step(h, C, j)

        # Flush a full (chunk, H) tile with an aligned, unmasked store.
        base = pl.multiple_of(c * chunk, chunk)
        res_ref[pl.ds(base, chunk), :] = cbuf_ref[...]
        return c + 1, h, C, jnp.logical_or(done, prev_hit)

    def keep_going(carry):
        c, _, _, done = carry
        return jnp.logical_and(c < num_chunks, jnp.logical_not(done))

    lax.while_loop(keep_going, run_chunk,
                   (jnp.int32(1), h, C, jnp.array(False)))

    # One batched decode for every step: (max_len, H) x (H, V) on the MXU,
    # lane-axis argmax (first occurrence, matching torch.max semantics),
    # first-'<end>' scan for the length, then mask the padded tail.  Rows of
    # never-executed chunks are zero and lie strictly after the real '<end>'
    # (the early exit only fires after a true argmax hit), so they cannot
    # affect `first_end`.
    res_all = res_ref[...]
    dots = jnp.dot(res_all, emb_t_ref[...],
                   preferred_element_type=jnp.float32)                    # (max_len, V)
    scaled = dots * inv_norm
    rmax = jnp.max(scaled, axis=1, keepdims=True)
    iota_v = lax.broadcasted_iota(jnp.int32, (max_len, V), 1)
    dec_all = jnp.min(jnp.where(scaled == rmax, iota_v, V),
                      axis=1, keepdims=True).astype(jnp.int32)            # (max_len, 1)

    step_iota = lax.broadcasted_iota(jnp.int32, (max_len, 1), 0)
    first_end = jnp.min(jnp.where(dec_all == end_idx, step_iota, max_len))
    length = jnp.minimum(first_end, max_len - 1) + 1                      # scalar i32

    valid = step_iota < length
    res_ref[...] = jnp.where(valid, res_all, 0.0)
    dec_ref[...] = jnp.where(valid, dec_all, jnp.int32(-1))
    len_ref[0] = length


def decoder_forward(embed, w_ih, w_hh, b_ih, b_hh, inp, start_idx, end_idx,
                    max_len=64, chunk=8, weight_dtype=jnp.bfloat16):
    """Pallas implementation of Decoder.forward.

    Returns (res, decoded, length):
      res:     (max_len, H) f32 — cell states C per step (zero padded)
      decoded: (max_len,)   i32 — greedy token ids (-1 padded)
      length:  (1,)         i32 — number of valid steps

    Pass weight_dtype=jnp.float32 for a closer-to-PyTorch (non-bf16) gate
    matmul if bit-faithfulness of near-tie argmaxes matters.
    """
    V, E = embed.shape
    H = w_hh.shape[1]
    I = w_ih.shape[1] - E                       # size of the encoder vector
    assert w_ih.shape[0] == 4 * H and w_hh.shape == (4 * H, H)
    assert inp.shape == (I,)
    assert E == H, "decode_embed compares C (H-dim) against embeddings (E-dim)"
    assert max_len % chunk == 0 and chunk % 8 == 0

    embed_f32 = embed.astype(jnp.float32)
    emb_t = jnp.transpose(embed_f32)                                      # (E, V)
    inv_norm = (1.0 / jnp.maximum(
        jnp.sqrt(jnp.sum(embed_f32 * embed_f32, axis=1)), 1e-8))[None, :]  # (1, V)

    # Split recurrent weights: Wx acts on x (== C), Wh acts on h.  bf16 on the
    # MXU path only; gates accumulate in f32.
    w_x_f32 = jnp.transpose(w_ih[:, :E]).astype(jnp.float32)              # (E, 4H)
    w_h_f32 = jnp.transpose(w_hh).astype(jnp.float32)                     # (H, 4H)
    w_x = w_x_f32.astype(weight_dtype)
    w_h = w_h_f32.astype(weight_dtype)

    # `inp` is constant over the decode loop: fold its gate contribution and
    # both biases into one vector here, outside the kernel.
    gconst = (inp.astype(jnp.float32)[None, :]
              @ jnp.transpose(w_ih[:, E:E + I]).astype(jnp.float32)
              + (b_ih + b_hh).astype(jnp.float32)[None, :])               # (1, 4H)

    # Step-0 gates are fully precomputable (h0 = C0 = 0, x0 = <start> embed).
    x0 = embed_f32[start_idx][None, :]                                    # (1, E)
    g0 = x0 @ w_x_f32 + gconst                                            # (1, 4H)

    kernel = functools.partial(_decoder_kernel, end_idx=int(end_idx),
                               max_len=int(max_len), chunk=int(chunk))

    res, dec, length = pl.pallas_call(
        kernel,
        out_shape=(
            jax.ShapeDtypeStruct((max_len, H), jnp.float32),
            jax.ShapeDtypeStruct((max_len, 1), jnp.int32),
            jax.ShapeDtypeStruct((1,), jnp.int32),
        ),
        in_specs=[pl.BlockSpec(memory_space=pltpu.MemorySpace.VMEM)] * 6,
        out_specs=(
            pl.BlockSpec(memory_space=pltpu.MemorySpace.VMEM),
            pl.BlockSpec(memory_space=pltpu.MemorySpace.VMEM),
            pl.BlockSpec(memory_space=pltpu.MemorySpace.SMEM),
        ),
        scratch_shapes=[pltpu.VMEM((chunk, H), jnp.float32)],
    )(emb_t, inv_norm, g0, w_x, w_h, gconst)
    return res, dec[:, 0], length


if __name__ == "__main__":
    # Synthetic vocab: index 0 = '<start>', index 1 = '<end>', rest are words.
    VOCAB_SIZE = 128          # embedding table (V, 128)
    EMBED_DIM = 128
    HIDDEN = 128              # LSTMCell(256, 128)
    MAX_LEN = 64
    START_IDX, END_IDX = 0, 1

    key = jax.random.PRNGKey(0)
    k1, k2, k3, k4, k5, k6 = jax.random.split(key, 6)

    embed = jax.random.normal(k1, (VOCAB_SIZE, EMBED_DIM), jnp.float32)
    bound = 1.0 / (HIDDEN ** 0.5)
    w_ih = jax.random.uniform(k2, (4 * HIDDEN, EMBED_DIM + HIDDEN),
                              minval=-bound, maxval=bound, dtype=jnp.float32)
    w_hh = jax.random.uniform(k3, (4 * HIDDEN, HIDDEN),
                              minval=-bound, maxval=bound, dtype=jnp.float32)
    b_ih = jax.random.uniform(k4, (4 * HIDDEN,),
                              minval=-bound, maxval=bound, dtype=jnp.float32)
    b_hh = jax.random.uniform(k5, (4 * HIDDEN,),
                              minval=-bound, maxval=bound, dtype=jnp.float32)
    # `inp` = Encoder output: last step of a bidirectional LSTM(128->64) = 128-d.
    inp = jax.random.normal(k6, (2 * 64,), jnp.float32)

    res, decoded, length = decoder_forward(
        embed, w_ih, w_hh, b_ih, b_hh, inp,
        start_idx=START_IDX, end_idx=END_IDX, max_len=MAX_LEN)
    jax.block_until_ready((res, decoded, length))

    n = int(length[0])
    assert 1 <= n <= MAX_LEN
    assert bool(jnp.all(jnp.isfinite(res[:n])))
    assert bool(jnp.all((decoded[:n] >= 0) & (decoded[:n] < VOCAB_SIZE)))
    assert bool(jnp.all(decoded[n:] == -1))
    assert bool(jnp.all(res[n:] == 0.0))
    print("KERNEL_OK")
</pallas_src>

<mosaic_0001>
module attributes {stable_mosaic.version = 11 : i64} {
  func.func @_decoder_kernel(%arg0: memref<128x128xf32, #tpu.memory_space<vmem>>, %arg1: memref<1x128xf32, #tpu.memory_space<vmem>>, %arg2: memref<1x512xf32, #tpu.memory_space<vmem>>, %arg3: memref<128x512xbf16, #tpu.memory_space<vmem>>, %arg4: memref<128x512xbf16, #tpu.memory_space<vmem>>, %arg5: memref<1x512xf32, #tpu.memory_space<vmem>>, %arg6: memref<64x128xf32, #tpu.memory_space<vmem>>, %arg7: memref<64x1xi32, #tpu.memory_space<vmem>>, %arg8: memref<1xi32, #tpu.memory_space<smem>>, %arg9: memref<8x128xf32, #tpu.memory_space<vmem>>) attributes {dimension_semantics = [], scalar_prefetch = 0 : i64, scratch_operands = 1 : i64, tpu.core_type = #tpu.core_type<tc>} {
    %cst = arith.constant 0.000000e+00 : f32
    %0 = vector.broadcast %cst : f32 to vector<64x128xf32>
    %c0 = arith.constant 0 : index
    %c0_0 = arith.constant 0 : index
    %1 = vector.load %arg6[%c0, %c0_0] : memref<64x128xf32, #tpu.memory_space<vmem>>, vector<64x128xf32>
    tpu.vector_store %arg6[%c0, %c0_0], %0 {strides = array<i32>} : memref<64x128xf32, #tpu.memory_space<vmem>>, vector<64x128xf32>,
    %c0_1 = arith.constant 0 : index
    %c0_2 = arith.constant 0 : index
    %2 = vector.load %arg5[%c0_1, %c0_2] : memref<1x512xf32, #tpu.memory_space<vmem>>, vector<1x512xf32>
    %c0_3 = arith.constant 0 : index
    %c0_4 = arith.constant 0 : index
    %3 = vector.load %arg1[%c0_3, %c0_4] : memref<1x128xf32, #tpu.memory_space<vmem>>, vector<1x128xf32>
    %c0_5 = arith.constant 0 : index
    %c0_6 = arith.constant 0 : index
    %4 = vector.load %arg2[%c0_5, %c0_6] : memref<1x512xf32, #tpu.memory_space<vmem>>, vector<1x512xf32>
    %cst_7 = arith.constant 0.000000e+00 : f32
    %5 = vector.broadcast %cst_7 : f32 to vector<1x128xf32>
    %6 = vector.extract_strided_slice %4 {offsets = [0, 0], sizes = [1, 128], strides = [1, 1]} : vector<1x512xf32> to vector<1x128xf32>
    %cst_8 = arith.constant 5.000000e-01 : f32
    %7 = vector.broadcast %cst_8 : f32 to vector<1x128xf32>
    %8 = arith.mulf %7, %6 : vector<1x128xf32>
    %9 = math.tanh %8 : vector<1x128xf32>
    %cst_9 = arith.constant 5.000000e-01 : f32
    %10 = vector.broadcast %cst_9 : f32 to vector<1x128xf32>
    %11 = arith.mulf %10, %9 : vector<1x128xf32>
    %cst_10 = arith.constant 5.000000e-01 : f32
    %12 = vector.broadcast %cst_10 : f32 to vector<1x128xf32>
    %13 = arith.addf %11, %12 : vector<1x128xf32>
    %14 = vector.extract_strided_slice %4 {offsets = [0, 128], sizes = [1, 128], strides = [1, 1]} : vector<1x512xf32> to vector<1x128xf32>
    %cst_11 = arith.constant 5.000000e-01 : f32
    %15 = vector.broadcast %cst_11 : f32 to vector<1x128xf32>
    %16 = arith.mulf %15, %14 : vector<1x128xf32>
    %17 = math.tanh %16 : vector<1x128xf32>
    %cst_12 = arith.constant 5.000000e-01 : f32
    %18 = vector.broadcast %cst_12 : f32 to vector<1x128xf32>
    %19 = arith.mulf %18, %17 : vector<1x128xf32>
    %cst_13 = arith.constant 5.000000e-01 : f32
    %20 = vector.broadcast %cst_13 : f32 to vector<1x128xf32>
    %21 = arith.addf %19, %20 : vector<1x128xf32>
    %22 = vector.extract_strided_slice %4 {offsets = [0, 256], sizes = [1, 128], strides = [1, 1]} : vector<1x512xf32> to vector<1x128xf32>
    %23 = math.tanh %22 : vector<1x128xf32>
    %24 = vector.extract_strided_slice %4 {offsets = [0, 384], sizes = [1, 128], strides = [1, 1]} : vector<1x512xf32> to vector<1x128xf32>
    %cst_14 = arith.constant 5.000000e-01 : f32
    %25 = vector.broadcast %cst_14 : f32 to vector<1x128xf32>
    %26 = arith.mulf %25, %24 : vector<1x128xf32>
    %27 = math.tanh %26 : vector<1x128xf32>
    %cst_15 = arith.constant 5.000000e-01 : f32
    %28 = vector.broadcast %cst_15 : f32 to vector<1x128xf32>
    %29 = arith.mulf %28, %27 : vector<1x128xf32>
    %cst_16 = arith.constant 5.000000e-01 : f32
    %30 = vector.broadcast %cst_16 : f32 to vector<1x128xf32>
    %31 = arith.addf %29, %30 : vector<1x128xf32>
    %32 = arith.mulf %21, %5 : vector<1x128xf32>
    %33 = arith.mulf %13, %23 : vector<1x128xf32>
    %34 = arith.addf %32, %33 : vector<1x128xf32>
    %35 = math.tanh %34 : vector<1x128xf32>
    %36 = arith.mulf %31, %35 : vector<1x128xf32>
    %c0_17 = arith.constant 0 : index
    %c0_18 = arith.constant 0 : index
    %37 = vector.load %arg9[%c0_17, %c0_18] : memref<8x128xf32, #tpu.memory_space<vmem>>, vector<1x128xf32>
    tpu.vector_store %arg9[%c0_17, %c0_18], %34 {strides = array<i32>} : memref<8x128xf32, #tpu.memory_space<vmem>>, vector<1x128xf32>,
    %38 = arith.truncf %34 : vector<1x128xf32> to vector<1x128xbf16>
    %c0_19 = arith.constant 0 : index
    %c0_20 = arith.constant 0 : index
    %39 = vector.load %arg3[%c0_19, %c0_20] : memref<128x512xbf16, #tpu.memory_space<vmem>>, vector<128x512xbf16>
    %cst_21 = arith.constant dense<0.000000e+00> : vector<1x512xf32>
    %40 = tpu.matmul %38, %39, %cst_21 {dimension_numbers = #tpu.dot_dimension_numbers<[1], [0], [0], [1], [0, 0, 1, 1], [], []>} : vector<1x128xbf16>, vector<128x512xbf16>, vector<1x512xf32> -> vector<1x512xf32>
    %41 = arith.truncf %36 : vector<1x128xf32> to vector<1x128xbf16>
    %c0_22 = arith.constant 0 : index
    %c0_23 = arith.constant 0 : index
    %42 = vector.load %arg4[%c0_22, %c0_23] : memref<128x512xbf16, #tpu.memory_space<vmem>>, vector<128x512xbf16>
    %cst_24 = arith.constant dense<0.000000e+00> : vector<1x512xf32>
    %43 = tpu.matmul %41, %42, %cst_24 {dimension_numbers = #tpu.dot_dimension_numbers<[1], [0], [0], [1], [0, 0, 1, 1], [], []>} : vector<1x128xbf16>, vector<128x512xbf16>, vector<1x512xf32> -> vector<1x512xf32>
    %44 = arith.addf %40, %43 : vector<1x512xf32>
    %45 = arith.addf %44, %2 : vector<1x512xf32>
    %46 = vector.extract_strided_slice %45 {offsets = [0, 0], sizes = [1, 128], strides = [1, 1]} : vector<1x512xf32> to vector<1x128xf32>
    %cst_25 = arith.constant 5.000000e-01 : f32
    %47 = vector.broadcast %cst_25 : f32 to vector<1x128xf32>
    %48 = arith.mulf %47, %46 : vector<1x128xf32>
    %49 = math.tanh %48 : vector<1x128xf32>
    %cst_26 = arith.constant 5.000000e-01 : f32
    %50 = vector.broadcast %cst_26 : f32 to vector<1x128xf32>
    %51 = arith.mulf %50, %49 : vector<1x128xf32>
    %cst_27 = arith.constant 5.000000e-01 : f32
    %52 = vector.broadcast %cst_27 : f32 to vector<1x128xf32>
    %53 = arith.addf %51, %52 : vector<1x128xf32>
    %54 = vector.extract_strided_slice %45 {offsets = [0, 128], sizes = [1, 128], strides = [1, 1]} : vector<1x512xf32> to vector<1x128xf32>
    %cst_28 = arith.constant 5.000000e-01 : f32
    %55 = vector.broadcast %cst_28 : f32 to vector<1x128xf32>
    %56 = arith.mulf %55, %54 : vector<1x128xf32>
    %57 = math.tanh %56 : vector<1x128xf32>
    %cst_29 = arith.constant 5.000000e-01 : f32
    %58 = vector.broadcast %cst_29 : f32 to vector<1x128xf32>
    %59 = arith.mulf %58, %57 : vector<1x128xf32>
    %cst_30 = arith.constant 5.000000e-01 : f32
    %60 = vector.broadcast %cst_30 : f32 to vector<1x128xf32>
    %61 = arith.addf %59, %60 : vector<1x128xf32>
    %62 = vector.extract_strided_slice %45 {offsets = [0, 256], sizes = [1, 128], strides = [1, 1]} : vector<1x512xf32> to vector<1x128xf32>
    %63 = math.tanh %62 : vector<1x128xf32>
    %64 = vector.extract_strided_slice %45 {offsets = [0, 384], sizes = [1, 128], strides = [1, 1]} : vector<1x512xf32> to vector<1x128xf32>
    %cst_31 = arith.constant 5.000000e-01 : f32
    %65 = vector.broadcast %cst_31 : f32 to vector<1x128xf32>
    %66 = arith.mulf %65, %64 : vector<1x128xf32>
    %67 = math.tanh %66 : vector<1x128xf32>
    %cst_32 = arith.constant 5.000000e-01 : f32
    %68 = vector.broadcast %cst_32 : f32 to vector<1x128xf32>
    %69 = arith.mulf %68, %67 : vector<1x128xf32>
    %cst_33 = arith.constant 5.000000e-01 : f32
    %70 = vector.broadcast %cst_33 : f32 to vector<1x128xf32>
    %71 = arith.addf %69, %70 : vector<1x128xf32>
    %72 = arith.mulf %61, %34 : vector<1x128xf32>
    %73 = arith.mulf %53, %63 : vector<1x128xf32>
    %74 = arith.addf %72, %73 : vector<1x128xf32>
    %75 = math.tanh %74 : vector<1x128xf32>
    %76 = arith.mulf %71, %75 : vector<1x128xf32>
    %c1 = arith.constant 1 : index
    %c0_34 = arith.constant 0 : index
    %77 = vector.load %arg9[%c1, %c0_34] : memref<8x128xf32, #tpu.memory_space<vmem>>, vector<1x128xf32>
    tpu.vector_store %arg9[%c1, %c0_34], %74 {strides = array<i32>} : memref<8x128xf32, #tpu.memory_space<vmem>>, vector<1x128xf32>,
    %78 = arith.truncf %74 : vector<1x128xf32> to vector<1x128xbf16>
    %c0_35 = arith.constant 0 : index
    %c0_36 = arith.constant 0 : index
    %79 = vector.load %arg3[%c0_35, %c0_36] : memref<128x512xbf16, #tpu.memory_space<vmem>>, vector<128x512xbf16>
    %cst_37 = arith.constant dense<0.000000e+00> : vector<1x512xf32>
    %80 = tpu.matmul %78, %79, %cst_37 {dimension_numbers = #tpu.dot_dimension_numbers<[1], [0], [0], [1], [0, 0, 1, 1], [], []>} : vector<1x128xbf16>, vector<128x512xbf16>, vector<1x512xf32> -> vector<1x512xf32>
    %81 = arith.truncf %76 : vector<1x128xf32> to vector<1x128xbf16>
    %c0_38 = arith.constant 0 : index
    %c0_39 = arith.constant 0 : index
    %82 = vector.load %arg4[%c0_38, %c0_39] : memref<128x512xbf16, #tpu.memory_space<vmem>>, vector<128x512xbf16>
    %cst_40 = arith.constant dense<0.000000e+00> : vector<1x512xf32>
    %83 = tpu.matmul %81, %82, %cst_40 {dimension_numbers = #tpu.dot_dimension_numbers<[1], [0], [0], [1], [0, 0, 1, 1], [], []>} : vector<1x128xbf16>, vector<128x512xbf16>, vector<1x512xf32> -> vector<1x512xf32>
    %84 = arith.addf %80, %83 : vector<1x512xf32>
    %85 = arith.addf %84, %2 : vector<1x512xf32>
    %86 = vector.extract_strided_slice %85 {offsets = [0, 0], sizes = [1, 128], strides = [1, 1]} : vector<1x512xf32> to vector<1x128xf32>
    %cst_41 = arith.constant 5.000000e-01 : f32
    %87 = vector.broadcast %cst_41 : f32 to vector<1x128xf32>
    %88 = arith.mulf %87, %86 : vector<1x128xf32>
    %89 = math.tanh %88 : vector<1x128xf32>
    %cst_42 = arith.constant 5.000000e-01 : f32
    %90 = vector.broadcast %cst_42 : f32 to vector<1x128xf32>
    %91 = arith.mulf %90, %89 : vector<1x128xf32>
    %cst_43 = arith.constant 5.000000e-01 : f32
    %92 = vector.broadcast %cst_43 : f32 to vector<1x128xf32>
    %93 = arith.addf %91, %92 : vector<1x128xf32>
    %94 = vector.extract_strided_slice %85 {offsets = [0, 128], sizes = [1, 128], strides = [1, 1]} : vector<1x512xf32> to vector<1x128xf32>
    %cst_44 = arith.constant 5.000000e-01 : f32
    %95 = vector.broadcast %cst_44 : f32 to vector<1x128xf32>
    %96 = arith.mulf %95, %94 : vector<1x128xf32>
    %97 = math.tanh %96 : vector<1x128xf32>
    %cst_45 = arith.constant 5.000000e-01 : f32
    %98 = vector.broadcast %cst_45 : f32 to vector<1x128xf32>
    %99 = arith.mulf %98, %97 : vector<1x128xf32>
    %cst_46 = arith.constant 5.000000e-01 : f32
    %100 = vector.broadcast %cst_46 : f32 to vector<1x128xf32>
    %101 = arith.addf %99, %100 : vector<1x128xf32>
    %102 = vector.extract_strided_slice %85 {offsets = [0, 256], sizes = [1, 128], strides = [1, 1]} : vector<1x512xf32> to vector<1x128xf32>
    %103 = math.tanh %102 : vector<1x128xf32>
    %104 = vector.extract_strided_slice %85 {offsets = [0, 384], sizes = [1, 128], strides = [1, 1]} : vector<1x512xf32> to vector<1x128xf32>
    %cst_47 = arith.constant 5.000000e-01 : f32
    %105 = vector.broadcast %cst_47 : f32 to vector<1x128xf32>
    %106 = arith.mulf %105, %104 : vector<1x128xf32>
    %107 = math.tanh %106 : vector<1x128xf32>
    %cst_48 = arith.constant 5.000000e-01 : f32
    %108 = vector.broadcast %cst_48 : f32 to vector<1x128xf32>
    %109 = arith.mulf %108, %107 : vector<1x128xf32>
    %cst_49 = arith.constant 5.000000e-01 : f32
    %110 = vector.broadcast %cst_49 : f32 to vector<1x128xf32>
    %111 = arith.addf %109, %110 : vector<1x128xf32>
    %112 = arith.mulf %101, %74 : vector<1x128xf32>
    %113 = arith.mulf %93, %103 : vector<1x128xf32>
    %114 = arith.addf %112, %113 : vector<1x128xf32>
    %115 = math.tanh %114 : vector<1x128xf32>
    %116 = arith.mulf %111, %115 : vector<1x128xf32>
    %c2 = arith.constant 2 : index
    %c0_50 = arith.constant 0 : index
    %117 = vector.load %arg9[%c2, %c0_50] : memref<8x128xf32, #tpu.memory_space<vmem>>, vector<1x128xf32>
    tpu.vector_store %arg9[%c2, %c0_50], %114 {strides = array<i32>} : memref<8x128xf32, #tpu.memory_space<vmem>>, vector<1x128xf32>,
    %118 = arith.truncf %114 : vector<1x128xf32> to vector<1x128xbf16>
    %c0_51 = arith.constant 0 : index
    %c0_52 = arith.constant 0 : index
    %119 = vector.load %arg3[%c0_51, %c0_52] : memref<128x512xbf16, #tpu.memory_space<vmem>>, vector<128x512xbf16>
    %cst_53 = arith.constant dense<0.000000e+00> : vector<1x512xf32>
    %120 = tpu.matmul %118, %119, %cst_53 {dimension_numbers = #tpu.dot_dimension_numbers<[1], [0], [0], [1], [0, 0, 1, 1], [], []>} : vector<1x128xbf16>, vector<128x512xbf16>, vector<1x512xf32> -> vector<1x512xf32>
    %121 = arith.truncf %116 : vector<1x128xf32> to vector<1x128xbf16>
    %c0_54 = arith.constant 0 : index
    %c0_55 = arith.constant 0 : index
    %122 = vector.load %arg4[%c0_54, %c0_55] : memref<128x512xbf16, #tpu.memory_space<vmem>>, vector<128x512xbf16>
    %cst_56 = arith.constant dense<0.000000e+00> : vector<1x512xf32>
    %123 = tpu.matmul %121, %122, %cst_56 {dimension_numbers = #tpu.dot_dimension_numbers<[1], [0], [0], [1], [0, 0, 1, 1], [], []>} : vector<1x128xbf16>, vector<128x512xbf16>, vector<1x512xf32> -> vector<1x512xf32>
    %124 = arith.addf %120, %123 : vector<1x512xf32>
    %125 = arith.addf %124, %2 : vector<1x512xf32>
    %126 = vector.extract_strided_slice %125 {offsets = [0, 0], sizes = [1, 128], strides = [1, 1]} : vector<1x512xf32> to vector<1x128xf32>
    %cst_57 = arith.constant 5.000000e-01 : f32
    %127 = vector.broadcast %cst_57 : f32 to vector<1x128xf32>
    %128 = arith.mulf %127, %126 : vector<1x128xf32>
    %129 = math.tanh %128 : vector<1x128xf32>
    %cst_58 = arith.constant 5.000000e-01 : f32
    %130 = vector.broadcast %cst_58 : f32 to vector<1x128xf32>
    %131 = arith.mulf %130, %129 : vector<1x128xf32>
    %cst_59 = arith.constant 5.000000e-01 : f32
    %132 = vector.broadcast %cst_59 : f32 to vector<1x128xf32>
    %133 = arith.addf %131, %132 : vector<1x128xf32>
    %134 = vector.extract_strided_slice %125 {offsets = [0, 128], sizes = [1, 128], strides = [1, 1]} : vector<1x512xf32> to vector<1x128xf32>
    %cst_60 = arith.constant 5.000000e-01 : f32
    %135 = vector.broadcast %cst_60 : f32 to vector<1x128xf32>
    %136 = arith.mulf %135, %134 : vector<1x128xf32>
    %137 = math.tanh %136 : vector<1x128xf32>
    %cst_61 = arith.constant 5.000000e-01 : f32
    %138 = vector.broadcast %cst_61 : f32 to vector<1x128xf32>
    %139 = arith.mulf %138, %137 : vector<1x128xf32>
    %cst_62 = arith.constant 5.000000e-01 : f32
    %140 = vector.broadcast %cst_62 : f32 to vector<1x128xf32>
    %141 = arith.addf %139, %140 : vector<1x128xf32>
    %142 = vector.extract_strided_slice %125 {offsets = [0, 256], sizes = [1, 128], strides = [1, 1]} : vector<1x512xf32> to vector<1x128xf32>
    %143 = math.tanh %142 : vector<1x128xf32>
    %144 = vector.extract_strided_slice %125 {offsets = [0, 384], sizes = [1, 128], strides = [1, 1]} : vector<1x512xf32> to vector<1x128xf32>
    %cst_63 = arith.constant 5.000000e-01 : f32
    %145 = vector.broadcast %cst_63 : f32 to vector<1x128xf32>
    %146 = arith.mulf %145, %144 : vector<1x128xf32>
    %147 = math.tanh %146 : vector<1x128xf32>
    %cst_64 = arith.constant 5.000000e-01 : f32
    %148 = vector.broadcast %cst_64 : f32 to vector<1x128xf32>
    %149 = arith.mulf %148, %147 : vector<1x128xf32>
    %cst_65 = arith.constant 5.000000e-01 : f32
    %150 = vector.broadcast %cst_65 : f32 to vector<1x128xf32>
    %151 = arith.addf %149, %150 : vector<1x128xf32>
    %152 = arith.mulf %141, %114 : vector<1x128xf32>
    %153 = arith.mulf %133, %143 : vector<1x128xf32>
    %154 = arith.addf %152, %153 : vector<1x128xf32>
    %155 = math.tanh %154 : vector<1x128xf32>
    %156 = arith.mulf %151, %155 : vector<1x128xf32>
    %c3 = arith.constant 3 : index
    %c0_66 = arith.constant 0 : index
    %157 = vector.load %arg9[%c3, %c0_66] : memref<8x128xf32, #tpu.memory_space<vmem>>, vector<1x128xf32>
    tpu.vector_store %arg9[%c3, %c0_66], %154 {strides = array<i32>} : memref<8x128xf32, #tpu.memory_space<vmem>>, vector<1x128xf32>,
    %158 = arith.truncf %154 : vector<1x128xf32> to vector<1x128xbf16>
    %c0_67 = arith.constant 0 : index
    %c0_68 = arith.constant 0 : index
    %159 = vector.load %arg3[%c0_67, %c0_68] : memref<128x512xbf16, #tpu.memory_space<vmem>>, vector<128x512xbf16>
    %cst_69 = arith.constant dense<0.000000e+00> : vector<1x512xf32>
    %160 = tpu.matmul %158, %159, %cst_69 {dimension_numbers = #tpu.dot_dimension_numbers<[1], [0], [0], [1], [0, 0, 1, 1], [], []>} : vector<1x128xbf16>, vector<128x512xbf16>, vector<1x512xf32> -> vector<1x512xf32>
    %161 = arith.truncf %156 : vector<1x128xf32> to vector<1x128xbf16>
    %c0_70 = arith.constant 0 : index
    %c0_71 = arith.constant 0 : index
    %162 = vector.load %arg4[%c0_70, %c0_71] : memref<128x512xbf16, #tpu.memory_space<vmem>>, vector<128x512xbf16>
    %cst_72 = arith.constant dense<0.000000e+00> : vector<1x512xf32>
    %163 = tpu.matmul %161, %162, %cst_72 {dimension_numbers = #tpu.dot_dimension_numbers<[1], [0], [0], [1], [0, 0, 1, 1], [], []>} : vector<1x128xbf16>, vector<128x512xbf16>, vector<1x512xf32> -> vector<1x512xf32>
    %164 = arith.addf %160, %163 : vector<1x512xf32>
    %165 = arith.addf %164, %2 : vector<1x512xf32>
    %166 = vector.extract_strided_slice %165 {offsets = [0, 0], sizes = [1, 128], strides = [1, 1]} : vector<1x512xf32> to vector<1x128xf32>
    %cst_73 = arith.constant 5.000000e-01 : f32
    %167 = vector.broadcast %cst_73 : f32 to vector<1x128xf32>
    %168 = arith.mulf %167, %166 : vector<1x128xf32>
    %169 = math.tanh %168 : vector<1x128xf32>
    %cst_74 = arith.constant 5.000000e-01 : f32
    %170 = vector.broadcast %cst_74 : f32 to vector<1x128xf32>
    %171 = arith.mulf %170, %169 : vector<1x128xf32>
    %cst_75 = arith.constant 5.000000e-01 : f32
    %172 = vector.broadcast %cst_75 : f32 to vector<1x128xf32>
    %173 = arith.addf %171, %172 : vector<1x128xf32>
    %174 = vector.extract_strided_slice %165 {offsets = [0, 128], sizes = [1, 128], strides = [1, 1]} : vector<1x512xf32> to vector<1x128xf32>
    %cst_76 = arith.constant 5.000000e-01 : f32
    %175 = vector.broadcast %cst_76 : f32 to vector<1x128xf32>
    %176 = arith.mulf %175, %174 : vector<1x128xf32>
    %177 = math.tanh %176 : vector<1x128xf32>
    %cst_77 = arith.constant 5.000000e-01 : f32
    %178 = vector.broadcast %cst_77 : f32 to vector<1x128xf32>
    %179 = arith.mulf %178, %177 : vector<1x128xf32>
    %cst_78 = arith.constant 5.000000e-01 : f32
    %180 = vector.broadcast %cst_78 : f32 to vector<1x128xf32>
    %181 = arith.addf %179, %180 : vector<1x128xf32>
    %182 = vector.extract_strided_slice %165 {offsets = [0, 256], sizes = [1, 128], strides = [1, 1]} : vector<1x512xf32> to vector<1x128xf32>
    %183 = math.tanh %182 : vector<1x128xf32>
    %184 = vector.extract_strided_slice %165 {offsets = [0, 384], sizes = [1, 128], strides = [1, 1]} : vector<1x512xf32> to vector<1x128xf32>
    %cst_79 = arith.constant 5.000000e-01 : f32
    %185 = vector.broadcast %cst_79 : f32 to vector<1x128xf32>
    %186 = arith.mulf %185, %184 : vector<1x128xf32>
    %187 = math.tanh %186 : vector<1x128xf32>
    %cst_80 = arith.constant 5.000000e-01 : f32
    %188 = vector.broadcast %cst_80 : f32 to vector<1x128xf32>
    %189 = arith.mulf %188, %187 : vector<1x128xf32>
    %cst_81 = arith.constant 5.000000e-01 : f32
    %190 = vector.broadcast %cst_81 : f32 to vector<1x128xf32>
    %191 = arith.addf %189, %190 : vector<1x128xf32>
    %192 = arith.mulf %181, %154 : vector<1x128xf32>
    %193 = arith.mulf %173, %183 : vector<1x128xf32>
    %194 = arith.addf %192, %193 : vector<1x128xf32>
    %195 = math.tanh %194 : vector<1x128xf32>
    %196 = arith.mulf %191, %195 : vector<1x128xf32>
    %c4 = arith.constant 4 : index
    %c0_82 = arith.constant 0 : index
    %197 = vector.load %arg9[%c4, %c0_82] : memref<8x128xf32, #tpu.memory_space<vmem>>, vector<1x128xf32>
    tpu.vector_store %arg9[%c4, %c0_82], %194 {strides = array<i32>} : memref<8x128xf32, #tpu.memory_space<vmem>>, vector<1x128xf32>,
    %198 = arith.truncf %194 : vector<1x128xf32> to vector<1x128xbf16>
    %c0_83 = arith.constant 0 : index
    %c0_84 = arith.constant 0 : index
    %199 = vector.load %arg3[%c0_83, %c0_84] : memref<128x512xbf16, #tpu.memory_space<vmem>>, vector<128x512xbf16>
    %cst_85 = arith.constant dense<0.000000e+00> : vector<1x512xf32>
    %200 = tpu.matmul %198, %199, %cst_85 {dimension_numbers = #tpu.dot_dimension_numbers<[1], [0], [0], [1], [0, 0, 1, 1], [], []>} : vector<1x128xbf16>, vector<128x512xbf16>, vector<1x512xf32> -> vector<1x512xf32>
    %201 = arith.truncf %196 : vector<1x128xf32> to vector<1x128xbf16>
    %c0_86 = arith.constant 0 : index
    %c0_87 = arith.constant 0 : index
    %202 = vector.load %arg4[%c0_86, %c0_87] : memref<128x512xbf16, #tpu.memory_space<vmem>>, vector<128x512xbf16>
    %cst_88 = arith.constant dense<0.000000e+00> : vector<1x512xf32>
    %203 = tpu.matmul %201, %202, %cst_88 {dimension_numbers = #tpu.dot_dimension_numbers<[1], [0], [0], [1], [0, 0, 1, 1], [], []>} : vector<1x128xbf16>, vector<128x512xbf16>, vector<1x512xf32> -> vector<1x512xf32>
    %204 = arith.addf %200, %203 : vector<1x512xf32>
    %205 = arith.addf %204, %2 : vector<1x512xf32>
    %206 = vector.extract_strided_slice %205 {offsets = [0, 0], sizes = [1, 128], strides = [1, 1]} : vector<1x512xf32> to vector<1x128xf32>
    %cst_89 = arith.constant 5.000000e-01 : f32
    %207 = vector.broadcast %cst_89 : f32 to vector<1x128xf32>
    %208 = arith.mulf %207, %206 : vector<1x128xf32>
    %209 = math.tanh %208 : vector<1x128xf32>
    %cst_90 = arith.constant 5.000000e-01 : f32
    %210 = vector.broadcast %cst_90 : f32 to vector<1x128xf32>
    %211 = arith.mulf %210, %209 : vector<1x128xf32>
    %cst_91 = arith.constant 5.000000e-01 : f32
    %212 = vector.broadcast %cst_91 : f32 to vector<1x128xf32>
    %213 = arith.addf %211, %212 : vector<1x128xf32>
    %214 = vector.extract_strided_slice %205 {offsets = [0, 128], sizes = [1, 128], strides = [1, 1]} : vector<1x512xf32> to vector<1x128xf32>
    %cst_92 = arith.constant 5.000000e-01 : f32
    %215 = vector.broadcast %cst_92 : f32 to vector<1x128xf32>
    %216 = arith.mulf %215, %214 : vector<1x128xf32>
    %217 = math.tanh %216 : vector<1x128xf32>
    %cst_93 = arith.constant 5.000000e-01 : f32
    %218 = vector.broadcast %cst_93 : f32 to vector<1x128xf32>
    %219 = arith.mulf %218, %217 : vector<1x128xf32>
    %cst_94 = arith.constant 5.000000e-01 : f32
    %220 = vector.broadcast %cst_94 : f32 to vector<1x128xf32>
    %221 = arith.addf %219, %220 : vector<1x128xf32>
    %222 = vector.extract_strided_slice %205 {offsets = [0, 256], sizes = [1, 128], strides = [1, 1]} : vector<1x512xf32> to vector<1x128xf32>
    %223 = math.tanh %222 : vector<1x128xf32>
    %224 = vector.extract_strided_slice %205 {offsets = [0, 384], sizes = [1, 128], strides = [1, 1]} : vector<1x512xf32> to vector<1x128xf32>
    %cst_95 = arith.constant 5.000000e-01 : f32
    %225 = vector.broadcast %cst_95 : f32 to vector<1x128xf32>
    %226 = arith.mulf %225, %224 : vector<1x128xf32>
    %227 = math.tanh %226 : vector<1x128xf32>
    %cst_96 = arith.constant 5.000000e-01 : f32
    %228 = vector.broadcast %cst_96 : f32 to vector<1x128xf32>
    %229 = arith.mulf %228, %227 : vector<1x128xf32>
    %cst_97 = arith.constant 5.000000e-01 : f32
    %230 = vector.broadcast %cst_97 : f32 to vector<1x128xf32>
    %231 = arith.addf %229, %230 : vector<1x128xf32>
    %232 = arith.mulf %221, %194 : vector<1x128xf32>
    %233 = arith.mulf %213, %223 : vector<1x128xf32>
    %234 = arith.addf %232, %233 : vector<1x128xf32>
    %235 = math.tanh %234 : vector<1x128xf32>
    %236 = arith.mulf %231, %235 : vector<1x128xf32>
    %c5 = arith.constant 5 : index
    %c0_98 = arith.constant 0 : index
    %237 = vector.load %arg9[%c5, %c0_98] : memref<8x128xf32, #tpu.memory_space<vmem>>, vector<1x128xf32>
    tpu.vector_store %arg9[%c5, %c0_98], %234 {strides = array<i32>} : memref<8x128xf32, #tpu.memory_space<vmem>>, vector<1x128xf32>,
    %238 = arith.truncf %234 : vector<1x128xf32> to vector<1x128xbf16>
    %c0_99 = arith.constant 0 : index
    %c0_100 = arith.constant 0 : index
    %239 = vector.load %arg3[%c0_99, %c0_100] : memref<128x512xbf16, #tpu.memory_space<vmem>>, vector<128x512xbf16>
    %cst_101 = arith.constant dense<0.000000e+00> : vector<1x512xf32>
    %240 = tpu.matmul %238, %239, %cst_101 {dimension_numbers = #tpu.dot_dimension_numbers<[1], [0], [0], [1], [0, 0, 1, 1], [], []>} : vector<1x128xbf16>, vector<128x512xbf16>, vector<1x512xf32> -> vector<1x512xf32>
    %241 = arith.truncf %236 : vector<1x128xf32> to vector<1x128xbf16>
    %c0_102 = arith.constant 0 : index
    %c0_103 = arith.constant 0 : index
    %242 = vector.load %arg4[%c0_102, %c0_103] : memref<128x512xbf16, #tpu.memory_space<vmem>>, vector<128x512xbf16>
    %cst_104 = arith.constant dense<0.000000e+00> : vector<1x512xf32>
    %243 = tpu.matmul %241, %242, %cst_104 {dimension_numbers = #tpu.dot_dimension_numbers<[1], [0], [0], [1], [0, 0, 1, 1], [], []>} : vector<1x128xbf16>, vector<128x512xbf16>, vector<1x512xf32> -> vector<1x512xf32>
    %244 = arith.addf %240, %243 : vector<1x512xf32>
    %245 = arith.addf %244, %2 : vector<1x512xf32>
    %246 = vector.extract_strided_slice %245 {offsets = [0, 0], sizes = [1, 128], strides = [1, 1]} : vector<1x512xf32> to vector<1x128xf32>
    %cst_105 = arith.constant 5.000000e-01 : f32
    %247 = vector.broadcast %cst_105 : f32 to vector<1x128xf32>
    %248 = arith.mulf %247, %246 : vector<1x128xf32>
    %249 = math.tanh %248 : vector<1x128xf32>
    %cst_106 = arith.constant 5.000000e-01 : f32
    %250 = vector.broadcast %cst_106 : f32 to vector<1x128xf32>
    %251 = arith.mulf %250, %249 : vector<1x128xf32>
    %cst_107 = arith.constant 5.000000e-01 : f32
    %252 = vector.broadcast %cst_107 : f32 to vector<1x128xf32>
    %253 = arith.addf %251, %252 : vector<1x128xf32>
    %254 = vector.extract_strided_slice %245 {offsets = [0, 128], sizes = [1, 128], strides = [1, 1]} : vector<1x512xf32> to vector<1x128xf32>
    %cst_108 = arith.constant 5.000000e-01 : f32
    %255 = vector.broadcast %cst_108 : f32 to vector<1x128xf32>
    %256 = arith.mulf %255, %254 : vector<1x128xf32>
    %257 = math.tanh %256 : vector<1x128xf32>
    %cst_109 = arith.constant 5.000000e-01 : f32
    %258 = vector.broadcast %cst_109 : f32 to vector<1x128xf32>
    %259 = arith.mulf %258, %257 : vector<1x128xf32>
    %cst_110 = arith.constant 5.000000e-01 : f32
    %260 = vector.broadcast %cst_110 : f32 to vector<1x128xf32>
    %261 = arith.addf %259, %260 : vector<1x128xf32>
    %262 = vector.extract_strided_slice %245 {offsets = [0, 256], sizes = [1, 128], strides = [1, 1]} : vector<1x512xf32> to vector<1x128xf32>
    %263 = math.tanh %262 : vector<1x128xf32>
    %264 = vector.extract_strided_slice %245 {offsets = [0, 384], sizes = [1, 128], strides = [1, 1]} : vector<1x512xf32> to vector<1x128xf32>
    %cst_111 = arith.constant 5.000000e-01 : f32
    %265 = vector.broadcast %cst_111 : f32 to vector<1x128xf32>
    %266 = arith.mulf %265, %264 : vector<1x128xf32>
    %267 = math.tanh %266 : vector<1x128xf32>
    %cst_112 = arith.constant 5.000000e-01 : f32
    %268 = vector.broadcast %cst_112 : f32 to vector<1x128xf32>
    %269 = arith.mulf %268, %267 : vector<1x128xf32>
    %cst_113 = arith.constant 5.000000e-01 : f32
    %270 = vector.broadcast %cst_113 : f32 to vector<1x128xf32>
    %271 = arith.addf %269, %270 : vector<1x128xf32>
    %272 = arith.mulf %261, %234 : vector<1x128xf32>
    %273 = arith.mulf %253, %263 : vector<1x128xf32>
    %274 = arith.addf %272, %273 : vector<1x128xf32>
    %275 = math.tanh %274 : vector<1x128xf32>
    %276 = arith.mulf %271, %275 : vector<1x128xf32>
    %c6 = arith.constant 6 : index
    %c0_114 = arith.constant 0 : index
    %277 = vector.load %arg9[%c6, %c0_114] : memref<8x128xf32, #tpu.memory_space<vmem>>, vector<1x128xf32>
    tpu.vector_store %arg9[%c6, %c0_114], %274 {strides = array<i32>} : memref<8x128xf32, #tpu.memory_space<vmem>>, vector<1x128xf32>,
    %278 = arith.truncf %274 : vector<1x128xf32> to vector<1x128xbf16>
    %c0_115 = arith.constant 0 : index
    %c0_116 = arith.constant 0 : index
    %279 = vector.load %arg3[%c0_115, %c0_116] : memref<128x512xbf16, #tpu.memory_space<vmem>>, vector<128x512xbf16>
    %cst_117 = arith.constant dense<0.000000e+00> : vector<1x512xf32>
    %280 = tpu.matmul %278, %279, %cst_117 {dimension_numbers = #tpu.dot_dimension_numbers<[1], [0], [0], [1], [0, 0, 1, 1], [], []>} : vector<1x128xbf16>, vector<128x512xbf16>, vector<1x512xf32> -> vector<1x512xf32>
    %281 = arith.truncf %276 : vector<1x128xf32> to vector<1x128xbf16>
    %c0_118 = arith.constant 0 : index
    %c0_119 = arith.constant 0 : index
    %282 = vector.load %arg4[%c0_118, %c0_119] : memref<128x512xbf16, #tpu.memory_space<vmem>>, vector<128x512xbf16>
    %cst_120 = arith.constant dense<0.000000e+00> : vector<1x512xf32>
    %283 = tpu.matmul %281, %282, %cst_120 {dimension_numbers = #tpu.dot_dimension_numbers<[1], [0], [0], [1], [0, 0, 1, 1], [], []>} : vector<1x128xbf16>, vector<128x512xbf16>, vector<1x512xf32> -> vector<1x512xf32>
    %284 = arith.addf %280, %283 : vector<1x512xf32>
    %285 = arith.addf %284, %2 : vector<1x512xf32>
    %286 = vector.extract_strided_slice %285 {offsets = [0, 0], sizes = [1, 128], strides = [1, 1]} : vector<1x512xf32> to vector<1x128xf32>
    %cst_121 = arith.constant 5.000000e-01 : f32
    %287 = vector.broadcast %cst_121 : f32 to vector<1x128xf32>
    %288 = arith.mulf %287, %286 : vector<1x128xf32>
    %289 = math.tanh %288 : vector<1x128xf32>
    %cst_122 = arith.constant 5.000000e-01 : f32
    %290 = vector.broadcast %cst_122 : f32 to vector<1x128xf32>
    %291 = arith.mulf %290, %289 : vector<1x128xf32>
    %cst_123 = arith.constant 5.000000e-01 : f32
    %292 = vector.broadcast %cst_123 : f32 to vector<1x128xf32>
    %293 = arith.addf %291, %292 : vector<1x128xf32>
    %294 = vector.extract_strided_slice %285 {offsets = [0, 128], sizes = [1, 128], strides = [1, 1]} : vector<1x512xf32> to vector<1x128xf32>
    %cst_124 = arith.constant 5.000000e-01 : f32
    %295 = vector.broadcast %cst_124 : f32 to vector<1x128xf32>
    %296 = arith.mulf %295, %294 : vector<1x128xf32>
    %297 = math.tanh %296 : vector<1x128xf32>
    %cst_125 = arith.constant 5.000000e-01 : f32
    %298 = vector.broadcast %cst_125 : f32 to vector<1x128xf32>
    %299 = arith.mulf %298, %297 : vector<1x128xf32>
    %cst_126 = arith.constant 5.000000e-01 : f32
    %300 = vector.broadcast %cst_126 : f32 to vector<1x128xf32>
    %301 = arith.addf %299, %300 : vector<1x128xf32>
    %302 = vector.extract_strided_slice %285 {offsets = [0, 256], sizes = [1, 128], strides = [1, 1]} : vector<1x512xf32> to vector<1x128xf32>
    %303 = math.tanh %302 : vector<1x128xf32>
    %304 = vector.extract_strided_slice %285 {offsets = [0, 384], sizes = [1, 128], strides = [1, 1]} : vector<1x512xf32> to vector<1x128xf32>
    %cst_127 = arith.constant 5.000000e-01 : f32
    %305 = vector.broadcast %cst_127 : f32 to vector<1x128xf32>
    %306 = arith.mulf %305, %304 : vector<1x128xf32>
    %307 = math.tanh %306 : vector<1x128xf32>
    %cst_128 = arith.constant 5.000000e-01 : f32
    %308 = vector.broadcast %cst_128 : f32 to vector<1x128xf32>
    %309 = arith.mulf %308, %307 : vector<1x128xf32>
    %cst_129 = arith.constant 5.000000e-01 : f32
    %310 = vector.broadcast %cst_129 : f32 to vector<1x128xf32>
    %311 = arith.addf %309, %310 : vector<1x128xf32>
    %312 = arith.mulf %301, %274 : vector<1x128xf32>
    %313 = arith.mulf %293, %303 : vector<1x128xf32>
    %314 = arith.addf %312, %313 : vector<1x128xf32>
    %315 = math.tanh %314 : vector<1x128xf32>
    %316 = arith.mulf %311, %315 : vector<1x128xf32>
    %c7 = arith.constant 7 : index
    %c0_130 = arith.constant 0 : index
    %317 = vector.load %arg9[%c7, %c0_130] : memref<8x128xf32, #tpu.memory_space<vmem>>, vector<1x128xf32>
    tpu.vector_store %arg9[%c7, %c0_130], %314 {strides = array<i32>} : memref<8x128xf32, #tpu.memory_space<vmem>>, vector<1x128xf32>,
    %c0_131 = arith.constant 0 : index
    %c0_132 = arith.constant 0 : index
    %318 = vector.load %arg9[%c0_131, %c0_132] : memref<8x128xf32, #tpu.memory_space<vmem>>, vector<8x128xf32>
    %c0_133 = arith.constant 0 : index
    %c0_134 = arith.constant 0 : index
    %319 = vector.load %arg6[%c0_133, %c0_134] : memref<64x128xf32, #tpu.memory_space<vmem>>, vector<8x128xf32>
    tpu.vector_store %arg6[%c0_133, %c0_134], %318 {strides = array<i32>} : memref<64x128xf32, #tpu.memory_space<vmem>>, vector<8x128xf32>,
    %c1_i32 = arith.constant 1 : i32
    %false = arith.constant false
    %320:4 = scf.while (%arg10 = %c1_i32, %arg11 = %316, %arg12 = %314, %arg13 = %false) : (i32, vector<1x128xf32>, vector<1x128xf32>, i1) -> (i32, vector<1x128xf32>, vector<1x128xf32>, i1) {
      %c8_i32 = arith.constant 8 : i32
      %357 = arith.cmpi slt, %arg10, %c8_i32 : i32
      %true = arith.constant true
      %358 = arith.xori %arg13, %true : i1
      %359 = arith.andi %357, %358 : i1
      scf.condition(%359) %arg10, %arg11, %arg12, %arg13 : i32, vector<1x128xf32>, vector<1x128xf32>, i1
    } do {
    ^bb0(%arg10: i32, %arg11: vector<1x128xf32>, %arg12: vector<1x128xf32>, %arg13: i1):
      %c1_i32_151 = arith.constant 1 : i32
      %357 = arith.subi %arg10, %c1_i32_151 : i32
      %c8_i32 = arith.constant 8 : i32
      %358 = arith.muli %357, %c8_i32 : i32
      %359 = tpu.assume_multiple %358, 8 : i32
      %360 = arith.index_cast %359 : i32 to index
      %c0_152 = arith.constant 0 : index
      %361 = vector.load %arg6[%360, %c0_152] : memref<64x128xf32, #tpu.memory_space<vmem>>, vector<8x128xf32>
      %c0_153 = arith.constant 0 : index
      %c0_154 = arith.constant 0 : index
      %362 = vector.load %arg0[%c0_153, %c0_154] : memref<128x128xf32, #tpu.memory_space<vmem>>, vector<128x128xf32>
      %cst_155 = arith.constant dense<0.000000e+00> : vector<8x128xf32>
      %363 = tpu.matmul %361, %362, %cst_155 {dimension_numbers = #tpu.dot_dimension_numbers<[1], [0], [0], [1], [0, 0, 1, 1], [], []>} : vector<8x128xf32>, vector<128x128xf32>, vector<8x128xf32> -> vector<8x128xf32>
      %364 = vector.broadcast %3 : vector<1x128xf32> to vector<8x128xf32>
      %365 = arith.mulf %363, %364 : vector<8x128xf32>
      %cst_156 = arith.constant dense<0xFF800000> : vector<8xf32>
      %366 = vector.multi_reduction <maximumf>, %365, %cst_156 [1] : vector<8x128xf32> to vector<8xf32>
      %367 = vector.shape_cast %366 : vector<8xf32> to vector<8x1xf32>
      %368 = tpu.iota {dimensions = array<i32: 1>} : vector<8x128xi32>
      %369 = vector.broadcast %367 : vector<8x1xf32> to vector<8x128xf32>
      %370 = arith.cmpf oeq, %365, %369 : vector<8x128xf32>
      %c128_i32_157 = arith.constant 128 : i32
      %371 = vector.broadcast %c128_i32_157 : i32 to vector<8x128xi32>
      %372 = arith.select %370, %368, %371 : vector<8x128xi1>, vector<8x128xi32>
      %cst_158 = arith.constant dense<2147483647> : vector<8xi32>
      %373 = vector.multi_reduction <minsi>, %372, %cst_158 [1] : vector<8x128xi32> to vector<8xi32>
      %374 = vector.shape_cast %373 : vector<8xi32> to vector<8x1xi32>
      %c1_i32_159 = arith.constant 1 : i32
      %375 = vector.broadcast %c1_i32_159 : i32 to vector<8x1xi32>
      %376 = arith.cmpi eq, %374, %375 : vector<8x1xi32>
      %377 = arith.extui %376 : vector<8x1xi1> to vector<8x1xi32>
      %378 = vector.shape_cast %377 : vector<8x1xi32> to vector<1x8x1xi32>
      %cst_160 = arith.constant dense<0> : vector<1xi32>
      %379 = vector.multi_reduction <add>, %378, %cst_160 [1, 2] : vector<1x8x1xi32> to vector<1xi32>
      %380 = vector.shape_cast %379 : vector<1xi32> to vector<1x1x1xi32>
      %381 = vector.extract %380[0, 0, 0] : i32 from vector<1x1x1xi32>
      %c0_i32 = arith.constant 0 : i32
      %382 = arith.cmpi sgt, %381, %c0_i32 : i32
      %383 = arith.truncf %arg12 : vector<1x128xf32> to vector<1x128xbf16>
      %c0_161 = arith.constant 0 : index
      %c0_162 = arith.constant 0 : index
      %384 = vector.load %arg3[%c0_161, %c0_162] : memref<128x512xbf16, #tpu.memory_space<vmem>>, vector<128x512xbf16>
      %cst_163 = arith.constant dense<0.000000e+00> : vector<1x512xf32>
      %385 = tpu.matmul %383, %384, %cst_163 {dimension_numbers = #tpu.dot_dimension_numbers<[1], [0], [0], [1], [0, 0, 1, 1], [], []>} : vector<1x128xbf16>, vector<128x512xbf16>, vector<1x512xf32> -> vector<1x512xf32>
      %386 = arith.truncf %arg11 : vector<1x128xf32> to vector<1x128xbf16>
      %c0_164 = arith.constant 0 : index
      %c0_165 = arith.constant 0 : index
      %387 = vector.load %arg4[%c0_164, %c0_165] : memref<128x512xbf16, #tpu.memory_space<vmem>>, vector<128x512xbf16>
      %cst_166 = arith.constant dense<0.000000e+00> : vector<1x512xf32>
      %388 = tpu.matmul %386, %387, %cst_166 {dimension_numbers = #tpu.dot_dimension_numbers<[1], [0], [0], [1], [0, 0, 1, 1], [], []>} : vector<1x128xbf16>, vector<128x512xbf16>, vector<1x512xf32> -> vector<1x512xf32>
      %389 = arith.addf %385, %388 : vector<1x512xf32>
      %390 = arith.addf %389, %2 : vector<1x512xf32>
      %391 = vector.extract_strided_slice %390 {offsets = [0, 0], sizes = [1, 128], strides = [1, 1]} : vector<1x512xf32> to vector<1x128xf32>
      %cst_167 = arith.constant 5.000000e-01 : f32
      %392 = vector.broadcast %cst_167 : f32 to vector<1x128xf32>
      %393 = arith.mulf %392, %391 : vector<1x128xf32>
      %394 = math.tanh %393 : vector<1x128xf32>
      %cst_168 = arith.constant 5.000000e-01 : f32
      %395 = vector.broadcast %cst_168 : f32 to vector<1x128xf32>
      %396 = arith.mulf %395, %394 : vector<1x128xf32>
      %cst_169 = arith.constant 5.000000e-01 : f32
      %397 = vector.broadcast %cst_169 : f32 to vector<1x128xf32>
      %398 = arith.addf %396, %397 : vector<1x128xf32>
      %399 = vector.extract_strided_slice %390 {offsets = [0, 128], sizes = [1, 128], strides = [1, 1]} : vector<1x512xf32> to vector<1x128xf32>
      %cst_170 = arith.constant 5.000000e-01 : f32
      %400 = vector.broadcast %cst_170 : f32 to vector<1x128xf32>
      %401 = arith.mulf %400, %399 : vector<1x128xf32>
      %402 = math.tanh %401 : vector<1x128xf32>
      %cst_171 = arith.constant 5.000000e-01 : f32
      %403 = vector.broadcast %cst_171 : f32 to vector<1x128xf32>
      %404 = arith.mulf %403, %402 : vector<1x128xf32>
      %cst_172 = arith.constant 5.000000e-01 : f32
      %405 = vector.broadcast %cst_172 : f32 to vector<1x128xf32>
      %406 = arith.addf %404, %405 : vector<1x128xf32>
      %407 = vector.extract_strided_slice %390 {offsets = [0, 256], sizes = [1, 128], strides = [1, 1]} : vector<1x512xf32> to vector<1x128xf32>
      %408 = math.tanh %407 : vector<1x128xf32>
      %409 = vector.extract_strided_slice %390 {offsets = [0, 384], sizes = [1, 128], strides = [1, 1]} : vector<1x512xf32> to vector<1x128xf32>
      %cst_173 = arith.constant 5.000000e-01 : f32
      %410 = vector.broadcast %cst_173 : f32 to vector<1x128xf32>
      %411 = arith.mulf %410, %409 : vector<1x128xf32>
      %412 = math.tanh %411 : vector<1x128xf32>
      %cst_174 = arith.constant 5.000000e-01 : f32
      %413 = vector.broadcast %cst_174 : f32 to vector<1x128xf32>
      %414 = arith.mulf %413, %412 : vector<1x128xf32>
      %cst_175 = arith.constant 5.000000e-01 : f32
      %415 = vector.broadcast %cst_175 : f32 to vector<1x128xf32>
      %416 = arith.addf %414, %415 : vector<1x128xf32>
      %417 = arith.mulf %406, %arg12 : vector<1x128xf32>
      %418 = arith.mulf %398, %408 : vector<1x128xf32>
      %419 = arith.addf %417, %418 : vector<1x128xf32>
      %420 = math.tanh %419 : vector<1x128xf32>
      %421 = arith.mulf %416, %420 : vector<1x128xf32>
      %c0_176 = arith.constant 0 : index
      %c0_177 = arith.constant 0 : index
      %422 = vector.load %arg9[%c0_176, %c0_177] : memref<8x128xf32, #tpu.memory_space<vmem>>, vector<1x128xf32>
      tpu.vector_store %arg9[%c0_176, %c0_177], %419 {strides = array<i32>} : memref<8x128xf32, #tpu.memory_space<vmem>>, vector<1x128xf32>,
      %423 = arith.truncf %419 : vector<1x128xf32> to vector<1x128xbf16>
      %c0_178 = arith.constant 0 : index
      %c0_179 = arith.constant 0 : index
      %424 = vector.load %arg3[%c0_178, %c0_179] : memref<128x512xbf16, #tpu.memory_space<vmem>>, vector<128x512xbf16>
      %cst_180 = arith.constant dense<0.000000e+00> : vector<1x512xf32>
      %425 = tpu.matmul %423, %424, %cst_180 {dimension_numbers = #tpu.dot_dimension_numbers<[1], [0], [0], [1], [0, 0, 1, 1], [], []>} : vector<1x128xbf16>, vector<128x512xbf16>, vector<1x512xf32> -> vector<1x512xf32>
      %426 = arith.truncf %421 : vector<1x128xf32> to vector<1x128xbf16>
      %c0_181 = arith.constant 0 : index
      %c0_182 = arith.constant 0 : index
      %427 = vector.load %arg4[%c0_181, %c0_182] : memref<128x512xbf16, #tpu.memory_space<vmem>>, vector<128x512xbf16>
      %cst_183 = arith.constant dense<0.000000e+00> : vector<1x512xf32>
      %428 = tpu.matmul %426, %427, %cst_183 {dimension_numbers = #tpu.dot_dimension_numbers<[1], [0], [0], [1], [0, 0, 1, 1], [], []>} : vector<1x128xbf16>, vector<128x512xbf16>, vector<1x512xf32> -> vector<1x512xf32>
      %429 = arith.addf %425, %428 : vector<1x512xf32>
      %430 = arith.addf %429, %2 : vector<1x512xf32>
      %431 = vector.extract_strided_slice %430 {offsets = [0, 0], sizes = [1, 128], strides = [1, 1]} : vector<1x512xf32> to vector<1x128xf32>
      %cst_184 = arith.constant 5.000000e-01 : f32
      %432 = vector.broadcast %cst_184 : f32 to vector<1x128xf32>
      %433 = arith.mulf %432, %431 : vector<1x128xf32>
      %434 = math.tanh %433 : vector<1x128xf32>
      %cst_185 = arith.constant 5.000000e-01 : f32
      %435 = vector.broadcast %cst_185 : f32 to vector<1x128xf32>
      %436 = arith.mulf %435, %434 : vector<1x128xf32>
      %cst_186 = arith.constant 5.000000e-01 : f32
      %437 = vector.broadcast %cst_186 : f32 to vector<1x128xf32>
      %438 = arith.addf %436, %437 : vector<1x128xf32>
      %439 = vector.extract_strided_slice %430 {offsets = [0, 128], sizes = [1, 128], strides = [1, 1]} : vector<1x512xf32> to vector<1x128xf32>
      %cst_187 = arith.constant 5.000000e-01 : f32
      %440 = vector.broadcast %cst_187 : f32 to vector<1x128xf32>
      %441 = arith.mulf %440, %439 : vector<1x128xf32>
      %442 = math.tanh %441 : vector<1x128xf32>
      %cst_188 = arith.constant 5.000000e-01 : f32
      %443 = vector.broadcast %cst_188 : f32 to vector<1x128xf32>
      %444 = arith.mulf %443, %442 : vector<1x128xf32>
      %cst_189 = arith.constant 5.000000e-01 : f32
      %445 = vector.broadcast %cst_189 : f32 to vector<1x128xf32>
      %446 = arith.addf %444, %445 : vector<1x128xf32>
      %447 = vector.extract_strided_slice %430 {offsets = [0, 256], sizes = [1, 128], strides = [1, 1]} : vector<1x512xf32> to vector<1x128xf32>
      %448 = math.tanh %447 : vector<1x128xf32>
      %449 = vector.extract_strided_slice %430 {offsets = [0, 384], sizes = [1, 128], strides = [1, 1]} : vector<1x512xf32> to vector<1x128xf32>
      %cst_190 = arith.constant 5.000000e-01 : f32
      %450 = vector.broadcast %cst_190 : f32 to vector<1x128xf32>
      %451 = arith.mulf %450, %449 : vector<1x128xf32>
      %452 = math.tanh %451 : vector<1x128xf32>
      %cst_191 = arith.constant 5.000000e-01 : f32
      %453 = vector.broadcast %cst_191 : f32 to vector<1x128xf32>
      %454 = arith.mulf %453, %452 : vector<1x128xf32>
      %cst_192 = arith.constant 5.000000e-01 : f32
      %455 = vector.broadcast %cst_192 : f32 to vector<1x128xf32>
      %456 = arith.addf %454, %455 : vector<1x128xf32>
      %457 = arith.mulf %446, %419 : vector<1x128xf32>
      %458 = arith.mulf %438, %448 : vector<1x128xf32>
      %459 = arith.addf %457, %458 : vector<1x128xf32>
      %460 = math.tanh %459 : vector<1x128xf32>
      %461 = arith.mulf %456, %460 : vector<1x128xf32>
      %c1_193 = arith.constant 1 : index
      %c0_194 = arith.constant 0 : index
      %462 = vector.load %arg9[%c1_193, %c0_194] : memref<8x128xf32, #tpu.memory_space<vmem>>, vector<1x128xf32>
      tpu.vector_store %arg9[%c1_193, %c0_194], %459 {strides = array<i32>} : memref<8x128xf32, #tpu.memory_space<vmem>>, vector<1x128xf32>,
      %463 = arith.truncf %459 : vector<1x128xf32> to vector<1x128xbf16>
      %c0_195 = arith.constant 0 : index
      %c0_196 = arith.constant 0 : index
      %464 = vector.load %arg3[%c0_195, %c0_196] : memref<128x512xbf16, #tpu.memory_space<vmem>>, vector<128x512xbf16>
      %cst_197 = arith.constant dense<0.000000e+00> : vector<1x512xf32>
      %465 = tpu.matmul %463, %464, %cst_197 {dimension_numbers = #tpu.dot_dimension_numbers<[1], [0], [0], [1], [0, 0, 1, 1], [], []>} : vector<1x128xbf16>, vector<128x512xbf16>, vector<1x512xf32> -> vector<1x512xf32>
      %466 = arith.truncf %461 : vector<1x128xf32> to vector<1x128xbf16>
      %c0_198 = arith.constant 0 : index
      %c0_199 = arith.constant 0 : index
      %467 = vector.load %arg4[%c0_198, %c0_199] : memref<128x512xbf16, #tpu.memory_space<vmem>>, vector<128x512xbf16>
      %cst_200 = arith.constant dense<0.000000e+00> : vector<1x512xf32>
      %468 = tpu.matmul %466, %467, %cst_200 {dimension_numbers = #tpu.dot_dimension_numbers<[1], [0], [0], [1], [0, 0, 1, 1], [], []>} : vector<1x128xbf16>, vector<128x512xbf16>, vector<1x512xf32> -> vector<1x512xf32>
      %469 = arith.addf %465, %468 : vector<1x512xf32>
      %470 = arith.addf %469, %2 : vector<1x512xf32>
      %471 = vector.extract_strided_slice %470 {offsets = [0, 0], sizes = [1, 128], strides = [1, 1]} : vector<1x512xf32> to vector<1x128xf32>
      %cst_201 = arith.constant 5.000000e-01 : f32
      %472 = vector.broadcast %cst_201 : f32 to vector<1x128xf32>
      %473 = arith.mulf %472, %471 : vector<1x128xf32>
      %474 = math.tanh %473 : vector<1x128xf32>
      %cst_202 = arith.constant 5.000000e-01 : f32
      %475 = vector.broadcast %cst_202 : f32 to vector<1x128xf32>
      %476 = arith.mulf %475, %474 : vector<1x128xf32>
      %cst_203 = arith.constant 5.000000e-01 : f32
      %477 = vector.broadcast %cst_203 : f32 to vector<1x128xf32>
      %478 = arith.addf %476, %477 : vector<1x128xf32>
      %479 = vector.extract_strided_slice %470 {offsets = [0, 128], sizes = [1, 128], strides = [1, 1]} : vector<1x512xf32> to vector<1x128xf32>
      %cst_204 = arith.constant 5.000000e-01 : f32
      %480 = vector.broadcast %cst_204 : f32 to vector<1x128xf32>
      %481 = arith.mulf %480, %479 : vector<1x128xf32>
      %482 = math.tanh %481 : vector<1x128xf32>
      %cst_205 = arith.constant 5.000000e-01 : f32
      %483 = vector.broadcast %cst_205 : f32 to vector<1x128xf32>
      %484 = arith.mulf %483, %482 : vector<1x128xf32>
      %cst_206 = arith.constant 5.000000e-01 : f32
      %485 = vector.broadcast %cst_206 : f32 to vector<1x128xf32>
      %486 = arith.addf %484, %485 : vector<1x128xf32>
      %487 = vector.extract_strided_slice %470 {offsets = [0, 256], sizes = [1, 128], strides = [1, 1]} : vector<1x512xf32> to vector<1x128xf32>
      %488 = math.tanh %487 : vector<1x128xf32>
      %489 = vector.extract_strided_slice %470 {offsets = [0, 384], sizes = [1, 128], strides = [1, 1]} : vector<1x512xf32> to vector<1x128xf32>
      %cst_207 = arith.constant 5.000000e-01 : f32
      %490 = vector.broadcast %cst_207 : f32 to vector<1x128xf32>
      %491 = arith.mulf %490, %489 : vector<1x128xf32>
      %492 = math.tanh %491 : vector<1x128xf32>
      %cst_208 = arith.constant 5.000000e-01 : f32
      %493 = vector.broadcast %cst_208 : f32 to vector<1x128xf32>
      %494 = arith.mulf %493, %492 : vector<1x128xf32>
      %cst_209 = arith.constant 5.000000e-01 : f32
      %495 = vector.broadcast %cst_209 : f32 to vector<1x128xf32>
      %496 = arith.addf %494, %495 : vector<1x128xf32>
      %497 = arith.mulf %486, %459 : vector<1x128xf32>
      %498 = arith.mulf %478, %488 : vector<1x128xf32>
      %499 = arith.addf %497, %498 : vector<1x128xf32>
      %500 = math.tanh %499 : vector<1x128xf32>
      %501 = arith.mulf %496, %500 : vector<1x128xf32>
      %c2_210 = arith.constant 2 : index
      %c0_211 = arith.constant 0 : index
      %502 = vector.load %arg9[%c2_210, %c0_211] : memref<8x128xf32, #tpu.memory_space<vmem>>, vector<1x128xf32>
      tpu.vector_store %arg9[%c2_210, %c0_211], %499 {strides = array<i32>} : memref<8x128xf32, #tpu.memory_space<vmem>>, vector<1x128xf32>,
      %503 = arith.truncf %499 : vector<1x128xf32> to vector<1x128xbf16>
      %c0_212 = arith.constant 0 : index
      %c0_213 = arith.constant 0 : index
      %504 = vector.load %arg3[%c0_212, %c0_213] : memref<128x512xbf16, #tpu.memory_space<vmem>>, vector<128x512xbf16>
      %cst_214 = arith.constant dense<0.000000e+00> : vector<1x512xf32>
      %505 = tpu.matmul %503, %504, %cst_214 {dimension_numbers = #tpu.dot_dimension_numbers<[1], [0], [0], [1], [0, 0, 1, 1], [], []>} : vector<1x128xbf16>, vector<128x512xbf16>, vector<1x512xf32> -> vector<1x512xf32>
      %506 = arith.truncf %501 : vector<1x128xf32> to vector<1x128xbf16>
      %c0_215 = arith.constant 0 : index
      %c0_216 = arith.constant 0 : index
      %507 = vector.load %arg4[%c0_215, %c0_216] : memref<128x512xbf16, #tpu.memory_space<vmem>>, vector<128x512xbf16>
      %cst_217 = arith.constant dense<0.000000e+00> : vector<1x512xf32>
      %508 = tpu.matmul %506, %507, %cst_217 {dimension_numbers = #tpu.dot_dimension_numbers<[1], [0], [0], [1], [0, 0, 1, 1], [], []>} : vector<1x128xbf16>, vector<128x512xbf16>, vector<1x512xf32> -> vector<1x512xf32>
      %509 = arith.addf %505, %508 : vector<1x512xf32>
      %510 = arith.addf %509, %2 : vector<1x512xf32>
      %511 = vector.extract_strided_slice %510 {offsets = [0, 0], sizes = [1, 128], strides = [1, 1]} : vector<1x512xf32> to vector<1x128xf32>
      %cst_218 = arith.constant 5.000000e-01 : f32
      %512 = vector.broadcast %cst_218 : f32 to vector<1x128xf32>
      %513 = arith.mulf %512, %511 : vector<1x128xf32>
      %514 = math.tanh %513 : vector<1x128xf32>
      %cst_219 = arith.constant 5.000000e-01 : f32
      %515 = vector.broadcast %cst_219 : f32 to vector<1x128xf32>
      %516 = arith.mulf %515, %514 : vector<1x128xf32>
      %cst_220 = arith.constant 5.000000e-01 : f32
      %517 = vector.broadcast %cst_220 : f32 to vector<1x128xf32>
      %518 = arith.addf %516, %517 : vector<1x128xf32>
      %519 = vector.extract_strided_slice %510 {offsets = [0, 128], sizes = [1, 128], strides = [1, 1]} : vector<1x512xf32> to vector<1x128xf32>
      %cst_221 = arith.constant 5.000000e-01 : f32
      %520 = vector.broadcast %cst_221 : f32 to vector<1x128xf32>
      %521 = arith.mulf %520, %519 : vector<1x128xf32>
      %522 = math.tanh %521 : vector<1x128xf32>
      %cst_222 = arith.constant 5.000000e-01 : f32
      %523 = vector.broadcast %cst_222 : f32 to vector<1x128xf32>
      %524 = arith.mulf %523, %522 : vector<1x128xf32>
      %cst_223 = arith.constant 5.000000e-01 : f32
      %525 = vector.broadcast %cst_223 : f32 to vector<1x128xf32>
      %526 = arith.addf %524, %525 : vector<1x128xf32>
      %527 = vector.extract_strided_slice %510 {offsets = [0, 256], sizes = [1, 128], strides = [1, 1]} : vector<1x512xf32> to vector<1x128xf32>
      %528 = math.tanh %527 : vector<1x128xf32>
      %529 = vector.extract_strided_slice %510 {offsets = [0, 384], sizes = [1, 128], strides = [1, 1]} : vector<1x512xf32> to vector<1x128xf32>
      %cst_224 = arith.constant 5.000000e-01 : f32
      %530 = vector.broadcast %cst_224 : f32 to vector<1x128xf32>
      %531 = arith.mulf %530, %529 : vector<1x128xf32>
      %532 = math.tanh %531 : vector<1x128xf32>
      %cst_225 = arith.constant 5.000000e-01 : f32
      %533 = vector.broadcast %cst_225 : f32 to vector<1x128xf32>
      %534 = arith.mulf %533, %532 : vector<1x128xf32>
      %cst_226 = arith.constant 5.000000e-01 : f32
      %535 = vector.broadcast %cst_226 : f32 to vector<1x128xf32>
      %536 = arith.addf %534, %535 : vector<1x128xf32>
      %537 = arith.mulf %526, %499 : vector<1x128xf32>
      %538 = arith.mulf %518, %528 : vector<1x128xf32>
      %539 = arith.addf %537, %538 : vector<1x128xf32>
      %540 = math.tanh %539 : vector<1x128xf32>
      %541 = arith.mulf %536, %540 : vector<1x128xf32>
      %c3_227 = arith.constant 3 : index
      %c0_228 = arith.constant 0 : index
      %542 = vector.load %arg9[%c3_227, %c0_228] : memref<8x128xf32, #tpu.memory_space<vmem>>, vector<1x128xf32>
      tpu.vector_store %arg9[%c3_227, %c0_228], %539 {strides = array<i32>} : memref<8x128xf32, #tpu.memory_space<vmem>>, vector<1x128xf32>,
      %543 = arith.truncf %539 : vector<1x128xf32> to vector<1x128xbf16>
      %c0_229 = arith.constant 0 : index
      %c0_230 = arith.constant 0 : index
      %544 = vector.load %arg3[%c0_229, %c0_230] : memref<128x512xbf16, #tpu.memory_space<vmem>>, vector<128x512xbf16>
      %cst_231 = arith.constant dense<0.000000e+00> : vector<1x512xf32>
      %545 = tpu.matmul %543, %544, %cst_231 {dimension_numbers = #tpu.dot_dimension_numbers<[1], [0], [0], [1], [0, 0, 1, 1], [], []>} : vector<1x128xbf16>, vector<128x512xbf16>, vector<1x512xf32> -> vector<1x512xf32>
      %546 = arith.truncf %541 : vector<1x128xf32> to vector<1x128xbf16>
      %c0_232 = arith.constant 0 : index
      %c0_233 = arith.constant 0 : index
      %547 = vector.load %arg4[%c0_232, %c0_233] : memref<128x512xbf16, #tpu.memory_space<vmem>>, vector<128x512xbf16>
      %cst_234 = arith.constant dense<0.000000e+00> : vector<1x512xf32>
      %548 = tpu.matmul %546, %547, %cst_234 {dimension_numbers = #tpu.dot_dimension_numbers<[1], [0], [0], [1], [0, 0, 1, 1], [], []>} : vector<1x128xbf16>, vector<128x512xbf16>, vector<1x512xf32> -> vector<1x512xf32>
      %549 = arith.addf %545, %548 : vector<1x512xf32>
      %550 = arith.addf %549, %2 : vector<1x512xf32>
      %551 = vector.extract_strided_slice %550 {offsets = [0, 0], sizes = [1, 128], strides = [1, 1]} : vector<1x512xf32> to vector<1x128xf32>
      %cst_235 = arith.constant 5.000000e-01 : f32
      %552 = vector.broadcast %cst_235 : f32 to vector<1x128xf32>
      %553 = arith.mulf %552, %551 : vector<1x128xf32>
      %554 = math.tanh %553 : vector<1x128xf32>
      %cst_236 = arith.constant 5.000000e-01 : f32
      %555 = vector.broadcast %cst_236 : f32 to vector<1x128xf32>
      %556 = arith.mulf %555, %554 : vector<1x128xf32>
      %cst_237 = arith.constant 5.000000e-01 : f32
      %557 = vector.broadcast %cst_237 : f32 to vector<1x128xf32>
      %558 = arith.addf %556, %557 : vector<1x128xf32>
      %559 = vector.extract_strided_slice %550 {offsets = [0, 128], sizes = [1, 128], strides = [1, 1]} : vector<1x512xf32> to vector<1x128xf32>
      %cst_238 = arith.constant 5.000000e-01 : f32
      %560 = vector.broadcast %cst_238 : f32 to vector<1x128xf32>
      %561 = arith.mulf %560, %559 : vector<1x128xf32>
      %562 = math.tanh %561 : vector<1x128xf32>
      %cst_239 = arith.constant 5.000000e-01 : f32
      %563 = vector.broadcast %cst_239 : f32 to vector<1x128xf32>
      %564 = arith.mulf %563, %562 : vector<1x128xf32>
      %cst_240 = arith.constant 5.000000e-01 : f32
      %565 = vector.broadcast %cst_240 : f32 to vector<1x128xf32>
      %566 = arith.addf %564, %565 : vector<1x128xf32>
      %567 = vector.extract_strided_slice %550 {offsets = [0, 256], sizes = [1, 128], strides = [1, 1]} : vector<1x512xf32> to vector<1x128xf32>
      %568 = math.tanh %567 : vector<1x128xf32>
      %569 = vector.extract_strided_slice %550 {offsets = [0, 384], sizes = [1, 128], strides = [1, 1]} : vector<1x512xf32> to vector<1x128xf32>
      %cst_241 = arith.constant 5.000000e-01 : f32
      %570 = vector.broadcast %cst_241 : f32 to vector<1x128xf32>
      %571 = arith.mulf %570, %569 : vector<1x128xf32>
      %572 = math.tanh %571 : vector<1x128xf32>
      %cst_242 = arith.constant 5.000000e-01 : f32
      %573 = vector.broadcast %cst_242 : f32 to vector<1x128xf32>
      %574 = arith.mulf %573, %572 : vector<1x128xf32>
      %cst_243 = arith.constant 5.000000e-01 : f32
      %575 = vector.broadcast %cst_243 : f32 to vector<1x128xf32>
      %576 = arith.addf %574, %575 : vector<1x128xf32>
      %577 = arith.mulf %566, %539 : vector<1x128xf32>
      %578 = arith.mulf %558, %568 : vector<1x128xf32>
      %579 = arith.addf %577, %578 : vector<1x128xf32>
      %580 = math.tanh %579 : vector<1x128xf32>
      %581 = arith.mulf %576, %580 : vector<1x128xf32>
      %c4_244 = arith.constant 4 : index
      %c0_245 = arith.constant 0 : index
      %582 = vector.load %arg9[%c4_244, %c0_245] : memref<8x128xf32, #tpu.memory_space<vmem>>, vector<1x128xf32>
      tpu.vector_store %arg9[%c4_244, %c0_245], %579 {strides = array<i32>} : memref<8x128xf32, #tpu.memory_space<vmem>>, vector<1x128xf32>,
      %583 = arith.truncf %579 : vector<1x128xf32> to vector<1x128xbf16>
      %c0_246 = arith.constant 0 : index
      %c0_247 = arith.constant 0 : index
      %584 = vector.load %arg3[%c0_246, %c0_247] : memref<128x512xbf16, #tpu.memory_space<vmem>>, vector<128x512xbf16>
      %cst_248 = arith.constant dense<0.000000e+00> : vector<1x512xf32>
      %585 = tpu.matmul %583, %584, %cst_248 {dimension_numbers = #tpu.dot_dimension_numbers<[1], [0], [0], [1], [0, 0, 1, 1], [], []>} : vector<1x128xbf16>, vector<128x512xbf16>, vector<1x512xf32> -> vector<1x512xf32>
      %586 = arith.truncf %581 : vector<1x128xf32> to vector<1x128xbf16>
      %c0_249 = arith.constant 0 : index
      %c0_250 = arith.constant 0 : index
      %587 = vector.load %arg4[%c0_249, %c0_250] : memref<128x512xbf16, #tpu.memory_space<vmem>>, vector<128x512xbf16>
      %cst_251 = arith.constant dense<0.000000e+00> : vector<1x512xf32>
      %588 = tpu.matmul %586, %587, %cst_251 {dimension_numbers = #tpu.dot_dimension_numbers<[1], [0], [0], [1], [0, 0, 1, 1], [], []>} : vector<1x128xbf16>, vector<128x512xbf16>, vector<1x512xf32> -> vector<1x512xf32>
      %589 = arith.addf %585, %588 : vector<1x512xf32>
      %590 = arith.addf %589, %2 : vector<1x512xf32>
      %591 = vector.extract_strided_slice %590 {offsets = [0, 0], sizes = [1, 128], strides = [1, 1]} : vector<1x512xf32> to vector<1x128xf32>
      %cst_252 = arith.constant 5.000000e-01 : f32
      %592 = vector.broadcast %cst_252 : f32 to vector<1x128xf32>
      %593 = arith.mulf %592, %591 : vector<1x128xf32>
      %594 = math.tanh %593 : vector<1x128xf32>
      %cst_253 = arith.constant 5.000000e-01 : f32
      %595 = vector.broadcast %cst_253 : f32 to vector<1x128xf32>
      %596 = arith.mulf %595, %594 : vector<1x128xf32>
      %cst_254 = arith.constant 5.000000e-01 : f32
      %597 = vector.broadcast %cst_254 : f32 to vector<1x128xf32>
      %598 = arith.addf %596, %597 : vector<1x128xf32>
      %599 = vector.extract_strided_slice %590 {offsets = [0, 128], sizes = [1, 128], strides = [1, 1]} : vector<1x512xf32> to vector<1x128xf32>
      %cst_255 = arith.constant 5.000000e-01 : f32
      %600 = vector.broadcast %cst_255 : f32 to vector<1x128xf32>
      %601 = arith.mulf %600, %599 : vector<1x128xf32>
      %602 = math.tanh %601 : vector<1x128xf32>
      %cst_256 = arith.constant 5.000000e-01 : f32
      %603 = vector.broadcast %cst_256 : f32 to vector<1x128xf32>
      %604 = arith.mulf %603, %602 : vector<1x128xf32>
      %cst_257 = arith.constant 5.000000e-01 : f32
      %605 = vector.broadcast %cst_257 : f32 to vector<1x128xf32>
      %606 = arith.addf %604, %605 : vector<1x128xf32>
      %607 = vector.extract_strided_slice %590 {offsets = [0, 256], sizes = [1, 128], strides = [1, 1]} : vector<1x512xf32> to vector<1x128xf32>
      %608 = math.tanh %607 : vector<1x128xf32>
      %609 = vector.extract_strided_slice %590 {offsets = [0, 384], sizes = [1, 128], strides = [1, 1]} : vector<1x512xf32> to vector<1x128xf32>
      %cst_258 = arith.constant 5.000000e-01 : f32
      %610 = vector.broadcast %cst_258 : f32 to vector<1x128xf32>
      %611 = arith.mulf %610, %609 : vector<1x128xf32>
      %612 = math.tanh %611 : vector<1x128xf32>
      %cst_259 = arith.constant 5.000000e-01 : f32
      %613 = vector.broadcast %cst_259 : f32 to vector<1x128xf32>
      %614 = arith.mulf %613, %612 : vector<1x128xf32>
      %cst_260 = arith.constant 5.000000e-01 : f32
      %615 = vector.broadcast %cst_260 : f32 to vector<1x128xf32>
      %616 = arith.addf %614, %615 : vector<1x128xf32>
      %617 = arith.mulf %606, %579 : vector<1x128xf32>
      %618 = arith.mulf %598, %608 : vector<1x128xf32>
      %619 = arith.addf %617, %618 : vector<1x128xf32>
      %620 = math.tanh %619 : vector<1x128xf32>
      %621 = arith.mulf %616, %620 : vector<1x128xf32>
      %c5_261 = arith.constant 5 : index
      %c0_262 = arith.constant 0 : index
      %622 = vector.load %arg9[%c5_261, %c0_262] : memref<8x128xf32, #tpu.memory_space<vmem>>, vector<1x128xf32>
      tpu.vector_store %arg9[%c5_261, %c0_262], %619 {strides = array<i32>} : memref<8x128xf32, #tpu.memory_space<vmem>>, vector<1x128xf32>,
      %623 = arith.truncf %619 : vector<1x128xf32> to vector<1x128xbf16>
      %c0_263 = arith.constant 0 : index
      %c0_264 = arith.constant 0 : index
      %624 = vector.load %arg3[%c0_263, %c0_264] : memref<128x512xbf16, #tpu.memory_space<vmem>>, vector<128x512xbf16>
      %cst_265 = arith.constant dense<0.000000e+00> : vector<1x512xf32>
      %625 = tpu.matmul %623, %624, %cst_265 {dimension_numbers = #tpu.dot_dimension_numbers<[1], [0], [0], [1], [0, 0, 1, 1], [], []>} : vector<1x128xbf16>, vector<128x512xbf16>, vector<1x512xf32> -> vector<1x512xf32>
      %626 = arith.truncf %621 : vector<1x128xf32> to vector<1x128xbf16>
      %c0_266 = arith.constant 0 : index
      %c0_267 = arith.constant 0 : index
      %627 = vector.load %arg4[%c0_266, %c0_267] : memref<128x512xbf16, #tpu.memory_space<vmem>>, vector<128x512xbf16>
      %cst_268 = arith.constant dense<0.000000e+00> : vector<1x512xf32>
      %628 = tpu.matmul %626, %627, %cst_268 {dimension_numbers = #tpu.dot_dimension_numbers<[1], [0], [0], [1], [0, 0, 1, 1], [], []>} : vector<1x128xbf16>, vector<128x512xbf16>, vector<1x512xf32> -> vector<1x512xf32>
      %629 = arith.addf %625, %628 : vector<1x512xf32>
      %630 = arith.addf %629, %2 : vector<1x512xf32>
      %631 = vector.extract_strided_slice %630 {offsets = [0, 0], sizes = [1, 128], strides = [1, 1]} : vector<1x512xf32> to vector<1x128xf32>
      %cst_269 = arith.constant 5.000000e-01 : f32
      %632 = vector.broadcast %cst_269 : f32 to vector<1x128xf32>
      %633 = arith.mulf %632, %631 : vector<1x128xf32>
      %634 = math.tanh %633 : vector<1x128xf32>
      %cst_270 = arith.constant 5.000000e-01 : f32
      %635 = vector.broadcast %cst_270 : f32 to vector<1x128xf32>
      %636 = arith.mulf %635, %634 : vector<1x128xf32>
      %cst_271 = arith.constant 5.000000e-01 : f32
      %637 = vector.broadcast %cst_271 : f32 to vector<1x128xf32>
      %638 = arith.addf %636, %637 : vector<1x128xf32>
      %639 = vector.extract_strided_slice %630 {offsets = [0, 128], sizes = [1, 128], strides = [1, 1]} : vector<1x512xf32> to vector<1x128xf32>
      %cst_272 = arith.constant 5.000000e-01 : f32
      %640 = vector.broadcast %cst_272 : f32 to vector<1x128xf32>
      %641 = arith.mulf %640, %639 : vector<1x128xf32>
      %642 = math.tanh %641 : vector<1x128xf32>
      %cst_273 = arith.constant 5.000000e-01 : f32
      %643 = vector.broadcast %cst_273 : f32 to vector<1x128xf32>
      %644 = arith.mulf %643, %642 : vector<1x128xf32>
      %cst_274 = arith.constant 5.000000e-01 : f32
      %645 = vector.broadcast %cst_274 : f32 to vector<1x128xf32>
      %646 = arith.addf %644, %645 : vector<1x128xf32>
      %647 = vector.extract_strided_slice %630 {offsets = [0, 256], sizes = [1, 128], strides = [1, 1]} : vector<1x512xf32> to vector<1x128xf32>
      %648 = math.tanh %647 : vector<1x128xf32>
      %649 = vector.extract_strided_slice %630 {offsets = [0, 384], sizes = [1, 128], strides = [1, 1]} : vector<1x512xf32> to vector<1x128xf32>
      %cst_275 = arith.constant 5.000000e-01 : f32
      %650 = vector.broadcast %cst_275 : f32 to vector<1x128xf32>
      %651 = arith.mulf %650, %649 : vector<1x128xf32>
      %652 = math.tanh %651 : vector<1x128xf32>
      %cst_276 = arith.constant 5.000000e-01 : f32
      %653 = vector.broadcast %cst_276 : f32 to vector<1x128xf32>
      %654 = arith.mulf %653, %652 : vector<1x128xf32>
      %cst_277 = arith.constant 5.000000e-01 : f32
      %655 = vector.broadcast %cst_277 : f32 to vector<1x128xf32>
      %656 = arith.addf %654, %655 : vector<1x128xf32>
      %657 = arith.mulf %646, %619 : vector<1x128xf32>
      %658 = arith.mulf %638, %648 : vector<1x128xf32>
      %659 = arith.addf %657, %658 : vector<1x128xf32>
      %660 = math.tanh %659 : vector<1x128xf32>
      %661 = arith.mulf %656, %660 : vector<1x128xf32>
      %c6_278 = arith.constant 6 : index
      %c0_279 = arith.constant 0 : index
      %662 = vector.load %arg9[%c6_278, %c0_279] : memref<8x128xf32, #tpu.memory_space<vmem>>, vector<1x128xf32>
      tpu.vector_store %arg9[%c6_278, %c0_279], %659 {strides = array<i32>} : memref<8x128xf32, #tpu.memory_space<vmem>>, vector<1x128xf32>,
      %663 = arith.truncf %659 : vector<1x128xf32> to vector<1x128xbf16>
      %c0_280 = arith.constant 0 : index
      %c0_281 = arith.constant 0 : index
      %664 = vector.load %arg3[%c0_280, %c0_281] : memref<128x512xbf16, #tpu.memory_space<vmem>>, vector<128x512xbf16>
      %cst_282 = arith.constant dense<0.000000e+00> : vector<1x512xf32>
      %665 = tpu.matmul %663, %664, %cst_282 {dimension_numbers = #tpu.dot_dimension_numbers<[1], [0], [0], [1], [0, 0, 1, 1], [], []>} : vector<1x128xbf16>, vector<128x512xbf16>, vector<1x512xf32> -> vector<1x512xf32>
      %666 = arith.truncf %661 : vector<1x128xf32> to vector<1x128xbf16>
      %c0_283 = arith.constant 0 : index
      %c0_284 = arith.constant 0 : index
      %667 = vector.load %arg4[%c0_283, %c0_284] : memref<128x512xbf16, #tpu.memory_space<vmem>>, vector<128x512xbf16>
      %cst_285 = arith.constant dense<0.000000e+00> : vector<1x512xf32>
      %668 = tpu.matmul %666, %667, %cst_285 {dimension_numbers = #tpu.dot_dimension_numbers<[1], [0], [0], [1], [0, 0, 1, 1], [], []>} : vector<1x128xbf16>, vector<128x512xbf16>, vector<1x512xf32> -> vector<1x512xf32>
      %669 = arith.addf %665, %668 : vector<1x512xf32>
      %670 = arith.addf %669, %2 : vector<1x512xf32>
      %671 = vector.extract_strided_slice %670 {offsets = [0, 0], sizes = [1, 128], strides = [1, 1]} : vector<1x512xf32> to vector<1x128xf32>
      %cst_286 = arith.constant 5.000000e-01 : f32
      %672 = vector.broadcast %cst_286 : f32 to vector<1x128xf32>
      %673 = arith.mulf %672, %671 : vector<1x128xf32>
      %674 = math.tanh %673 : vector<1x128xf32>
      %cst_287 = arith.constant 5.000000e-01 : f32
      %675 = vector.broadcast %cst_287 : f32 to vector<1x128xf32>
      %676 = arith.mulf %675, %674 : vector<1x128xf32>
      %cst_288 = arith.constant 5.000000e-01 : f32
      %677 = vector.broadcast %cst_288 : f32 to vector<1x128xf32>
      %678 = arith.addf %676, %677 : vector<1x128xf32>
      %679 = vector.extract_strided_slice %670 {offsets = [0, 128], sizes = [1, 128], strides = [1, 1]} : vector<1x512xf32> to vector<1x128xf32>
      %cst_289 = arith.constant 5.000000e-01 : f32
      %680 = vector.broadcast %cst_289 : f32 to vector<1x128xf32>
      %681 = arith.mulf %680, %679 : vector<1x128xf32>
      %682 = math.tanh %681 : vector<1x128xf32>
      %cst_290 = arith.constant 5.000000e-01 : f32
      %683 = vector.broadcast %cst_290 : f32 to vector<1x128xf32>
      %684 = arith.mulf %683, %682 : vector<1x128xf32>
      %cst_291 = arith.constant 5.000000e-01 : f32
      %685 = vector.broadcast %cst_291 : f32 to vector<1x128xf32>
      %686 = arith.addf %684, %685 : vector<1x128xf32>
      %687 = vector.extract_strided_slice %670 {offsets = [0, 256], sizes = [1, 128], strides = [1, 1]} : vector<1x512xf32> to vector<1x128xf32>
      %688 = math.tanh %687 : vector<1x128xf32>
      %689 = vector.extract_strided_slice %670 {offsets = [0, 384], sizes = [1, 128], strides = [1, 1]} : vector<1x512xf32> to vector<1x128xf32>
      %cst_292 = arith.constant 5.000000e-01 : f32
      %690 = vector.broadcast %cst_292 : f32 to vector<1x128xf32>
      %691 = arith.mulf %690, %689 : vector<1x128xf32>
      %692 = math.tanh %691 : vector<1x128xf32>
      %cst_293 = arith.constant 5.000000e-01 : f32
      %693 = vector.broadcast %cst_293 : f32 to vector<1x128xf32>
      %694 = arith.mulf %693, %692 : vector<1x128xf32>
      %cst_294 = arith.constant 5.000000e-01 : f32
      %695 = vector.broadcast %cst_294 : f32 to vector<1x128xf32>
      %696 = arith.addf %694, %695 : vector<1x128xf32>
      %697 = arith.mulf %686, %659 : vector<1x128xf32>
      %698 = arith.mulf %678, %688 : vector<1x128xf32>
      %699 = arith.addf %697, %698 : vector<1x128xf32>
      %700 = math.tanh %699 : vector<1x128xf32>
      %701 = arith.mulf %696, %700 : vector<1x128xf32>
      %c7_295 = arith.constant 7 : index
      %c0_296 = arith.constant 0 : index
      %702 = vector.load %arg9[%c7_295, %c0_296] : memref<8x128xf32, #tpu.memory_space<vmem>>, vector<1x128xf32>
      tpu.vector_store %arg9[%c7_295, %c0_296], %699 {strides = array<i32>} : memref<8x128xf32, #tpu.memory_space<vmem>>, vector<1x128xf32>,
      %c8_i32_297 = arith.constant 8 : i32
      %703 = arith.muli %arg10, %c8_i32_297 : i32
      %704 = tpu.assume_multiple %703, 8 : i32
      %c0_298 = arith.constant 0 : index
      %c0_299 = arith.constant 0 : index
      %705 = vector.load %arg9[%c0_298, %c0_299] : memref<8x128xf32, #tpu.memory_space<vmem>>, vector<8x128xf32>
      %706 = arith.index_cast %704 : i32 to index
      %c0_300 = arith.constant 0 : index
      %707 = vector.load %arg6[%706, %c0_300] : memref<64x128xf32, #tpu.memory_space<vmem>>, vector<8x128xf32>
      tpu.vector_store %arg6[%706, %c0_300], %705 {strides = array<i32>} : memref<64x128xf32, #tpu.memory_space<vmem>>, vector<8x128xf32>,
      %c1_i32_301 = arith.constant 1 : i32
      %708 = arith.addi %arg10, %c1_i32_301 : i32
      %709 = arith.ori %arg13, %382 : i1
      scf.yield %708, %701, %699, %709 : i32, vector<1x128xf32>, vector<1x128xf32>, i1
    }
    %c0_135 = arith.constant 0 : index
    %c0_136 = arith.constant 0 : index
    %321 = vector.load %arg6[%c0_135, %c0_136] : memref<64x128xf32, #tpu.memory_space<vmem>>, vector<64x128xf32>
    %c0_137 = arith.constant 0 : index
    %c0_138 = arith.constant 0 : index
    %322 = vector.load %arg0[%c0_137, %c0_138] : memref<128x128xf32, #tpu.memory_space<vmem>>, vector<128x128xf32>
    %cst_139 = arith.constant dense<0.000000e+00> : vector<64x128xf32>
    %323 = tpu.matmul %321, %322, %cst_139 {dimension_numbers = #tpu.dot_dimension_numbers<[1], [0], [0], [1], [0, 0, 1, 1], [], []>} : vector<64x128xf32>, vector<128x128xf32>, vector<64x128xf32> -> vector<64x128xf32>
    %324 = vector.broadcast %3 : vector<1x128xf32> to vector<64x128xf32>
    %325 = arith.mulf %323, %324 : vector<64x128xf32>
    %cst_140 = arith.constant dense<0xFF800000> : vector<64xf32>
    %326 = vector.multi_reduction <maximumf>, %325, %cst_140 [1] : vector<64x128xf32> to vector<64xf32>
    %327 = vector.shape_cast %326 : vector<64xf32> to vector<64x1xf32>
    %328 = tpu.iota {dimensions = array<i32: 1>} : vector<64x128xi32>
    %329 = vector.broadcast %327 : vector<64x1xf32> to vector<64x128xf32>
    %330 = arith.cmpf oeq, %325, %329 : vector<64x128xf32>
    %c128_i32 = arith.constant 128 : i32
    %331 = vector.broadcast %c128_i32 : i32 to vector<64x128xi32>
    %332 = arith.select %330, %328, %331 : vector<64x128xi1>, vector<64x128xi32>
    %cst_141 = arith.constant dense<2147483647> : vector<64xi32>
    %333 = vector.multi_reduction <minsi>, %332, %cst_141 [1] : vector<64x128xi32> to vector<64xi32>
    %334 = vector.shape_cast %333 : vector<64xi32> to vector<64x1xi32>
    %335 = tpu.iota {dimensions = array<i32: 0>} : vector<64x1xi32>
    %c1_i32_142 = arith.constant 1 : i32
    %336 = vector.broadcast %c1_i32_142 : i32 to vector<64x1xi32>
    %337 = arith.cmpi eq, %334, %336 : vector<64x1xi32>
    %c64_i32 = arith.constant 64 : i32
    %338 = vector.broadcast %c64_i32 : i32 to vector<64x1xi32>
    %339 = arith.select %337, %335, %338 : vector<64x1xi1>, vector<64x1xi32>
    %340 = vector.shape_cast %339 : vector<64x1xi32> to vector<1x64x1xi32>
    %cst_143 = arith.constant dense<2147483647> : vector<1xi32>
    %341 = vector.multi_reduction <minsi>, %340, %cst_143 [1, 2] : vector<1x64x1xi32> to vector<1xi32>
    %342 = vector.shape_cast %341 : vector<1xi32> to vector<1x1x1xi32>
    %343 = vector.extract %342[0, 0, 0] : i32 from vector<1x1x1xi32>
    %c63_i32 = arith.constant 63 : i32
    %344 = arith.minsi %343, %c63_i32 : i32
    %c1_i32_144 = arith.constant 1 : i32
    %345 = arith.addi %344, %c1_i32_144 : i32
    %346 = vector.broadcast %345 : i32 to vector<64x1xi32>
    %347 = arith.cmpi slt, %335, %346 : vector<64x1xi32>
    %cst_145 = arith.constant 0.000000e+00 : f32
    %348 = vector.shape_cast %347 : vector<64x1xi1> to vector<64x1xi1>
    %349 = vector.broadcast %348 : vector<64x1xi1> to vector<64x128xi1>
    %350 = vector.broadcast %cst_145 : f32 to vector<64x128xf32>
    %351 = arith.select %349, %321, %350 : vector<64x128xi1>, vector<64x128xf32>
    %c0_146 = arith.constant 0 : index
    %c0_147 = arith.constant 0 : index
    %352 = vector.load %arg6[%c0_146, %c0_147] : memref<64x128xf32, #tpu.memory_space<vmem>>, vector<64x128xf32>
    tpu.vector_store %arg6[%c0_146, %c0_147], %351 {strides = array<i32>} : memref<64x128xf32, #tpu.memory_space<vmem>>, vector<64x128xf32>,
    %c-1_i32 = arith.constant -1 : i32
    %353 = vector.broadcast %c-1_i32 : i32 to vector<64x1xi32>
    %354 = arith.select %347, %334, %353 : vector<64x1xi1>, vector<64x1xi32>
    %c0_148 = arith.constant 0 : index
    %c0_149 = arith.constant 0 : index
    %355 = vector.load %arg7[%c0_148, %c0_149] : memref<64x1xi32, #tpu.memory_space<vmem>>, vector<64x1xi32>
    tpu.vector_store %arg7[%c0_148, %c0_149], %354 {strides = array<i32>} : memref<64x1xi32, #tpu.memory_space<vmem>>, vector<64x1xi32>,
    %c0_150 = arith.constant 0 : index
    %356 = memref.load %arg8[%c0_150] : memref<1xi32, #tpu.memory_space<smem>>
    memref.store %345, %arg8[%c0_150] : memref<1xi32, #tpu.memory_space<smem>>
    return
  }
}

</mosaic_0001>

<llo_original>
// kernel: tpu_custom_call.1
$region0: #{tpu_custom_call.1}
  #allocation0 [shape = 'u32[]', space=smem, size = 0x4, offset = 0x4, fixed_abs, tag = 'smem constant byte address 0x4 - core index']
  #allocation1 [shape = 'u32[72,128]{1,0:T(1,128)}', space=vmem, size = 0x9000, scoped, tag = 'internal scratch']
  #allocation2 [shape = 'f32[8,128]{1,0:T(8,128)}', space=vmem, size = 0x1000, scoped, tag = 'scratch operand']
  %s0 = inlined_call_operand.hbm [shape: f32[128,128], index: 0, kind: input, shape index: {}]
  %s1 = inlined_call_operand.hbm [shape: f32[1,128], index: 1, kind: input, shape index: {}]
  %s2 = inlined_call_operand.hbm [shape: f32[1,512], index: 2, kind: input, shape index: {}]
  %s3 = inlined_call_operand.hbm [shape: bf16[128,512], index: 3, kind: input, shape index: {}]
  %s4 = inlined_call_operand.hbm [shape: bf16[128,512], index: 4, kind: input, shape index: {}]
  %s5 = inlined_call_operand.vmem [shape: f32[1,512], index: 5, kind: input, shape index: {}]
  %s6 = inlined_call_operand.hbm [shape: f32[64,128], index: 6, kind: output, shape index: {0}]
  %s7 = inlined_call_operand.vmem [shape: s32[64,1], index: 7, kind: output, shape index: {1}]
  %s8 = inlined_call_operand.hbm [shape: s32[1], index: 8, kind: output, shape index: {2}]
  %9 = xla_tuple %s6, %s7, %s8
  %s10 = sld [smem:[#allocation0]]
  $region77: #{tpu_custom_call.1} parent=0
    _
  %s12 = ssub.s32 1, %s10
  %s13 = scalar_select 0, %s12, %s10
  $region1: #{tpu_custom_call.1} parent=0
    #allocation3 [shape = 'u8[65536]{0}', space=vmem, size = 0x10000, scoped, tag = 'input window, operand 0, single buffered']
    #allocation4 [shape = 's32[1]{0}', space=sflag, size = 0x4, scoped, tag = 'scoped memory for tpu_custom_call.1']
    #allocation5 [shape = 's32[1]{0}', space=sflag, size = 0x4, scoped, tag = 'scoped memory for tpu_custom_call.1']
    #allocation6 [shape = 's32[1]{0}', space=sflag, size = 0x4, scoped, tag = 'scoped memory for tpu_custom_call.1']
    #allocation7 [shape = 'u8[512]{0}', space=vmem, size = 0x400, scoped, tag = 'input window, operand 1, single buffered']
    #allocation8 [shape = 's32[1]{0}', space=sflag, size = 0x4, scoped, tag = 'scoped memory for tpu_custom_call.1']
    #allocation9 [shape = 'u8[2048]{0}', space=vmem, size = 0x800, scoped, tag = 'input window, operand 2, single buffered']
    #allocation10 [shape = 'u8[131072]{0}', space=vmem, size = 0x20000, scoped, tag = 'input window, operand 3, single buffered']
    #allocation11 [shape = 's32[1]{0}', space=sflag, size = 0x4, scoped, tag = 'scoped memory for tpu_custom_call.1']
    #allocation12 [shape = 'u8[131072]{0}', space=vmem, size = 0x20000, scoped, tag = 'input window, operand 4, single buffered']
    #allocation13 [shape = 'u8[32768]{0}', space=vmem, size = 0x8000, scoped, tag = 'output window, operand 0, single buffered']
    #allocation14 [shape = 'u8[512]{0}', space=smem, size = 0x200, scoped, tag = 'output window, operand 2, single buffered']
    %14 = vsyncpa [#allocation4], 0
    %15 = vsyncpa [#allocation8], 0
    %16 = vsyncpa [#allocation11], 0
    %17 = vsyncpa [#allocation5], 0
    %18 = vsyncpa [#allocation6], 0
    // Predicated region
    $region2: #{tpu_custom_call.1} parent=1 // pred_check
      _
    $region3: #{tpu_custom_call.1} parent=1 // pred_check_branch
      %20 = sbr.rel (0) target = $region5
    $region4: #{tpu_custom_call.1} parent=1 // pred_region
      %22 = vsyncadd [#allocation4], 0
      %s23 = sshll.u32 %s0, 4
      %s24 = int_to_ptr.hbm [resolvable:$true] %s23
      %s25 = sshll.u32 [#allocation3], 4
      %s26 = int_to_ptr.vmem [resolvable:$true] %s25
      %31 = dma.hbm_to_vmem [thread:$0]  %s24, 2048, %s26, [#allocation4], 128, 128, 8
    $region5: #{tpu_custom_call.1} parent=1 // pred_fallthru
      _
    // Predicated region
    $region6: #{tpu_custom_call.1} parent=1 // pred_check
      _
    $region7: #{tpu_custom_call.1} parent=1 // pred_check_branch
      %33 = sbr.rel (0) target = $region9
    $region8: #{tpu_custom_call.1} parent=1 // pred_region
      %35 = vsyncadd [#allocation8], 0
      %s37 = sshll.u32 %s1, 4
      %s38 = int_to_ptr.hbm [resolvable:$true] %s37
      %s39 = sshll.u32 [#allocation7], 4
      %s40 = int_to_ptr.vmem [resolvable:$true] %s39
      %42 = dma.hbm_to_vmem [thread:$0]  %s38, 16, %s40, [#allocation8]
    $region9: #{tpu_custom_call.1} parent=1 // pred_fallthru
      _
    // Predicated region
    $region10: #{tpu_custom_call.1} parent=1 // pred_check
      _
    $region11: #{tpu_custom_call.1} parent=1 // pred_check_branch
      %44 = sbr.rel (0) target = $region13
    $region12: #{tpu_custom_call.1} parent=1 // pred_region
      %46 = vsyncadd [#allocation8], 0
      %s48 = sshll.u32 %s2, 4
      %s49 = int_to_ptr.hbm [resolvable:$true] %s48
      %s50 = sshll.u32 [#allocation9], 4
      %s51 = int_to_ptr.vmem [resolvable:$true] %s50
      %53 = dma.hbm_to_vmem [thread:$0]  %s49, 64, %s51, [#allocation8]
    $region13: #{tpu_custom_call.1} parent=1 // pred_fallthru
      _
    // Predicated region
    $region14: #{tpu_custom_call.1} parent=1 // pred_check
      _
    $region15: #{tpu_custom_call.1} parent=1 // pred_check_branch
      %55 = sbr.rel (0) target = $region17
    $region16: #{tpu_custom_call.1} parent=1 // pred_region
      %57 = vsyncadd [#allocation11], 0
      %s58 = sshll.u32 %s3, 4
      %s59 = int_to_ptr.hbm [resolvable:$true] %s58
      %s60 = sshll.u32 [#allocation10], 4
      %s61 = int_to_ptr.vmem [resolvable:$true] %s60
      %66 = dma.hbm_to_vmem [thread:$0]  %s59, 4096, %s61, [#allocation11], 256, 256, 16
    $region17: #{tpu_custom_call.1} parent=1 // pred_fallthru
      _
    // Predicated region
    $region18: #{tpu_custom_call.1} parent=1 // pred_check
      _
    $region19: #{tpu_custom_call.1} parent=1 // pred_check_branch
      %68 = sbr.rel (0) target = $region21
    $region20: #{tpu_custom_call.1} parent=1 // pred_region
      %70 = vsyncadd [#allocation11], 0
      %s71 = sshll.u32 %s4, 4
      %s72 = int_to_ptr.hbm [resolvable:$true] %s71
      %s73 = sshll.u32 [#allocation12], 4
      %s74 = int_to_ptr.vmem [resolvable:$true] %s73
      %79 = dma.hbm_to_vmem [thread:$0]  %s72, 4096, %s74, [#allocation11], 256, 256, 16
    $region21: #{tpu_custom_call.1} parent=1 // pred_fallthru
      _
    // Predicated region
    $region22: #{tpu_custom_call.1} parent=1 // pred_check
      _
    $region23: #{tpu_custom_call.1} parent=1 // pred_check_branch
      %81 = sbr.rel (0) target = $region25
    $region24: #{tpu_custom_call.1} parent=1 // pred_region
      _
    $region25: #{tpu_custom_call.1} parent=1 // pred_fallthru
      _
    // Predicated region
    $region26: #{tpu_custom_call.1} parent=1 // pred_check
      _
    $region27: #{tpu_custom_call.1} parent=1 // pred_check_branch
      %83 = sbr.rel (0) target = $region29
    $region28: #{tpu_custom_call.1} parent=1 // pred_region
      %85 = dma.done [#allocation4], 2048
    $region29: #{tpu_custom_call.1} parent=1 // pred_fallthru
      _
    // Predicated region
    $region30: #{tpu_custom_call.1} parent=1 // pred_check
      _
    $region31: #{tpu_custom_call.1} parent=1 // pred_check_branch
      %87 = sbr.rel (0) target = $region33
    $region32: #{tpu_custom_call.1} parent=1 // pred_region
      %89 = dma.done [#allocation8], 16
    $region33: #{tpu_custom_call.1} parent=1 // pred_fallthru
      _
    // Predicated region
    $region34: #{tpu_custom_call.1} parent=1 // pred_check
      _
    $region35: #{tpu_custom_call.1} parent=1 // pred_check_branch
      %91 = sbr.rel (0) target = $region37
    $region36: #{tpu_custom_call.1} parent=1 // pred_region
      %93 = dma.done [#allocation8], 64
    $region37: #{tpu_custom_call.1} parent=1 // pred_fallthru
      _
    // Predicated region
    $region38: #{tpu_custom_call.1} parent=1 // pred_check
      _
    $region39: #{tpu_custom_call.1} parent=1 // pred_check_branch
      %95 = sbr.rel (0) target = $region41
    $region40: #{tpu_custom_call.1} parent=1 // pred_region
      %97 = dma.done [#allocation11], 4096
    $region41: #{tpu_custom_call.1} parent=1 // pred_fallthru
      _
    // Predicated region
    $region42: #{tpu_custom_call.1} parent=1 // pred_check
      _
    $region43: #{tpu_custom_call.1} parent=1 // pred_check_branch
      %99 = sbr.rel (0) target = $region45
    $region44: #{tpu_custom_call.1} parent=1 // pred_region
      %101 = dma.done [#allocation11], 4096
    $region45: #{tpu_custom_call.1} parent=1 // pred_fallthru
      _
    %102 = vst [vmem:[#allocation13] sm:$0xff] 0.0
    %103 = vst [vmem:[#allocation13 + $0x8] sm:$0xff] 0.0
    %104 = vst [vmem:[#allocation13 + $0x10] sm:$0xff] 0.0
    %105 = vst [vmem:[#allocation13 + $0x18] sm:$0xff] 0.0
    %106 = vst [vmem:[#allocation13 + $0x20] sm:$0xff] 0.0
    %107 = vst [vmem:[#allocation13 + $0x28] sm:$0xff] 0.0
    %108 = vst [vmem:[#allocation13 + $0x30] sm:$0xff] 0.0
    %109 = vst [vmem:[#allocation13 + $0x38] sm:$0xff] 0.0
    %v110 = vld [vmem:[%s5] sm:$0xf]
    %v111 = vld [vmem:[#allocation7] sm:$0x1]
    %v112 = vld [vmem:[#allocation9] sm:$0xf]
    %v113 = vmul.f32 %v112, 0.5
    %v114 = vtanh.pop %v113
    %v115 = vmul.f32 %v114, 0.5
    %v116 = vadd.f32 %v115, 0.5
    %v118 = vrot.slane %v112, 1
    %v120 = vmul.f32 %v118, 0.5
    %v121 = vtanh.pop %v120
    %v122 = vmul.f32 %v121, 0.5
    %v123 = vadd.f32 %v122, 0.5
    %v124 = vrot.slane %v112, 2
    %v126 = vtanh.pop %v124
    %v127 = vrot.slane %v112, 3
    %v129 = vmul.f32 %v127, 0.5
    %v130 = vtanh.pop %v129
    %v131 = vmul.f32 %v130, 0.5
    %v132 = vadd.f32 %v131, 0.5
    %v133 = vmul.f32 %v123, 0.0
    %v134 = vmul.f32 %v116, %v126
    %v135 = vadd.f32 %v133, %v134
    %v136 = vtanh.pop %v135
    %v137 = vmul.f32 %v132, %v136
    %138 = vst [vmem:[#allocation2] sm:$0x1] %v135
    %v139 = vpack.c.bf16 %v135, %v135
    %v140 = vld [vmem:[#allocation10] sm:$0xff]
    %v141 = vld [vmem:[#allocation10 + $0x8] sm:$0xff]
    %v142 = vld [vmem:[#allocation10 + $0x10] sm:$0xff]
    %v143 = vld [vmem:[#allocation10 + $0x18] sm:$0xff]
    %v144 = vld [vmem:[#allocation10 + $0x20] sm:$0xff]
    %v145 = vld [vmem:[#allocation10 + $0x28] sm:$0xff]
    %v146 = vld [vmem:[#allocation10 + $0x30] sm:$0xff]
    %v147 = vld [vmem:[#allocation10 + $0x38] sm:$0xff]
    %v148 = vld [vmem:[#allocation10 + $0x40] sm:$0xff]
    %v149 = vld [vmem:[#allocation10 + $0x48] sm:$0xff]
    %v150 = vld [vmem:[#allocation10 + $0x50] sm:$0xff]
    %v151 = vld [vmem:[#allocation10 + $0x58] sm:$0xff]
    %v152 = vld [vmem:[#allocation10 + $0x60] sm:$0xff]
    %v153 = vld [vmem:[#allocation10 + $0x68] sm:$0xff]
    %v154 = vld [vmem:[#allocation10 + $0x70] sm:$0xff]
    %v155 = vld [vmem:[#allocation10 + $0x78] sm:$0xff]
    %v156 = vld [vmem:[#allocation10 + $0x80] sm:$0xff]
    %v157 = vld [vmem:[#allocation10 + $0x88] sm:$0xff]
    %v158 = vld [vmem:[#allocation10 + $0x90] sm:$0xff]
    %v159 = vld [vmem:[#allocation10 + $0x98] sm:$0xff]
    %v160 = vld [vmem:[#allocation10 + $0xa0] sm:$0xff]
    %v161 = vld [vmem:[#allocation10 + $0xa8] sm:$0xff]
    %v162 = vld [vmem:[#allocation10 + $0xb0] sm:$0xff]
    %v163 = vld [vmem:[#allocation10 + $0xb8] sm:$0xff]
    %v164 = vld [vmem:[#allocation10 + $0xc0] sm:$0xff]
    %v165 = vld [vmem:[#allocation10 + $0xc8] sm:$0xff]
    %v166 = vld [vmem:[#allocation10 + $0xd0] sm:$0xff]
    %v167 = vld [vmem:[#allocation10 + $0xd8] sm:$0xff]
    %v168 = vld [vmem:[#allocation10 + $0xe0] sm:$0xff]
    %v169 = vld [vmem:[#allocation10 + $0xe8] sm:$0xff]
    %v170 = vld [vmem:[#allocation10 + $0xf0] sm:$0xff]
    %v171 = vld [vmem:[#allocation10 + $0xf8] sm:$0xff]
    %v172 = vpack.c.bf16 %v137, %v137
    %v173 = vld [vmem:[#allocation12] sm:$0xff]
    %v174 = vld [vmem:[#allocation12 + $0x8] sm:$0xff]
    %v175 = vld [vmem:[#allocation12 + $0x10] sm:$0xff]
    %v176 = vld [vmem:[#allocation12 + $0x18] sm:$0xff]
    %v177 = vld [vmem:[#allocation12 + $0x20] sm:$0xff]
    %v178 = vld [vmem:[#allocation12 + $0x28] sm:$0xff]
    %v179 = vld [vmem:[#allocation12 + $0x30] sm:$0xff]
    %v180 = vld [vmem:[#allocation12 + $0x38] sm:$0xff]
    %v181 = vld [vmem:[#allocation12 + $0x40] sm:$0xff]
    %v182 = vld [vmem:[#allocation12 + $0x48] sm:$0xff]
    %v183 = vld [vmem:[#allocation12 + $0x50] sm:$0xff]
    %v184 = vld [vmem:[#allocation12 + $0x58] sm:$0xff]
    %v185 = vld [vmem:[#allocation12 + $0x60] sm:$0xff]
    %v186 = vld [vmem:[#allocation12 + $0x68] sm:$0xff]
    %v187 = vld [vmem:[#allocation12 + $0x70] sm:$0xff]
    %v188 = vld [vmem:[#allocation12 + $0x78] sm:$0xff]
    %v189 = vld [vmem:[#allocation12 + $0x80] sm:$0xff]
    %v190 = vld [vmem:[#allocation12 + $0x88] sm:$0xff]
    %v191 = vld [vmem:[#allocation12 + $0x90] sm:$0xff]
    %v192 = vld [vmem:[#allocation12 + $0x98] sm:$0xff]
    %v193 = vld [vmem:[#allocation12 + $0xa0] sm:$0xff]
    %v194 = vld [vmem:[#allocation12 + $0xa8] sm:$0xff]
    %v195 = vld [vmem:[#allocation12 + $0xb0] sm:$0xff]
    %v196 = vld [vmem:[#allocation12 + $0xb8] sm:$0xff]
    %v197 = vld [vmem:[#allocation12 + $0xc0] sm:$0xff]
    %v198 = vld [vmem:[#allocation12 + $0xc8] sm:$0xff]
    %v199 = vld [vmem:[#allocation12 + $0xd0] sm:$0xff]
    %v200 = vld [vmem:[#allocation12 + $0xd8] sm:$0xff]
    %v201 = vld [vmem:[#allocation12 + $0xe0] sm:$0xff]
    %v202 = vld [vmem:[#allocation12 + $0xe8] sm:$0xff]
    %v203 = vld [vmem:[#allocation12 + $0xf0] sm:$0xff]
    %v204 = vld [vmem:[#allocation12 + $0xf8] sm:$0xff]
    %v237 = vunpack.c.l.b16 %v173
    %v238 = vunpack.c.h.b16 %v173
    %v239 = vunpack.c.l.b16 %v174
    %v240 = vunpack.c.h.b16 %v174
    %v241 = vunpack.c.l.b16 %v175
    %v242 = vunpack.c.h.b16 %v175
    %v243 = vunpack.c.l.b16 %v176
    %v244 = vunpack.c.h.b16 %v176
    %v245 = vunpack.c.l.b16 %v177
    %v246 = vunpack.c.h.b16 %v177
    %v247 = vunpack.c.l.b16 %v178
    %v248 = vunpack.c.h.b16 %v178
    %v249 = vunpack.c.l.b16 %v179
    %v250 = vunpack.c.h.b16 %v179
    %v251 = vunpack.c.l.b16 %v180
    %v252 = vunpack.c.h.b16 %v180
    %v253 = vunpack.c.l.b16 %v181
    %v254 = vunpack.c.h.b16 %v181
    %v255 = vunpack.c.l.b16 %v182
    %v256 = vunpack.c.h.b16 %v182
    %v257 = vunpack.c.l.b16 %v183
    %v258 = vunpack.c.h.b16 %v183
    %v259 = vunpack.c.l.b16 %v184
    %v260 = vunpack.c.h.b16 %v184
    %v261 = vunpack.c.l.b16 %v185
    %v262 = vunpack.c.h.b16 %v185
    %v263 = vunpack.c.l.b16 %v186
    %v264 = vunpack.c.h.b16 %v186
    %v265 = vunpack.c.l.b16 %v187
    %v266 = vunpack.c.h.b16 %v187
    %v267 = vunpack.c.l.b16 %v188
    %v268 = vunpack.c.h.b16 %v188
    %v269 = vunpack.c.l.b16 %v189
    %v270 = vunpack.c.h.b16 %v189
    %v271 = vunpack.c.l.b16 %v190
    %v272 = vunpack.c.h.b16 %v190
    %v273 = vunpack.c.l.b16 %v191
    %v274 = vunpack.c.h.b16 %v191
    %v275 = vunpack.c.l.b16 %v192
    %v276 = vunpack.c.h.b16 %v192
    %v277 = vunpack.c.l.b16 %v193
    %v278 = vunpack.c.h.b16 %v193
    %v279 = vunpack.c.l.b16 %v194
    %v280 = vunpack.c.h.b16 %v194
    %v281 = vunpack.c.l.b16 %v195
    %v282 = vunpack.c.h.b16 %v195
    %v283 = vunpack.c.l.b16 %v196
    %v284 = vunpack.c.h.b16 %v196
    %v285 = vunpack.c.l.b16 %v197
    %v286 = vunpack.c.h.b16 %v197
    %v287 = vunpack.c.l.b16 %v198
    %v288 = vunpack.c.h.b16 %v198
    %v289 = vunpack.c.l.b16 %v199
    %v290 = vunpack.c.h.b16 %v199
    %v291 = vunpack.c.l.b16 %v200
    %v292 = vunpack.c.h.b16 %v200
    %v293 = vunpack.c.l.b16 %v201
    %v294 = vunpack.c.h.b16 %v201
    %v295 = vunpack.c.l.b16 %v202
    %v296 = vunpack.c.h.b16 %v202
    %v297 = vunpack.c.l.b16 %v203
    %v298 = vunpack.c.h.b16 %v203
    %v299 = vunpack.c.l.b16 %v204
    %v300 = vunpack.c.h.b16 %v204
    %v301 = vpack.c.b16 %v241, %v237
    %v302 = vpack.c.b16 %v242, %v238
    %v303 = vpack.c.b16 %v243, %v239
    %v304 = vpack.c.b16 %v244, %v240
    %v305 = vpack.c.b16 %v249, %v245
    %v306 = vpack.c.b16 %v250, %v246
    %v307 = vpack.c.b16 %v251, %v247
    %v308 = vpack.c.b16 %v252, %v248
    %v309 = vpack.c.b16 %v257, %v253
    %v310 = vpack.c.b16 %v258, %v254
    %v311 = vpack.c.b16 %v259, %v255
    %v312 = vpack.c.b16 %v260, %v256
    %v313 = vpack.c.b16 %v265, %v261
    %v314 = vpack.c.b16 %v266, %v262
    %v315 = vpack.c.b16 %v267, %v263
    %v316 = vpack.c.b16 %v268, %v264
    %v317 = vpack.c.b16 %v273, %v269
    %v318 = vpack.c.b16 %v274, %v270
    %v319 = vpack.c.b16 %v275, %v271
    %v320 = vpack.c.b16 %v276, %v272
    %v321 = vpack.c.b16 %v281, %v277
    %v322 = vpack.c.b16 %v282, %v278
    %v323 = vpack.c.b16 %v283, %v279
    %v324 = vpack.c.b16 %v284, %v280
    %v325 = vpack.c.b16 %v289, %v285
    %v326 = vpack.c.b16 %v290, %v286
    %v327 = vpack.c.b16 %v291, %v287
    %v328 = vpack.c.b16 %v292, %v288
    %v329 = vpack.c.b16 %v297, %v293
    %v330 = vpack.c.b16 %v298, %v294
    %v331 = vpack.c.b16 %v299, %v295
    %v332 = vpack.c.b16 %v300, %v296
    %365 = vmatpush.bf16.msra.mxu0 %v329
    %366 = vmatpush.bf16.msra.mxu0 %v325
    %367 = vmatpush.bf16.msra.mxu0 %v321
    %368 = vmatpush.bf16.msra.mxu0 %v317
    %369 = vmatpush.bf16.msra.mxu0 %v313
    %370 = vmatpush.bf16.msra.mxu0 %v309
    %371 = vmatpush.bf16.msra.mxu0 %v305
    %372 = vmatpush.bf16.msra.mxu0 %v301
    %373 = vmatmul.bf16.gmra.mxu0 %v172
    %v374 = vpop.f32.mrf.mxu0
    %v375 = vadd.f32 0.0, %v374
    %v376 = vpop.f32.mrf.mxu0
    %377 = vdwg.mxu0
    %378 = vmatpush.bf16.msra.mxu0 %v330
    %379 = vmatpush.bf16.msra.mxu0 %v326
    %380 = vmatpush.bf16.msra.mxu0 %v322
    %381 = vmatpush.bf16.msra.mxu0 %v318
    %382 = vmatpush.bf16.msra.mxu0 %v314
    %383 = vmatpush.bf16.msra.mxu0 %v310
    %384 = vmatpush.bf16.msra.mxu0 %v306
    %385 = vmatpush.bf16.msra.mxu0 %v302
    %386 = vmatmul.bf16.gmra.mxu0 %v172
    %v387 = vpop.f32.mrf.mxu0
    %v388 = vadd.f32 0.0, %v387
    %v389 = vpop.f32.mrf.mxu0
    %390 = vdwg.mxu0
    %391 = vmatpush.bf16.msra.mxu0 %v331
    %392 = vmatpush.bf16.msra.mxu0 %v327
    %393 = vmatpush.bf16.msra.mxu0 %v323
    %394 = vmatpush.bf16.msra.mxu0 %v319
    %395 = vmatpush.bf16.msra.mxu0 %v315
    %396 = vmatpush.bf16.msra.mxu0 %v311
    %397 = vmatpush.bf16.msra.mxu0 %v307
    %398 = vmatpush.bf16.msra.mxu0 %v303
    %399 = vmatmul.bf16.gmra.mxu0 %v172
    %v400 = vpop.f32.mrf.mxu0
    %v401 = vadd.f32 0.0, %v400
    %v402 = vpop.f32.mrf.mxu0
    %403 = vdwg.mxu0
    %404 = vmatpush.bf16.msra.mxu0 %v332
    %405 = vmatpush.bf16.msra.mxu0 %v328
    %406 = vmatpush.bf16.msra.mxu0 %v324
    %407 = vmatpush.bf16.msra.mxu0 %v320
    %408 = vmatpush.bf16.msra.mxu0 %v316
    %409 = vmatpush.bf16.msra.mxu0 %v312
    %410 = vmatpush.bf16.msra.mxu0 %v308
    %411 = vmatpush.bf16.msra.mxu0 %v304
    %412 = vmatmul.bf16.gmra.mxu0 %v172
    %v413 = vpop.f32.mrf.mxu0
    %v414 = vadd.f32 0.0, %v413
    %v415 = vpop.f32.mrf.mxu0
    %416 = vdwg.mxu0
    %v449 = vunpack.c.l.b16 %v140
    %v450 = vunpack.c.h.b16 %v140
    %v451 = vunpack.c.l.b16 %v141
    %v452 = vunpack.c.h.b16 %v141
    %v453 = vunpack.c.l.b16 %v142
    %v454 = vunpack.c.h.b16 %v142
    %v455 = vunpack.c.l.b16 %v143
    %v456 = vunpack.c.h.b16 %v143
    %v457 = vunpack.c.l.b16 %v144
    %v458 = vunpack.c.h.b16 %v144
    %v459 = vunpack.c.l.b16 %v145
    %v460 = vunpack.c.h.b16 %v145
    %v461 = vunpack.c.l.b16 %v146
    %v462 = vunpack.c.h.b16 %v146
    %v463 = vunpack.c.l.b16 %v147
    %v464 = vunpack.c.h.b16 %v147
    %v465 = vunpack.c.l.b16 %v148
    %v466 = vunpack.c.h.b16 %v148
    %v467 = vunpack.c.l.b16 %v149
    %v468 = vunpack.c.h.b16 %v149
    %v469 = vunpack.c.l.b16 %v150
    %v470 = vunpack.c.h.b16 %v150
    %v471 = vunpack.c.l.b16 %v151
    %v472 = vunpack.c.h.b16 %v151
    %v473 = vunpack.c.l.b16 %v152
    %v474 = vunpack.c.h.b16 %v152
    %v475 = vunpack.c.l.b16 %v153
    %v476 = vunpack.c.h.b16 %v153
    %v477 = vunpack.c.l.b16 %v154
    %v478 = vunpack.c.h.b16 %v154
    %v479 = vunpack.c.l.b16 %v155
    %v480 = vunpack.c.h.b16 %v155
    %v481 = vunpack.c.l.b16 %v156
    %v482 = vunpack.c.h.b16 %v156
    %v483 = vunpack.c.l.b16 %v157
    %v484 = vunpack.c.h.b16 %v157
    %v485 = vunpack.c.l.b16 %v158
    %v486 = vunpack.c.h.b16 %v158
    %v487 = vunpack.c.l.b16 %v159
    %v488 = vunpack.c.h.b16 %v159
    %v489 = vunpack.c.l.b16 %v160
    %v490 = vunpack.c.h.b16 %v160
    %v491 = vunpack.c.l.b16 %v161
    %v492 = vunpack.c.h.b16 %v161
    %v493 = vunpack.c.l.b16 %v162
    %v494 = vunpack.c.h.b16 %v162
    %v495 = vunpack.c.l.b16 %v163
    %v496 = vunpack.c.h.b16 %v163
    %v497 = vunpack.c.l.b16 %v164
    %v498 = vunpack.c.h.b16 %v164
    %v499 = vunpack.c.l.b16 %v165
    %v500 = vunpack.c.h.b16 %v165
    %v501 = vunpack.c.l.b16 %v166
    %v502 = vunpack.c.h.b16 %v166
    %v503 = vunpack.c.l.b16 %v167
    %v504 = vunpack.c.h.b16 %v167
    %v505 = vunpack.c.l.b16 %v168
    %v506 = vunpack.c.h.b16 %v168
    %v507 = vunpack.c.l.b16 %v169
    %v508 = vunpack.c.h.b16 %v169
    %v509 = vunpack.c.l.b16 %v170
    %v510 = vunpack.c.h.b16 %v170
    %v511 = vunpack.c.l.b16 %v171
    %v512 = vunpack.c.h.b16 %v171
    %v513 = vpack.c.b16 %v453, %v449
    %v514 = vpack.c.b16 %v454, %v450
    %v515 = vpack.c.b16 %v455, %v451
    %v516 = vpack.c.b16 %v456, %v452
    %v517 = vpack.c.b16 %v461, %v457
    %v518 = vpack.c.b16 %v462, %v458
    %v519 = vpack.c.b16 %v463, %v459
    %v520 = vpack.c.b16 %v464, %v460
    %v521 = vpack.c.b16 %v469, %v465
    %v522 = vpack.c.b16 %v470, %v466
    %v523 = vpack.c.b16 %v471, %v467
    %v524 = vpack.c.b16 %v472, %v468
    %v525 = vpack.c.b16 %v477, %v473
    %v526 = vpack.c.b16 %v478, %v474
    %v527 = vpack.c.b16 %v479, %v475
    %v528 = vpack.c.b16 %v480, %v476
    %v529 = vpack.c.b16 %v485, %v481
    %v530 = vpack.c.b16 %v486, %v482
    %v531 = vpack.c.b16 %v487, %v483
    %v532 = vpack.c.b16 %v488, %v484
    %v533 = vpack.c.b16 %v493, %v489
    %v534 = vpack.c.b16 %v494, %v490
    %v535 = vpack.c.b16 %v495, %v491
    %v536 = vpack.c.b16 %v496, %v492
    %v537 = vpack.c.b16 %v501, %v497
    %v538 = vpack.c.b16 %v502, %v498
    %v539 = vpack.c.b16 %v503, %v499
    %v540 = vpack.c.b16 %v504, %v500
    %v541 = vpack.c.b16 %v509, %v505
    %v542 = vpack.c.b16 %v510, %v506
    %v543 = vpack.c.b16 %v511, %v507
    %v544 = vpack.c.b16 %v512, %v508
    %577 = vmatpush.bf16.msra.mxu0 %v541
    %578 = vmatpush.bf16.msra.mxu0 %v537
    %579 = vmatpush.bf16.msra.mxu0 %v533
    %580 = vmatpush.bf16.msra.mxu0 %v529
    %581 = vmatpush.bf16.msra.mxu0 %v525
    %582 = vmatpush.bf16.msra.mxu0 %v521
    %583 = vmatpush.bf16.msra.mxu0 %v517
    %584 = vmatpush.bf16.msra.mxu0 %v513
    %585 = vmatmul.bf16.gmra.mxu0 %v139
    %v586 = vpop.f32.mrf.mxu0
    %v587 = vadd.f32 %v375, %v586
    %v588 = vpop.f32.mrf.mxu0
    %589 = vdwg.mxu0
    %590 = vmatpush.bf16.msra.mxu0 %v542
    %591 = vmatpush.bf16.msra.mxu0 %v538
    %592 = vmatpush.bf16.msra.mxu0 %v534
    %593 = vmatpush.bf16.msra.mxu0 %v530
    %594 = vmatpush.bf16.msra.mxu0 %v526
    %595 = vmatpush.bf16.msra.mxu0 %v522
    %596 = vmatpush.bf16.msra.mxu0 %v518
    %597 = vmatpush.bf16.msra.mxu0 %v514
    %598 = vmatmul.bf16.gmra.mxu0 %v139
    %v599 = vpop.f32.mrf.mxu0
    %v600 = vadd.f32 %v388, %v599
    %v601 = vpop.f32.mrf.mxu0
    %602 = vdwg.mxu0
    %603 = vmatpush.bf16.msra.mxu0 %v543
    %604 = vmatpush.bf16.msra.mxu0 %v539
    %605 = vmatpush.bf16.msra.mxu0 %v535
    %606 = vmatpush.bf16.msra.mxu0 %v531
    %607 = vmatpush.bf16.msra.mxu0 %v527
    %608 = vmatpush.bf16.msra.mxu0 %v523
    %609 = vmatpush.bf16.msra.mxu0 %v519
    %610 = vmatpush.bf16.msra.mxu0 %v515
    %611 = vmatmul.bf16.gmra.mxu0 %v139
    %v612 = vpop.f32.mrf.mxu0
    %v613 = vadd.f32 %v401, %v612
    %v614 = vpop.f32.mrf.mxu0
    %615 = vdwg.mxu0
    %616 = vmatpush.bf16.msra.mxu0 %v544
    %617 = vmatpush.bf16.msra.mxu0 %v540
    %618 = vmatpush.bf16.msra.mxu0 %v536
    %619 = vmatpush.bf16.msra.mxu0 %v532
    %620 = vmatpush.bf16.msra.mxu0 %v528
    %621 = vmatpush.bf16.msra.mxu0 %v524
    %622 = vmatpush.bf16.msra.mxu0 %v520
    %623 = vmatpush.bf16.msra.mxu0 %v516
    %624 = vmatmul.bf16.gmra.mxu0 %v139
    %v625 = vpop.f32.mrf.mxu0
    %v626 = vadd.f32 %v414, %v625
    %v627 = vpop.f32.mrf.mxu0
    %628 = vdwg.mxu0
    %v630 = vperm.slane %v110, 0
    %v631 = vperm.slane %v110, 1
    %v632 = vperm.slane %v110, 2
    %v633 = vperm.slane %v110, 3
    %v638 = vadd.f32 %v587, %v630
    %v639 = vadd.f32 %v600, %v631
    %v640 = vadd.f32 %v613, %v632
    %v641 = vadd.f32 %v626, %v633
    %v642 = vmul.f32 %v638, 0.5
    %v643 = vtanh.pop %v642
    %v644 = vmul.f32 %v643, 0.5
    %v645 = vadd.f32 %v644, 0.5
    %v646 = vmul.f32 %v639, 0.5
    %v647 = vtanh.pop %v646
    %v648 = vmul.f32 %v647, 0.5
    %v649 = vadd.f32 %v648, 0.5
    %v650 = vtanh.pop %v640
    %v651 = vmul.f32 %v641, 0.5
    %v652 = vtanh.pop %v651
    %v653 = vmul.f32 %v652, 0.5
    %v654 = vadd.f32 %v653, 0.5
    %v655 = vmul.f32 %v649, %v135
    %v656 = vmul.f32 %v645, %v650
    %v657 = vadd.f32 %v655, %v656
    %v658 = vtanh.pop %v657
    %v659 = vmul.f32 %v654, %v658
    %660 = vst [vmem:[#allocation2 + $0x1] sm:$0x1] %v657
    %v661 = vpack.c.bf16 %v657, %v657
    %v662 = vld [vmem:[#allocation10] sm:$0xff]
    %v663 = vld [vmem:[#allocation10 + $0x8] sm:$0xff]
    %v664 = vld [vmem:[#allocation10 + $0x10] sm:$0xff]
    %v665 = vld [vmem:[#allocation10 + $0x18] sm:$0xff]
    %v666 = vld [vmem:[#allocation10 + $0x20] sm:$0xff]
    %v667 = vld [vmem:[#allocation10 + $0x28] sm:$0xff]
    %v668 = vld [vmem:[#allocation10 + $0x30] sm:$0xff]
    %v669 = vld [vmem:[#allocation10 + $0x38] sm:$0xff]
    %v670 = vld [vmem:[#allocation10 + $0x40] sm:$0xff]
    %v671 = vld [vmem:[#allocation10 + $0x48] sm:$0xff]
    %v672 = vld [vmem:[#allocation10 + $0x50] sm:$0xff]
    %v673 = vld [vmem:[#allocation10 + $0x58] sm:$0xff]
    %v674 = vld [vmem:[#allocation10 + $0x60] sm:$0xff]
    %v675 = vld [vmem:[#allocation10 + $0x68] sm:$0xff]
    %v676 = vld [vmem:[#allocation10 + $0x70] sm:$0xff]
    %v677 = vld [vmem:[#allocation10 + $0x78] sm:$0xff]
    %v678 = vld [vmem:[#allocation10 + $0x80] sm:$0xff]
    %v679 = vld [vmem:[#allocation10 + $0x88] sm:$0xff]
    %v680 = vld [vmem:[#allocation10 + $0x90] sm:$0xff]
    %v681 = vld [vmem:[#allocation10 + $0x98] sm:$0xff]
    %v682 = vld [vmem:[#allocation10 + $0xa0] sm:$0xff]
    %v683 = vld [vmem:[#allocation10 + $0xa8] sm:$0xff]
    %v684 = vld [vmem:[#allocation10 + $0xb0] sm:$0xff]
    %v685 = vld [vmem:[#allocation10 + $0xb8] sm:$0xff]
    %v686 = vld [vmem:[#allocation10 + $0xc0] sm:$0xff]
    %v687 = vld [vmem:[#allocation10 + $0xc8] sm:$0xff]
    %v688 = vld [vmem:[#allocation10 + $0xd0] sm:$0xff]
    %v689 = vld [vmem:[#allocation10 + $0xd8] sm:$0xff]
    %v690 = vld [vmem:[#allocation10 + $0xe0] sm:$0xff]
    %v691 = vld [vmem:[#allocation10 + $0xe8] sm:$0xff]
    %v692 = vld [vmem:[#allocation10 + $0xf0] sm:$0xff]
    %v693 = vld [vmem:[#allocation10 + $0xf8] sm:$0xff]
    %v694 = vpack.c.bf16 %v659, %v659
    %v695 = vld [vmem:[#allocation12] sm:$0xff]
    %v696 = vld [vmem:[#allocation12 + $0x8] sm:$0xff]
    %v697 = vld [vmem:[#allocation12 + $0x10] sm:$0xff]
    %v698 = vld [vmem:[#allocation12 + $0x18] sm:$0xff]
    %v699 = vld [vmem:[#allocation12 + $0x20] sm:$0xff]
    %v700 = vld [vmem:[#allocation12 + $0x28] sm:$0xff]
    %v701 = vld [vmem:[#allocation12 + $0x30] sm:$0xff]
    %v702 = vld [vmem:[#allocation12 + $0x38] sm:$0xff]
    %v703 = vld [vmem:[#allocation12 + $0x40] sm:$0xff]
    %v704 = vld [vmem:[#allocation12 + $0x48] sm:$0xff]
    %v705 = vld [vmem:[#allocation12 + $0x50] sm:$0xff]
    %v706 = vld [vmem:[#allocation12 + $0x58] sm:$0xff]
    %v707 = vld [vmem:[#allocation12 + $0x60] sm:$0xff]
    %v708 = vld [vmem:[#allocation12 + $0x68] sm:$0xff]
    %v709 = vld [vmem:[#allocation12 + $0x70] sm:$0xff]
    %v710 = vld [vmem:[#allocation12 + $0x78] sm:$0xff]
    %v711 = vld [vmem:[#allocation12 + $0x80] sm:$0xff]
    %v712 = vld [vmem:[#allocation12 + $0x88] sm:$0xff]
    %v713 = vld [vmem:[#allocation12 + $0x90] sm:$0xff]
    %v714 = vld [vmem:[#allocation12 + $0x98] sm:$0xff]
    %v715 = vld [vmem:[#allocation12 + $0xa0] sm:$0xff]
    %v716 = vld [vmem:[#allocation12 + $0xa8] sm:$0xff]
    %v717 = vld [vmem:[#allocation12 + $0xb0] sm:$0xff]
    %v718 = vld [vmem:[#allocation12 + $0xb8] sm:$0xff]
    %v719 = vld [vmem:[#allocation12 + $0xc0] sm:$0xff]
    %v720 = vld [vmem:[#allocation12 + $0xc8] sm:$0xff]
    %v721 = vld [vmem:[#allocation12 + $0xd0] sm:$0xff]
    %v722 = vld [vmem:[#allocation12 + $0xd8] sm:$0xff]
    %v723 = vld [vmem:[#allocation12 + $0xe0] sm:$0xff]
    %v724 = vld [vmem:[#allocation12 + $0xe8] sm:$0xff]
    %v725 = vld [vmem:[#allocation12 + $0xf0] sm:$0xff]
    %v726 = vld [vmem:[#allocation12 + $0xf8] sm:$0xff]
    %v759 = vunpack.c.l.b16 %v695
    %v760 = vunpack.c.h.b16 %v695
    %v761 = vunpack.c.l.b16 %v696
    %v762 = vunpack.c.h.b16 %v696
    %v763 = vunpack.c.l.b16 %v697
    %v764 = vunpack.c.h.b16 %v697
    %v765 = vunpack.c.l.b16 %v698
    %v766 = vunpack.c.h.b16 %v698
    %v767 = vunpack.c.l.b16 %v699
    %v768 = vunpack.c.h.b16 %v699
    %v769 = vunpack.c.l.b16 %v700
    %v770 = vunpack.c.h.b16 %v700
    %v771 = vunpack.c.l.b16 %v701
    %v772 = vunpack.c.h.b16 %v701
    %v773 = vunpack.c.l.b16 %v702
    %v774 = vunpack.c.h.b16 %v702
    %v775 = vunpack.c.l.b16 %v703
    %v776 = vunpack.c.h.b16 %v703
    %v777 = vunpack.c.l.b16 %v704
    %v778 = vunpack.c.h.b16 %v704
    %v779 = vunpack.c.l.b16 %v705
    %v780 = vunpack.c.h.b16 %v705
    %v781 = vunpack.c.l.b16 %v706
    %v782 = vunpack.c.h.b16 %v706
    %v783 = vunpack.c.l.b16 %v707
    %v784 = vunpack.c.h.b16 %v707
    %v785 = vunpack.c.l.b16 %v708
    %v786 = vunpack.c.h.b16 %v708
    %v787 = vunpack.c.l.b16 %v709
    %v788 = vunpack.c.h.b16 %v709
    %v789 = vunpack.c.l.b16 %v710
    %v790 = vunpack.c.h.b16 %v710
    %v791 = vunpack.c.l.b16 %v711
    %v792 = vunpack.c.h.b16 %v711
    %v793 = vunpack.c.l.b16 %v712
    %v794 = vunpack.c.h.b16 %v712
    %v795 = vunpack.c.l.b16 %v713
    %v796 = vunpack.c.h.b16 %v713
    %v797 = vunpack.c.l.b16 %v714
    %v798 = vunpack.c.h.b16 %v714
    %v799 = vunpack.c.l.b16 %v715
    %v800 = vunpack.c.h.b16 %v715
    %v801 = vunpack.c.l.b16 %v716
    %v802 = vunpack.c.h.b16 %v716
    %v803 = vunpack.c.l.b16 %v717
    %v804 = vunpack.c.h.b16 %v717
    %v805 = vunpack.c.l.b16 %v718
    %v806 = vunpack.c.h.b16 %v718
    %v807 = vunpack.c.l.b16 %v719
    %v808 = vunpack.c.h.b16 %v719
    %v809 = vunpack.c.l.b16 %v720
    %v810 = vunpack.c.h.b16 %v720
    %v811 = vunpack.c.l.b16 %v721
    %v812 = vunpack.c.h.b16 %v721
    %v813 = vunpack.c.l.b16 %v722
    %v814 = vunpack.c.h.b16 %v722
    %v815 = vunpack.c.l.b16 %v723
    %v816 = vunpack.c.h.b16 %v723
    %v817 = vunpack.c.l.b16 %v724
    %v818 = vunpack.c.h.b16 %v724
    %v819 = vunpack.c.l.b16 %v725
    %v820 = vunpack.c.h.b16 %v725
    %v821 = vunpack.c.l.b16 %v726
    %v822 = vunpack.c.h.b16 %v726
    %v823 = vpack.c.b16 %v763, %v759
    %v824 = vpack.c.b16 %v764, %v760
    %v825 = vpack.c.b16 %v765, %v761
    %v826 = vpack.c.b16 %v766, %v762
    %v827 = vpack.c.b16 %v771, %v767
    %v828 = vpack.c.b16 %v772, %v768
    %v829 = vpack.c.b16 %v773, %v769
    %v830 = vpack.c.b16 %v774, %v770
    %v831 = vpack.c.b16 %v779, %v775
    %v832 = vpack.c.b16 %v780, %v776
    %v833 = vpack.c.b16 %v781, %v777
    %v834 = vpack.c.b16 %v782, %v778
    %v835 = vpack.c.b16 %v787, %v783
    %v836 = vpack.c.b16 %v788, %v784
    %v837 = vpack.c.b16 %v789, %v785
    %v838 = vpack.c.b16 %v790, %v786
    %v839 = vpack.c.b16 %v795, %v791
    %v840 = vpack.c.b16 %v796, %v792
    %v841 = vpack.c.b16 %v797, %v793
    %v842 = vpack.c.b16 %v798, %v794
    %v843 = vpack.c.b16 %v803, %v799
    %v844 = vpack.c.b16 %v804, %v800
    %v845 = vpack.c.b16 %v805, %v801
    %v846 = vpack.c.b16 %v806, %v802
    %v847 = vpack.c.b16 %v811, %v807
    %v848 = vpack.c.b16 %v812, %v808
    %v849 = vpack.c.b16 %v813, %v809
    %v850 = vpack.c.b16 %v814, %v810
    %v851 = vpack.c.b16 %v819, %v815
    %v852 = vpack.c.b16 %v820, %v816
    %v853 = vpack.c.b16 %v821, %v817
    %v854 = vpack.c.b16 %v822, %v818
    %887 = vmatpush.bf16.msra.mxu0 %v851
    %888 = vmatpush.bf16.msra.mxu0 %v847
    %889 = vmatpush.bf16.msra.mxu0 %v843
    %890 = vmatpush.bf16.msra.mxu0 %v839
    %891 = vmatpush.bf16.msra.mxu0 %v835
    %892 = vmatpush.bf16.msra.mxu0 %v831
    %893 = vmatpush.bf16.msra.mxu0 %v827
    %894 = vmatpush.bf16.msra.mxu0 %v823
    %895 = vmatmul.bf16.gmra.mxu0 %v694
    %v896 = vpop.f32.mrf.mxu0
    %v897 = vadd.f32 0.0, %v896
    %v898 = vpop.f32.mrf.mxu0
    %899 = vdwg.mxu0
    %900 = vmatpush.bf16.msra.mxu0 %v852
    %901 = vmatpush.bf16.msra.mxu0 %v848
    %902 = vmatpush.bf16.msra.mxu0 %v844
    %903 = vmatpush.bf16.msra.mxu0 %v840
    %904 = vmatpush.bf16.msra.mxu0 %v836
    %905 = vmatpush.bf16.msra.mxu0 %v832
    %906 = vmatpush.bf16.msra.mxu0 %v828
    %907 = vmatpush.bf16.msra.mxu0 %v824
    %908 = vmatmul.bf16.gmra.mxu0 %v694
    %v909 = vpop.f32.mrf.mxu0
    %v910 = vadd.f32 0.0, %v909
    %v911 = vpop.f32.mrf.mxu0
    %912 = vdwg.mxu0
    %913 = vmatpush.bf16.msra.mxu0 %v853
    %914 = vmatpush.bf16.msra.mxu0 %v849
    %915 = vmatpush.bf16.msra.mxu0 %v845
    %916 = vmatpush.bf16.msra.mxu0 %v841
    %917 = vmatpush.bf16.msra.mxu0 %v837
    %918 = vmatpush.bf16.msra.mxu0 %v833
    %919 = vmatpush.bf16.msra.mxu0 %v829
    %920 = vmatpush.bf16.msra.mxu0 %v825
    %921 = vmatmul.bf16.gmra.mxu0 %v694
    %v922 = vpop.f32.mrf.mxu0
    %v923 = vadd.f32 0.0, %v922
    %v924 = vpop.f32.mrf.mxu0
    %925 = vdwg.mxu0
    %926 = vmatpush.bf16.msra.mxu0 %v854
    %927 = vmatpush.bf16.msra.mxu0 %v850
    %928 = vmatpush.bf16.msra.mxu0 %v846
    %929 = vmatpush.bf16.msra.mxu0 %v842
    %930 = vmatpush.bf16.msra.mxu0 %v838
    %931 = vmatpush.bf16.msra.mxu0 %v834
    %932 = vmatpush.bf16.msra.mxu0 %v830
    %933 = vmatpush.bf16.msra.mxu0 %v826
    %934 = vmatmul.bf16.gmra.mxu0 %v694
    %v935 = vpop.f32.mrf.mxu0
    %v936 = vadd.f32 0.0, %v935
    %v937 = vpop.f32.mrf.mxu0
    %938 = vdwg.mxu0
    %v971 = vunpack.c.l.b16 %v662
    %v972 = vunpack.c.h.b16 %v662
    %v973 = vunpack.c.l.b16 %v663
    %v974 = vunpack.c.h.b16 %v663
    %v975 = vunpack.c.l.b16 %v664
    %v976 = vunpack.c.h.b16 %v664
    %v977 = vunpack.c.l.b16 %v665
    %v978 = vunpack.c.h.b16 %v665
    %v979 = vunpack.c.l.b16 %v666
    %v980 = vunpack.c.h.b16 %v666
    %v981 = vunpack.c.l.b16 %v667
    %v982 = vunpack.c.h.b16 %v667
    %v983 = vunpack.c.l.b16 %v668
    %v984 = vunpack.c.h.b16 %v668
    %v985 = vunpack.c.l.b16 %v669
    %v986 = vunpack.c.h.b16 %v669
    %v987 = vunpack.c.l.b16 %v670
    %v988 = vunpack.c.h.b16 %v670
    %v989 = vunpack.c.l.b16 %v671
    %v990 = vunpack.c.h.b16 %v671
    %v991 = vunpack.c.l.b16 %v672
    %v992 = vunpack.c.h.b16 %v672
    %v993 = vunpack.c.l.b16 %v673
    %v994 = vunpack.c.h.b16 %v673
    %v995 = vunpack.c.l.b16 %v674
    %v996 = vunpack.c.h.b16 %v674
    %v997 = vunpack.c.l.b16 %v675
    %v998 = vunpack.c.h.b16 %v675
    %v999 = vunpack.c.l.b16 %v676
    %v1000 = vunpack.c.h.b16 %v676
    %v1001 = vunpack.c.l.b16 %v677
    %v1002 = vunpack.c.h.b16 %v677
    %v1003 = vunpack.c.l.b16 %v678
    %v1004 = vunpack.c.h.b16 %v678
    %v1005 = vunpack.c.l.b16 %v679
    %v1006 = vunpack.c.h.b16 %v679
    %v1007 = vunpack.c.l.b16 %v680
    %v1008 = vunpack.c.h.b16 %v680
    %v1009 = vunpack.c.l.b16 %v681
    %v1010 = vunpack.c.h.b16 %v681
    %v1011 = vunpack.c.l.b16 %v682
    %v1012 = vunpack.c.h.b16 %v682
    %v1013 = vunpack.c.l.b16 %v683
    %v1014 = vunpack.c.h.b16 %v683
    %v1015 = vunpack.c.l.b16 %v684
    %v1016 = vunpack.c.h.b16 %v684
    %v1017 = vunpack.c.l.b16 %v685
    %v1018 = vunpack.c.h.b16 %v685
    %v1019 = vunpack.c.l.b16 %v686
    %v1020 = vunpack.c.h.b16 %v686
    %v1021 = vunpack.c.l.b16 %v687
    %v1022 = vunpack.c.h.b16 %v687
    %v1023 = vunpack.c.l.b16 %v688
    %v1024 = vunpack.c.h.b16 %v688
    %v1025 = vunpack.c.l.b16 %v689
    %v1026 = vunpack.c.h.b16 %v689
    %v1027 = vunpack.c.l.b16 %v690
    %v1028 = vunpack.c.h.b16 %v690
    %v1029 = vunpack.c.l.b16 %v691
    %v1030 = vunpack.c.h.b16 %v691
    %v1031 = vunpack.c.l.b16 %v692
    %v1032 = vunpack.c.h.b16 %v692
    %v1033 = vunpack.c.l.b16 %v693
    %v1034 = vunpack.c.h.b16 %v693
    %v1035 = vpack.c.b16 %v975, %v971
    %v1036 = vpack.c.b16 %v976, %v972
    %v1037 = vpack.c.b16 %v977, %v973
    %v1038 = vpack.c.b16 %v978, %v974
    %v1039 = vpack.c.b16 %v983, %v979
    %v1040 = vpack.c.b16 %v984, %v980
    %v1041 = vpack.c.b16 %v985, %v981
    %v1042 = vpack.c.b16 %v986, %v982
    %v1043 = vpack.c.b16 %v991, %v987
    %v1044 = vpack.c.b16 %v992, %v988
    %v1045 = vpack.c.b16 %v993, %v989
    %v1046 = vpack.c.b16 %v994, %v990
    %v1047 = vpack.c.b16 %v999, %v995
    %v1048 = vpack.c.b16 %v1000, %v996
    %v1049 = vpack.c.b16 %v1001, %v997
    %v1050 = vpack.c.b16 %v1002, %v998
    %v1051 = vpack.c.b16 %v1007, %v1003
    %v1052 = vpack.c.b16 %v1008, %v1004
    %v1053 = vpack.c.b16 %v1009, %v1005
    %v1054 = vpack.c.b16 %v1010, %v1006
    %v1055 = vpack.c.b16 %v1015, %v1011
    %v1056 = vpack.c.b16 %v1016, %v1012
    %v1057 = vpack.c.b16 %v1017, %v1013
    %v1058 = vpack.c.b16 %v1018, %v1014
    %v1059 = vpack.c.b16 %v1023, %v1019
    %v1060 = vpack.c.b16 %v1024, %v1020
    %v1061 = vpack.c.b16 %v1025, %v1021
    %v1062 = vpack.c.b16 %v1026, %v1022
    %v1063 = vpack.c.b16 %v1031, %v1027
    %v1064 = vpack.c.b16 %v1032, %v1028
    %v1065 = vpack.c.b16 %v1033, %v1029
    %v1066 = vpack.c.b16 %v1034, %v1030
    %1099 = vmatpush.bf16.msra.mxu0 %v1063
    %1100 = vmatpush.bf16.msra.mxu0 %v1059
    %1101 = vmatpush.bf16.msra.mxu0 %v1055
    %1102 = vmatpush.bf16.msra.mxu0 %v1051
    %1103 = vmatpush.bf16.msra.mxu0 %v1047
    %1104 = vmatpush.bf16.msra.mxu0 %v1043
    %1105 = vmatpush.bf16.msra.mxu0 %v1039
    %1106 = vmatpush.bf16.msra.mxu0 %v1035
    %1107 = vmatmul.bf16.gmra.mxu0 %v661
    %v1108 = vpop.f32.mrf.mxu0
    %v1109 = vadd.f32 %v897, %v1108
    %v1110 = vpop.f32.mrf.mxu0
    %1111 = vdwg.mxu0
    %1112 = vmatpush.bf16.msra.mxu0 %v1064
    %1113 = vmatpush.bf16.msra.mxu0 %v1060
    %1114 = vmatpush.bf16.msra.mxu0 %v1056
    %1115 = vmatpush.bf16.msra.mxu0 %v1052
    %1116 = vmatpush.bf16.msra.mxu0 %v1048
    %1117 = vmatpush.bf16.msra.mxu0 %v1044
    %1118 = vmatpush.bf16.msra.mxu0 %v1040
    %1119 = vmatpush.bf16.msra.mxu0 %v1036
    %1120 = vmatmul.bf16.gmra.mxu0 %v661
    %v1121 = vpop.f32.mrf.mxu0
    %v1122 = vadd.f32 %v910, %v1121
    %v1123 = vpop.f32.mrf.mxu0
    %1124 = vdwg.mxu0
    %1125 = vmatpush.bf16.msra.mxu0 %v1065
    %1126 = vmatpush.bf16.msra.mxu0 %v1061
    %1127 = vmatpush.bf16.msra.mxu0 %v1057
    %1128 = vmatpush.bf16.msra.mxu0 %v1053
    %1129 = vmatpush.bf16.msra.mxu0 %v1049
    %1130 = vmatpush.bf16.msra.mxu0 %v1045
    %1131 = vmatpush.bf16.msra.mxu0 %v1041
    %1132 = vmatpush.bf16.msra.mxu0 %v1037
    %1133 = vmatmul.bf16.gmra.mxu0 %v661
    %v1134 = vpop.f32.mrf.mxu0
    %v1135 = vadd.f32 %v923, %v1134
    %v1136 = vpop.f32.mrf.mxu0
    %1137 = vdwg.mxu0
    %1138 = vmatpush.bf16.msra.mxu0 %v1066
    %1139 = vmatpush.bf16.msra.mxu0 %v1062
    %1140 = vmatpush.bf16.msra.mxu0 %v1058
    %1141 = vmatpush.bf16.msra.mxu0 %v1054
    %1142 = vmatpush.bf16.msra.mxu0 %v1050
    %1143 = vmatpush.bf16.msra.mxu0 %v1046
    %1144 = vmatpush.bf16.msra.mxu0 %v1042
    %1145 = vmatpush.bf16.msra.mxu0 %v1038
    %1146 = vmatmul.bf16.gmra.mxu0 %v661
    %v1147 = vpop.f32.mrf.mxu0
    %v1148 = vadd.f32 %v936, %v1147
    %v1149 = vpop.f32.mrf.mxu0
    %1150 = vdwg.mxu0
    %v1151 = vadd.f32 %v1109, %v630
    %v1152 = vadd.f32 %v1122, %v631
    %v1153 = vadd.f32 %v1135, %v632
    %v1154 = vadd.f32 %v1148, %v633
    %v1155 = vmul.f32 %v1151, 0.5
    %v1156 = vtanh.pop %v1155
    %v1157 = vmul.f32 %v1156, 0.5
    %v1158 = vadd.f32 %v1157, 0.5
    %v1159 = vmul.f32 %v1152, 0.5
    %v1160 = vtanh.pop %v1159
    %v1161 = vmul.f32 %v1160, 0.5
    %v1162 = vadd.f32 %v1161, 0.5
    %v1163 = vtanh.pop %v1153
    %v1164 = vmul.f32 %v1154, 0.5
    %v1165 = vtanh.pop %v1164
    %v1166 = vmul.f32 %v1165, 0.5
    %v1167 = vadd.f32 %v1166, 0.5
    %v1168 = vmul.f32 %v1162, %v657
    %v1169 = vmul.f32 %v1158, %v1163
    %v1170 = vadd.f32 %v1168, %v1169
    %v1171 = vtanh.pop %v1170
    %v1172 = vmul.f32 %v1167, %v1171
    %1173 = vst [vmem:[#allocation2 + $0x2] sm:$0x1] %v1170
    %v1174 = vpack.c.bf16 %v1170, %v1170
    %v1175 = vld [vmem:[#allocation10] sm:$0xff]
    %v1176 = vld [vmem:[#allocation10 + $0x8] sm:$0xff]
    %v1177 = vld [vmem:[#allocation10 + $0x10] sm:$0xff]
    %v1178 = vld [vmem:[#allocation10 + $0x18] sm:$0xff]
    %v1179 = vld [vmem:[#allocation10 + $0x20] sm:$0xff]
    %v1180 = vld [vmem:[#allocation10 + $0x28] sm:$0xff]
    %v1181 = vld [vmem:[#allocation10 + $0x30] sm:$0xff]
    %v1182 = vld [vmem:[#allocation10 + $0x38] sm:$0xff]
    %v1183 = vld [vmem:[#allocation10 + $0x40] sm:$0xff]
    %v1184 = vld [vmem:[#allocation10 + $0x48] sm:$0xff]
    %v1185 = vld [vmem:[#allocation10 + $0x50] sm:$0xff]
    %v1186 = vld [vmem:[#allocation10 + $0x58] sm:$0xff]
    %v1187 = vld [vmem:[#allocation10 + $0x60] sm:$0xff]
    %v1188 = vld [vmem:[#allocation10 + $0x68] sm:$0xff]
    %v1189 = vld [vmem:[#allocation10 + $0x70] sm:$0xff]
    %v1190 = vld [vmem:[#allocation10 + $0x78] sm:$0xff]
    %v1191 = vld [vmem:[#allocation10 + $0x80] sm:$0xff]
    %v1192 = vld [vmem:[#allocation10 + $0x88] sm:$0xff]
    %v1193 = vld [vmem:[#allocation10 + $0x90] sm:$0xff]
    %v1194 = vld [vmem:[#allocation10 + $0x98] sm:$0xff]
    %v1195 = vld [vmem:[#allocation10 + $0xa0] sm:$0xff]
    %v1196 = vld [vmem:[#allocation10 + $0xa8] sm:$0xff]
    %v1197 = vld [vmem:[#allocation10 + $0xb0] sm:$0xff]
    %v1198 = vld [vmem:[#allocation10 + $0xb8] sm:$0xff]
    %v1199 = vld [vmem:[#allocation10 + $0xc0] sm:$0xff]
    %v1200 = vld [vmem:[#allocation10 + $0xc8] sm:$0xff]
    %v1201 = vld [vmem:[#allocation10 + $0xd0] sm:$0xff]
    %v1202 = vld [vmem:[#allocation10 + $0xd8] sm:$0xff]
    %v1203 = vld [vmem:[#allocation10 + $0xe0] sm:$0xff]
    %v1204 = vld [vmem:[#allocation10 + $0xe8] sm:$0xff]
    %v1205 = vld [vmem:[#allocation10 + $0xf0] sm:$0xff]
    %v1206 = vld [vmem:[#allocation10 + $0xf8] sm:$0xff]
    %v1207 = vpack.c.bf16 %v1172, %v1172
    %v1208 = vld [vmem:[#allocation12] sm:$0xff]
    %v1209 = vld [vmem:[#allocation12 + $0x8] sm:$0xff]
    %v1210 = vld [vmem:[#allocation12 + $0x10] sm:$0xff]
    %v1211 = vld [vmem:[#allocation12 + $0x18] sm:$0xff]
    %v1212 = vld [vmem:[#allocation12 + $0x20] sm:$0xff]
    %v1213 = vld [vmem:[#allocation12 + $0x28] sm:$0xff]
    %v1214 = vld [vmem:[#allocation12 + $0x30] sm:$0xff]
    %v1215 = vld [vmem:[#allocation12 + $0x38] sm:$0xff]
    %v1216 = vld [vmem:[#allocation12 + $0x40] sm:$0xff]
    %v1217 = vld [vmem:[#allocation12 + $0x48] sm:$0xff]
    %v1218 = vld [vmem:[#allocation12 + $0x50] sm:$0xff]
    %v1219 = vld [vmem:[#allocation12 + $0x58] sm:$0xff]
    %v1220 = vld [vmem:[#allocation12 + $0x60] sm:$0xff]
    %v1221 = vld [vmem:[#allocation12 + $0x68] sm:$0xff]
    %v1222 = vld [vmem:[#allocation12 + $0x70] sm:$0xff]
    %v1223 = vld [vmem:[#allocation12 + $0x78] sm:$0xff]
    %v1224 = vld [vmem:[#allocation12 + $0x80] sm:$0xff]
    %v1225 = vld [vmem:[#allocation12 + $0x88] sm:$0xff]
    %v1226 = vld [vmem:[#allocation12 + $0x90] sm:$0xff]
    %v1227 = vld [vmem:[#allocation12 + $0x98] sm:$0xff]
    %v1228 = vld [vmem:[#allocation12 + $0xa0] sm:$0xff]
    %v1229 = vld [vmem:[#allocation12 + $0xa8] sm:$0xff]
    %v1230 = vld [vmem:[#allocation12 + $0xb0] sm:$0xff]
    %v1231 = vld [vmem:[#allocation12 + $0xb8] sm:$0xff]
    %v1232 = vld [vmem:[#allocation12 + $0xc0] sm:$0xff]
    %v1233 = vld [vmem:[#allocation12 + $0xc8] sm:$0xff]
    %v1234 = vld [vmem:[#allocation12 + $0xd0] sm:$0xff]
    %v1235 = vld [vmem:[#allocation12 + $0xd8] sm:$0xff]
    %v1236 = vld [vmem:[#allocation12 + $0xe0] sm:$0xff]
    %v1237 = vld [vmem:[#allocation12 + $0xe8] sm:$0xff]
    %v1238 = vld [vmem:[#allocation12 + $0xf0] sm:$0xff]
    %v1239 = vld [vmem:[#allocation12 + $0xf8] sm:$0xff]
    %v1272 = vunpack.c.l.b16 %v1208
    %v1273 = vunpack.c.h.b16 %v1208
    %v1274 = vunpack.c.l.b16 %v1209
    %v1275 = vunpack.c.h.b16 %v1209
    %v1276 = vunpack.c.l.b16 %v1210
    %v1277 = vunpack.c.h.b16 %v1210
    %v1278 = vunpack.c.l.b16 %v1211
    %v1279 = vunpack.c.h.b16 %v1211
    %v1280 = vunpack.c.l.b16 %v1212
    %v1281 = vunpack.c.h.b16 %v1212
    %v1282 = vunpack.c.l.b16 %v1213
    %v1283 = vunpack.c.h.b16 %v1213
    %v1284 = vunpack.c.l.b16 %v1214
    %v1285 = vunpack.c.h.b16 %v1214
    %v1286 = vunpack.c.l.b16 %v1215
    %v1287 = vunpack.c.h.b16 %v1215
    %v1288 = vunpack.c.l.b16 %v1216
    %v1289 = vunpack.c.h.b16 %v1216
    %v1290 = vunpack.c.l.b16 %v1217
    %v1291 = vunpack.c.h.b16 %v1217
    %v1292 = vunpack.c.l.b16 %v1218
    %v1293 = vunpack.c.h.b16 %v1218
    %v1294 = vunpack.c.l.b16 %v1219
    %v1295 = vunpack.c.h.b16 %v1219
    %v1296 = vunpack.c.l.b16 %v1220
    %v1297 = vunpack.c.h.b16 %v1220
    %v1298 = vunpack.c.l.b16 %v1221
    %v1299 = vunpack.c.h.b16 %v1221
    %v1300 = vunpack.c.l.b16 %v1222
    %v1301 = vunpack.c.h.b16 %v1222
    %v1302 = vunpack.c.l.b16 %v1223
    %v1303 = vunpack.c.h.b16 %v1223
    %v1304 = vunpack.c.l.b16 %v1224
    %v1305 = vunpack.c.h.b16 %v1224
    %v1306 = vunpack.c.l.b16 %v1225
    %v1307 = vunpack.c.h.b16 %v1225
    %v1308 = vunpack.c.l.b16 %v1226
    %v1309 = vunpack.c.h.b16 %v1226
    %v1310 = vunpack.c.l.b16 %v1227
    %v1311 = vunpack.c.h.b16 %v1227
    %v1312 = vunpack.c.l.b16 %v1228
    %v1313 = vunpack.c.h.b16 %v1228
    %v1314 = vunpack.c.l.b16 %v1229
    %v1315 = vunpack.c.h.b16 %v1229
    %v1316 = vunpack.c.l.b16 %v1230
    %v1317 = vunpack.c.h.b16 %v1230
    %v1318 = vunpack.c.l.b16 %v1231
    %v1319 = vunpack.c.h.b16 %v1231
    %v1320 = vunpack.c.l.b16 %v1232
    %v1321 = vunpack.c.h.b16 %v1232
    %v1322 = vunpack.c.l.b16 %v1233
    %v1323 = vunpack.c.h.b16 %v1233
    %v1324 = vunpack.c.l.b16 %v1234
    %v1325 = vunpack.c.h.b16 %v1234
    %v1326 = vunpack.c.l.b16 %v1235
    %v1327 = vunpack.c.h.b16 %v1235
    %v1328 = vunpack.c.l.b16 %v1236
    %v1329 = vunpack.c.h.b16 %v1236
    %v1330 = vunpack.c.l.b16 %v1237
    %v1331 = vunpack.c.h.b16 %v1237
    %v1332 = vunpack.c.l.b16 %v1238
    %v1333 = vunpack.c.h.b16 %v1238
    %v1334 = vunpack.c.l.b16 %v1239
    %v1335 = vunpack.c.h.b16 %v1239
    %v1336 = vpack.c.b16 %v1276, %v1272
    %v1337 = vpack.c.b16 %v1277, %v1273
    %v1338 = vpack.c.b16 %v1278, %v1274
    %v1339 = vpack.c.b16 %v1279, %v1275
    %v1340 = vpack.c.b16 %v1284, %v1280
    %v1341 = vpack.c.b16 %v1285, %v1281
    %v1342 = vpack.c.b16 %v1286, %v1282
    %v1343 = vpack.c.b16 %v1287, %v1283
    %v1344 = vpack.c.b16 %v1292, %v1288
    %v1345 = vpack.c.b16 %v1293, %v1289
    %v1346 = vpack.c.b16 %v1294, %v1290
    %v1347 = vpack.c.b16 %v1295, %v1291
    %v1348 = vpack.c.b16 %v1300, %v1296
    %v1349 = vpack.c.b16 %v1301, %v1297
    %v1350 = vpack.c.b16 %v1302, %v1298
    %v1351 = vpack.c.b16 %v1303, %v1299
    %v1352 = vpack.c.b16 %v1308, %v1304
    %v1353 = vpack.c.b16 %v1309, %v1305
    %v1354 = vpack.c.b16 %v1310, %v1306
    %v1355 = vpack.c.b16 %v1311, %v1307
    %v1356 = vpack.c.b16 %v1316, %v1312
    %v1357 = vpack.c.b16 %v1317, %v1313
    %v1358 = vpack.c.b16 %v1318, %v1314
    %v1359 = vpack.c.b16 %v1319, %v1315
    %v1360 = vpack.c.b16 %v1324, %v1320
    %v1361 = vpack.c.b16 %v1325, %v1321
    %v1362 = vpack.c.b16 %v1326, %v1322
    %v1363 = vpack.c.b16 %v1327, %v1323
    %v1364 = vpack.c.b16 %v1332, %v1328
    %v1365 = vpack.c.b16 %v1333, %v1329
    %v1366 = vpack.c.b16 %v1334, %v1330
    %v1367 = vpack.c.b16 %v1335, %v1331
    %1400 = vmatpush.bf16.msra.mxu0 %v1364
    %1401 = vmatpush.bf16.msra.mxu0 %v1360
    %1402 = vmatpush.bf16.msra.mxu0 %v1356
    %1403 = vmatpush.bf16.msra.mxu0 %v1352
    %1404 = vmatpush.bf16.msra.mxu0 %v1348
    %1405 = vmatpush.bf16.msra.mxu0 %v1344
    %1406 = vmatpush.bf16.msra.mxu0 %v1340
    %1407 = vmatpush.bf16.msra.mxu0 %v1336
    %1408 = vmatmul.bf16.gmra.mxu0 %v1207
    %v1409 = vpop.f32.mrf.mxu0
    %v1410 = vadd.f32 0.0, %v1409
    %v1411 = vpop.f32.mrf.mxu0
    %1412 = vdwg.mxu0
    %1413 = vmatpush.bf16.msra.mxu0 %v1365
    %1414 = vmatpush.bf16.msra.mxu0 %v1361
    %1415 = vmatpush.bf16.msra.mxu0 %v1357
    %1416 = vmatpush.bf16.msra.mxu0 %v1353
    %1417 = vmatpush.bf16.msra.mxu0 %v1349
    %1418 = vmatpush.bf16.msra.mxu0 %v1345
    %1419 = vmatpush.bf16.msra.mxu0 %v1341
    %1420 = vmatpush.bf16.msra.mxu0 %v1337
    %1421 = vmatmul.bf16.gmra.mxu0 %v1207
    %v1422 = vpop.f32.mrf.mxu0
    %v1423 = vadd.f32 0.0, %v1422
    %v1424 = vpop.f32.mrf.mxu0
    %1425 = vdwg.mxu0
    %1426 = vmatpush.bf16.msra.mxu0 %v1366
    %1427 = vmatpush.bf16.msra.mxu0 %v1362
    %1428 = vmatpush.bf16.msra.mxu0 %v1358
    %1429 = vmatpush.bf16.msra.mxu0 %v1354
    %1430 = vmatpush.bf16.msra.mxu0 %v1350
    %1431 = vmatpush.bf16.msra.mxu0 %v1346
    %1432 = vmatpush.bf16.msra.mxu0 %v1342
    %1433 = vmatpush.bf16.msra.mxu0 %v1338
    %1434 = vmatmul.bf16.gmra.mxu0 %v1207
    %v1435 = vpop.f32.mrf.mxu0
    %v1436 = vadd.f32 0.0, %v1435
    %v1437 = vpop.f32.mrf.mxu0
    %1438 = vdwg.mxu0
    %1439 = vmatpush.bf16.msra.mxu0 %v1367
    %1440 = vmatpush.bf16.msra.mxu0 %v1363
    %1441 = vmatpush.bf16.msra.mxu0 %v1359
    %1442 = vmatpush.bf16.msra.mxu0 %v1355
    %1443 = vmatpush.bf16.msra.mxu0 %v1351
    %1444 = vmatpush.bf16.msra.mxu0 %v1347
    %1445 = vmatpush.bf16.msra.mxu0 %v1343
    %1446 = vmatpush.bf16.msra.mxu0 %v1339
    %1447 = vmatmul.bf16.gmra.mxu0 %v1207
    %v1448 = vpop.f32.mrf.mxu0
    %v1449 = vadd.f32 0.0, %v1448
    %v1450 = vpop.f32.mrf.mxu0
    %1451 = vdwg.mxu0
    %v1484 = vunpack.c.l.b16 %v1175
    %v1485 = vunpack.c.h.b16 %v1175
    %v1486 = vunpack.c.l.b16 %v1176
    %v1487 = vunpack.c.h.b16 %v1176
    %v1488 = vunpack.c.l.b16 %v1177
    %v1489 = vunpack.c.h.b16 %v1177
    %v1490 = vunpack.c.l.b16 %v1178
    %v1491 = vunpack.c.h.b16 %v1178
    %v1492 = vunpack.c.l.b16 %v1179
    %v1493 = vunpack.c.h.b16 %v1179
    %v1494 = vunpack.c.l.b16 %v1180
    %v1495 = vunpack.c.h.b16 %v1180
    %v1496 = vunpack.c.l.b16 %v1181
    %v1497 = vunpack.c.h.b16 %v1181
    %v1498 = vunpack.c.l.b16 %v1182
    %v1499 = vunpack.c.h.b16 %v1182
    %v1500 = vunpack.c.l.b16 %v1183
    %v1501 = vunpack.c.h.b16 %v1183
    %v1502 = vunpack.c.l.b16 %v1184
    %v1503 = vunpack.c.h.b16 %v1184
    %v1504 = vunpack.c.l.b16 %v1185
    %v1505 = vunpack.c.h.b16 %v1185
    %v1506 = vunpack.c.l.b16 %v1186
    %v1507 = vunpack.c.h.b16 %v1186
    %v1508 = vunpack.c.l.b16 %v1187
    %v1509 = vunpack.c.h.b16 %v1187
    %v1510 = vunpack.c.l.b16 %v1188
    %v1511 = vunpack.c.h.b16 %v1188
    %v1512 = vunpack.c.l.b16 %v1189
    %v1513 = vunpack.c.h.b16 %v1189
    %v1514 = vunpack.c.l.b16 %v1190
    %v1515 = vunpack.c.h.b16 %v1190
    %v1516 = vunpack.c.l.b16 %v1191
    %v1517 = vunpack.c.h.b16 %v1191
    %v1518 = vunpack.c.l.b16 %v1192
    %v1519 = vunpack.c.h.b16 %v1192
    %v1520 = vunpack.c.l.b16 %v1193
    %v1521 = vunpack.c.h.b16 %v1193
    %v1522 = vunpack.c.l.b16 %v1194
    %v1523 = vunpack.c.h.b16 %v1194
    %v1524 = vunpack.c.l.b16 %v1195
    %v1525 = vunpack.c.h.b16 %v1195
    %v1526 = vunpack.c.l.b16 %v1196
    %v1527 = vunpack.c.h.b16 %v1196
    %v1528 = vunpack.c.l.b16 %v1197
    %v1529 = vunpack.c.h.b16 %v1197
    %v1530 = vunpack.c.l.b16 %v1198
    %v1531 = vunpack.c.h.b16 %v1198
    %v1532 = vunpack.c.l.b16 %v1199
    %v1533 = vunpack.c.h.b16 %v1199
    %v1534 = vunpack.c.l.b16 %v1200
    %v1535 = vunpack.c.h.b16 %v1200
    %v1536 = vunpack.c.l.b16 %v1201
    %v1537 = vunpack.c.h.b16 %v1201
    %v1538 = vunpack.c.l.b16 %v1202
    %v1539 = vunpack.c.h.b16 %v1202
    %v1540 = vunpack.c.l.b16 %v1203
    %v1541 = vunpack.c.h.b16 %v1203
    %v1542 = vunpack.c.l.b16 %v1204
    %v1543 = vunpack.c.h.b16 %v1204
    %v1544 = vunpack.c.l.b16 %v1205
    %v1545 = vunpack.c.h.b16 %v1205
    %v1546 = vunpack.c.l.b16 %v1206
    %v1547 = vunpack.c.h.b16 %v1206
    %v1548 = vpack.c.b16 %v1488, %v1484
    %v1549 = vpack.c.b16 %v1489, %v1485
    %v1550 = vpack.c.b16 %v1490, %v1486
    %v1551 = vpack.c.b16 %v1491, %v1487
    %v1552 = vpack.c.b16 %v1496, %v1492
    %v1553 = vpack.c.b16 %v1497, %v1493
    %v1554 = vpack.c.b16 %v1498, %v1494
    %v1555 = vpack.c.b16 %v1499, %v1495
    %v1556 = vpack.c.b16 %v1504, %v1500
    %v1557 = vpack.c.b16 %v1505, %v1501
    %v1558 = vpack.c.b16 %v1506, %v1502
    %v1559 = vpack.c.b16 %v1507, %v1503
    %v1560 = vpack.c.b16 %v1512, %v1508
    %v1561 = vpack.c.b16 %v1513, %v1509
    %v1562 = vpack.c.b16 %v1514, %v1510
    %v1563 = vpack.c.b16 %v1515, %v1511
    %v1564 = vpack.c.b16 %v1520, %v1516
    %v1565 = vpack.c.b16 %v1521, %v1517
    %v1566 = vpack.c.b16 %v1522, %v1518
    %v1567 = vpack.c.b16 %v1523, %v1519
    %v1568 = vpack.c.b16 %v1528, %v1524
    %v1569 = vpack.c.b16 %v1529, %v1525
    %v1570 = vpack.c.b16 %v1530, %v1526
    %v1571 = vpack.c.b16 %v1531, %v1527
    %v1572 = vpack.c.b16 %v1536, %v1532
    %v1573 = vpack.c.b16 %v1537, %v1533
    %v1574 = vpack.c.b16 %v1538, %v1534
    %v1575 = vpack.c.b16 %v1539, %v1535
    %v1576 = vpack.c.b16 %v1544, %v1540
    %v1577 = vpack.c.b16 %v1545, %v1541
    %v1578 = vpack.c.b16 %v1546, %v1542
    %v1579 = vpack.c.b16 %v1547, %v1543
    %1612 = vmatpush.bf16.msra.mxu0 %v1576
    %1613 = vmatpush.bf16.msra.mxu0 %v1572
    %1614 = vmatpush.bf16.msra.mxu0 %v1568
    %1615 = vmatpush.bf16.msra.mxu0 %v1564
    %1616 = vmatpush.bf16.msra.mxu0 %v1560
    %1617 = vmatpush.bf16.msra.mxu0 %v1556
    %1618 = vmatpush.bf16.msra.mxu0 %v1552
    %1619 = vmatpush.bf16.msra.mxu0 %v1548
    %1620 = vmatmul.bf16.gmra.mxu0 %v1174
    %v1621 = vpop.f32.mrf.mxu0
    %v1622 = vadd.f32 %v1410, %v1621
    %v1623 = vpop.f32.mrf.mxu0
    %1624 = vdwg.mxu0
    %1625 = vmatpush.bf16.msra.mxu0 %v1577
    %1626 = vmatpush.bf16.msra.mxu0 %v1573
    %1627 = vmatpush.bf16.msra.mxu0 %v1569
    %1628 = vmatpush.bf16.msra.mxu0 %v1565
    %1629 = vmatpush.bf16.msra.mxu0 %v1561
    %1630 = vmatpush.bf16.msra.mxu0 %v1557
    %1631 = vmatpush.bf16.msra.mxu0 %v1553
    %1632 = vmatpush.bf16.msra.mxu0 %v1549
    %1633 = vmatmul.bf16.gmra.mxu0 %v1174
    %v1634 = vpop.f32.mrf.mxu0
    %v1635 = vadd.f32 %v1423, %v1634
    %v1636 = vpop.f32.mrf.mxu0
    %1637 = vdwg.mxu0
    %1638 = vmatpush.bf16.msra.mxu0 %v1578
    %1639 = vmatpush.bf16.msra.mxu0 %v1574
    %1640 = vmatpush.bf16.msra.mxu0 %v1570
    %1641 = vmatpush.bf16.msra.mxu0 %v1566
    %1642 = vmatpush.bf16.msra.mxu0 %v1562
    %1643 = vmatpush.bf16.msra.mxu0 %v1558
    %1644 = vmatpush.bf16.msra.mxu0 %v1554
    %1645 = vmatpush.bf16.msra.mxu0 %v1550
    %1646 = vmatmul.bf16.gmra.mxu0 %v1174
    %v1647 = vpop.f32.mrf.mxu0
    %v1648 = vadd.f32 %v1436, %v1647
    %v1649 = vpop.f32.mrf.mxu0
    %1650 = vdwg.mxu0
    %1651 = vmatpush.bf16.msra.mxu0 %v1579
    %1652 = vmatpush.bf16.msra.mxu0 %v1575
    %1653 = vmatpush.bf16.msra.mxu0 %v1571
    %1654 = vmatpush.bf16.msra.mxu0 %v1567
    %1655 = vmatpush.bf16.msra.mxu0 %v1563
    %1656 = vmatpush.bf16.msra.mxu0 %v1559
    %1657 = vmatpush.bf16.msra.mxu0 %v1555
    %1658 = vmatpush.bf16.msra.mxu0 %v1551
    %1659 = vmatmul.bf16.gmra.mxu0 %v1174
    %v1660 = vpop.f32.mrf.mxu0
    %v1661 = vadd.f32 %v1449, %v1660
    %v1662 = vpop.f32.mrf.mxu0
    %1663 = vdwg.mxu0
    %v1664 = vadd.f32 %v1622, %v630
    %v1665 = vadd.f32 %v1635, %v631
    %v1666 = vadd.f32 %v1648, %v632
    %v1667 = vadd.f32 %v1661, %v633
    %v1668 = vmul.f32 %v1664, 0.5
    %v1669 = vtanh.pop %v1668
    %v1670 = vmul.f32 %v1669, 0.5
    %v1671 = vadd.f32 %v1670, 0.5
    %v1672 = vmul.f32 %v1665, 0.5
    %v1673 = vtanh.pop %v1672
    %v1674 = vmul.f32 %v1673, 0.5
    %v1675 = vadd.f32 %v1674, 0.5
    %v1676 = vtanh.pop %v1666
    %v1677 = vmul.f32 %v1667, 0.5
    %v1678 = vtanh.pop %v1677
    %v1679 = vmul.f32 %v1678, 0.5
    %v1680 = vadd.f32 %v1679, 0.5
    %v1681 = vmul.f32 %v1675, %v1170
    %v1682 = vmul.f32 %v1671, %v1676
    %v1683 = vadd.f32 %v1681, %v1682
    %v1684 = vtanh.pop %v1683
    %v1685 = vmul.f32 %v1680, %v1684
    %1686 = vst [vmem:[#allocation2 + $0x3] sm:$0x1] %v1683
    %v1687 = vpack.c.bf16 %v1683, %v1683
    %v1688 = vld [vmem:[#allocation10] sm:$0xff]
    %v1689 = vld [vmem:[#allocation10 + $0x8] sm:$0xff]
    %v1690 = vld [vmem:[#allocation10 + $0x10] sm:$0xff]
    %v1691 = vld [vmem:[#allocation10 + $0x18] sm:$0xff]
    %v1692 = vld [vmem:[#allocation10 + $0x20] sm:$0xff]
    %v1693 = vld [vmem:[#allocation10 + $0x28] sm:$0xff]
    %v1694 = vld [vmem:[#allocation10 + $0x30] sm:$0xff]
    %v1695 = vld [vmem:[#allocation10 + $0x38] sm:$0xff]
    %v1696 = vld [vmem:[#allocation10 + $0x40] sm:$0xff]
    %v1697 = vld [vmem:[#allocation10 + $0x48] sm:$0xff]
    %v1698 = vld [vmem:[#allocation10 + $0x50] sm:$0xff]
    %v1699 = vld [vmem:[#allocation10 + $0x58] sm:$0xff]
    %v1700 = vld [vmem:[#allocation10 + $0x60] sm:$0xff]
    %v1701 = vld [vmem:[#allocation10 + $0x68] sm:$0xff]
    %v1702 = vld [vmem:[#allocation10 + $0x70] sm:$0xff]
    %v1703 = vld [vmem:[#allocation10 + $0x78] sm:$0xff]
    %v1704 = vld [vmem:[#allocation10 + $0x80] sm:$0xff]
    %v1705 = vld [vmem:[#allocation10 + $0x88] sm:$0xff]
    %v1706 = vld [vmem:[#allocation10 + $0x90] sm:$0xff]
    %v1707 = vld [vmem:[#allocation10 + $0x98] sm:$0xff]
    %v1708 = vld [vmem:[#allocation10 + $0xa0] sm:$0xff]
    %v1709 = vld [vmem:[#allocation10 + $0xa8] sm:$0xff]
    %v1710 = vld [vmem:[#allocation10 + $0xb0] sm:$0xff]
    %v1711 = vld [vmem:[#allocation10 + $0xb8] sm:$0xff]
    %v1712 = vld [vmem:[#allocation10 + $0xc0] sm:$0xff]
    %v1713 = vld [vmem:[#allocation10 + $0xc8] sm:$0xff]
    %v1714 = vld [vmem:[#allocation10 + $0xd0] sm:$0xff]
    %v1715 = vld [vmem:[#allocation10 + $0xd8] sm:$0xff]
    %v1716 = vld [vmem:[#allocation10 + $0xe0] sm:$0xff]
    %v1717 = vld [vmem:[#allocation10 + $0xe8] sm:$0xff]
    %v1718 = vld [vmem:[#allocation10 + $0xf0] sm:$0xff]
    %v1719 = vld [vmem:[#allocation10 + $0xf8] sm:$0xff]
    %v1720 = vpack.c.bf16 %v1685, %v1685
    %v1721 = vld [vmem:[#allocation12] sm:$0xff]
    %v1722 = vld [vmem:[#allocation12 + $0x8] sm:$0xff]
    %v1723 = vld [vmem:[#allocation12 + $0x10] sm:$0xff]
    %v1724 = vld [vmem:[#allocation12 + $0x18] sm:$0xff]
    %v1725 = vld [vmem:[#allocation12 + $0x20] sm:$0xff]
    %v1726 = vld [vmem:[#allocation12 + $0x28] sm:$0xff]
    %v1727 = vld [vmem:[#allocation12 + $0x30] sm:$0xff]
    %v1728 = vld [vmem:[#allocation12 + $0x38] sm:$0xff]
    %v1729 = vld [vmem:[#allocation12 + $0x40] sm:$0xff]
    %v1730 = vld [vmem:[#allocation12 + $0x48] sm:$0xff]
    %v1731 = vld [vmem:[#allocation12 + $0x50] sm:$0xff]
    %v1732 = vld [vmem:[#allocation12 + $0x58] sm:$0xff]
    %v1733 = vld [vmem:[#allocation12 + $0x60] sm:$0xff]
    %v1734 = vld [vmem:[#allocation12 + $0x68] sm:$0xff]
    %v1735 = vld [vmem:[#allocation12 + $0x70] sm:$0xff]
    %v1736 = vld [vmem:[#allocation12 + $0x78] sm:$0xff]
    %v1737 = vld [vmem:[#allocation12 + $0x80] sm:$0xff]
    %v1738 = vld [vmem:[#allocation12 + $0x88] sm:$0xff]
    %v1739 = vld [vmem:[#allocation12 + $0x90] sm:$0xff]
    %v1740 = vld [vmem:[#allocation12 + $0x98] sm:$0xff]
    %v1741 = vld [vmem:[#allocation12 + $0xa0] sm:$0xff]
    %v1742 = vld [vmem:[#allocation12 + $0xa8] sm:$0xff]
    %v1743 = vld [vmem:[#allocation12 + $0xb0] sm:$0xff]
    %v1744 = vld [vmem:[#allocation12 + $0xb8] sm:$0xff]
    %v1745 = vld [vmem:[#allocation12 + $0xc0] sm:$0xff]
    %v1746 = vld [vmem:[#allocation12 + $0xc8] sm:$0xff]
    %v1747 = vld [vmem:[#allocation12 + $0xd0] sm:$0xff]
    %v1748 = vld [vmem:[#allocation12 + $0xd8] sm:$0xff]
    %v1749 = vld [vmem:[#allocation12 + $0xe0] sm:$0xff]
    %v1750 = vld [vmem:[#allocation12 + $0xe8] sm:$0xff]
    %v1751 = vld [vmem:[#allocation12 + $0xf0] sm:$0xff]
    %v1752 = vld [vmem:[#allocation12 + $0xf8] sm:$0xff]
    %v1785 = vunpack.c.l.b16 %v1721
    %v1786 = vunpack.c.h.b16 %v1721
    %v1787 = vunpack.c.l.b16 %v1722
    %v1788 = vunpack.c.h.b16 %v1722
    %v1789 = vunpack.c.l.b16 %v1723
    %v1790 = vunpack.c.h.b16 %v1723
    %v1791 = vunpack.c.l.b16 %v1724
    %v1792 = vunpack.c.h.b16 %v1724
    %v1793 = vunpack.c.l.b16 %v1725
    %v1794 = vunpack.c.h.b16 %v1725
    %v1795 = vunpack.c.l.b16 %v1726
    %v1796 = vunpack.c.h.b16 %v1726
    %v1797 = vunpack.c.l.b16 %v1727
    %v1798 = vunpack.c.h.b16 %v1727
    %v1799 = vunpack.c.l.b16 %v1728
    %v1800 = vunpack.c.h.b16 %v1728
    %v1801 = vunpack.c.l.b16 %v1729
    %v1802 = vunpack.c.h.b16 %v1729
    %v1803 = vunpack.c.l.b16 %v1730
    %v1804 = vunpack.c.h.b16 %v1730
    %v1805 = vunpack.c.l.b16 %v1731
    %v1806 = vunpack.c.h.b16 %v1731
    %v1807 = vunpack.c.l.b16 %v1732
    %v1808 = vunpack.c.h.b16 %v1732
    %v1809 = vunpack.c.l.b16 %v1733
    %v1810 = vunpack.c.h.b16 %v1733
    %v1811 = vunpack.c.l.b16 %v1734
    %v1812 = vunpack.c.h.b16 %v1734
    %v1813 = vunpack.c.l.b16 %v1735
    %v1814 = vunpack.c.h.b16 %v1735
    %v1815 = vunpack.c.l.b16 %v1736
    %v1816 = vunpack.c.h.b16 %v1736
    %v1817 = vunpack.c.l.b16 %v1737
    %v1818 = vunpack.c.h.b16 %v1737
    %v1819 = vunpack.c.l.b16 %v1738
    %v1820 = vunpack.c.h.b16 %v1738
    %v1821 = vunpack.c.l.b16 %v1739
    %v1822 = vunpack.c.h.b16 %v1739
    %v1823 = vunpack.c.l.b16 %v1740
    %v1824 = vunpack.c.h.b16 %v1740
    %v1825 = vunpack.c.l.b16 %v1741
    %v1826 = vunpack.c.h.b16 %v1741
    %v1827 = vunpack.c.l.b16 %v1742
    %v1828 = vunpack.c.h.b16 %v1742
    %v1829 = vunpack.c.l.b16 %v1743
    %v1830 = vunpack.c.h.b16 %v1743
    %v1831 = vunpack.c.l.b16 %v1744
    %v1832 = vunpack.c.h.b16 %v1744
    %v1833 = vunpack.c.l.b16 %v1745
    %v1834 = vunpack.c.h.b16 %v1745
    %v1835 = vunpack.c.l.b16 %v1746
    %v1836 = vunpack.c.h.b16 %v1746
    %v1837 = vunpack.c.l.b16 %v1747
    %v1838 = vunpack.c.h.b16 %v1747
    %v1839 = vunpack.c.l.b16 %v1748
    %v1840 = vunpack.c.h.b16 %v1748
    %v1841 = vunpack.c.l.b16 %v1749
    %v1842 = vunpack.c.h.b16 %v1749
    %v1843 = vunpack.c.l.b16 %v1750
    %v1844 = vunpack.c.h.b16 %v1750
    %v1845 = vunpack.c.l.b16 %v1751
    %v1846 = vunpack.c.h.b16 %v1751
    %v1847 = vunpack.c.l.b16 %v1752
    %v1848 = vunpack.c.h.b16 %v1752
    %v1849 = vpack.c.b16 %v1789, %v1785
    %v1850 = vpack.c.b16 %v1790, %v1786
    %v1851 = vpack.c.b16 %v1791, %v1787
    %v1852 = vpack.c.b16 %v1792, %v1788
    %v1853 = vpack.c.b16 %v1797, %v1793
    %v1854 = vpack.c.b16 %v1798, %v1794
    %v1855 = vpack.c.b16 %v1799, %v1795
    %v1856 = vpack.c.b16 %v1800, %v1796
    %v1857 = vpack.c.b16 %v1805, %v1801
    %v1858 = vpack.c.b16 %v1806, %v1802
    %v1859 = vpack.c.b16 %v1807, %v1803
    %v1860 = vpack.c.b16 %v1808, %v1804
    %v1861 = vpack.c.b16 %v1813, %v1809
    %v1862 = vpack.c.b16 %v1814, %v1810
    %v1863 = vpack.c.b16 %v1815, %v1811
    %v1864 = vpack.c.b16 %v1816, %v1812
    %v1865 = vpack.c.b16 %v1821, %v1817
    %v1866 = vpack.c.b16 %v1822, %v1818
    %v1867 = vpack.c.b16 %v1823, %v1819
    %v1868 = vpack.c.b16 %v1824, %v1820
    %v1869 = vpack.c.b16 %v1829, %v1825
    %v1870 = vpack.c.b16 %v1830, %v1826
    %v1871 = vpack.c.b16 %v1831, %v1827
    %v1872 = vpack.c.b16 %v1832, %v1828
    %v1873 = vpack.c.b16 %v1837, %v1833
    %v1874 = vpack.c.b16 %v1838, %v1834
    %v1875 = vpack.c.b16 %v1839, %v1835
    %v1876 = vpack.c.b16 %v1840, %v1836
    %v1877 = vpack.c.b16 %v1845, %v1841
    %v1878 = vpack.c.b16 %v1846, %v1842
    %v1879 = vpack.c.b16 %v1847, %v1843
    %v1880 = vpack.c.b16 %v1848, %v1844
    %1913 = vmatpush.bf16.msra.mxu0 %v1877
    %1914 = vmatpush.bf16.msra.mxu0 %v1873
    %1915 = vmatpush.bf16.msra.mxu0 %v1869
    %1916 = vmatpush.bf16.msra.mxu0 %v1865
    %1917 = vmatpush.bf16.msra.mxu0 %v1861
    %1918 = vmatpush.bf16.msra.mxu0 %v1857
    %1919 = vmatpush.bf16.msra.mxu0 %v1853
    %1920 = vmatpush.bf16.msra.mxu0 %v1849
    %1921 = vmatmul.bf16.gmra.mxu0 %v1720
    %v1922 = vpop.f32.mrf.mxu0
    %v1923 = vadd.f32 0.0, %v1922
    %v1924 = vpop.f32.mrf.mxu0
    %1925 = vdwg.mxu0
    %1926 = vmatpush.bf16.msra.mxu0 %v1878
    %1927 = vmatpush.bf16.msra.mxu0 %v1874
    %1928 = vmatpush.bf16.msra.mxu0 %v1870
    %1929 = vmatpush.bf16.msra.mxu0 %v1866
    %1930 = vmatpush.bf16.msra.mxu0 %v1862
    %1931 = vmatpush.bf16.msra.mxu0 %v1858
    %1932 = vmatpush.bf16.msra.mxu0 %v1854
    %1933 = vmatpush.bf16.msra.mxu0 %v1850
    %1934 = vmatmul.bf16.gmra.mxu0 %v1720
    %v1935 = vpop.f32.mrf.mxu0
    %v1936 = vadd.f32 0.0, %v1935
    %v1937 = vpop.f32.mrf.mxu0
    %1938 = vdwg.mxu0
    %1939 = vmatpush.bf16.msra.mxu0 %v1879
    %1940 = vmatpush.bf16.msra.mxu0 %v1875
    %1941 = vmatpush.bf16.msra.mxu0 %v1871
    %1942 = vmatpush.bf16.msra.mxu0 %v1867
    %1943 = vmatpush.bf16.msra.mxu0 %v1863
    %1944 = vmatpush.bf16.msra.mxu0 %v1859
    %1945 = vmatpush.bf16.msra.mxu0 %v1855
    %1946 = vmatpush.bf16.msra.mxu0 %v1851
    %1947 = vmatmul.bf16.gmra.mxu0 %v1720
    %v1948 = vpop.f32.mrf.mxu0
    %v1949 = vadd.f32 0.0, %v1948
    %v1950 = vpop.f32.mrf.mxu0
    %1951 = vdwg.mxu0
    %1952 = vmatpush.bf16.msra.mxu0 %v1880
    %1953 = vmatpush.bf16.msra.mxu0 %v1876
    %1954 = vmatpush.bf16.msra.mxu0 %v1872
    %1955 = vmatpush.bf16.msra.mxu0 %v1868
    %1956 = vmatpush.bf16.msra.mxu0 %v1864
    %1957 = vmatpush.bf16.msra.mxu0 %v1860
    %1958 = vmatpush.bf16.msra.mxu0 %v1856
    %1959 = vmatpush.bf16.msra.mxu0 %v1852
    %1960 = vmatmul.bf16.gmra.mxu0 %v1720
    %v1961 = vpop.f32.mrf.mxu0
    %v1962 = vadd.f32 0.0, %v1961
    %v1963 = vpop.f32.mrf.mxu0
    %1964 = vdwg.mxu0
    %v1997 = vunpack.c.l.b16 %v1688
    %v1998 = vunpack.c.h.b16 %v1688
    %v1999 = vunpack.c.l.b16 %v1689
    %v2000 = vunpack.c.h.b16 %v1689
    %v2001 = vunpack.c.l.b16 %v1690
    %v2002 = vunpack.c.h.b16 %v1690
    %v2003 = vunpack.c.l.b16 %v1691
    %v2004 = vunpack.c.h.b16 %v1691
    %v2005 = vunpack.c.l.b16 %v1692
    %v2006 = vunpack.c.h.b16 %v1692
    %v2007 = vunpack.c.l.b16 %v1693
    %v2008 = vunpack.c.h.b16 %v1693
    %v2009 = vunpack.c.l.b16 %v1694
    %v2010 = vunpack.c.h.b16 %v1694
    %v2011 = vunpack.c.l.b16 %v1695
    %v2012 = vunpack.c.h.b16 %v1695
    %v2013 = vunpack.c.l.b16 %v1696
    %v2014 = vunpack.c.h.b16 %v1696
    %v2015 = vunpack.c.l.b16 %v1697
    %v2016 = vunpack.c.h.b16 %v1697
    %v2017 = vunpack.c.l.b16 %v1698
    %v2018 = vunpack.c.h.b16 %v1698
    %v2019 = vunpack.c.l.b16 %v1699
    %v2020 = vunpack.c.h.b16 %v1699
    %v2021 = vunpack.c.l.b16 %v1700
    %v2022 = vunpack.c.h.b16 %v1700
    %v2023 = vunpack.c.l.b16 %v1701
    %v2024 = vunpack.c.h.b16 %v1701
    %v2025 = vunpack.c.l.b16 %v1702
    %v2026 = vunpack.c.h.b16 %v1702
    %v2027 = vunpack.c.l.b16 %v1703
    %v2028 = vunpack.c.h.b16 %v1703
    %v2029 = vunpack.c.l.b16 %v1704
    %v2030 = vunpack.c.h.b16 %v1704
    %v2031 = vunpack.c.l.b16 %v1705
    %v2032 = vunpack.c.h.b16 %v1705
    %v2033 = vunpack.c.l.b16 %v1706
    %v2034 = vunpack.c.h.b16 %v1706
    %v2035 = vunpack.c.l.b16 %v1707
    %v2036 = vunpack.c.h.b16 %v1707
    %v2037 = vunpack.c.l.b16 %v1708
    %v2038 = vunpack.c.h.b16 %v1708
    %v2039 = vunpack.c.l.b16 %v1709
    %v2040 = vunpack.c.h.b16 %v1709
    %v2041 = vunpack.c.l.b16 %v1710
    %v2042 = vunpack.c.h.b16 %v1710
    %v2043 = vunpack.c.l.b16 %v1711
    %v2044 = vunpack.c.h.b16 %v1711
    %v2045 = vunpack.c.l.b16 %v1712
    %v2046 = vunpack.c.h.b16 %v1712
    %v2047 = vunpack.c.l.b16 %v1713
    %v2048 = vunpack.c.h.b16 %v1713
    %v2049 = vunpack.c.l.b16 %v1714
    %v2050 = vunpack.c.h.b16 %v1714
    %v2051 = vunpack.c.l.b16 %v1715
    %v2052 = vunpack.c.h.b16 %v1715
    %v2053 = vunpack.c.l.b16 %v1716
    %v2054 = vunpack.c.h.b16 %v1716
    %v2055 = vunpack.c.l.b16 %v1717
    %v2056 = vunpack.c.h.b16 %v1717
    %v2057 = vunpack.c.l.b16 %v1718
    %v2058 = vunpack.c.h.b16 %v1718
    %v2059 = vunpack.c.l.b16 %v1719
    %v2060 = vunpack.c.h.b16 %v1719
    %v2061 = vpack.c.b16 %v2001, %v1997
    %v2062 = vpack.c.b16 %v2002, %v1998
    %v2063 = vpack.c.b16 %v2003, %v1999
    %v2064 = vpack.c.b16 %v2004, %v2000
    %v2065 = vpack.c.b16 %v2009, %v2005
    %v2066 = vpack.c.b16 %v2010, %v2006
    %v2067 = vpack.c.b16 %v2011, %v2007
    %v2068 = vpack.c.b16 %v2012, %v2008
    %v2069 = vpack.c.b16 %v2017, %v2013
    %v2070 = vpack.c.b16 %v2018, %v2014
    %v2071 = vpack.c.b16 %v2019, %v2015
    %v2072 = vpack.c.b16 %v2020, %v2016
    %v2073 = vpack.c.b16 %v2025, %v2021
    %v2074 = vpack.c.b16 %v2026, %v2022
    %v2075 = vpack.c.b16 %v2027, %v2023
    %v2076 = vpack.c.b16 %v2028, %v2024
    %v2077 = vpack.c.b16 %v2033, %v2029
    %v2078 = vpack.c.b16 %v2034, %v2030
    %v2079 = vpack.c.b16 %v2035, %v2031
    %v2080 = vpack.c.b16 %v2036, %v2032
    %v2081 = vpack.c.b16 %v2041, %v2037
    %v2082 = vpack.c.b16 %v2042, %v2038
    %v2083 = vpack.c.b16 %v2043, %v2039
    %v2084 = vpack.c.b16 %v2044, %v2040
    %v2085 = vpack.c.b16 %v2049, %v2045
    %v2086 = vpack.c.b16 %v2050, %v2046
    %v2087 = vpack.c.b16 %v2051, %v2047
    %v2088 = vpack.c.b16 %v2052, %v2048
    %v2089 = vpack.c.b16 %v2057, %v2053
    %v2090 = vpack.c.b16 %v2058, %v2054
    %v2091 = vpack.c.b16 %v2059, %v2055
    %v2092 = vpack.c.b16 %v2060, %v2056
    %2125 = vmatpush.bf16.msra.mxu0 %v2089
    %2126 = vmatpush.bf16.msra.mxu0 %v2085
    %2127 = vmatpush.bf16.msra.mxu0 %v2081
    %2128 = vmatpush.bf16.msra.mxu0 %v2077
    %2129 = vmatpush.bf16.msra.mxu0 %v2073
    %2130 = vmatpush.bf16.msra.mxu0 %v2069
    %2131 = vmatpush.bf16.msra.mxu0 %v2065
    %2132 = vmatpush.bf16.msra.mxu0 %v2061
    %2133 = vmatmul.bf16.gmra.mxu0 %v1687
    %v2134 = vpop.f32.mrf.mxu0
    %v2135 = vadd.f32 %v1923, %v2134
    %v2136 = vpop.f32.mrf.mxu0
    %2137 = vdwg.mxu0
    %2138 = vmatpush.bf16.msra.mxu0 %v2090
    %2139 = vmatpush.bf16.msra.mxu0 %v2086
    %2140 = vmatpush.bf16.msra.mxu0 %v2082
    %2141 = vmatpush.bf16.msra.mxu0 %v2078
    %2142 = vmatpush.bf16.msra.mxu0 %v2074
    %2143 = vmatpush.bf16.msra.mxu0 %v2070
    %2144 = vmatpush.bf16.msra.mxu0 %v2066
    %2145 = vmatpush.bf16.msra.mxu0 %v2062
    %2146 = vmatmul.bf16.gmra.mxu0 %v1687
    %v2147 = vpop.f32.mrf.mxu0
    %v2148 = vadd.f32 %v1936, %v2147
    %v2149 = vpop.f32.mrf.mxu0
    %2150 = vdwg.mxu0
    %2151 = vmatpush.bf16.msra.mxu0 %v2091
    %2152 = vmatpush.bf16.msra.mxu0 %v2087
    %2153 = vmatpush.bf16.msra.mxu0 %v2083
    %2154 = vmatpush.bf16.msra.mxu0 %v2079
    %2155 = vmatpush.bf16.msra.mxu0 %v2075
    %2156 = vmatpush.bf16.msra.mxu0 %v2071
    %2157 = vmatpush.bf16.msra.mxu0 %v2067
    %2158 = vmatpush.bf16.msra.mxu0 %v2063
    %2159 = vmatmul.bf16.gmra.mxu0 %v1687
    %v2160 = vpop.f32.mrf.mxu0
    %v2161 = vadd.f32 %v1949, %v2160
    %v2162 = vpop.f32.mrf.mxu0
    %2163 = vdwg.mxu0
    %2164 = vmatpush.bf16.msra.mxu0 %v2092
    %2165 = vmatpush.bf16.msra.mxu0 %v2088
    %2166 = vmatpush.bf16.msra.mxu0 %v2084
    %2167 = vmatpush.bf16.msra.mxu0 %v2080
    %2168 = vmatpush.bf16.msra.mxu0 %v2076
    %2169 = vmatpush.bf16.msra.mxu0 %v2072
    %2170 = vmatpush.bf16.msra.mxu0 %v2068
    %2171 = vmatpush.bf16.msra.mxu0 %v2064
    %2172 = vmatmul.bf16.gmra.mxu0 %v1687
    %v2173 = vpop.f32.mrf.mxu0
    %v2174 = vadd.f32 %v1962, %v2173
    %v2175 = vpop.f32.mrf.mxu0
    %2176 = vdwg.mxu0
    %v2177 = vadd.f32 %v2135, %v630
    %v2178 = vadd.f32 %v2148, %v631
    %v2179 = vadd.f32 %v2161, %v632
    %v2180 = vadd.f32 %v2174, %v633
    %v2181 = vmul.f32 %v2177, 0.5
    %v2182 = vtanh.pop %v2181
    %v2183 = vmul.f32 %v2182, 0.5
    %v2184 = vadd.f32 %v2183, 0.5
    %v2185 = vmul.f32 %v2178, 0.5
    %v2186 = vtanh.pop %v2185
    %v2187 = vmul.f32 %v2186, 0.5
    %v2188 = vadd.f32 %v2187, 0.5
    %v2189 = vtanh.pop %v2179
    %v2190 = vmul.f32 %v2180, 0.5
    %v2191 = vtanh.pop %v2190
    %v2192 = vmul.f32 %v2191, 0.5
    %v2193 = vadd.f32 %v2192, 0.5
    %v2194 = vmul.f32 %v2188, %v1683
    %v2195 = vmul.f32 %v2184, %v2189
    %v2196 = vadd.f32 %v2194, %v2195
    %v2197 = vtanh.pop %v2196
    %v2198 = vmul.f32 %v2193, %v2197
    %2199 = vst [vmem:[#allocation2 + $0x4] sm:$0x1] %v2196
    %v2200 = vpack.c.bf16 %v2196, %v2196
    %v2201 = vld [vmem:[#allocation10] sm:$0xff]
    %v2202 = vld [vmem:[#allocation10 + $0x8] sm:$0xff]
    %v2203 = vld [vmem:[#allocation10 + $0x10] sm:$0xff]
    %v2204 = vld [vmem:[#allocation10 + $0x18] sm:$0xff]
    %v2205 = vld [vmem:[#allocation10 + $0x20] sm:$0xff]
    %v2206 = vld [vmem:[#allocation10 + $0x28] sm:$0xff]
    %v2207 = vld [vmem:[#allocation10 + $0x30] sm:$0xff]
    %v2208 = vld [vmem:[#allocation10 + $0x38] sm:$0xff]
    %v2209 = vld [vmem:[#allocation10 + $0x40] sm:$0xff]
    %v2210 = vld [vmem:[#allocation10 + $0x48] sm:$0xff]
    %v2211 = vld [vmem:[#allocation10 + $0x50] sm:$0xff]
    %v2212 = vld [vmem:[#allocation10 + $0x58] sm:$0xff]
    %v2213 = vld [vmem:[#allocation10 + $0x60] sm:$0xff]
    %v2214 = vld [vmem:[#allocation10 + $0x68] sm:$0xff]
    %v2215 = vld [vmem:[#allocation10 + $0x70] sm:$0xff]
    %v2216 = vld [vmem:[#allocation10 + $0x78] sm:$0xff]
    %v2217 = vld [vmem:[#allocation10 + $0x80] sm:$0xff]
    %v2218 = vld [vmem:[#allocation10 + $0x88] sm:$0xff]
    %v2219 = vld [vmem:[#allocation10 + $0x90] sm:$0xff]
    %v2220 = vld [vmem:[#allocation10 + $0x98] sm:$0xff]
    %v2221 = vld [vmem:[#allocation10 + $0xa0] sm:$0xff]
    %v2222 = vld [vmem:[#allocation10 + $0xa8] sm:$0xff]
    %v2223 = vld [vmem:[#allocation10 + $0xb0] sm:$0xff]
    %v2224 = vld [vmem:[#allocation10 + $0xb8] sm:$0xff]
    %v2225 = vld [vmem:[#allocation10 + $0xc0] sm:$0xff]
    %v2226 = vld [vmem:[#allocation10 + $0xc8] sm:$0xff]
    %v2227 = vld [vmem:[#allocation10 + $0xd0] sm:$0xff]
    %v2228 = vld [vmem:[#allocation10 + $0xd8] sm:$0xff]
    %v2229 = vld [vmem:[#allocation10 + $0xe0] sm:$0xff]
    %v2230 = vld [vmem:[#allocation10 + $0xe8] sm:$0xff]
    %v2231 = vld [vmem:[#allocation10 + $0xf0] sm:$0xff]
    %v2232 = vld [vmem:[#allocation10 + $0xf8] sm:$0xff]
    %v2233 = vpack.c.bf16 %v2198, %v2198
    %v2234 = vld [vmem:[#allocation12] sm:$0xff]
    %v2235 = vld [vmem:[#allocation12 + $0x8] sm:$0xff]
    %v2236 = vld [vmem:[#allocation12 + $0x10] sm:$0xff]
    %v2237 = vld [vmem:[#allocation12 + $0x18] sm:$0xff]
    %v2238 = vld [vmem:[#allocation12 + $0x20] sm:$0xff]
    %v2239 = vld [vmem:[#allocation12 + $0x28] sm:$0xff]
    %v2240 = vld [vmem:[#allocation12 + $0x30] sm:$0xff]
    %v2241 = vld [vmem:[#allocation12 + $0x38] sm:$0xff]
    %v2242 = vld [vmem:[#allocation12 + $0x40] sm:$0xff]
    %v2243 = vld [vmem:[#allocation12 + $0x48] sm:$0xff]
    %v2244 = vld [vmem:[#allocation12 + $0x50] sm:$0xff]
    %v2245 = vld [vmem:[#allocation12 + $0x58] sm:$0xff]
    %v2246 = vld [vmem:[#allocation12 + $0x60] sm:$0xff]
    %v2247 = vld [vmem:[#allocation12 + $0x68] sm:$0xff]
    %v2248 = vld [vmem:[#allocation12 + $0x70] sm:$0xff]
    %v2249 = vld [vmem:[#allocation12 + $0x78] sm:$0xff]
    %v2250 = vld [vmem:[#allocation12 + $0x80] sm:$0xff]
    %v2251 = vld [vmem:[#allocation12 + $0x88] sm:$0xff]
    %v2252 = vld [vmem:[#allocation12 + $0x90] sm:$0xff]
    %v2253 = vld [vmem:[#allocation12 + $0x98] sm:$0xff]
    %v2254 = vld [vmem:[#allocation12 + $0xa0] sm:$0xff]
    %v2255 = vld [vmem:[#allocation12 + $0xa8] sm:$0xff]
    %v2256 = vld [vmem:[#allocation12 + $0xb0] sm:$0xff]
    %v2257 = vld [vmem:[#allocation12 + $0xb8] sm:$0xff]
    %v2258 = vld [vmem:[#allocation12 + $0xc0] sm:$0xff]
    %v2259 = vld [vmem:[#allocation12 + $0xc8] sm:$0xff]
    %v2260 = vld [vmem:[#allocation12 + $0xd0] sm:$0xff]
    %v2261 = vld [vmem:[#allocation12 + $0xd8] sm:$0xff]
    %v2262 = vld [vmem:[#allocation12 + $0xe0] sm:$0xff]
    %v2263 = vld [vmem:[#allocation12 + $0xe8] sm:$0xff]
    %v2264 = vld [vmem:[#allocation12 + $0xf0] sm:$0xff]
    %v2265 = vld [vmem:[#allocation12 + $0xf8] sm:$0xff]
    %v2298 = vunpack.c.l.b16 %v2234
    %v2299 = vunpack.c.h.b16 %v2234
    %v2300 = vunpack.c.l.b16 %v2235
    %v2301 = vunpack.c.h.b16 %v2235
    %v2302 = vunpack.c.l.b16 %v2236
    %v2303 = vunpack.c.h.b16 %v2236
    %v2304 = vunpack.c.l.b16 %v2237
    %v2305 = vunpack.c.h.b16 %v2237
    %v2306 = vunpack.c.l.b16 %v2238
    %v2307 = vunpack.c.h.b16 %v2238
    %v2308 = vunpack.c.l.b16 %v2239
    %v2309 = vunpack.c.h.b16 %v2239
    %v2310 = vunpack.c.l.b16 %v2240
    %v2311 = vunpack.c.h.b16 %v2240
    %v2312 = vunpack.c.l.b16 %v2241
    %v2313 = vunpack.c.h.b16 %v2241
    %v2314 = vunpack.c.l.b16 %v2242
    %v2315 = vunpack.c.h.b16 %v2242
    %v2316 = vunpack.c.l.b16 %v2243
    %v2317 = vunpack.c.h.b16 %v2243
    %v2318 = vunpack.c.l.b16 %v2244
    %v2319 = vunpack.c.h.b16 %v2244
    %v2320 = vunpack.c.l.b16 %v2245
    %v2321 = vunpack.c.h.b16 %v2245
    %v2322 = vunpack.c.l.b16 %v2246
    %v2323 = vunpack.c.h.b16 %v2246
    %v2324 = vunpack.c.l.b16 %v2247
    %v2325 = vunpack.c.h.b16 %v2247
    %v2326 = vunpack.c.l.b16 %v2248
    %v2327 = vunpack.c.h.b16 %v2248
    %v2328 = vunpack.c.l.b16 %v2249
    %v2329 = vunpack.c.h.b16 %v2249
    %v2330 = vunpack.c.l.b16 %v2250
    %v2331 = vunpack.c.h.b16 %v2250
    %v2332 = vunpack.c.l.b16 %v2251
    %v2333 = vunpack.c.h.b16 %v2251
    %v2334 = vunpack.c.l.b16 %v2252
    %v2335 = vunpack.c.h.b16 %v2252
    %v2336 = vunpack.c.l.b16 %v2253
    %v2337 = vunpack.c.h.b16 %v2253
    %v2338 = vunpack.c.l.b16 %v2254
    %v2339 = vunpack.c.h.b16 %v2254
    %v2340 = vunpack.c.l.b16 %v2255
    %v2341 = vunpack.c.h.b16 %v2255
    %v2342 = vunpack.c.l.b16 %v2256
    %v2343 = vunpack.c.h.b16 %v2256
    %v2344 = vunpack.c.l.b16 %v2257
    %v2345 = vunpack.c.h.b16 %v2257
    %v2346 = vunpack.c.l.b16 %v2258
    %v2347 = vunpack.c.h.b16 %v2258
    %v2348 = vunpack.c.l.b16 %v2259
    %v2349 = vunpack.c.h.b16 %v2259
    %v2350 = vunpack.c.l.b16 %v2260
    %v2351 = vunpack.c.h.b16 %v2260
    %v2352 = vunpack.c.l.b16 %v2261
    %v2353 = vunpack.c.h.b16 %v2261
    %v2354 = vunpack.c.l.b16 %v2262
    %v2355 = vunpack.c.h.b16 %v2262
    %v2356 = vunpack.c.l.b16 %v2263
    %v2357 = vunpack.c.h.b16 %v2263
    %v2358 = vunpack.c.l.b16 %v2264
    %v2359 = vunpack.c.h.b16 %v2264
    %v2360 = vunpack.c.l.b16 %v2265
    %v2361 = vunpack.c.h.b16 %v2265
    %v2362 = vpack.c.b16 %v2302, %v2298
    %v2363 = vpack.c.b16 %v2303, %v2299
    %v2364 = vpack.c.b16 %v2304, %v2300
    %v2365 = vpack.c.b16 %v2305, %v2301
    %v2366 = vpack.c.b16 %v2310, %v2306
    %v2367 = vpack.c.b16 %v2311, %v2307
    %v2368 = vpack.c.b16 %v2312, %v2308
    %v2369 = vpack.c.b16 %v2313, %v2309
    %v2370 = vpack.c.b16 %v2318, %v2314
    %v2371 = vpack.c.b16 %v2319, %v2315
    %v2372 = vpack.c.b16 %v2320, %v2316
    %v2373 = vpack.c.b16 %v2321, %v2317
    %v2374 = vpack.c.b16 %v2326, %v2322
    %v2375 = vpack.c.b16 %v2327, %v2323
    %v2376 = vpack.c.b16 %v2328, %v2324
    %v2377 = vpack.c.b16 %v2329, %v2325
    %v2378 = vpack.c.b16 %v2334, %v2330
    %v2379 = vpack.c.b16 %v2335, %v2331
    %v2380 = vpack.c.b16 %v2336, %v2332
    %v2381 = vpack.c.b16 %v2337, %v2333
    %v2382 = vpack.c.b16 %v2342, %v2338
    %v2383 = vpack.c.b16 %v2343, %v2339
    %v2384 = vpack.c.b16 %v2344, %v2340
    %v2385 = vpack.c.b16 %v2345, %v2341
    %v2386 = vpack.c.b16 %v2350, %v2346
    %v2387 = vpack.c.b16 %v2351, %v2347
    %v2388 = vpack.c.b16 %v2352, %v2348
    %v2389 = vpack.c.b16 %v2353, %v2349
    %v2390 = vpack.c.b16 %v2358, %v2354
    %v2391 = vpack.c.b16 %v2359, %v2355
    %v2392 = vpack.c.b16 %v2360, %v2356
    %v2393 = vpack.c.b16 %v2361, %v2357
    %2426 = vmatpush.bf16.msra.mxu0 %v2390
    %2427 = vmatpush.bf16.msra.mxu0 %v2386
    %2428 = vmatpush.bf16.msra.mxu0 %v2382
    %2429 = vmatpush.bf16.msra.mxu0 %v2378
    %2430 = vmatpush.bf16.msra.mxu0 %v2374
    %2431 = vmatpush.bf16.msra.mxu0 %v2370
    %2432 = vmatpush.bf16.msra.mxu0 %v2366
    %2433 = vmatpush.bf16.msra.mxu0 %v2362
    %2434 = vmatmul.bf16.gmra.mxu0 %v2233
    %v2435 = vpop.f32.mrf.mxu0
    %v2436 = vadd.f32 0.0, %v2435
    %v2437 = vpop.f32.mrf.mxu0
    %2438 = vdwg.mxu0
    %2439 = vmatpush.bf16.msra.mxu0 %v2391
    %2440 = vmatpush.bf16.msra.mxu0 %v2387
    %2441 = vmatpush.bf16.msra.mxu0 %v2383
    %2442 = vmatpush.bf16.msra.mxu0 %v2379
    %2443 = vmatpush.bf16.msra.mxu0 %v2375
    %2444 = vmatpush.bf16.msra.mxu0 %v2371
    %2445 = vmatpush.bf16.msra.mxu0 %v2367
    %2446 = vmatpush.bf16.msra.mxu0 %v2363
    %2447 = vmatmul.bf16.gmra.mxu0 %v2233
    %v2448 = vpop.f32.mrf.mxu0
    %v2449 = vadd.f32 0.0, %v2448
    %v2450 = vpop.f32.mrf.mxu0
    %2451 = vdwg.mxu0
    %2452 = vmatpush.bf16.msra.mxu0 %v2392
    %2453 = vmatpush.bf16.msra.mxu0 %v2388
    %2454 = vmatpush.bf16.msra.mxu0 %v2384
    %2455 = vmatpush.bf16.msra.mxu0 %v2380
    %2456 = vmatpush.bf16.msra.mxu0 %v2376
    %2457 = vmatpush.bf16.msra.mxu0 %v2372
    %2458 = vmatpush.bf16.msra.mxu0 %v2368
    %2459 = vmatpush.bf16.msra.mxu0 %v2364
    %2460 = vmatmul.bf16.gmra.mxu0 %v2233
    %v2461 = vpop.f32.mrf.mxu0
    %v2462 = vadd.f32 0.0, %v2461
    %v2463 = vpop.f32.mrf.mxu0
    %2464 = vdwg.mxu0
    %2465 = vmatpush.bf16.msra.mxu0 %v2393
    %2466 = vmatpush.bf16.msra.mxu0 %v2389
    %2467 = vmatpush.bf16.msra.mxu0 %v2385
    %2468 = vmatpush.bf16.msra.mxu0 %v2381
    %2469 = vmatpush.bf16.msra.mxu0 %v2377
    %2470 = vmatpush.bf16.msra.mxu0 %v2373
    %2471 = vmatpush.bf16.msra.mxu0 %v2369
    %2472 = vmatpush.bf16.msra.mxu0 %v2365
    %2473 = vmatmul.bf16.gmra.mxu0 %v2233
    %v2474 = vpop.f32.mrf.mxu0
    %v2475 = vadd.f32 0.0, %v2474
    %v2476 = vpop.f32.mrf.mxu0
    %2477 = vdwg.mxu0
    %v2510 = vunpack.c.l.b16 %v2201
    %v2511 = vunpack.c.h.b16 %v2201
    %v2512 = vunpack.c.l.b16 %v2202
    %v2513 = vunpack.c.h.b16 %v2202
    %v2514 = vunpack.c.l.b16 %v2203
    %v2515 = vunpack.c.h.b16 %v2203
    %v2516 = vunpack.c.l.b16 %v2204
    %v2517 = vunpack.c.h.b16 %v2204
    %v2518 = vunpack.c.l.b16 %v2205
    %v2519 = vunpack.c.h.b16 %v2205
    %v2520 = vunpack.c.l.b16 %v2206
    %v2521 = vunpack.c.h.b16 %v2206
    %v2522 = vunpack.c.l.b16 %v2207
    %v2523 = vunpack.c.h.b16 %v2207
    %v2524 = vunpack.c.l.b16 %v2208
    %v2525 = vunpack.c.h.b16 %v2208
    %v2526 = vunpack.c.l.b16 %v2209
    %v2527 = vunpack.c.h.b16 %v2209
    %v2528 = vunpack.c.l.b16 %v2210
    %v2529 = vunpack.c.h.b16 %v2210
    %v2530 = vunpack.c.l.b16 %v2211
    %v2531 = vunpack.c.h.b16 %v2211
    %v2532 = vunpack.c.l.b16 %v2212
    %v2533 = vunpack.c.h.b16 %v2212
    %v2534 = vunpack.c.l.b16 %v2213
    %v2535 = vunpack.c.h.b16 %v2213
    %v2536 = vunpack.c.l.b16 %v2214
    %v2537 = vunpack.c.h.b16 %v2214
    %v2538 = vunpack.c.l.b16 %v2215
    %v2539 = vunpack.c.h.b16 %v2215
    %v2540 = vunpack.c.l.b16 %v2216
    %v2541 = vunpack.c.h.b16 %v2216
    %v2542 = vunpack.c.l.b16 %v2217
    %v2543 = vunpack.c.h.b16 %v2217
    %v2544 = vunpack.c.l.b16 %v2218
    %v2545 = vunpack.c.h.b16 %v2218
    %v2546 = vunpack.c.l.b16 %v2219
    %v2547 = vunpack.c.h.b16 %v2219
    %v2548 = vunpack.c.l.b16 %v2220
    %v2549 = vunpack.c.h.b16 %v2220
    %v2550 = vunpack.c.l.b16 %v2221
    %v2551 = vunpack.c.h.b16 %v2221
    %v2552 = vunpack.c.l.b16 %v2222
    %v2553 = vunpack.c.h.b16 %v2222
    %v2554 = vunpack.c.l.b16 %v2223
    %v2555 = vunpack.c.h.b16 %v2223
    %v2556 = vunpack.c.l.b16 %v2224
    %v2557 = vunpack.c.h.b16 %v2224
    %v2558 = vunpack.c.l.b16 %v2225
    %v2559 = vunpack.c.h.b16 %v2225
    %v2560 = vunpack.c.l.b16 %v2226
    %v2561 = vunpack.c.h.b16 %v2226
    %v2562 = vunpack.c.l.b16 %v2227
    %v2563 = vunpack.c.h.b16 %v2227
    %v2564 = vunpack.c.l.b16 %v2228
    %v2565 = vunpack.c.h.b16 %v2228
    %v2566 = vunpack.c.l.b16 %v2229
    %v2567 = vunpack.c.h.b16 %v2229
    %v2568 = vunpack.c.l.b16 %v2230
    %v2569 = vunpack.c.h.b16 %v2230
    %v2570 = vunpack.c.l.b16 %v2231
    %v2571 = vunpack.c.h.b16 %v2231
    %v2572 = vunpack.c.l.b16 %v2232
    %v2573 = vunpack.c.h.b16 %v2232
    %v2574 = vpack.c.b16 %v2514, %v2510
    %v2575 = vpack.c.b16 %v2515, %v2511
    %v2576 = vpack.c.b16 %v2516, %v2512
    %v2577 = vpack.c.b16 %v2517, %v2513
    %v2578 = vpack.c.b16 %v2522, %v2518
    %v2579 = vpack.c.b16 %v2523, %v2519
    %v2580 = vpack.c.b16 %v2524, %v2520
    %v2581 = vpack.c.b16 %v2525, %v2521
    %v2582 = vpack.c.b16 %v2530, %v2526
    %v2583 = vpack.c.b16 %v2531, %v2527
    %v2584 = vpack.c.b16 %v2532, %v2528
    %v2585 = vpack.c.b16 %v2533, %v2529
    %v2586 = vpack.c.b16 %v2538, %v2534
    %v2587 = vpack.c.b16 %v2539, %v2535
    %v2588 = vpack.c.b16 %v2540, %v2536
    %v2589 = vpack.c.b16 %v2541, %v2537
    %v2590 = vpack.c.b16 %v2546, %v2542
    %v2591 = vpack.c.b16 %v2547, %v2543
    %v2592 = vpack.c.b16 %v2548, %v2544
    %v2593 = vpack.c.b16 %v2549, %v2545
    %v2594 = vpack.c.b16 %v2554, %v2550
    %v2595 = vpack.c.b16 %v2555, %v2551
    %v2596 = vpack.c.b16 %v2556, %v2552
    %v2597 = vpack.c.b16 %v2557, %v2553
    %v2598 = vpack.c.b16 %v2562, %v2558
    %v2599 = vpack.c.b16 %v2563, %v2559
    %v2600 = vpack.c.b16 %v2564, %v2560
    %v2601 = vpack.c.b16 %v2565, %v2561
    %v2602 = vpack.c.b16 %v2570, %v2566
    %v2603 = vpack.c.b16 %v2571, %v2567
    %v2604 = vpack.c.b16 %v2572, %v2568
    %v2605 = vpack.c.b16 %v2573, %v2569
    %2638 = vmatpush.bf16.msra.mxu0 %v2602
    %2639 = vmatpush.bf16.msra.mxu0 %v2598
    %2640 = vmatpush.bf16.msra.mxu0 %v2594
    %2641 = vmatpush.bf16.msra.mxu0 %v2590
    %2642 = vmatpush.bf16.msra.mxu0 %v2586
    %2643 = vmatpush.bf16.msra.mxu0 %v2582
    %2644 = vmatpush.bf16.msra.mxu0 %v2578
    %2645 = vmatpush.bf16.msra.mxu0 %v2574
    %2646 = vmatmul.bf16.gmra.mxu0 %v2200
    %v2647 = vpop.f32.mrf.mxu0
    %v2648 = vadd.f32 %v2436, %v2647
    %v2649 = vpop.f32.mrf.mxu0
    %2650 = vdwg.mxu0
    %2651 = vmatpush.bf16.msra.mxu0 %v2603
    %2652 = vmatpush.bf16.msra.mxu0 %v2599
    %2653 = vmatpush.bf16.msra.mxu0 %v2595
    %2654 = vmatpush.bf16.msra.mxu0 %v2591
    %2655 = vmatpush.bf16.msra.mxu0 %v2587
    %2656 = vmatpush.bf16.msra.mxu0 %v2583
    %2657 = vmatpush.bf16.msra.mxu0 %v2579
    %2658 = vmatpush.bf16.msra.mxu0 %v2575
    %2659 = vmatmul.bf16.gmra.mxu0 %v2200
    %v2660 = vpop.f32.mrf.mxu0
    %v2661 = vadd.f32 %v2449, %v2660
    %v2662 = vpop.f32.mrf.mxu0
    %2663 = vdwg.mxu0
    %2664 = vmatpush.bf16.msra.mxu0 %v2604
    %2665 = vmatpush.bf16.msra.mxu0 %v2600
    %2666 = vmatpush.bf16.msra.mxu0 %v2596
    %2667 = vmatpush.bf16.msra.mxu0 %v2592
    %2668 = vmatpush.bf16.msra.mxu0 %v2588
    %2669 = vmatpush.bf16.msra.mxu0 %v2584
    %2670 = vmatpush.bf16.msra.mxu0 %v2580
    %2671 = vmatpush.bf16.msra.mxu0 %v2576
    %2672 = vmatmul.bf16.gmra.mxu0 %v2200
    %v2673 = vpop.f32.mrf.mxu0
    %v2674 = vadd.f32 %v2462, %v2673
    %v2675 = vpop.f32.mrf.mxu0
    %2676 = vdwg.mxu0
    %2677 = vmatpush.bf16.msra.mxu0 %v2605
    %2678 = vmatpush.bf16.msra.mxu0 %v2601
    %2679 = vmatpush.bf16.msra.mxu0 %v2597
    %2680 = vmatpush.bf16.msra.mxu0 %v2593
    %2681 = vmatpush.bf16.msra.mxu0 %v2589
    %2682 = vmatpush.bf16.msra.mxu0 %v2585
    %2683 = vmatpush.bf16.msra.mxu0 %v2581
    %2684 = vmatpush.bf16.msra.mxu0 %v2577
    %2685 = vmatmul.bf16.gmra.mxu0 %v2200
    %v2686 = vpop.f32.mrf.mxu0
    %v2687 = vadd.f32 %v2475, %v2686
    %v2688 = vpop.f32.mrf.mxu0
    %2689 = vdwg.mxu0
    %v2690 = vadd.f32 %v2648, %v630
    %v2691 = vadd.f32 %v2661, %v631
    %v2692 = vadd.f32 %v2674, %v632
    %v2693 = vadd.f32 %v2687, %v633
    %v2694 = vmul.f32 %v2690, 0.5
    %v2695 = vtanh.pop %v2694
    %v2696 = vmul.f32 %v2695, 0.5
    %v2697 = vadd.f32 %v2696, 0.5
    %v2698 = vmul.f32 %v2691, 0.5
    %v2699 = vtanh.pop %v2698
    %v2700 = vmul.f32 %v2699, 0.5
    %v2701 = vadd.f32 %v2700, 0.5
    %v2702 = vtanh.pop %v2692
    %v2703 = vmul.f32 %v2693, 0.5
    %v2704 = vtanh.pop %v2703
    %v2705 = vmul.f32 %v2704, 0.5
    %v2706 = vadd.f32 %v2705, 0.5
    %v2707 = vmul.f32 %v2701, %v2196
    %v2708 = vmul.f32 %v2697, %v2702
    %v2709 = vadd.f32 %v2707, %v2708
    %v2710 = vtanh.pop %v2709
    %v2711 = vmul.f32 %v2706, %v2710
    %2712 = vst [vmem:[#allocation2 + $0x5] sm:$0x1] %v2709
    %v2713 = vpack.c.bf16 %v2709, %v2709
    %v2714 = vld [vmem:[#allocation10] sm:$0xff]
    %v2715 = vld [vmem:[#allocation10 + $0x8] sm:$0xff]
    %v2716 = vld [vmem:[#allocation10 + $0x10] sm:$0xff]
    %v2717 = vld [vmem:[#allocation10 + $0x18] sm:$0xff]
    %v2718 = vld [vmem:[#allocation10 + $0x20] sm:$0xff]
    %v2719 = vld [vmem:[#allocation10 + $0x28] sm:$0xff]
    %v2720 = vld [vmem:[#allocation10 + $0x30] sm:$0xff]
    %v2721 = vld [vmem:[#allocation10 + $0x38] sm:$0xff]
    %v2722 = vld [vmem:[#allocation10 + $0x40] sm:$0xff]
    %v2723 = vld [vmem:[#allocation10 + $0x48] sm:$0xff]
    %v2724 = vld [vmem:[#allocation10 + $0x50] sm:$0xff]
    %v2725 = vld [vmem:[#allocation10 + $0x58] sm:$0xff]
    %v2726 = vld [vmem:[#allocation10 + $0x60] sm:$0xff]
    %v2727 = vld [vmem:[#allocation10 + $0x68] sm:$0xff]
    %v2728 = vld [vmem:[#allocation10 + $0x70] sm:$0xff]
    %v2729 = vld [vmem:[#allocation10 + $0x78] sm:$0xff]
    %v2730 = vld [vmem:[#allocation10 + $0x80] sm:$0xff]
    %v2731 = vld [vmem:[#allocation10 + $0x88] sm:$0xff]
    %v2732 = vld [vmem:[#allocation10 + $0x90] sm:$0xff]
    %v2733 = vld [vmem:[#allocation10 + $0x98] sm:$0xff]
    %v2734 = vld [vmem:[#allocation10 + $0xa0] sm:$0xff]
    %v2735 = vld [vmem:[#allocation10 + $0xa8] sm:$0xff]
    %v2736 = vld [vmem:[#allocation10 + $0xb0] sm:$0xff]
    %v2737 = vld [vmem:[#allocation10 + $0xb8] sm:$0xff]
    %v2738 = vld [vmem:[#allocation10 + $0xc0] sm:$0xff]
    %v2739 = vld [vmem:[#allocation10 + $0xc8] sm:$0xff]
    %v2740 = vld [vmem:[#allocation10 + $0xd0] sm:$0xff]
    %v2741 = vld [vmem:[#allocation10 + $0xd8] sm:$0xff]
    %v2742 = vld [vmem:[#allocation10 + $0xe0] sm:$0xff]
    %v2743 = vld [vmem:[#allocation10 + $0xe8] sm:$0xff]
    %v2744 = vld [vmem:[#allocation10 + $0xf0] sm:$0xff]
    %v2745 = vld [vmem:[#allocation10 + $0xf8] sm:$0xff]
    %v2746 = vpack.c.bf16 %v2711, %v2711
    %v2747 = vld [vmem:[#allocation12] sm:$0xff]
    %v2748 = vld [vmem:[#allocation12 + $0x8] sm:$0xff]
    %v2749 = vld [vmem:[#allocation12 + $0x10] sm:$0xff]
    %v2750 = vld [vmem:[#allocation12 + $0x18] sm:$0xff]
    %v2751 = vld [vmem:[#allocation12 + $0x20] sm:$0xff]
    %v2752 = vld [vmem:[#allocation12 + $0x28] sm:$0xff]
    %v2753 = vld [vmem:[#allocation12 + $0x30] sm:$0xff]
    %v2754 = vld [vmem:[#allocation12 + $0x38] sm:$0xff]
    %v2755 = vld [vmem:[#allocation12 + $0x40] sm:$0xff]
    %v2756 = vld [vmem:[#allocation12 + $0x48] sm:$0xff]
    %v2757 = vld [vmem:[#allocation12 + $0x50] sm:$0xff]
    %v2758 = vld [vmem:[#allocation12 + $0x58] sm:$0xff]
    %v2759 = vld [vmem:[#allocation12 + $0x60] sm:$0xff]
    %v2760 = vld [vmem:[#allocation12 + $0x68] sm:$0xff]
    %v2761 = vld [vmem:[#allocation12 + $0x70] sm:$0xff]
    %v2762 = vld [vmem:[#allocation12 + $0x78] sm:$0xff]
    %v2763 = vld [vmem:[#allocation12 + $0x80] sm:$0xff]
    %v2764 = vld [vmem:[#allocation12 + $0x88] sm:$0xff]
    %v2765 = vld [vmem:[#allocation12 + $0x90] sm:$0xff]
    %v2766 = vld [vmem:[#allocation12 + $0x98] sm:$0xff]
    %v2767 = vld [vmem:[#allocation12 + $0xa0] sm:$0xff]
    %v2768 = vld [vmem:[#allocation12 + $0xa8] sm:$0xff]
    %v2769 = vld [vmem:[#allocation12 + $0xb0] sm:$0xff]
    %v2770 = vld [vmem:[#allocation12 + $0xb8] sm:$0xff]
    %v2771 = vld [vmem:[#allocation12 + $0xc0] sm:$0xff]
    %v2772 = vld [vmem:[#allocation12 + $0xc8] sm:$0xff]
    %v2773 = vld [vmem:[#allocation12 + $0xd0] sm:$0xff]
    %v2774 = vld [vmem:[#allocation12 + $0xd8] sm:$0xff]
    %v2775 = vld [vmem:[#allocation12 + $0xe0] sm:$0xff]
    %v2776 = vld [vmem:[#allocation12 + $0xe8] sm:$0xff]
    %v2777 = vld [vmem:[#allocation12 + $0xf0] sm:$0xff]
    %v2778 = vld [vmem:[#allocation12 + $0xf8] sm:$0xff]
    %v2811 = vunpack.c.l.b16 %v2747
    %v2812 = vunpack.c.h.b16 %v2747
    %v2813 = vunpack.c.l.b16 %v2748
    %v2814 = vunpack.c.h.b16 %v2748
    %v2815 = vunpack.c.l.b16 %v2749
    %v2816 = vunpack.c.h.b16 %v2749
    %v2817 = vunpack.c.l.b16 %v2750
    %v2818 = vunpack.c.h.b16 %v2750
    %v2819 = vunpack.c.l.b16 %v2751
    %v2820 = vunpack.c.h.b16 %v2751
    %v2821 = vunpack.c.l.b16 %v2752
    %v2822 = vunpack.c.h.b16 %v2752
    %v2823 = vunpack.c.l.b16 %v2753
    %v2824 = vunpack.c.h.b16 %v2753
    %v2825 = vunpack.c.l.b16 %v2754
    %v2826 = vunpack.c.h.b16 %v2754
    %v2827 = vunpack.c.l.b16 %v2755
    %v2828 = vunpack.c.h.b16 %v2755
    %v2829 = vunpack.c.l.b16 %v2756
    %v2830 = vunpack.c.h.b16 %v2756
    %v2831 = vunpack.c.l.b16 %v2757
    %v2832 = vunpack.c.h.b16 %v2757
    %v2833 = vunpack.c.l.b16 %v2758
    %v2834 = vunpack.c.h.b16 %v2758
    %v2835 = vunpack.c.l.b16 %v2759
    %v2836 = vunpack.c.h.b16 %v2759
    %v2837 = vunpack.c.l.b16 %v2760
    %v2838 = vunpack.c.h.b16 %v2760
    %v2839 = vunpack.c.l.b16 %v2761
    %v2840 = vunpack.c.h.b16 %v2761
    %v2841 = vunpack.c.l.b16 %v2762
    %v2842 = vunpack.c.h.b16 %v2762
    %v2843 = vunpack.c.l.b16 %v2763
    %v2844 = vunpack.c.h.b16 %v2763
    %v2845 = vunpack.c.l.b16 %v2764
    %v2846 = vunpack.c.h.b16 %v2764
    %v2847 = vunpack.c.l.b16 %v2765
    %v2848 = vunpack.c.h.b16 %v2765
    %v2849 = vunpack.c.l.b16 %v2766
    %v2850 = vunpack.c.h.b16 %v2766
    %v2851 = vunpack.c.l.b16 %v2767
    %v2852 = vunpack.c.h.b16 %v2767
    %v2853 = vunpack.c.l.b16 %v2768
    %v2854 = vunpack.c.h.b16 %v2768
    %v2855 = vunpack.c.l.b16 %v2769
    %v2856 = vunpack.c.h.b16 %v2769
    %v2857 = vunpack.c.l.b16 %v2770
    %v2858 = vunpack.c.h.b16 %v2770
    %v2859 = vunpack.c.l.b16 %v2771
    %v2860 = vunpack.c.h.b16 %v2771
    %v2861 = vunpack.c.l.b16 %v2772
    %v2862 = vunpack.c.h.b16 %v2772
    %v2863 = vunpack.c.l.b16 %v2773
    %v2864 = vunpack.c.h.b16 %v2773
    %v2865 = vunpack.c.l.b16 %v2774
    %v2866 = vunpack.c.h.b16 %v2774
    %v2867 = vunpack.c.l.b16 %v2775
    %v2868 = vunpack.c.h.b16 %v2775
    %v2869 = vunpack.c.l.b16 %v2776
    %v2870 = vunpack.c.h.b16 %v2776
    %v2871 = vunpack.c.l.b16 %v2777
    %v2872 = vunpack.c.h.b16 %v2777
    %v2873 = vunpack.c.l.b16 %v2778
    %v2874 = vunpack.c.h.b16 %v2778
    %v2875 = vpack.c.b16 %v2815, %v2811
    %v2876 = vpack.c.b16 %v2816, %v2812
    %v2877 = vpack.c.b16 %v2817, %v2813
    %v2878 = vpack.c.b16 %v2818, %v2814
    %v2879 = vpack.c.b16 %v2823, %v2819
    %v2880 = vpack.c.b16 %v2824, %v2820
    %v2881 = vpack.c.b16 %v2825, %v2821
    %v2882 = vpack.c.b16 %v2826, %v2822
    %v2883 = vpack.c.b16 %v2831, %v2827
    %v2884 = vpack.c.b16 %v2832, %v2828
    %v2885 = vpack.c.b16 %v2833, %v2829
    %v2886 = vpack.c.b16 %v2834, %v2830
    %v2887 = vpack.c.b16 %v2839, %v2835
    %v2888 = vpack.c.b16 %v2840, %v2836
    %v2889 = vpack.c.b16 %v2841, %v2837
    %v2890 = vpack.c.b16 %v2842, %v2838
    %v2891 = vpack.c.b16 %v2847, %v2843
    %v2892 = vpack.c.b16 %v2848, %v2844
    %v2893 = vpack.c.b16 %v2849, %v2845
    %v2894 = vpack.c.b16 %v2850, %v2846
    %v2895 = vpack.c.b16 %v2855, %v2851
    %v2896 = vpack.c.b16 %v2856, %v2852
    %v2897 = vpack.c.b16 %v2857, %v2853
    %v2898 = vpack.c.b16 %v2858, %v2854
    %v2899 = vpack.c.b16 %v2863, %v2859
    %v2900 = vpack.c.b16 %v2864, %v2860
    %v2901 = vpack.c.b16 %v2865, %v2861
    %v2902 = vpack.c.b16 %v2866, %v2862
    %v2903 = vpack.c.b16 %v2871, %v2867
    %v2904 = vpack.c.b16 %v2872, %v2868
    %v2905 = vpack.c.b16 %v2873, %v2869
    %v2906 = vpack.c.b16 %v2874, %v2870
    %2939 = vmatpush.bf16.msra.mxu0 %v2903
    %2940 = vmatpush.bf16.msra.mxu0 %v2899
    %2941 = vmatpush.bf16.msra.mxu0 %v2895
    %2942 = vmatpush.bf16.msra.mxu0 %v2891
    %2943 = vmatpush.bf16.msra.mxu0 %v2887
    %2944 = vmatpush.bf16.msra.mxu0 %v2883
    %2945 = vmatpush.bf16.msra.mxu0 %v2879
    %2946 = vmatpush.bf16.msra.mxu0 %v2875
    %2947 = vmatmul.bf16.gmra.mxu0 %v2746
    %v2948 = vpop.f32.mrf.mxu0
    %v2949 = vadd.f32 0.0, %v2948
    %v2950 = vpop.f32.mrf.mxu0
    %2951 = vdwg.mxu0
    %2952 = vmatpush.bf16.msra.mxu0 %v2904
    %2953 = vmatpush.bf16.msra.mxu0 %v2900
    %2954 = vmatpush.bf16.msra.mxu0 %v2896
    %2955 = vmatpush.bf16.msra.mxu0 %v2892
    %2956 = vmatpush.bf16.msra.mxu0 %v2888
    %2957 = vmatpush.bf16.msra.mxu0 %v2884
    %2958 = vmatpush.bf16.msra.mxu0 %v2880
    %2959 = vmatpush.bf16.msra.mxu0 %v2876
    %2960 = vmatmul.bf16.gmra.mxu0 %v2746
    %v2961 = vpop.f32.mrf.mxu0
    %v2962 = vadd.f32 0.0, %v2961
    %v2963 = vpop.f32.mrf.mxu0
    %2964 = vdwg.mxu0
    %2965 = vmatpush.bf16.msra.mxu0 %v2905
    %2966 = vmatpush.bf16.msra.mxu0 %v2901
    %2967 = vmatpush.bf16.msra.mxu0 %v2897
    %2968 = vmatpush.bf16.msra.mxu0 %v2893
    %2969 = vmatpush.bf16.msra.mxu0 %v2889
    %2970 = vmatpush.bf16.msra.mxu0 %v2885
    %2971 = vmatpush.bf16.msra.mxu0 %v2881
    %2972 = vmatpush.bf16.msra.mxu0 %v2877
    %2973 = vmatmul.bf16.gmra.mxu0 %v2746
    %v2974 = vpop.f32.mrf.mxu0
    %v2975 = vadd.f32 0.0, %v2974
    %v2976 = vpop.f32.mrf.mxu0
    %2977 = vdwg.mxu0
    %2978 = vmatpush.bf16.msra.mxu0 %v2906
    %2979 = vmatpush.bf16.msra.mxu0 %v2902
    %2980 = vmatpush.bf16.msra.mxu0 %v2898
    %2981 = vmatpush.bf16.msra.mxu0 %v2894
    %2982 = vmatpush.bf16.msra.mxu0 %v2890
    %2983 = vmatpush.bf16.msra.mxu0 %v2886
    %2984 = vmatpush.bf16.msra.mxu0 %v2882
    %2985 = vmatpush.bf16.msra.mxu0 %v2878
    %2986 = vmatmul.bf16.gmra.mxu0 %v2746
    %v2987 = vpop.f32.mrf.mxu0
    %v2988 = vadd.f32 0.0, %v2987
    %v2989 = vpop.f32.mrf.mxu0
    %2990 = vdwg.mxu0
    %v3023 = vunpack.c.l.b16 %v2714
    %v3024 = vunpack.c.h.b16 %v2714
    %v3025 = vunpack.c.l.b16 %v2715
    %v3026 = vunpack.c.h.b16 %v2715
    %v3027 = vunpack.c.l.b16 %v2716
    %v3028 = vunpack.c.h.b16 %v2716
    %v3029 = vunpack.c.l.b16 %v2717
    %v3030 = vunpack.c.h.b16 %v2717
    %v3031 = vunpack.c.l.b16 %v2718
    %v3032 = vunpack.c.h.b16 %v2718
    %v3033 = vunpack.c.l.b16 %v2719
    %v3034 = vunpack.c.h.b16 %v2719
    %v3035 = vunpack.c.l.b16 %v2720
    %v3036 = vunpack.c.h.b16 %v2720
    %v3037 = vunpack.c.l.b16 %v2721
    %v3038 = vunpack.c.h.b16 %v2721
    %v3039 = vunpack.c.l.b16 %v2722
    %v3040 = vunpack.c.h.b16 %v2722
    %v3041 = vunpack.c.l.b16 %v2723
    %v3042 = vunpack.c.h.b16 %v2723
    %v3043 = vunpack.c.l.b16 %v2724
    %v3044 = vunpack.c.h.b16 %v2724
    %v3045 = vunpack.c.l.b16 %v2725
    %v3046 = vunpack.c.h.b16 %v2725
    %v3047 = vunpack.c.l.b16 %v2726
    %v3048 = vunpack.c.h.b16 %v2726
    %v3049 = vunpack.c.l.b16 %v2727
    %v3050 = vunpack.c.h.b16 %v2727
    %v3051 = vunpack.c.l.b16 %v2728
    %v3052 = vunpack.c.h.b16 %v2728
    %v3053 = vunpack.c.l.b16 %v2729
    %v3054 = vunpack.c.h.b16 %v2729
    %v3055 = vunpack.c.l.b16 %v2730
    %v3056 = vunpack.c.h.b16 %v2730
    %v3057 = vunpack.c.l.b16 %v2731
    %v3058 = vunpack.c.h.b16 %v2731
    %v3059 = vunpack.c.l.b16 %v2732
    %v3060 = vunpack.c.h.b16 %v2732
    %v3061 = vunpack.c.l.b16 %v2733
    %v3062 = vunpack.c.h.b16 %v2733
    %v3063 = vunpack.c.l.b16 %v2734
    %v3064 = vunpack.c.h.b16 %v2734
    %v3065 = vunpack.c.l.b16 %v2735
    %v3066 = vunpack.c.h.b16 %v2735
    %v3067 = vunpack.c.l.b16 %v2736
    %v3068 = vunpack.c.h.b16 %v2736
    %v3069 = vunpack.c.l.b16 %v2737
    %v3070 = vunpack.c.h.b16 %v2737
    %v3071 = vunpack.c.l.b16 %v2738
    %v3072 = vunpack.c.h.b16 %v2738
    %v3073 = vunpack.c.l.b16 %v2739
    %v3074 = vunpack.c.h.b16 %v2739
    %v3075 = vunpack.c.l.b16 %v2740
    %v3076 = vunpack.c.h.b16 %v2740
    %v3077 = vunpack.c.l.b16 %v2741
    %v3078 = vunpack.c.h.b16 %v2741
    %v3079 = vunpack.c.l.b16 %v2742
    %v3080 = vunpack.c.h.b16 %v2742
    %v3081 = vunpack.c.l.b16 %v2743
    %v3082 = vunpack.c.h.b16 %v2743
    %v3083 = vunpack.c.l.b16 %v2744
    %v3084 = vunpack.c.h.b16 %v2744
    %v3085 = vunpack.c.l.b16 %v2745
    %v3086 = vunpack.c.h.b16 %v2745
    %v3087 = vpack.c.b16 %v3027, %v3023
    %v3088 = vpack.c.b16 %v3028, %v3024
    %v3089 = vpack.c.b16 %v3029, %v3025
    %v3090 = vpack.c.b16 %v3030, %v3026
    %v3091 = vpack.c.b16 %v3035, %v3031
    %v3092 = vpack.c.b16 %v3036, %v3032
    %v3093 = vpack.c.b16 %v3037, %v3033
    %v3094 = vpack.c.b16 %v3038, %v3034
    %v3095 = vpack.c.b16 %v3043, %v3039
    %v3096 = vpack.c.b16 %v3044, %v3040
    %v3097 = vpack.c.b16 %v3045, %v3041
    %v3098 = vpack.c.b16 %v3046, %v3042
    %v3099 = vpack.c.b16 %v3051, %v3047
    %v3100 = vpack.c.b16 %v3052, %v3048
    %v3101 = vpack.c.b16 %v3053, %v3049
    %v3102 = vpack.c.b16 %v3054, %v3050
    %v3103 = vpack.c.b16 %v3059, %v3055
    %v3104 = vpack.c.b16 %v3060, %v3056
    %v3105 = vpack.c.b16 %v3061, %v3057
    %v3106 = vpack.c.b16 %v3062, %v3058
    %v3107 = vpack.c.b16 %v3067, %v3063
    %v3108 = vpack.c.b16 %v3068, %v3064
    %v3109 = vpack.c.b16 %v3069, %v3065
    %v3110 = vpack.c.b16 %v3070, %v3066
    %v3111 = vpack.c.b16 %v3075, %v3071
    %v3112 = vpack.c.b16 %v3076, %v3072
    %v3113 = vpack.c.b16 %v3077, %v3073
    %v3114 = vpack.c.b16 %v3078, %v3074
    %v3115 = vpack.c.b16 %v3083, %v3079
    %v3116 = vpack.c.b16 %v3084, %v3080
    %v3117 = vpack.c.b16 %v3085, %v3081
    %v3118 = vpack.c.b16 %v3086, %v3082
    %3151 = vmatpush.bf16.msra.mxu0 %v3115
    %3152 = vmatpush.bf16.msra.mxu0 %v3111
    %3153 = vmatpush.bf16.msra.mxu0 %v3107
    %3154 = vmatpush.bf16.msra.mxu0 %v3103
    %3155 = vmatpush.bf16.msra.mxu0 %v3099
    %3156 = vmatpush.bf16.msra.mxu0 %v3095
    %3157 = vmatpush.bf16.msra.mxu0 %v3091
    %3158 = vmatpush.bf16.msra.mxu0 %v3087
    %3159 = vmatmul.bf16.gmra.mxu0 %v2713
    %v3160 = vpop.f32.mrf.mxu0
    %v3161 = vadd.f32 %v2949, %v3160
    %v3162 = vpop.f32.mrf.mxu0
    %3163 = vdwg.mxu0
    %3164 = vmatpush.bf16.msra.mxu0 %v3116
    %3165 = vmatpush.bf16.msra.mxu0 %v3112
    %3166 = vmatpush.bf16.msra.mxu0 %v3108
    %3167 = vmatpush.bf16.msra.mxu0 %v3104
    %3168 = vmatpush.bf16.msra.mxu0 %v3100
    %3169 = vmatpush.bf16.msra.mxu0 %v3096
    %3170 = vmatpush.bf16.msra.mxu0 %v3092
    %3171 = vmatpush.bf16.msra.mxu0 %v3088
    %3172 = vmatmul.bf16.gmra.mxu0 %v2713
    %v3173 = vpop.f32.mrf.mxu0
    %v3174 = vadd.f32 %v2962, %v3173
    %v3175 = vpop.f32.mrf.mxu0
    %3176 = vdwg.mxu0
    %3177 = vmatpush.bf16.msra.mxu0 %v3117
    %3178 = vmatpush.bf16.msra.mxu0 %v3113
    %3179 = vmatpush.bf16.msra.mxu0 %v3109
    %3180 = vmatpush.bf16.msra.mxu0 %v3105
    %3181 = vmatpush.bf16.msra.mxu0 %v3101
    %3182 = vmatpush.bf16.msra.mxu0 %v3097
    %3183 = vmatpush.bf16.msra.mxu0 %v3093
    %3184 = vmatpush.bf16.msra.mxu0 %v3089
    %3185 = vmatmul.bf16.gmra.mxu0 %v2713
    %v3186 = vpop.f32.mrf.mxu0
    %v3187 = vadd.f32 %v2975, %v3186
    %v3188 = vpop.f32.mrf.mxu0
    %3189 = vdwg.mxu0
    %3190 = vmatpush.bf16.msra.mxu0 %v3118
    %3191 = vmatpush.bf16.msra.mxu0 %v3114
    %3192 = vmatpush.bf16.msra.mxu0 %v3110
    %3193 = vmatpush.bf16.msra.mxu0 %v3106
    %3194 = vmatpush.bf16.msra.mxu0 %v3102
    %3195 = vmatpush.bf16.msra.mxu0 %v3098
    %3196 = vmatpush.bf16.msra.mxu0 %v3094
    %3197 = vmatpush.bf16.msra.mxu0 %v3090
    %3198 = vmatmul.bf16.gmra.mxu0 %v2713
    %v3199 = vpop.f32.mrf.mxu0
    %v3200 = vadd.f32 %v2988, %v3199
    %v3201 = vpop.f32.mrf.mxu0
    %3202 = vdwg.mxu0
    %v3203 = vadd.f32 %v3161, %v630
    %v3204 = vadd.f32 %v3174, %v631
    %v3205 = vadd.f32 %v3187, %v632
    %v3206 = vadd.f32 %v3200, %v633
    %v3207 = vmul.f32 %v3203, 0.5
    %v3208 = vtanh.pop %v3207
    %v3209 = vmul.f32 %v3208, 0.5
    %v3210 = vadd.f32 %v3209, 0.5
    %v3211 = vmul.f32 %v3204, 0.5
    %v3212 = vtanh.pop %v3211
    %v3213 = vmul.f32 %v3212, 0.5
    %v3214 = vadd.f32 %v3213, 0.5
    %v3215 = vtanh.pop %v3205
    %v3216 = vmul.f32 %v3206, 0.5
    %v3217 = vtanh.pop %v3216
    %v3218 = vmul.f32 %v3217, 0.5
    %v3219 = vadd.f32 %v3218, 0.5
    %v3220 = vmul.f32 %v3214, %v2709
    %v3221 = vmul.f32 %v3210, %v3215
    %v3222 = vadd.f32 %v3220, %v3221
    %v3223 = vtanh.pop %v3222
    %v3224 = vmul.f32 %v3219, %v3223
    %3225 = vst [vmem:[#allocation2 + $0x6] sm:$0x1] %v3222
    %v3226 = vpack.c.bf16 %v3222, %v3222
    %v3227 = vld [vmem:[#allocation10] sm:$0xff]
    %v3228 = vld [vmem:[#allocation10 + $0x8] sm:$0xff]
    %v3229 = vld [vmem:[#allocation10 + $0x10] sm:$0xff]
    %v3230 = vld [vmem:[#allocation10 + $0x18] sm:$0xff]
    %v3231 = vld [vmem:[#allocation10 + $0x20] sm:$0xff]
    %v3232 = vld [vmem:[#allocation10 + $0x28] sm:$0xff]
    %v3233 = vld [vmem:[#allocation10 + $0x30] sm:$0xff]
    %v3234 = vld [vmem:[#allocation10 + $0x38] sm:$0xff]
    %v3235 = vld [vmem:[#allocation10 + $0x40] sm:$0xff]
    %v3236 = vld [vmem:[#allocation10 + $0x48] sm:$0xff]
    %v3237 = vld [vmem:[#allocation10 + $0x50] sm:$0xff]
    %v3238 = vld [vmem:[#allocation10 + $0x58] sm:$0xff]
    %v3239 = vld [vmem:[#allocation10 + $0x60] sm:$0xff]
    %v3240 = vld [vmem:[#allocation10 + $0x68] sm:$0xff]
    %v3241 = vld [vmem:[#allocation10 + $0x70] sm:$0xff]
    %v3242 = vld [vmem:[#allocation10 + $0x78] sm:$0xff]
    %v3243 = vld [vmem:[#allocation10 + $0x80] sm:$0xff]
    %v3244 = vld [vmem:[#allocation10 + $0x88] sm:$0xff]
    %v3245 = vld [vmem:[#allocation10 + $0x90] sm:$0xff]
    %v3246 = vld [vmem:[#allocation10 + $0x98] sm:$0xff]
    %v3247 = vld [vmem:[#allocation10 + $0xa0] sm:$0xff]
    %v3248 = vld [vmem:[#allocation10 + $0xa8] sm:$0xff]
    %v3249 = vld [vmem:[#allocation10 + $0xb0] sm:$0xff]
    %v3250 = vld [vmem:[#allocation10 + $0xb8] sm:$0xff]
    %v3251 = vld [vmem:[#allocation10 + $0xc0] sm:$0xff]
    %v3252 = vld [vmem:[#allocation10 + $0xc8] sm:$0xff]
    %v3253 = vld [vmem:[#allocation10 + $0xd0] sm:$0xff]
    %v3254 = vld [vmem:[#allocation10 + $0xd8] sm:$0xff]
    %v3255 = vld [vmem:[#allocation10 + $0xe0] sm:$0xff]
    %v3256 = vld [vmem:[#allocation10 + $0xe8] sm:$0xff]
    %v3257 = vld [vmem:[#allocation10 + $0xf0] sm:$0xff]
    %v3258 = vld [vmem:[#allocation10 + $0xf8] sm:$0xff]
    %v3259 = vpack.c.bf16 %v3224, %v3224
    %v3260 = vld [vmem:[#allocation12] sm:$0xff]
    %v3261 = vld [vmem:[#allocation12 + $0x8] sm:$0xff]
    %v3262 = vld [vmem:[#allocation12 + $0x10] sm:$0xff]
    %v3263 = vld [vmem:[#allocation12 + $0x18] sm:$0xff]
    %v3264 = vld [vmem:[#allocation12 + $0x20] sm:$0xff]
    %v3265 = vld [vmem:[#allocation12 + $0x28] sm:$0xff]
    %v3266 = vld [vmem:[#allocation12 + $0x30] sm:$0xff]
    %v3267 = vld [vmem:[#allocation12 + $0x38] sm:$0xff]
    %v3268 = vld [vmem:[#allocation12 + $0x40] sm:$0xff]
    %v3269 = vld [vmem:[#allocation12 + $0x48] sm:$0xff]
    %v3270 = vld [vmem:[#allocation12 + $0x50] sm:$0xff]
    %v3271 = vld [vmem:[#allocation12 + $0x58] sm:$0xff]
    %v3272 = vld [vmem:[#allocation12 + $0x60] sm:$0xff]
    %v3273 = vld [vmem:[#allocation12 + $0x68] sm:$0xff]
    %v3274 = vld [vmem:[#allocation12 + $0x70] sm:$0xff]
    %v3275 = vld [vmem:[#allocation12 + $0x78] sm:$0xff]
    %v3276 = vld [vmem:[#allocation12 + $0x80] sm:$0xff]
    %v3277 = vld [vmem:[#allocation12 + $0x88] sm:$0xff]
    %v3278 = vld [vmem:[#allocation12 + $0x90] sm:$0xff]
    %v3279 = vld [vmem:[#allocation12 + $0x98] sm:$0xff]
    %v3280 = vld [vmem:[#allocation12 + $0xa0] sm:$0xff]
    %v3281 = vld [vmem:[#allocation12 + $0xa8] sm:$0xff]
    %v3282 = vld [vmem:[#allocation12 + $0xb0] sm:$0xff]
    %v3283 = vld [vmem:[#allocation12 + $0xb8] sm:$0xff]
    %v3284 = vld [vmem:[#allocation12 + $0xc0] sm:$0xff]
    %v3285 = vld [vmem:[#allocation12 + $0xc8] sm:$0xff]
    %v3286 = vld [vmem:[#allocation12 + $0xd0] sm:$0xff]
    %v3287 = vld [vmem:[#allocation12 + $0xd8] sm:$0xff]
    %v3288 = vld [vmem:[#allocation12 + $0xe0] sm:$0xff]
    %v3289 = vld [vmem:[#allocation12 + $0xe8] sm:$0xff]
    %v3290 = vld [vmem:[#allocation12 + $0xf0] sm:$0xff]
    %v3291 = vld [vmem:[#allocation12 + $0xf8] sm:$0xff]
    %v3324 = vunpack.c.l.b16 %v3260
    %v3325 = vunpack.c.h.b16 %v3260
    %v3326 = vunpack.c.l.b16 %v3261
    %v3327 = vunpack.c.h.b16 %v3261
    %v3328 = vunpack.c.l.b16 %v3262
    %v3329 = vunpack.c.h.b16 %v3262
    %v3330 = vunpack.c.l.b16 %v3263
    %v3331 = vunpack.c.h.b16 %v3263
    %v3332 = vunpack.c.l.b16 %v3264
    %v3333 = vunpack.c.h.b16 %v3264
    %v3334 = vunpack.c.l.b16 %v3265
    %v3335 = vunpack.c.h.b16 %v3265
    %v3336 = vunpack.c.l.b16 %v3266
    %v3337 = vunpack.c.h.b16 %v3266
    %v3338 = vunpack.c.l.b16 %v3267
    %v3339 = vunpack.c.h.b16 %v3267
    %v3340 = vunpack.c.l.b16 %v3268
    %v3341 = vunpack.c.h.b16 %v3268
    %v3342 = vunpack.c.l.b16 %v3269
    %v3343 = vunpack.c.h.b16 %v3269
    %v3344 = vunpack.c.l.b16 %v3270
    %v3345 = vunpack.c.h.b16 %v3270
    %v3346 = vunpack.c.l.b16 %v3271
    %v3347 = vunpack.c.h.b16 %v3271
    %v3348 = vunpack.c.l.b16 %v3272
    %v3349 = vunpack.c.h.b16 %v3272
    %v3350 = vunpack.c.l.b16 %v3273
    %v3351 = vunpack.c.h.b16 %v3273
    %v3352 = vunpack.c.l.b16 %v3274
    %v3353 = vunpack.c.h.b16 %v3274
    %v3354 = vunpack.c.l.b16 %v3275
    %v3355 = vunpack.c.h.b16 %v3275
    %v3356 = vunpack.c.l.b16 %v3276
    %v3357 = vunpack.c.h.b16 %v3276
    %v3358 = vunpack.c.l.b16 %v3277
    %v3359 = vunpack.c.h.b16 %v3277
    %v3360 = vunpack.c.l.b16 %v3278
    %v3361 = vunpack.c.h.b16 %v3278
    %v3362 = vunpack.c.l.b16 %v3279
    %v3363 = vunpack.c.h.b16 %v3279
    %v3364 = vunpack.c.l.b16 %v3280
    %v3365 = vunpack.c.h.b16 %v3280
    %v3366 = vunpack.c.l.b16 %v3281
    %v3367 = vunpack.c.h.b16 %v3281
    %v3368 = vunpack.c.l.b16 %v3282
    %v3369 = vunpack.c.h.b16 %v3282
    %v3370 = vunpack.c.l.b16 %v3283
    %v3371 = vunpack.c.h.b16 %v3283
    %v3372 = vunpack.c.l.b16 %v3284
    %v3373 = vunpack.c.h.b16 %v3284
    %v3374 = vunpack.c.l.b16 %v3285
    %v3375 = vunpack.c.h.b16 %v3285
    %v3376 = vunpack.c.l.b16 %v3286
    %v3377 = vunpack.c.h.b16 %v3286
    %v3378 = vunpack.c.l.b16 %v3287
    %v3379 = vunpack.c.h.b16 %v3287
    %v3380 = vunpack.c.l.b16 %v3288
    %v3381 = vunpack.c.h.b16 %v3288
    %v3382 = vunpack.c.l.b16 %v3289
    %v3383 = vunpack.c.h.b16 %v3289
    %v3384 = vunpack.c.l.b16 %v3290
    %v3385 = vunpack.c.h.b16 %v3290
    %v3386 = vunpack.c.l.b16 %v3291
    %v3387 = vunpack.c.h.b16 %v3291
    %v3388 = vpack.c.b16 %v3328, %v3324
    %v3389 = vpack.c.b16 %v3329, %v3325
    %v3390 = vpack.c.b16 %v3330, %v3326
    %v3391 = vpack.c.b16 %v3331, %v3327
    %v3392 = vpack.c.b16 %v3336, %v3332
    %v3393 = vpack.c.b16 %v3337, %v3333
    %v3394 = vpack.c.b16 %v3338, %v3334
    %v3395 = vpack.c.b16 %v3339, %v3335
    %v3396 = vpack.c.b16 %v3344, %v3340
    %v3397 = vpack.c.b16 %v3345, %v3341
    %v3398 = vpack.c.b16 %v3346, %v3342
    %v3399 = vpack.c.b16 %v3347, %v3343
    %v3400 = vpack.c.b16 %v3352, %v3348
    %v3401 = vpack.c.b16 %v3353, %v3349
    %v3402 = vpack.c.b16 %v3354, %v3350
    %v3403 = vpack.c.b16 %v3355, %v3351
    %v3404 = vpack.c.b16 %v3360, %v3356
    %v3405 = vpack.c.b16 %v3361, %v3357
    %v3406 = vpack.c.b16 %v3362, %v3358
    %v3407 = vpack.c.b16 %v3363, %v3359
    %v3408 = vpack.c.b16 %v3368, %v3364
    %v3409 = vpack.c.b16 %v3369, %v3365
    %v3410 = vpack.c.b16 %v3370, %v3366
    %v3411 = vpack.c.b16 %v3371, %v3367
    %v3412 = vpack.c.b16 %v3376, %v3372
    %v3413 = vpack.c.b16 %v3377, %v3373
    %v3414 = vpack.c.b16 %v3378, %v3374
    %v3415 = vpack.c.b16 %v3379, %v3375
    %v3416 = vpack.c.b16 %v3384, %v3380
    %v3417 = vpack.c.b16 %v3385, %v3381
    %v3418 = vpack.c.b16 %v3386, %v3382
    %v3419 = vpack.c.b16 %v3387, %v3383
    %3452 = vmatpush.bf16.msra.mxu0 %v3416
    %3453 = vmatpush.bf16.msra.mxu0 %v3412
    %3454 = vmatpush.bf16.msra.mxu0 %v3408
    %3455 = vmatpush.bf16.msra.mxu0 %v3404
    %3456 = vmatpush.bf16.msra.mxu0 %v3400
    %3457 = vmatpush.bf16.msra.mxu0 %v3396
    %3458 = vmatpush.bf16.msra.mxu0 %v3392
    %3459 = vmatpush.bf16.msra.mxu0 %v3388
    %3460 = vmatmul.bf16.gmra.mxu0 %v3259
    %v3461 = vpop.f32.mrf.mxu0
    %v3462 = vadd.f32 0.0, %v3461
    %v3463 = vpop.f32.mrf.mxu0
    %3464 = vdwg.mxu0
    %3465 = vmatpush.bf16.msra.mxu0 %v3417
    %3466 = vmatpush.bf16.msra.mxu0 %v3413
    %3467 = vmatpush.bf16.msra.mxu0 %v3409
    %3468 = vmatpush.bf16.msra.mxu0 %v3405
    %3469 = vmatpush.bf16.msra.mxu0 %v3401
    %3470 = vmatpush.bf16.msra.mxu0 %v3397
    %3471 = vmatpush.bf16.msra.mxu0 %v3393
    %3472 = vmatpush.bf16.msra.mxu0 %v3389
    %3473 = vmatmul.bf16.gmra.mxu0 %v3259
    %v3474 = vpop.f32.mrf.mxu0
    %v3475 = vadd.f32 0.0, %v3474
    %v3476 = vpop.f32.mrf.mxu0
    %3477 = vdwg.mxu0
    %3478 = vmatpush.bf16.msra.mxu0 %v3418
    %3479 = vmatpush.bf16.msra.mxu0 %v3414
    %3480 = vmatpush.bf16.msra.mxu0 %v3410
    %3481 = vmatpush.bf16.msra.mxu0 %v3406
    %3482 = vmatpush.bf16.msra.mxu0 %v3402
    %3483 = vmatpush.bf16.msra.mxu0 %v3398
    %3484 = vmatpush.bf16.msra.mxu0 %v3394
    %3485 = vmatpush.bf16.msra.mxu0 %v3390
    %3486 = vmatmul.bf16.gmra.mxu0 %v3259
    %v3487 = vpop.f32.mrf.mxu0
    %v3488 = vadd.f32 0.0, %v3487
    %v3489 = vpop.f32.mrf.mxu0
    %3490 = vdwg.mxu0
    %3491 = vmatpush.bf16.msra.mxu0 %v3419
    %3492 = vmatpush.bf16.msra.mxu0 %v3415
    %3493 = vmatpush.bf16.msra.mxu0 %v3411
    %3494 = vmatpush.bf16.msra.mxu0 %v3407
    %3495 = vmatpush.bf16.msra.mxu0 %v3403
    %3496 = vmatpush.bf16.msra.mxu0 %v3399
    %3497 = vmatpush.bf16.msra.mxu0 %v3395
    %3498 = vmatpush.bf16.msra.mxu0 %v3391
    %3499 = vmatmul.bf16.gmra.mxu0 %v3259
    %v3500 = vpop.f32.mrf.mxu0
    %v3501 = vadd.f32 0.0, %v3500
    %v3502 = vpop.f32.mrf.mxu0
    %3503 = vdwg.mxu0
    %v3536 = vunpack.c.l.b16 %v3227
    %v3537 = vunpack.c.h.b16 %v3227
    %v3538 = vunpack.c.l.b16 %v3228
    %v3539 = vunpack.c.h.b16 %v3228
    %v3540 = vunpack.c.l.b16 %v3229
    %v3541 = vunpack.c.h.b16 %v3229
    %v3542 = vunpack.c.l.b16 %v3230
    %v3543 = vunpack.c.h.b16 %v3230
    %v3544 = vunpack.c.l.b16 %v3231
    %v3545 = vunpack.c.h.b16 %v3231
    %v3546 = vunpack.c.l.b16 %v3232
    %v3547 = vunpack.c.h.b16 %v3232
    %v3548 = vunpack.c.l.b16 %v3233
    %v3549 = vunpack.c.h.b16 %v3233
    %v3550 = vunpack.c.l.b16 %v3234
    %v3551 = vunpack.c.h.b16 %v3234
    %v3552 = vunpack.c.l.b16 %v3235
    %v3553 = vunpack.c.h.b16 %v3235
    %v3554 = vunpack.c.l.b16 %v3236
    %v3555 = vunpack.c.h.b16 %v3236
    %v3556 = vunpack.c.l.b16 %v3237
    %v3557 = vunpack.c.h.b16 %v3237
    %v3558 = vunpack.c.l.b16 %v3238
    %v3559 = vunpack.c.h.b16 %v3238
    %v3560 = vunpack.c.l.b16 %v3239
    %v3561 = vunpack.c.h.b16 %v3239
    %v3562 = vunpack.c.l.b16 %v3240
    %v3563 = vunpack.c.h.b16 %v3240
    %v3564 = vunpack.c.l.b16 %v3241
    %v3565 = vunpack.c.h.b16 %v3241
    %v3566 = vunpack.c.l.b16 %v3242
    %v3567 = vunpack.c.h.b16 %v3242
    %v3568 = vunpack.c.l.b16 %v3243
    %v3569 = vunpack.c.h.b16 %v3243
    %v3570 = vunpack.c.l.b16 %v3244
    %v3571 = vunpack.c.h.b16 %v3244
    %v3572 = vunpack.c.l.b16 %v3245
    %v3573 = vunpack.c.h.b16 %v3245
    %v3574 = vunpack.c.l.b16 %v3246
    %v3575 = vunpack.c.h.b16 %v3246
    %v3576 = vunpack.c.l.b16 %v3247
    %v3577 = vunpack.c.h.b16 %v3247
    %v3578 = vunpack.c.l.b16 %v3248
    %v3579 = vunpack.c.h.b16 %v3248
    %v3580 = vunpack.c.l.b16 %v3249
    %v3581 = vunpack.c.h.b16 %v3249
    %v3582 = vunpack.c.l.b16 %v3250
    %v3583 = vunpack.c.h.b16 %v3250
    %v3584 = vunpack.c.l.b16 %v3251
    %v3585 = vunpack.c.h.b16 %v3251
    %v3586 = vunpack.c.l.b16 %v3252
    %v3587 = vunpack.c.h.b16 %v3252
    %v3588 = vunpack.c.l.b16 %v3253
    %v3589 = vunpack.c.h.b16 %v3253
    %v3590 = vunpack.c.l.b16 %v3254
    %v3591 = vunpack.c.h.b16 %v3254
    %v3592 = vunpack.c.l.b16 %v3255
    %v3593 = vunpack.c.h.b16 %v3255
    %v3594 = vunpack.c.l.b16 %v3256
    %v3595 = vunpack.c.h.b16 %v3256
    %v3596 = vunpack.c.l.b16 %v3257
    %v3597 = vunpack.c.h.b16 %v3257
    %v3598 = vunpack.c.l.b16 %v3258
    %v3599 = vunpack.c.h.b16 %v3258
    %v3600 = vpack.c.b16 %v3540, %v3536
    %v3601 = vpack.c.b16 %v3541, %v3537
    %v3602 = vpack.c.b16 %v3542, %v3538
    %v3603 = vpack.c.b16 %v3543, %v3539
    %v3604 = vpack.c.b16 %v3548, %v3544
    %v3605 = vpack.c.b16 %v3549, %v3545
    %v3606 = vpack.c.b16 %v3550, %v3546
    %v3607 = vpack.c.b16 %v3551, %v3547
    %v3608 = vpack.c.b16 %v3556, %v3552
    %v3609 = vpack.c.b16 %v3557, %v3553
    %v3610 = vpack.c.b16 %v3558, %v3554
    %v3611 = vpack.c.b16 %v3559, %v3555
    %v3612 = vpack.c.b16 %v3564, %v3560
    %v3613 = vpack.c.b16 %v3565, %v3561
    %v3614 = vpack.c.b16 %v3566, %v3562
    %v3615 = vpack.c.b16 %v3567, %v3563
    %v3616 = vpack.c.b16 %v3572, %v3568
    %v3617 = vpack.c.b16 %v3573, %v3569
    %v3618 = vpack.c.b16 %v3574, %v3570
    %v3619 = vpack.c.b16 %v3575, %v3571
    %v3620 = vpack.c.b16 %v3580, %v3576
    %v3621 = vpack.c.b16 %v3581, %v3577
    %v3622 = vpack.c.b16 %v3582, %v3578
    %v3623 = vpack.c.b16 %v3583, %v3579
    %v3624 = vpack.c.b16 %v3588, %v3584
    %v3625 = vpack.c.b16 %v3589, %v3585
    %v3626 = vpack.c.b16 %v3590, %v3586
    %v3627 = vpack.c.b16 %v3591, %v3587
    %v3628 = vpack.c.b16 %v3596, %v3592
    %v3629 = vpack.c.b16 %v3597, %v3593
    %v3630 = vpack.c.b16 %v3598, %v3594
    %v3631 = vpack.c.b16 %v3599, %v3595
    %3664 = vmatpush.bf16.msra.mxu0 %v3628
    %3665 = vmatpush.bf16.msra.mxu0 %v3624
    %3666 = vmatpush.bf16.msra.mxu0 %v3620
    %3667 = vmatpush.bf16.msra.mxu0 %v3616
    %3668 = vmatpush.bf16.msra.mxu0 %v3612
    %3669 = vmatpush.bf16.msra.mxu0 %v3608
    %3670 = vmatpush.bf16.msra.mxu0 %v3604
    %3671 = vmatpush.bf16.msra.mxu0 %v3600
    %3672 = vmatmul.bf16.gmra.mxu0 %v3226
    %v3673 = vpop.f32.mrf.mxu0
    %v3674 = vadd.f32 %v3462, %v3673
    %v3675 = vpop.f32.mrf.mxu0
    %3676 = vdwg.mxu0
    %3677 = vmatpush.bf16.msra.mxu0 %v3629
    %3678 = vmatpush.bf16.msra.mxu0 %v3625
    %3679 = vmatpush.bf16.msra.mxu0 %v3621
    %3680 = vmatpush.bf16.msra.mxu0 %v3617
    %3681 = vmatpush.bf16.msra.mxu0 %v3613
    %3682 = vmatpush.bf16.msra.mxu0 %v3609
    %3683 = vmatpush.bf16.msra.mxu0 %v3605
    %3684 = vmatpush.bf16.msra.mxu0 %v3601
    %3685 = vmatmul.bf16.gmra.mxu0 %v3226
    %v3686 = vpop.f32.mrf.mxu0
    %v3687 = vadd.f32 %v3475, %v3686
    %v3688 = vpop.f32.mrf.mxu0
    %3689 = vdwg.mxu0
    %3690 = vmatpush.bf16.msra.mxu0 %v3630
    %3691 = vmatpush.bf16.msra.mxu0 %v3626
    %3692 = vmatpush.bf16.msra.mxu0 %v3622
    %3693 = vmatpush.bf16.msra.mxu0 %v3618
    %3694 = vmatpush.bf16.msra.mxu0 %v3614
    %3695 = vmatpush.bf16.msra.mxu0 %v3610
    %3696 = vmatpush.bf16.msra.mxu0 %v3606
    %3697 = vmatpush.bf16.msra.mxu0 %v3602
    %3698 = vmatmul.bf16.gmra.mxu0 %v3226
    %v3699 = vpop.f32.mrf.mxu0
    %v3700 = vadd.f32 %v3488, %v3699
    %v3701 = vpop.f32.mrf.mxu0
    %3702 = vdwg.mxu0
    %3703 = vmatpush.bf16.msra.mxu0 %v3631
    %3704 = vmatpush.bf16.msra.mxu0 %v3627
    %3705 = vmatpush.bf16.msra.mxu0 %v3623
    %3706 = vmatpush.bf16.msra.mxu0 %v3619
    %3707 = vmatpush.bf16.msra.mxu0 %v3615
    %3708 = vmatpush.bf16.msra.mxu0 %v3611
    %3709 = vmatpush.bf16.msra.mxu0 %v3607
    %3710 = vmatpush.bf16.msra.mxu0 %v3603
    %3711 = vmatmul.bf16.gmra.mxu0 %v3226
    %v3712 = vpop.f32.mrf.mxu0
    %v3713 = vadd.f32 %v3501, %v3712
    %v3714 = vpop.f32.mrf.mxu0
    %3715 = vdwg.mxu0
    %v3716 = vadd.f32 %v3674, %v630
    %v3717 = vadd.f32 %v3687, %v631
    %v3718 = vadd.f32 %v3700, %v632
    %v3719 = vadd.f32 %v3713, %v633
    %v3720 = vmul.f32 %v3716, 0.5
    %v3721 = vtanh.pop %v3720
    %v3722 = vmul.f32 %v3721, 0.5
    %v3723 = vadd.f32 %v3722, 0.5
    %v3724 = vmul.f32 %v3717, 0.5
    %v3725 = vtanh.pop %v3724
    %v3726 = vmul.f32 %v3725, 0.5
    %v3727 = vadd.f32 %v3726, 0.5
    %v3728 = vtanh.pop %v3718
    %v3729 = vmul.f32 %v3719, 0.5
    %v3730 = vtanh.pop %v3729
    %v3731 = vmul.f32 %v3730, 0.5
    %v3732 = vadd.f32 %v3731, 0.5
    %v3733 = vmul.f32 %v3727, %v3222
    %v3734 = vmul.f32 %v3723, %v3728
    %v3735 = vadd.f32 %v3733, %v3734
    %v3736 = vtanh.pop %v3735
    %v3737 = vmul.f32 %v3732, %v3736
    %3738 = vst [vmem:[#allocation2 + $0x7] sm:$0x1] %v3735
    %v3739 = vld [vmem:[#allocation2] sm:$0xff]
    %3740 = vst [vmem:[#allocation13] sm:$0xff] %v3739
    // While loop
    $region46: #{tpu_custom_call.1} parent=1 // loop_pre_header
      _
    $region47: #{tpu_custom_call.1} parent=1 // loop_header
      %s3742 = sphi 1, %s7934
      %v3743 = vphi %v3737, %v7928
      %v3744 = vphi %v3735, %v7926
      %p3745 = pphi 0, %p7935
      %p3746 = scmp.lt.s32.totalorder %s3742, 8
      %p3747 = pneg %p3745
      %p3748 = pnand %p3746, %p3747
      %p3749 = pneg %p3748
    $region48: #{tpu_custom_call.1} parent=1 // loop_header_branch
      %3751 = sbr.rel (%p3748) target = $region52
    $region49: #{tpu_custom_call.1} parent=1 // loop_body
      %s3752 = ssub.s32 %s3742, 1
      %s3753 = smul.u32 %s3752, 8
      %s3754 = scalar_lea.vmem [#allocation13], %s3753
      %v3755 = vld [vmem:[%s3754] sm:$0xff]
      %v3756 = vld [vmem:[#allocation3] sm:$0xff]
      %v3757 = vld [vmem:[#allocation3 + $0x8] sm:$0xff]
      %v3758 = vld [vmem:[#allocation3 + $0x10] sm:$0xff]
      %v3759 = vld [vmem:[#allocation3 + $0x18] sm:$0xff]
      %v3760 = vld [vmem:[#allocation3 + $0x20] sm:$0xff]
      %v3761 = vld [vmem:[#allocation3 + $0x28] sm:$0xff]
      %v3762 = vld [vmem:[#allocation3 + $0x30] sm:$0xff]
      %v3763 = vld [vmem:[#allocation3 + $0x38] sm:$0xff]
      %v3764 = vld [vmem:[#allocation3 + $0x40] sm:$0xff]
      %v3765 = vld [vmem:[#allocation3 + $0x48] sm:$0xff]
      %v3766 = vld [vmem:[#allocation3 + $0x50] sm:$0xff]
      %v3767 = vld [vmem:[#allocation3 + $0x58] sm:$0xff]
      %v3768 = vld [vmem:[#allocation3 + $0x60] sm:$0xff]
      %v3769 = vld [vmem:[#allocation3 + $0x68] sm:$0xff]
      %v3770 = vld [vmem:[#allocation3 + $0x70] sm:$0xff]
      %v3771 = vld [vmem:[#allocation3 + $0x78] sm:$0xff]
      %3772 = vmatpush.msra.mxu0 %v3771
      %3773 = vmatpush.msra.mxu0 %v3770
      %3774 = vmatpush.msra.mxu0 %v3769
      %3775 = vmatpush.msra.mxu0 %v3768
      %3776 = vmatpush.msra.mxu0 %v3767
      %3777 = vmatpush.msra.mxu0 %v3766
      %3778 = vmatpush.msra.mxu0 %v3765
      %3779 = vmatpush.msra.mxu0 %v3764
      %3780 = vmatpush.msra.mxu0 %v3763
      %3781 = vmatpush.msra.mxu0 %v3762
      %3782 = vmatpush.msra.mxu0 %v3761
      %3783 = vmatpush.msra.mxu0 %v3760
      %3784 = vmatpush.msra.mxu0 %v3759
      %3785 = vmatpush.msra.mxu0 %v3758
      %3786 = vmatpush.msra.mxu0 %v3757
      %3787 = vmatpush.msra.mxu0 %v3756
      %3788 = vmatmul.f32.gmra.mxu0 %v3755
      %v3789 = vpop.f32.mrf.mxu0
      %v3790 = vadd.f32 0.0, %v3789
      %3791 = vdwg.mxu0
      %v3793 = vperm.slane %v111, 0
      %v3795 = vmul.f32 %v3790, %v3793
      %3796 = vmax.xlane.f32.xlu0 %v3795
      %v3797 = vpop.xlane.xlu0 %3796
      %v3798 = vlaneseq
      %v3799 = vand.u32 %v3798, 127
      %vm3800 = vcmp.eq.f32.partialorder %v3795, %v3797
      %v3801 = vsel %vm3800, %v3799, 128
      %v3802 = vand.u32 %v3801, 65535
      %v3803 = vshra.s32 %v3801, 16
      %v3804 = vcvt.s32.f32 %v3802
      %v3805 = vcvt.s32.f32 %v3803
      %3806 = vmin.xlane.f32.xlu0 %v3805
      %v3807 = vpop.xlane.xlu0 %3806
      %vm3808 = vcmp.eq.f32.partialorder %v3805, %v3807
      %v3809 = vsel %vm3808, %v3804, inf
      %3810 = vmin.xlane.f32.xlu0 %v3809
      %v3811 = vpop.xlane.xlu0 %3810
      %v3812 = vcvt.f32.s32 %v3811
      %v3813 = vcvt.f32.s32 %v3807
      %v3814 = vshll.u32 %v3813, 16
      %v3815 = vadd.s32 %v3814, %v3812
      %vm3816 = vcmp.eq.s32.totalorder %v3815, 1
      %v3817 = vsel %vm3816, 1, 0
      %v3818 = vrot.slane %v3817, 4
      %v3819 = vadd.s32 %v3817, %v3818
      %v3820 = vrot.slane %v3819, 2
      %v3821 = vadd.s32 %v3819, %v3820
      %v3822 = vrot.slane %v3821, 1
      %v3823 = vadd.s32 %v3821, %v3822
      %s3824 = vtos %v3823
      %p3825 = scmp.gt.s32.totalorder %s3824, 0
      %v3826 = vpack.c.bf16 %v3744, %v3744
      %v3827 = vld [vmem:[#allocation10] sm:$0xff]
      %v3828 = vld [vmem:[#allocation10 + $0x8] sm:$0xff]
      %v3829 = vld [vmem:[#allocation10 + $0x10] sm:$0xff]
      %v3830 = vld [vmem:[#allocation10 + $0x18] sm:$0xff]
      %v3831 = vld [vmem:[#allocation10 + $0x20] sm:$0xff]
      %v3832 = vld [vmem:[#allocation10 + $0x28] sm:$0xff]
      %v3833 = vld [vmem:[#allocation10 + $0x30] sm:$0xff]
      %v3834 = vld [vmem:[#allocation10 + $0x38] sm:$0xff]
      %v3835 = vld [vmem:[#allocation10 + $0x40] sm:$0xff]
      %v3836 = vld [vmem:[#allocation10 + $0x48] sm:$0xff]
      %v3837 = vld [vmem:[#allocation10 + $0x50] sm:$0xff]
      %v3838 = vld [vmem:[#allocation10 + $0x58] sm:$0xff]
      %v3839 = vld [vmem:[#allocation10 + $0x60] sm:$0xff]
      %v3840 = vld [vmem:[#allocation10 + $0x68] sm:$0xff]
      %v3841 = vld [vmem:[#allocation10 + $0x70] sm:$0xff]
      %v3842 = vld [vmem:[#allocation10 + $0x78] sm:$0xff]
      %v3843 = vld [vmem:[#allocation10 + $0x80] sm:$0xff]
      %v3844 = vld [vmem:[#allocation10 + $0x88] sm:$0xff]
      %v3845 = vld [vmem:[#allocation10 + $0x90] sm:$0xff]
      %v3846 = vld [vmem:[#allocation10 + $0x98] sm:$0xff]
      %v3847 = vld [vmem:[#allocation10 + $0xa0] sm:$0xff]
      %v3848 = vld [vmem:[#allocation10 + $0xa8] sm:$0xff]
      %v3849 = vld [vmem:[#allocation10 + $0xb0] sm:$0xff]
      %v3850 = vld [vmem:[#allocation10 + $0xb8] sm:$0xff]
      %v3851 = vld [vmem:[#allocation10 + $0xc0] sm:$0xff]
      %v3852 = vld [vmem:[#allocation10 + $0xc8] sm:$0xff]
      %v3853 = vld [vmem:[#allocation10 + $0xd0] sm:$0xff]
      %v3854 = vld [vmem:[#allocation10 + $0xd8] sm:$0xff]
      %v3855 = vld [vmem:[#allocation10 + $0xe0] sm:$0xff]
      %v3856 = vld [vmem:[#allocation10 + $0xe8] sm:$0xff]
      %v3857 = vld [vmem:[#allocation10 + $0xf0] sm:$0xff]
      %v3858 = vld [vmem:[#allocation10 + $0xf8] sm:$0xff]
      %v3859 = vpack.c.bf16 %v3743, %v3743
      %v3860 = vld [vmem:[#allocation12] sm:$0xff]
      %v3861 = vld [vmem:[#allocation12 + $0x8] sm:$0xff]
      %v3862 = vld [vmem:[#allocation12 + $0x10] sm:$0xff]
      %v3863 = vld [vmem:[#allocation12 + $0x18] sm:$0xff]
      %v3864 = vld [vmem:[#allocation12 + $0x20] sm:$0xff]
      %v3865 = vld [vmem:[#allocation12 + $0x28] sm:$0xff]
      %v3866 = vld [vmem:[#allocation12 + $0x30] sm:$0xff]
      %v3867 = vld [vmem:[#allocation12 + $0x38] sm:$0xff]
      %v3868 = vld [vmem:[#allocation12 + $0x40] sm:$0xff]
      %v3869 = vld [vmem:[#allocation12 + $0x48] sm:$0xff]
      %v3870 = vld [vmem:[#allocation12 + $0x50] sm:$0xff]
      %v3871 = vld [vmem:[#allocation12 + $0x58] sm:$0xff]
      %v3872 = vld [vmem:[#allocation12 + $0x60] sm:$0xff]
      %v3873 = vld [vmem:[#allocation12 + $0x68] sm:$0xff]
      %v3874 = vld [vmem:[#allocation12 + $0x70] sm:$0xff]
      %v3875 = vld [vmem:[#allocation12 + $0x78] sm:$0xff]
      %v3876 = vld [vmem:[#allocation12 + $0x80] sm:$0xff]
      %v3877 = vld [vmem:[#allocation12 + $0x88] sm:$0xff]
      %v3878 = vld [vmem:[#allocation12 + $0x90] sm:$0xff]
      %v3879 = vld [vmem:[#allocation12 + $0x98] sm:$0xff]
      %v3880 = vld [vmem:[#allocation12 + $0xa0] sm:$0xff]
      %v3881 = vld [vmem:[#allocation12 + $0xa8] sm:$0xff]
      %v3882 = vld [vmem:[#allocation12 + $0xb0] sm:$0xff]
      %v3883 = vld [vmem:[#allocation12 + $0xb8] sm:$0xff]
      %v3884 = vld [vmem:[#allocation12 + $0xc0] sm:$0xff]
      %v3885 = vld [vmem:[#allocation12 + $0xc8] sm:$0xff]
      %v3886 = vld [vmem:[#allocation12 + $0xd0] sm:$0xff]
      %v3887 = vld [vmem:[#allocation12 + $0xd8] sm:$0xff]
      %v3888 = vld [vmem:[#allocation12 + $0xe0] sm:$0xff]
      %v3889 = vld [vmem:[#allocation12 + $0xe8] sm:$0xff]
      %v3890 = vld [vmem:[#allocation12 + $0xf0] sm:$0xff]
      %v3891 = vld [vmem:[#allocation12 + $0xf8] sm:$0xff]
      %v3924 = vunpack.c.l.b16 %v3860
      %v3925 = vunpack.c.h.b16 %v3860
      %v3926 = vunpack.c.l.b16 %v3861
      %v3927 = vunpack.c.h.b16 %v3861
      %v3928 = vunpack.c.l.b16 %v3862
      %v3929 = vunpack.c.h.b16 %v3862
      %v3930 = vunpack.c.l.b16 %v3863
      %v3931 = vunpack.c.h.b16 %v3863
      %v3932 = vunpack.c.l.b16 %v3864
      %v3933 = vunpack.c.h.b16 %v3864
      %v3934 = vunpack.c.l.b16 %v3865
      %v3935 = vunpack.c.h.b16 %v3865
      %v3936 = vunpack.c.l.b16 %v3866
      %v3937 = vunpack.c.h.b16 %v3866
      %v3938 = vunpack.c.l.b16 %v3867
      %v3939 = vunpack.c.h.b16 %v3867
      %v3940 = vunpack.c.l.b16 %v3868
      %v3941 = vunpack.c.h.b16 %v3868
      %v3942 = vunpack.c.l.b16 %v3869
      %v3943 = vunpack.c.h.b16 %v3869
      %v3944 = vunpack.c.l.b16 %v3870
      %v3945 = vunpack.c.h.b16 %v3870
      %v3946 = vunpack.c.l.b16 %v3871
      %v3947 = vunpack.c.h.b16 %v3871
      %v3948 = vunpack.c.l.b16 %v3872
      %v3949 = vunpack.c.h.b16 %v3872
      %v3950 = vunpack.c.l.b16 %v3873
      %v3951 = vunpack.c.h.b16 %v3873
      %v3952 = vunpack.c.l.b16 %v3874
      %v3953 = vunpack.c.h.b16 %v3874
      %v3954 = vunpack.c.l.b16 %v3875
      %v3955 = vunpack.c.h.b16 %v3875
      %v3956 = vunpack.c.l.b16 %v3876
      %v3957 = vunpack.c.h.b16 %v3876
      %v3958 = vunpack.c.l.b16 %v3877
      %v3959 = vunpack.c.h.b16 %v3877
      %v3960 = vunpack.c.l.b16 %v3878
      %v3961 = vunpack.c.h.b16 %v3878
      %v3962 = vunpack.c.l.b16 %v3879
      %v3963 = vunpack.c.h.b16 %v3879
      %v3964 = vunpack.c.l.b16 %v3880
      %v3965 = vunpack.c.h.b16 %v3880
      %v3966 = vunpack.c.l.b16 %v3881
      %v3967 = vunpack.c.h.b16 %v3881
      %v3968 = vunpack.c.l.b16 %v3882
      %v3969 = vunpack.c.h.b16 %v3882
      %v3970 = vunpack.c.l.b16 %v3883
      %v3971 = vunpack.c.h.b16 %v3883
      %v3972 = vunpack.c.l.b16 %v3884
      %v3973 = vunpack.c.h.b16 %v3884
      %v3974 = vunpack.c.l.b16 %v3885
      %v3975 = vunpack.c.h.b16 %v3885
      %v3976 = vunpack.c.l.b16 %v3886
      %v3977 = vunpack.c.h.b16 %v3886
      %v3978 = vunpack.c.l.b16 %v3887
      %v3979 = vunpack.c.h.b16 %v3887
      %v3980 = vunpack.c.l.b16 %v3888
      %v3981 = vunpack.c.h.b16 %v3888
      %v3982 = vunpack.c.l.b16 %v3889
      %v3983 = vunpack.c.h.b16 %v3889
      %v3984 = vunpack.c.l.b16 %v3890
      %v3985 = vunpack.c.h.b16 %v3890
      %v3986 = vunpack.c.l.b16 %v3891
      %v3987 = vunpack.c.h.b16 %v3891
      %v3988 = vpack.c.b16 %v3928, %v3924
      %v3989 = vpack.c.b16 %v3929, %v3925
      %v3990 = vpack.c.b16 %v3930, %v3926
      %v3991 = vpack.c.b16 %v3931, %v3927
      %v3992 = vpack.c.b16 %v3936, %v3932
      %v3993 = vpack.c.b16 %v3937, %v3933
      %v3994 = vpack.c.b16 %v3938, %v3934
      %v3995 = vpack.c.b16 %v3939, %v3935
      %v3996 = vpack.c.b16 %v3944, %v3940
      %v3997 = vpack.c.b16 %v3945, %v3941
      %v3998 = vpack.c.b16 %v3946, %v3942
      %v3999 = vpack.c.b16 %v3947, %v3943
      %v4000 = vpack.c.b16 %v3952, %v3948
      %v4001 = vpack.c.b16 %v3953, %v3949
      %v4002 = vpack.c.b16 %v3954, %v3950
      %v4003 = vpack.c.b16 %v3955, %v3951
      %v4004 = vpack.c.b16 %v3960, %v3956
      %v4005 = vpack.c.b16 %v3961, %v3957
      %v4006 = vpack.c.b16 %v3962, %v3958
      %v4007 = vpack.c.b16 %v3963, %v3959
      %v4008 = vpack.c.b16 %v3968, %v3964
      %v4009 = vpack.c.b16 %v3969, %v3965
      %v4010 = vpack.c.b16 %v3970, %v3966
      %v4011 = vpack.c.b16 %v3971, %v3967
      %v4012 = vpack.c.b16 %v3976, %v3972
      %v4013 = vpack.c.b16 %v3977, %v3973
      %v4014 = vpack.c.b16 %v3978, %v3974
      %v4015 = vpack.c.b16 %v3979, %v3975
      %v4016 = vpack.c.b16 %v3984, %v3980
      %v4017 = vpack.c.b16 %v3985, %v3981
      %v4018 = vpack.c.b16 %v3986, %v3982
      %v4019 = vpack.c.b16 %v3987, %v3983
      %4052 = vmatpush.bf16.msra.mxu0 %v4016
      %4053 = vmatpush.bf16.msra.mxu0 %v4012
      %4054 = vmatpush.bf16.msra.mxu0 %v4008
      %4055 = vmatpush.bf16.msra.mxu0 %v4004
      %4056 = vmatpush.bf16.msra.mxu0 %v4000
      %4057 = vmatpush.bf16.msra.mxu0 %v3996
      %4058 = vmatpush.bf16.msra.mxu0 %v3992
      %4059 = vmatpush.bf16.msra.mxu0 %v3988
      %4060 = vmatmul.bf16.gmra.mxu0 %v3859
      %v4061 = vpop.f32.mrf.mxu0
      %v4062 = vadd.f32 0.0, %v4061
      %v4063 = vpop.f32.mrf.mxu0
      %4064 = vdwg.mxu0
      %4065 = vmatpush.bf16.msra.mxu0 %v4017
      %4066 = vmatpush.bf16.msra.mxu0 %v4013
      %4067 = vmatpush.bf16.msra.mxu0 %v4009
      %4068 = vmatpush.bf16.msra.mxu0 %v4005
      %4069 = vmatpush.bf16.msra.mxu0 %v4001
      %4070 = vmatpush.bf16.msra.mxu0 %v3997
      %4071 = vmatpush.bf16.msra.mxu0 %v3993
      %4072 = vmatpush.bf16.msra.mxu0 %v3989
      %4073 = vmatmul.bf16.gmra.mxu0 %v3859
      %v4074 = vpop.f32.mrf.mxu0
      %v4075 = vadd.f32 0.0, %v4074
      %v4076 = vpop.f32.mrf.mxu0
      %4077 = vdwg.mxu0
      %4078 = vmatpush.bf16.msra.mxu0 %v4018
      %4079 = vmatpush.bf16.msra.mxu0 %v4014
      %4080 = vmatpush.bf16.msra.mxu0 %v4010
      %4081 = vmatpush.bf16.msra.mxu0 %v4006
      %4082 = vmatpush.bf16.msra.mxu0 %v4002
      %4083 = vmatpush.bf16.msra.mxu0 %v3998
      %4084 = vmatpush.bf16.msra.mxu0 %v3994
      %4085 = vmatpush.bf16.msra.mxu0 %v3990
      %4086 = vmatmul.bf16.gmra.mxu0 %v3859
      %v4087 = vpop.f32.mrf.mxu0
      %v4088 = vadd.f32 0.0, %v4087
      %v4089 = vpop.f32.mrf.mxu0
      %4090 = vdwg.mxu0
      %4091 = vmatpush.bf16.msra.mxu0 %v4019
      %4092 = vmatpush.bf16.msra.mxu0 %v4015
      %4093 = vmatpush.bf16.msra.mxu0 %v4011
      %4094 = vmatpush.bf16.msra.mxu0 %v4007
      %4095 = vmatpush.bf16.msra.mxu0 %v4003
      %4096 = vmatpush.bf16.msra.mxu0 %v3999
      %4097 = vmatpush.bf16.msra.mxu0 %v3995
      %4098 = vmatpush.bf16.msra.mxu0 %v3991
      %4099 = vmatmul.bf16.gmra.mxu0 %v3859
      %v4100 = vpop.f32.mrf.mxu0
      %v4101 = vadd.f32 0.0, %v4100
      %v4102 = vpop.f32.mrf.mxu0
      %4103 = vdwg.mxu0
      %v4136 = vunpack.c.l.b16 %v3827
      %v4137 = vunpack.c.h.b16 %v3827
      %v4138 = vunpack.c.l.b16 %v3828
      %v4139 = vunpack.c.h.b16 %v3828
      %v4140 = vunpack.c.l.b16 %v3829
      %v4141 = vunpack.c.h.b16 %v3829
      %v4142 = vunpack.c.l.b16 %v3830
      %v4143 = vunpack.c.h.b16 %v3830
      %v4144 = vunpack.c.l.b16 %v3831
      %v4145 = vunpack.c.h.b16 %v3831
      %v4146 = vunpack.c.l.b16 %v3832
      %v4147 = vunpack.c.h.b16 %v3832
      %v4148 = vunpack.c.l.b16 %v3833
      %v4149 = vunpack.c.h.b16 %v3833
      %v4150 = vunpack.c.l.b16 %v3834
      %v4151 = vunpack.c.h.b16 %v3834
      %v4152 = vunpack.c.l.b16 %v3835
      %v4153 = vunpack.c.h.b16 %v3835
      %v4154 = vunpack.c.l.b16 %v3836
      %v4155 = vunpack.c.h.b16 %v3836
      %v4156 = vunpack.c.l.b16 %v3837
      %v4157 = vunpack.c.h.b16 %v3837
      %v4158 = vunpack.c.l.b16 %v3838
      %v4159 = vunpack.c.h.b16 %v3838
      %v4160 = vunpack.c.l.b16 %v3839
      %v4161 = vunpack.c.h.b16 %v3839
      %v4162 = vunpack.c.l.b16 %v3840
      %v4163 = vunpack.c.h.b16 %v3840
      %v4164 = vunpack.c.l.b16 %v3841
      %v4165 = vunpack.c.h.b16 %v3841
      %v4166 = vunpack.c.l.b16 %v3842
      %v4167 = vunpack.c.h.b16 %v3842
      %v4168 = vunpack.c.l.b16 %v3843
      %v4169 = vunpack.c.h.b16 %v3843
      %v4170 = vunpack.c.l.b16 %v3844
      %v4171 = vunpack.c.h.b16 %v3844
      %v4172 = vunpack.c.l.b16 %v3845
      %v4173 = vunpack.c.h.b16 %v3845
      %v4174 = vunpack.c.l.b16 %v3846
      %v4175 = vunpack.c.h.b16 %v3846
      %v4176 = vunpack.c.l.b16 %v3847
      %v4177 = vunpack.c.h.b16 %v3847
      %v4178 = vunpack.c.l.b16 %v3848
      %v4179 = vunpack.c.h.b16 %v3848
      %v4180 = vunpack.c.l.b16 %v3849
      %v4181 = vunpack.c.h.b16 %v3849
      %v4182 = vunpack.c.l.b16 %v3850
      %v4183 = vunpack.c.h.b16 %v3850
      %v4184 = vunpack.c.l.b16 %v3851
      %v4185 = vunpack.c.h.b16 %v3851
      %v4186 = vunpack.c.l.b16 %v3852
      %v4187 = vunpack.c.h.b16 %v3852
      %v4188 = vunpack.c.l.b16 %v3853
      %v4189 = vunpack.c.h.b16 %v3853
      %v4190 = vunpack.c.l.b16 %v3854
      %v4191 = vunpack.c.h.b16 %v3854
      %v4192 = vunpack.c.l.b16 %v3855
      %v4193 = vunpack.c.h.b16 %v3855
      %v4194 = vunpack.c.l.b16 %v3856
      %v4195 = vunpack.c.h.b16 %v3856
      %v4196 = vunpack.c.l.b16 %v3857
      %v4197 = vunpack.c.h.b16 %v3857
      %v4198 = vunpack.c.l.b16 %v3858
      %v4199 = vunpack.c.h.b16 %v3858
      %v4200 = vpack.c.b16 %v4140, %v4136
      %v4201 = vpack.c.b16 %v4141, %v4137
      %v4202 = vpack.c.b16 %v4142, %v4138
      %v4203 = vpack.c.b16 %v4143, %v4139
      %v4204 = vpack.c.b16 %v4148, %v4144
      %v4205 = vpack.c.b16 %v4149, %v4145
      %v4206 = vpack.c.b16 %v4150, %v4146
      %v4207 = vpack.c.b16 %v4151, %v4147
      %v4208 = vpack.c.b16 %v4156, %v4152
      %v4209 = vpack.c.b16 %v4157, %v4153
      %v4210 = vpack.c.b16 %v4158, %v4154
      %v4211 = vpack.c.b16 %v4159, %v4155
      %v4212 = vpack.c.b16 %v4164, %v4160
      %v4213 = vpack.c.b16 %v4165, %v4161
      %v4214 = vpack.c.b16 %v4166, %v4162
      %v4215 = vpack.c.b16 %v4167, %v4163
      %v4216 = vpack.c.b16 %v4172, %v4168
      %v4217 = vpack.c.b16 %v4173, %v4169
      %v4218 = vpack.c.b16 %v4174, %v4170
      %v4219 = vpack.c.b16 %v4175, %v4171
      %v4220 = vpack.c.b16 %v4180, %v4176
      %v4221 = vpack.c.b16 %v4181, %v4177
      %v4222 = vpack.c.b16 %v4182, %v4178
      %v4223 = vpack.c.b16 %v4183, %v4179
      %v4224 = vpack.c.b16 %v4188, %v4184
      %v4225 = vpack.c.b16 %v4189, %v4185
      %v4226 = vpack.c.b16 %v4190, %v4186
      %v4227 = vpack.c.b16 %v4191, %v4187
      %v4228 = vpack.c.b16 %v4196, %v4192
      %v4229 = vpack.c.b16 %v4197, %v4193
      %v4230 = vpack.c.b16 %v4198, %v4194
      %v4231 = vpack.c.b16 %v4199, %v4195
      %4264 = vmatpush.bf16.msra.mxu0 %v4228
      %4265 = vmatpush.bf16.msra.mxu0 %v4224
      %4266 = vmatpush.bf16.msra.mxu0 %v4220
      %4267 = vmatpush.bf16.msra.mxu0 %v4216
      %4268 = vmatpush.bf16.msra.mxu0 %v4212
      %4269 = vmatpush.bf16.msra.mxu0 %v4208
      %4270 = vmatpush.bf16.msra.mxu0 %v4204
      %4271 = vmatpush.bf16.msra.mxu0 %v4200
      %4272 = vmatmul.bf16.gmra.mxu0 %v3826
      %v4273 = vpop.f32.mrf.mxu0
      %v4274 = vadd.f32 %v4062, %v4273
      %v4275 = vpop.f32.mrf.mxu0
      %4276 = vdwg.mxu0
      %4277 = vmatpush.bf16.msra.mxu0 %v4229
      %4278 = vmatpush.bf16.msra.mxu0 %v4225
      %4279 = vmatpush.bf16.msra.mxu0 %v4221
      %4280 = vmatpush.bf16.msra.mxu0 %v4217
      %4281 = vmatpush.bf16.msra.mxu0 %v4213
      %4282 = vmatpush.bf16.msra.mxu0 %v4209
      %4283 = vmatpush.bf16.msra.mxu0 %v4205
      %4284 = vmatpush.bf16.msra.mxu0 %v4201
      %4285 = vmatmul.bf16.gmra.mxu0 %v3826
      %v4286 = vpop.f32.mrf.mxu0
      %v4287 = vadd.f32 %v4075, %v4286
      %v4288 = vpop.f32.mrf.mxu0
      %4289 = vdwg.mxu0
      %4290 = vmatpush.bf16.msra.mxu0 %v4230
      %4291 = vmatpush.bf16.msra.mxu0 %v4226
      %4292 = vmatpush.bf16.msra.mxu0 %v4222
      %4293 = vmatpush.bf16.msra.mxu0 %v4218
      %4294 = vmatpush.bf16.msra.mxu0 %v4214
      %4295 = vmatpush.bf16.msra.mxu0 %v4210
      %4296 = vmatpush.bf16.msra.mxu0 %v4206
      %4297 = vmatpush.bf16.msra.mxu0 %v4202
      %4298 = vmatmul.bf16.gmra.mxu0 %v3826
      %v4299 = vpop.f32.mrf.mxu0
      %v4300 = vadd.f32 %v4088, %v4299
      %v4301 = vpop.f32.mrf.mxu0
      %4302 = vdwg.mxu0
      %4303 = vmatpush.bf16.msra.mxu0 %v4231
      %4304 = vmatpush.bf16.msra.mxu0 %v4227
      %4305 = vmatpush.bf16.msra.mxu0 %v4223
      %4306 = vmatpush.bf16.msra.mxu0 %v4219
      %4307 = vmatpush.bf16.msra.mxu0 %v4215
      %4308 = vmatpush.bf16.msra.mxu0 %v4211
      %4309 = vmatpush.bf16.msra.mxu0 %v4207
      %4310 = vmatpush.bf16.msra.mxu0 %v4203
      %4311 = vmatmul.bf16.gmra.mxu0 %v3826
      %v4312 = vpop.f32.mrf.mxu0
      %v4313 = vadd.f32 %v4101, %v4312
      %v4314 = vpop.f32.mrf.mxu0
      %4315 = vdwg.mxu0
      %v4316 = vadd.f32 %v4274, %v630
      %v4317 = vadd.f32 %v4287, %v631
      %v4318 = vadd.f32 %v4300, %v632
      %v4319 = vadd.f32 %v4313, %v633
      %v4320 = vmul.f32 %v4316, 0.5
      %v4321 = vtanh.pop %v4320
      %v4322 = vmul.f32 %v4321, 0.5
      %v4323 = vadd.f32 %v4322, 0.5
      %v4324 = vmul.f32 %v4317, 0.5
      %v4325 = vtanh.pop %v4324
      %v4326 = vmul.f32 %v4325, 0.5
      %v4327 = vadd.f32 %v4326, 0.5
      %v4328 = vtanh.pop %v4318
      %v4329 = vmul.f32 %v4319, 0.5
      %v4330 = vtanh.pop %v4329
      %v4331 = vmul.f32 %v4330, 0.5
      %v4332 = vadd.f32 %v4331, 0.5
      %v4333 = vmul.f32 %v4327, %v3744
      %v4334 = vmul.f32 %v4323, %v4328
      %v4335 = vadd.f32 %v4333, %v4334
      %v4336 = vtanh.pop %v4335
      %v4337 = vmul.f32 %v4332, %v4336
      %4338 = vst [vmem:[#allocation2] sm:$0x1] %v4335
      %v4339 = vpack.c.bf16 %v4335, %v4335
      %v4340 = vld [vmem:[#allocation10] sm:$0xff]
      %v4341 = vld [vmem:[#allocation10 + $0x8] sm:$0xff]
      %v4342 = vld [vmem:[#allocation10 + $0x10] sm:$0xff]
      %v4343 = vld [vmem:[#allocation10 + $0x18] sm:$0xff]
      %v4344 = vld [vmem:[#allocation10 + $0x20] sm:$0xff]
      %v4345 = vld [vmem:[#allocation10 + $0x28] sm:$0xff]
      %v4346 = vld [vmem:[#allocation10 + $0x30] sm:$0xff]
      %v4347 = vld [vmem:[#allocation10 + $0x38] sm:$0xff]
      %v4348 = vld [vmem:[#allocation10 + $0x40] sm:$0xff]
      %v4349 = vld [vmem:[#allocation10 + $0x48] sm:$0xff]
      %v4350 = vld [vmem:[#allocation10 + $0x50] sm:$0xff]
      %v4351 = vld [vmem:[#allocation10 + $0x58] sm:$0xff]
      %v4352 = vld [vmem:[#allocation10 + $0x60] sm:$0xff]
      %v4353 = vld [vmem:[#allocation10 + $0x68] sm:$0xff]
      %v4354 = vld [vmem:[#allocation10 + $0x70] sm:$0xff]
      %v4355 = vld [vmem:[#allocation10 + $0x78] sm:$0xff]
      %v4356 = vld [vmem:[#allocation10 + $0x80] sm:$0xff]
      %v4357 = vld [vmem:[#allocation10 + $0x88] sm:$0xff]
      %v4358 = vld [vmem:[#allocation10 + $0x90] sm:$0xff]
      %v4359 = vld [vmem:[#allocation10 + $0x98] sm:$0xff]
      %v4360 = vld [vmem:[#allocation10 + $0xa0] sm:$0xff]
      %v4361 = vld [vmem:[#allocation10 + $0xa8] sm:$0xff]
      %v4362 = vld [vmem:[#allocation10 + $0xb0] sm:$0xff]
      %v4363 = vld [vmem:[#allocation10 + $0xb8] sm:$0xff]
      %v4364 = vld [vmem:[#allocation10 + $0xc0] sm:$0xff]
      %v4365 = vld [vmem:[#allocation10 + $0xc8] sm:$0xff]
      %v4366 = vld [vmem:[#allocation10 + $0xd0] sm:$0xff]
      %v4367 = vld [vmem:[#allocation10 + $0xd8] sm:$0xff]
      %v4368 = vld [vmem:[#allocation10 + $0xe0] sm:$0xff]
      %v4369 = vld [vmem:[#allocation10 + $0xe8] sm:$0xff]
      %v4370 = vld [vmem:[#allocation10 + $0xf0] sm:$0xff]
      %v4371 = vld [vmem:[#allocation10 + $0xf8] sm:$0xff]
      %v4372 = vpack.c.bf16 %v4337, %v4337
      %v4373 = vld [vmem:[#allocation12] sm:$0xff]
      %v4374 = vld [vmem:[#allocation12 + $0x8] sm:$0xff]
      %v4375 = vld [vmem:[#allocation12 + $0x10] sm:$0xff]
      %v4376 = vld [vmem:[#allocation12 + $0x18] sm:$0xff]
      %v4377 = vld [vmem:[#allocation12 + $0x20] sm:$0xff]
      %v4378 = vld [vmem:[#allocation12 + $0x28] sm:$0xff]
      %v4379 = vld [vmem:[#allocation12 + $0x30] sm:$0xff]
      %v4380 = vld [vmem:[#allocation12 + $0x38] sm:$0xff]
      %v4381 = vld [vmem:[#allocation12 + $0x40] sm:$0xff]
      %v4382 = vld [vmem:[#allocation12 + $0x48] sm:$0xff]
      %v4383 = vld [vmem:[#allocation12 + $0x50] sm:$0xff]
      %v4384 = vld [vmem:[#allocation12 + $0x58] sm:$0xff]
      %v4385 = vld [vmem:[#allocation12 + $0x60] sm:$0xff]
      %v4386 = vld [vmem:[#allocation12 + $0x68] sm:$0xff]
      %v4387 = vld [vmem:[#allocation12 + $0x70] sm:$0xff]
      %v4388 = vld [vmem:[#allocation12 + $0x78] sm:$0xff]
      %v4389 = vld [vmem:[#allocation12 + $0x80] sm:$0xff]
      %v4390 = vld [vmem:[#allocation12 + $0x88] sm:$0xff]
      %v4391 = vld [vmem:[#allocation12 + $0x90] sm:$0xff]
      %v4392 = vld [vmem:[#allocation12 + $0x98] sm:$0xff]
      %v4393 = vld [vmem:[#allocation12 + $0xa0] sm:$0xff]
      %v4394 = vld [vmem:[#allocation12 + $0xa8] sm:$0xff]
      %v4395 = vld [vmem:[#allocation12 + $0xb0] sm:$0xff]
      %v4396 = vld [vmem:[#allocation12 + $0xb8] sm:$0xff]
      %v4397 = vld [vmem:[#allocation12 + $0xc0] sm:$0xff]
      %v4398 = vld [vmem:[#allocation12 + $0xc8] sm:$0xff]
      %v4399 = vld [vmem:[#allocation12 + $0xd0] sm:$0xff]
      %v4400 = vld [vmem:[#allocation12 + $0xd8] sm:$0xff]
      %v4401 = vld [vmem:[#allocation12 + $0xe0] sm:$0xff]
      %v4402 = vld [vmem:[#allocation12 + $0xe8] sm:$0xff]
      %v4403 = vld [vmem:[#allocation12 + $0xf0] sm:$0xff]
      %v4404 = vld [vmem:[#allocation12 + $0xf8] sm:$0xff]
      %v4437 = vunpack.c.l.b16 %v4373
      %v4438 = vunpack.c.h.b16 %v4373
      %v4439 = vunpack.c.l.b16 %v4374
      %v4440 = vunpack.c.h.b16 %v4374
      %v4441 = vunpack.c.l.b16 %v4375
      %v4442 = vunpack.c.h.b16 %v4375
      %v4443 = vunpack.c.l.b16 %v4376
      %v4444 = vunpack.c.h.b16 %v4376
      %v4445 = vunpack.c.l.b16 %v4377
      %v4446 = vunpack.c.h.b16 %v4377
      %v4447 = vunpack.c.l.b16 %v4378
      %v4448 = vunpack.c.h.b16 %v4378
      %v4449 = vunpack.c.l.b16 %v4379
      %v4450 = vunpack.c.h.b16 %v4379
      %v4451 = vunpack.c.l.b16 %v4380
      %v4452 = vunpack.c.h.b16 %v4380
      %v4453 = vunpack.c.l.b16 %v4381
      %v4454 = vunpack.c.h.b16 %v4381
      %v4455 = vunpack.c.l.b16 %v4382
      %v4456 = vunpack.c.h.b16 %v4382
      %v4457 = vunpack.c.l.b16 %v4383
      %v4458 = vunpack.c.h.b16 %v4383
      %v4459 = vunpack.c.l.b16 %v4384
      %v4460 = vunpack.c.h.b16 %v4384
      %v4461 = vunpack.c.l.b16 %v4385
      %v4462 = vunpack.c.h.b16 %v4385
      %v4463 = vunpack.c.l.b16 %v4386
      %v4464 = vunpack.c.h.b16 %v4386
      %v4465 = vunpack.c.l.b16 %v4387
      %v4466 = vunpack.c.h.b16 %v4387
      %v4467 = vunpack.c.l.b16 %v4388
      %v4468 = vunpack.c.h.b16 %v4388
      %v4469 = vunpack.c.l.b16 %v4389
      %v4470 = vunpack.c.h.b16 %v4389
      %v4471 = vunpack.c.l.b16 %v4390
      %v4472 = vunpack.c.h.b16 %v4390
      %v4473 = vunpack.c.l.b16 %v4391
      %v4474 = vunpack.c.h.b16 %v4391
      %v4475 = vunpack.c.l.b16 %v4392
      %v4476 = vunpack.c.h.b16 %v4392
      %v4477 = vunpack.c.l.b16 %v4393
      %v4478 = vunpack.c.h.b16 %v4393
      %v4479 = vunpack.c.l.b16 %v4394
      %v4480 = vunpack.c.h.b16 %v4394
      %v4481 = vunpack.c.l.b16 %v4395
      %v4482 = vunpack.c.h.b16 %v4395
      %v4483 = vunpack.c.l.b16 %v4396
      %v4484 = vunpack.c.h.b16 %v4396
      %v4485 = vunpack.c.l.b16 %v4397
      %v4486 = vunpack.c.h.b16 %v4397
      %v4487 = vunpack.c.l.b16 %v4398
      %v4488 = vunpack.c.h.b16 %v4398
      %v4489 = vunpack.c.l.b16 %v4399
      %v4490 = vunpack.c.h.b16 %v4399
      %v4491 = vunpack.c.l.b16 %v4400
      %v4492 = vunpack.c.h.b16 %v4400
      %v4493 = vunpack.c.l.b16 %v4401
      %v4494 = vunpack.c.h.b16 %v4401
      %v4495 = vunpack.c.l.b16 %v4402
      %v4496 = vunpack.c.h.b16 %v4402
      %v4497 = vunpack.c.l.b16 %v4403
      %v4498 = vunpack.c.h.b16 %v4403
      %v4499 = vunpack.c.l.b16 %v4404
      %v4500 = vunpack.c.h.b16 %v4404
      %v4501 = vpack.c.b16 %v4441, %v4437
      %v4502 = vpack.c.b16 %v4442, %v4438
      %v4503 = vpack.c.b16 %v4443, %v4439
      %v4504 = vpack.c.b16 %v4444, %v4440
      %v4505 = vpack.c.b16 %v4449, %v4445
      %v4506 = vpack.c.b16 %v4450, %v4446
      %v4507 = vpack.c.b16 %v4451, %v4447
      %v4508 = vpack.c.b16 %v4452, %v4448
      %v4509 = vpack.c.b16 %v4457, %v4453
      %v4510 = vpack.c.b16 %v4458, %v4454
      %v4511 = vpack.c.b16 %v4459, %v4455
      %v4512 = vpack.c.b16 %v4460, %v4456
      %v4513 = vpack.c.b16 %v4465, %v4461
      %v4514 = vpack.c.b16 %v4466, %v4462
      %v4515 = vpack.c.b16 %v4467, %v4463
      %v4516 = vpack.c.b16 %v4468, %v4464
      %v4517 = vpack.c.b16 %v4473, %v4469
      %v4518 = vpack.c.b16 %v4474, %v4470
      %v4519 = vpack.c.b16 %v4475, %v4471
      %v4520 = vpack.c.b16 %v4476, %v4472
      %v4521 = vpack.c.b16 %v4481, %v4477
      %v4522 = vpack.c.b16 %v4482, %v4478
      %v4523 = vpack.c.b16 %v4483, %v4479
      %v4524 = vpack.c.b16 %v4484, %v4480
      %v4525 = vpack.c.b16 %v4489, %v4485
      %v4526 = vpack.c.b16 %v4490, %v4486
      %v4527 = vpack.c.b16 %v4491, %v4487
      %v4528 = vpack.c.b16 %v4492, %v4488
      %v4529 = vpack.c.b16 %v4497, %v4493
      %v4530 = vpack.c.b16 %v4498, %v4494
      %v4531 = vpack.c.b16 %v4499, %v4495
      %v4532 = vpack.c.b16 %v4500, %v4496
      %4565 = vmatpush.bf16.msra.mxu0 %v4529
      %4566 = vmatpush.bf16.msra.mxu0 %v4525
      %4567 = vmatpush.bf16.msra.mxu0 %v4521
      %4568 = vmatpush.bf16.msra.mxu0 %v4517
      %4569 = vmatpush.bf16.msra.mxu0 %v4513
      %4570 = vmatpush.bf16.msra.mxu0 %v4509
      %4571 = vmatpush.bf16.msra.mxu0 %v4505
      %4572 = vmatpush.bf16.msra.mxu0 %v4501
      %4573 = vmatmul.bf16.gmra.mxu0 %v4372
      %v4574 = vpop.f32.mrf.mxu0
      %v4575 = vadd.f32 0.0, %v4574
      %v4576 = vpop.f32.mrf.mxu0
      %4577 = vdwg.mxu0
      %4578 = vmatpush.bf16.msra.mxu0 %v4530
      %4579 = vmatpush.bf16.msra.mxu0 %v4526
      %4580 = vmatpush.bf16.msra.mxu0 %v4522
      %4581 = vmatpush.bf16.msra.mxu0 %v4518
      %4582 = vmatpush.bf16.msra.mxu0 %v4514
      %4583 = vmatpush.bf16.msra.mxu0 %v4510
      %4584 = vmatpush.bf16.msra.mxu0 %v4506
      %4585 = vmatpush.bf16.msra.mxu0 %v4502
      %4586 = vmatmul.bf16.gmra.mxu0 %v4372
      %v4587 = vpop.f32.mrf.mxu0
      %v4588 = vadd.f32 0.0, %v4587
      %v4589 = vpop.f32.mrf.mxu0
      %4590 = vdwg.mxu0
      %4591 = vmatpush.bf16.msra.mxu0 %v4531
      %4592 = vmatpush.bf16.msra.mxu0 %v4527
      %4593 = vmatpush.bf16.msra.mxu0 %v4523
      %4594 = vmatpush.bf16.msra.mxu0 %v4519
      %4595 = vmatpush.bf16.msra.mxu0 %v4515
      %4596 = vmatpush.bf16.msra.mxu0 %v4511
      %4597 = vmatpush.bf16.msra.mxu0 %v4507
      %4598 = vmatpush.bf16.msra.mxu0 %v4503
      %4599 = vmatmul.bf16.gmra.mxu0 %v4372
      %v4600 = vpop.f32.mrf.mxu0
      %v4601 = vadd.f32 0.0, %v4600
      %v4602 = vpop.f32.mrf.mxu0
      %4603 = vdwg.mxu0
      %4604 = vmatpush.bf16.msra.mxu0 %v4532
      %4605 = vmatpush.bf16.msra.mxu0 %v4528
      %4606 = vmatpush.bf16.msra.mxu0 %v4524
      %4607 = vmatpush.bf16.msra.mxu0 %v4520
      %4608 = vmatpush.bf16.msra.mxu0 %v4516
      %4609 = vmatpush.bf16.msra.mxu0 %v4512
      %4610 = vmatpush.bf16.msra.mxu0 %v4508
      %4611 = vmatpush.bf16.msra.mxu0 %v4504
      %4612 = vmatmul.bf16.gmra.mxu0 %v4372
      %v4613 = vpop.f32.mrf.mxu0
      %v4614 = vadd.f32 0.0, %v4613
      %v4615 = vpop.f32.mrf.mxu0
      %4616 = vdwg.mxu0
      %v4649 = vunpack.c.l.b16 %v4340
      %v4650 = vunpack.c.h.b16 %v4340
      %v4651 = vunpack.c.l.b16 %v4341
      %v4652 = vunpack.c.h.b16 %v4341
      %v4653 = vunpack.c.l.b16 %v4342
      %v4654 = vunpack.c.h.b16 %v4342
      %v4655 = vunpack.c.l.b16 %v4343
      %v4656 = vunpack.c.h.b16 %v4343
      %v4657 = vunpack.c.l.b16 %v4344
      %v4658 = vunpack.c.h.b16 %v4344
      %v4659 = vunpack.c.l.b16 %v4345
      %v4660 = vunpack.c.h.b16 %v4345
      %v4661 = vunpack.c.l.b16 %v4346
      %v4662 = vunpack.c.h.b16 %v4346
      %v4663 = vunpack.c.l.b16 %v4347
      %v4664 = vunpack.c.h.b16 %v4347
      %v4665 = vunpack.c.l.b16 %v4348
      %v4666 = vunpack.c.h.b16 %v4348
      %v4667 = vunpack.c.l.b16 %v4349
      %v4668 = vunpack.c.h.b16 %v4349
      %v4669 = vunpack.c.l.b16 %v4350
      %v4670 = vunpack.c.h.b16 %v4350
      %v4671 = vunpack.c.l.b16 %v4351
      %v4672 = vunpack.c.h.b16 %v4351
      %v4673 = vunpack.c.l.b16 %v4352
      %v4674 = vunpack.c.h.b16 %v4352
      %v4675 = vunpack.c.l.b16 %v4353
      %v4676 = vunpack.c.h.b16 %v4353
      %v4677 = vunpack.c.l.b16 %v4354
      %v4678 = vunpack.c.h.b16 %v4354
      %v4679 = vunpack.c.l.b16 %v4355
      %v4680 = vunpack.c.h.b16 %v4355
      %v4681 = vunpack.c.l.b16 %v4356
      %v4682 = vunpack.c.h.b16 %v4356
      %v4683 = vunpack.c.l.b16 %v4357
      %v4684 = vunpack.c.h.b16 %v4357
      %v4685 = vunpack.c.l.b16 %v4358
      %v4686 = vunpack.c.h.b16 %v4358
      %v4687 = vunpack.c.l.b16 %v4359
      %v4688 = vunpack.c.h.b16 %v4359
      %v4689 = vunpack.c.l.b16 %v4360
      %v4690 = vunpack.c.h.b16 %v4360
      %v4691 = vunpack.c.l.b16 %v4361
      %v4692 = vunpack.c.h.b16 %v4361
      %v4693 = vunpack.c.l.b16 %v4362
      %v4694 = vunpack.c.h.b16 %v4362
      %v4695 = vunpack.c.l.b16 %v4363
      %v4696 = vunpack.c.h.b16 %v4363
      %v4697 = vunpack.c.l.b16 %v4364
      %v4698 = vunpack.c.h.b16 %v4364
      %v4699 = vunpack.c.l.b16 %v4365
      %v4700 = vunpack.c.h.b16 %v4365
      %v4701 = vunpack.c.l.b16 %v4366
      %v4702 = vunpack.c.h.b16 %v4366
      %v4703 = vunpack.c.l.b16 %v4367
      %v4704 = vunpack.c.h.b16 %v4367
      %v4705 = vunpack.c.l.b16 %v4368
      %v4706 = vunpack.c.h.b16 %v4368
      %v4707 = vunpack.c.l.b16 %v4369
      %v4708 = vunpack.c.h.b16 %v4369
      %v4709 = vunpack.c.l.b16 %v4370
      %v4710 = vunpack.c.h.b16 %v4370
      %v4711 = vunpack.c.l.b16 %v4371
      %v4712 = vunpack.c.h.b16 %v4371
      %v4713 = vpack.c.b16 %v4653, %v4649
      %v4714 = vpack.c.b16 %v4654, %v4650
      %v4715 = vpack.c.b16 %v4655, %v4651
      %v4716 = vpack.c.b16 %v4656, %v4652
      %v4717 = vpack.c.b16 %v4661, %v4657
      %v4718 = vpack.c.b16 %v4662, %v4658
      %v4719 = vpack.c.b16 %v4663, %v4659
      %v4720 = vpack.c.b16 %v4664, %v4660
      %v4721 = vpack.c.b16 %v4669, %v4665
      %v4722 = vpack.c.b16 %v4670, %v4666
      %v4723 = vpack.c.b16 %v4671, %v4667
      %v4724 = vpack.c.b16 %v4672, %v4668
      %v4725 = vpack.c.b16 %v4677, %v4673
      %v4726 = vpack.c.b16 %v4678, %v4674
      %v4727 = vpack.c.b16 %v4679, %v4675
      %v4728 = vpack.c.b16 %v4680, %v4676
      %v4729 = vpack.c.b16 %v4685, %v4681
      %v4730 = vpack.c.b16 %v4686, %v4682
      %v4731 = vpack.c.b16 %v4687, %v4683
      %v4732 = vpack.c.b16 %v4688, %v4684
      %v4733 = vpack.c.b16 %v4693, %v4689
      %v4734 = vpack.c.b16 %v4694, %v4690
      %v4735 = vpack.c.b16 %v4695, %v4691
      %v4736 = vpack.c.b16 %v4696, %v4692
      %v4737 = vpack.c.b16 %v4701, %v4697
      %v4738 = vpack.c.b16 %v4702, %v4698
      %v4739 = vpack.c.b16 %v4703, %v4699
      %v4740 = vpack.c.b16 %v4704, %v4700
      %v4741 = vpack.c.b16 %v4709, %v4705
      %v4742 = vpack.c.b16 %v4710, %v4706
      %v4743 = vpack.c.b16 %v4711, %v4707
      %v4744 = vpack.c.b16 %v4712, %v4708
      %4777 = vmatpush.bf16.msra.mxu0 %v4741
      %4778 = vmatpush.bf16.msra.mxu0 %v4737
      %4779 = vmatpush.bf16.msra.mxu0 %v4733
      %4780 = vmatpush.bf16.msra.mxu0 %v4729
      %4781 = vmatpush.bf16.msra.mxu0 %v4725
      %4782 = vmatpush.bf16.msra.mxu0 %v4721
      %4783 = vmatpush.bf16.msra.mxu0 %v4717
      %4784 = vmatpush.bf16.msra.mxu0 %v4713
      %4785 = vmatmul.bf16.gmra.mxu0 %v4339
      %v4786 = vpop.f32.mrf.mxu0
      %v4787 = vadd.f32 %v4575, %v4786
      %v4788 = vpop.f32.mrf.mxu0
      %4789 = vdwg.mxu0
      %4790 = vmatpush.bf16.msra.mxu0 %v4742
      %4791 = vmatpush.bf16.msra.mxu0 %v4738
      %4792 = vmatpush.bf16.msra.mxu0 %v4734
      %4793 = vmatpush.bf16.msra.mxu0 %v4730
      %4794 = vmatpush.bf16.msra.mxu0 %v4726
      %4795 = vmatpush.bf16.msra.mxu0 %v4722
      %4796 = vmatpush.bf16.msra.mxu0 %v4718
      %4797 = vmatpush.bf16.msra.mxu0 %v4714
      %4798 = vmatmul.bf16.gmra.mxu0 %v4339
      %v4799 = vpop.f32.mrf.mxu0
      %v4800 = vadd.f32 %v4588, %v4799
      %v4801 = vpop.f32.mrf.mxu0
      %4802 = vdwg.mxu0
      %4803 = vmatpush.bf16.msra.mxu0 %v4743
      %4804 = vmatpush.bf16.msra.mxu0 %v4739
      %4805 = vmatpush.bf16.msra.mxu0 %v4735
      %4806 = vmatpush.bf16.msra.mxu0 %v4731
      %4807 = vmatpush.bf16.msra.mxu0 %v4727
      %4808 = vmatpush.bf16.msra.mxu0 %v4723
      %4809 = vmatpush.bf16.msra.mxu0 %v4719
      %4810 = vmatpush.bf16.msra.mxu0 %v4715
      %4811 = vmatmul.bf16.gmra.mxu0 %v4339
      %v4812 = vpop.f32.mrf.mxu0
      %v4813 = vadd.f32 %v4601, %v4812
      %v4814 = vpop.f32.mrf.mxu0
      %4815 = vdwg.mxu0
      %4816 = vmatpush.bf16.msra.mxu0 %v4744
      %4817 = vmatpush.bf16.msra.mxu0 %v4740
      %4818 = vmatpush.bf16.msra.mxu0 %v4736
      %4819 = vmatpush.bf16.msra.mxu0 %v4732
      %4820 = vmatpush.bf16.msra.mxu0 %v4728
      %4821 = vmatpush.bf16.msra.mxu0 %v4724
      %4822 = vmatpush.bf16.msra.mxu0 %v4720
      %4823 = vmatpush.bf16.msra.mxu0 %v4716
      %4824 = vmatmul.bf16.gmra.mxu0 %v4339
      %v4825 = vpop.f32.mrf.mxu0
      %v4826 = vadd.f32 %v4614, %v4825
      %v4827 = vpop.f32.mrf.mxu0
      %4828 = vdwg.mxu0
      %v4829 = vadd.f32 %v4787, %v630
      %v4830 = vadd.f32 %v4800, %v631
      %v4831 = vadd.f32 %v4813, %v632
      %v4832 = vadd.f32 %v4826, %v633
      %v4833 = vmul.f32 %v4829, 0.5
      %v4834 = vtanh.pop %v4833
      %v4835 = vmul.f32 %v4834, 0.5
      %v4836 = vadd.f32 %v4835, 0.5
      %v4837 = vmul.f32 %v4830, 0.5
      %v4838 = vtanh.pop %v4837
      %v4839 = vmul.f32 %v4838, 0.5
      %v4840 = vadd.f32 %v4839, 0.5
      %v4841 = vtanh.pop %v4831
      %v4842 = vmul.f32 %v4832, 0.5
      %v4843 = vtanh.pop %v4842
      %v4844 = vmul.f32 %v4843, 0.5
      %v4845 = vadd.f32 %v4844, 0.5
      %v4846 = vmul.f32 %v4840, %v4335
      %v4847 = vmul.f32 %v4836, %v4841
      %v4848 = vadd.f32 %v4846, %v4847
      %v4849 = vtanh.pop %v4848
      %v4850 = vmul.f32 %v4845, %v4849
      %4851 = vst [vmem:[#allocation2 + $0x1] sm:$0x1] %v4848
      %v4852 = vpack.c.bf16 %v4848, %v4848
      %v4853 = vld [vmem:[#allocation10] sm:$0xff]
      %v4854 = vld [vmem:[#allocation10 + $0x8] sm:$0xff]
      %v4855 = vld [vmem:[#allocation10 + $0x10] sm:$0xff]
      %v4856 = vld [vmem:[#allocation10 + $0x18] sm:$0xff]
      %v4857 = vld [vmem:[#allocation10 + $0x20] sm:$0xff]
      %v4858 = vld [vmem:[#allocation10 + $0x28] sm:$0xff]
      %v4859 = vld [vmem:[#allocation10 + $0x30] sm:$0xff]
      %v4860 = vld [vmem:[#allocation10 + $0x38] sm:$0xff]
      %v4861 = vld [vmem:[#allocation10 + $0x40] sm:$0xff]
      %v4862 = vld [vmem:[#allocation10 + $0x48] sm:$0xff]
      %v4863 = vld [vmem:[#allocation10 + $0x50] sm:$0xff]
      %v4864 = vld [vmem:[#allocation10 + $0x58] sm:$0xff]
      %v4865 = vld [vmem:[#allocation10 + $0x60] sm:$0xff]
      %v4866 = vld [vmem:[#allocation10 + $0x68] sm:$0xff]
      %v4867 = vld [vmem:[#allocation10 + $0x70] sm:$0xff]
      %v4868 = vld [vmem:[#allocation10 + $0x78] sm:$0xff]
      %v4869 = vld [vmem:[#allocation10 + $0x80] sm:$0xff]
      %v4870 = vld [vmem:[#allocation10 + $0x88] sm:$0xff]
      %v4871 = vld [vmem:[#allocation10 + $0x90] sm:$0xff]
      %v4872 = vld [vmem:[#allocation10 + $0x98] sm:$0xff]
      %v4873 = vld [vmem:[#allocation10 + $0xa0] sm:$0xff]
      %v4874 = vld [vmem:[#allocation10 + $0xa8] sm:$0xff]
      %v4875 = vld [vmem:[#allocation10 + $0xb0] sm:$0xff]
      %v4876 = vld [vmem:[#allocation10 + $0xb8] sm:$0xff]
      %v4877 = vld [vmem:[#allocation10 + $0xc0] sm:$0xff]
      %v4878 = vld [vmem:[#allocation10 + $0xc8] sm:$0xff]
      %v4879 = vld [vmem:[#allocation10 + $0xd0] sm:$0xff]
      %v4880 = vld [vmem:[#allocation10 + $0xd8] sm:$0xff]
      %v4881 = vld [vmem:[#allocation10 + $0xe0] sm:$0xff]
      %v4882 = vld [vmem:[#allocation10 + $0xe8] sm:$0xff]
      %v4883 = vld [vmem:[#allocation10 + $0xf0] sm:$0xff]
      %v4884 = vld [vmem:[#allocation10 + $0xf8] sm:$0xff]
      %v4885 = vpack.c.bf16 %v4850, %v4850
      %v4886 = vld [vmem:[#allocation12] sm:$0xff]
      %v4887 = vld [vmem:[#allocation12 + $0x8] sm:$0xff]
      %v4888 = vld [vmem:[#allocation12 + $0x10] sm:$0xff]
      %v4889 = vld [vmem:[#allocation12 + $0x18] sm:$0xff]
      %v4890 = vld [vmem:[#allocation12 + $0x20] sm:$0xff]
      %v4891 = vld [vmem:[#allocation12 + $0x28] sm:$0xff]
      %v4892 = vld [vmem:[#allocation12 + $0x30] sm:$0xff]
      %v4893 = vld [vmem:[#allocation12 + $0x38] sm:$0xff]
      %v4894 = vld [vmem:[#allocation12 + $0x40] sm:$0xff]
      %v4895 = vld [vmem:[#allocation12 + $0x48] sm:$0xff]
      %v4896 = vld [vmem:[#allocation12 + $0x50] sm:$0xff]
      %v4897 = vld [vmem:[#allocation12 + $0x58] sm:$0xff]
      %v4898 = vld [vmem:[#allocation12 + $0x60] sm:$0xff]
      %v4899 = vld [vmem:[#allocation12 + $0x68] sm:$0xff]
      %v4900 = vld [vmem:[#allocation12 + $0x70] sm:$0xff]
      %v4901 = vld [vmem:[#allocation12 + $0x78] sm:$0xff]
      %v4902 = vld [vmem:[#allocation12 + $0x80] sm:$0xff]
      %v4903 = vld [vmem:[#allocation12 + $0x88] sm:$0xff]
      %v4904 = vld [vmem:[#allocation12 + $0x90] sm:$0xff]
      %v4905 = vld [vmem:[#allocation12 + $0x98] sm:$0xff]
      %v4906 = vld [vmem:[#allocation12 + $0xa0] sm:$0xff]
      %v4907 = vld [vmem:[#allocation12 + $0xa8] sm:$0xff]
      %v4908 = vld [vmem:[#allocation12 + $0xb0] sm:$0xff]
      %v4909 = vld [vmem:[#allocation12 + $0xb8] sm:$0xff]
      %v4910 = vld [vmem:[#allocation12 + $0xc0] sm:$0xff]
      %v4911 = vld [vmem:[#allocation12 + $0xc8] sm:$0xff]
      %v4912 = vld [vmem:[#allocation12 + $0xd0] sm:$0xff]
      %v4913 = vld [vmem:[#allocation12 + $0xd8] sm:$0xff]
      %v4914 = vld [vmem:[#allocation12 + $0xe0] sm:$0xff]
      %v4915 = vld [vmem:[#allocation12 + $0xe8] sm:$0xff]
      %v4916 = vld [vmem:[#allocation12 + $0xf0] sm:$0xff]
      %v4917 = vld [vmem:[#allocation12 + $0xf8] sm:$0xff]
      %v4950 = vunpack.c.l.b16 %v4886
      %v4951 = vunpack.c.h.b16 %v4886
      %v4952 = vunpack.c.l.b16 %v4887
      %v4953 = vunpack.c.h.b16 %v4887
      %v4954 = vunpack.c.l.b16 %v4888
      %v4955 = vunpack.c.h.b16 %v4888
      %v4956 = vunpack.c.l.b16 %v4889
      %v4957 = vunpack.c.h.b16 %v4889
      %v4958 = vunpack.c.l.b16 %v4890
      %v4959 = vunpack.c.h.b16 %v4890
      %v4960 = vunpack.c.l.b16 %v4891
      %v4961 = vunpack.c.h.b16 %v4891
      %v4962 = vunpack.c.l.b16 %v4892
      %v4963 = vunpack.c.h.b16 %v4892
      %v4964 = vunpack.c.l.b16 %v4893
      %v4965 = vunpack.c.h.b16 %v4893
      %v4966 = vunpack.c.l.b16 %v4894
      %v4967 = vunpack.c.h.b16 %v4894
      %v4968 = vunpack.c.l.b16 %v4895
      %v4969 = vunpack.c.h.b16 %v4895
      %v4970 = vunpack.c.l.b16 %v4896
      %v4971 = vunpack.c.h.b16 %v4896
      %v4972 = vunpack.c.l.b16 %v4897
      %v4973 = vunpack.c.h.b16 %v4897
      %v4974 = vunpack.c.l.b16 %v4898
      %v4975 = vunpack.c.h.b16 %v4898
      %v4976 = vunpack.c.l.b16 %v4899
      %v4977 = vunpack.c.h.b16 %v4899
      %v4978 = vunpack.c.l.b16 %v4900
      %v4979 = vunpack.c.h.b16 %v4900
      %v4980 = vunpack.c.l.b16 %v4901
      %v4981 = vunpack.c.h.b16 %v4901
      %v4982 = vunpack.c.l.b16 %v4902
      %v4983 = vunpack.c.h.b16 %v4902
      %v4984 = vunpack.c.l.b16 %v4903
      %v4985 = vunpack.c.h.b16 %v4903
      %v4986 = vunpack.c.l.b16 %v4904
      %v4987 = vunpack.c.h.b16 %v4904
      %v4988 = vunpack.c.l.b16 %v4905
      %v4989 = vunpack.c.h.b16 %v4905
      %v4990 = vunpack.c.l.b16 %v4906
      %v4991 = vunpack.c.h.b16 %v4906
      %v4992 = vunpack.c.l.b16 %v4907
      %v4993 = vunpack.c.h.b16 %v4907
      %v4994 = vunpack.c.l.b16 %v4908
      %v4995 = vunpack.c.h.b16 %v4908
      %v4996 = vunpack.c.l.b16 %v4909
      %v4997 = vunpack.c.h.b16 %v4909
      %v4998 = vunpack.c.l.b16 %v4910
      %v4999 = vunpack.c.h.b16 %v4910
      %v5000 = vunpack.c.l.b16 %v4911
      %v5001 = vunpack.c.h.b16 %v4911
      %v5002 = vunpack.c.l.b16 %v4912
      %v5003 = vunpack.c.h.b16 %v4912
      %v5004 = vunpack.c.l.b16 %v4913
      %v5005 = vunpack.c.h.b16 %v4913
      %v5006 = vunpack.c.l.b16 %v4914
      %v5007 = vunpack.c.h.b16 %v4914
      %v5008 = vunpack.c.l.b16 %v4915
      %v5009 = vunpack.c.h.b16 %v4915
      %v5010 = vunpack.c.l.b16 %v4916
      %v5011 = vunpack.c.h.b16 %v4916
      %v5012 = vunpack.c.l.b16 %v4917
      %v5013 = vunpack.c.h.b16 %v4917
      %v5014 = vpack.c.b16 %v4954, %v4950
      %v5015 = vpack.c.b16 %v4955, %v4951
      %v5016 = vpack.c.b16 %v4956, %v4952
      %v5017 = vpack.c.b16 %v4957, %v4953
      %v5018 = vpack.c.b16 %v4962, %v4958
      %v5019 = vpack.c.b16 %v4963, %v4959
      %v5020 = vpack.c.b16 %v4964, %v4960
      %v5021 = vpack.c.b16 %v4965, %v4961
      %v5022 = vpack.c.b16 %v4970, %v4966
      %v5023 = vpack.c.b16 %v4971, %v4967
      %v5024 = vpack.c.b16 %v4972, %v4968
      %v5025 = vpack.c.b16 %v4973, %v4969
      %v5026 = vpack.c.b16 %v4978, %v4974
      %v5027 = vpack.c.b16 %v4979, %v4975
      %v5028 = vpack.c.b16 %v4980, %v4976
      %v5029 = vpack.c.b16 %v4981, %v4977
      %v5030 = vpack.c.b16 %v4986, %v4982
      %v5031 = vpack.c.b16 %v4987, %v4983
      %v5032 = vpack.c.b16 %v4988, %v4984
      %v5033 = vpack.c.b16 %v4989, %v4985
      %v5034 = vpack.c.b16 %v4994, %v4990
      %v5035 = vpack.c.b16 %v4995, %v4991
      %v5036 = vpack.c.b16 %v4996, %v4992
      %v5037 = vpack.c.b16 %v4997, %v4993
      %v5038 = vpack.c.b16 %v5002, %v4998
      %v5039 = vpack.c.b16 %v5003, %v4999
      %v5040 = vpack.c.b16 %v5004, %v5000
      %v5041 = vpack.c.b16 %v5005, %v5001
      %v5042 = vpack.c.b16 %v5010, %v5006
      %v5043 = vpack.c.b16 %v5011, %v5007
      %v5044 = vpack.c.b16 %v5012, %v5008
      %v5045 = vpack.c.b16 %v5013, %v5009
      %5078 = vmatpush.bf16.msra.mxu0 %v5042
      %5079 = vmatpush.bf16.msra.mxu0 %v5038
      %5080 = vmatpush.bf16.msra.mxu0 %v5034
      %5081 = vmatpush.bf16.msra.mxu0 %v5030
      %5082 = vmatpush.bf16.msra.mxu0 %v5026
      %5083 = vmatpush.bf16.msra.mxu0 %v5022
      %5084 = vmatpush.bf16.msra.mxu0 %v5018
      %5085 = vmatpush.bf16.msra.mxu0 %v5014
      %5086 = vmatmul.bf16.gmra.mxu0 %v4885
      %v5087 = vpop.f32.mrf.mxu0
      %v5088 = vadd.f32 0.0, %v5087
      %v5089 = vpop.f32.mrf.mxu0
      %5090 = vdwg.mxu0
      %5091 = vmatpush.bf16.msra.mxu0 %v5043
      %5092 = vmatpush.bf16.msra.mxu0 %v5039
      %5093 = vmatpush.bf16.msra.mxu0 %v5035
      %5094 = vmatpush.bf16.msra.mxu0 %v5031
      %5095 = vmatpush.bf16.msra.mxu0 %v5027
      %5096 = vmatpush.bf16.msra.mxu0 %v5023
      %5097 = vmatpush.bf16.msra.mxu0 %v5019
      %5098 = vmatpush.bf16.msra.mxu0 %v5015
      %5099 = vmatmul.bf16.gmra.mxu0 %v4885
      %v5100 = vpop.f32.mrf.mxu0
      %v5101 = vadd.f32 0.0, %v5100
      %v5102 = vpop.f32.mrf.mxu0
      %5103 = vdwg.mxu0
      %5104 = vmatpush.bf16.msra.mxu0 %v5044
      %5105 = vmatpush.bf16.msra.mxu0 %v5040
      %5106 = vmatpush.bf16.msra.mxu0 %v5036
      %5107 = vmatpush.bf16.msra.mxu0 %v5032
      %5108 = vmatpush.bf16.msra.mxu0 %v5028
      %5109 = vmatpush.bf16.msra.mxu0 %v5024
      %5110 = vmatpush.bf16.msra.mxu0 %v5020
      %5111 = vmatpush.bf16.msra.mxu0 %v5016
      %5112 = vmatmul.bf16.gmra.mxu0 %v4885
      %v5113 = vpop.f32.mrf.mxu0
      %v5114 = vadd.f32 0.0, %v5113
      %v5115 = vpop.f32.mrf.mxu0
      %5116 = vdwg.mxu0
      %5117 = vmatpush.bf16.msra.mxu0 %v5045
      %5118 = vmatpush.bf16.msra.mxu0 %v5041
      %5119 = vmatpush.bf16.msra.mxu0 %v5037
      %5120 = vmatpush.bf16.msra.mxu0 %v5033
      %5121 = vmatpush.bf16.msra.mxu0 %v5029
      %5122 = vmatpush.bf16.msra.mxu0 %v5025
      %5123 = vmatpush.bf16.msra.mxu0 %v5021
      %5124 = vmatpush.bf16.msra.mxu0 %v5017
      %5125 = vmatmul.bf16.gmra.mxu0 %v4885
      %v5126 = vpop.f32.mrf.mxu0
      %v5127 = vadd.f32 0.0, %v5126
      %v5128 = vpop.f32.mrf.mxu0
      %5129 = vdwg.mxu0
      %v5162 = vunpack.c.l.b16 %v4853
      %v5163 = vunpack.c.h.b16 %v4853
      %v5164 = vunpack.c.l.b16 %v4854
      %v5165 = vunpack.c.h.b16 %v4854
      %v5166 = vunpack.c.l.b16 %v4855
      %v5167 = vunpack.c.h.b16 %v4855
      %v5168 = vunpack.c.l.b16 %v4856
      %v5169 = vunpack.c.h.b16 %v4856
      %v5170 = vunpack.c.l.b16 %v4857
      %v5171 = vunpack.c.h.b16 %v4857
      %v5172 = vunpack.c.l.b16 %v4858
      %v5173 = vunpack.c.h.b16 %v4858
      %v5174 = vunpack.c.l.b16 %v4859
      %v5175 = vunpack.c.h.b16 %v4859
      %v5176 = vunpack.c.l.b16 %v4860
      %v5177 = vunpack.c.h.b16 %v4860
      %v5178 = vunpack.c.l.b16 %v4861
      %v5179 = vunpack.c.h.b16 %v4861
      %v5180 = vunpack.c.l.b16 %v4862
      %v5181 = vunpack.c.h.b16 %v4862
      %v5182 = vunpack.c.l.b16 %v4863
      %v5183 = vunpack.c.h.b16 %v4863
      %v5184 = vunpack.c.l.b16 %v4864
      %v5185 = vunpack.c.h.b16 %v4864
      %v5186 = vunpack.c.l.b16 %v4865
      %v5187 = vunpack.c.h.b16 %v4865
      %v5188 = vunpack.c.l.b16 %v4866
      %v5189 = vunpack.c.h.b16 %v4866
      %v5190 = vunpack.c.l.b16 %v4867
      %v5191 = vunpack.c.h.b16 %v4867
      %v5192 = vunpack.c.l.b16 %v4868
      %v5193 = vunpack.c.h.b16 %v4868
      %v5194 = vunpack.c.l.b16 %v4869
      %v5195 = vunpack.c.h.b16 %v4869
      %v5196 = vunpack.c.l.b16 %v4870
      %v5197 = vunpack.c.h.b16 %v4870
      %v5198 = vunpack.c.l.b16 %v4871
      %v5199 = vunpack.c.h.b16 %v4871
      %v5200 = vunpack.c.l.b16 %v4872
      %v5201 = vunpack.c.h.b16 %v4872
      %v5202 = vunpack.c.l.b16 %v4873
      %v5203 = vunpack.c.h.b16 %v4873
      %v5204 = vunpack.c.l.b16 %v4874
      %v5205 = vunpack.c.h.b16 %v4874
      %v5206 = vunpack.c.l.b16 %v4875
      %v5207 = vunpack.c.h.b16 %v4875
      %v5208 = vunpack.c.l.b16 %v4876
      %v5209 = vunpack.c.h.b16 %v4876
      %v5210 = vunpack.c.l.b16 %v4877
      %v5211 = vunpack.c.h.b16 %v4877
      %v5212 = vunpack.c.l.b16 %v4878
      %v5213 = vunpack.c.h.b16 %v4878
      %v5214 = vunpack.c.l.b16 %v4879
      %v5215 = vunpack.c.h.b16 %v4879
      %v5216 = vunpack.c.l.b16 %v4880
      %v5217 = vunpack.c.h.b16 %v4880
      %v5218 = vunpack.c.l.b16 %v4881
      %v5219 = vunpack.c.h.b16 %v4881
      %v5220 = vunpack.c.l.b16 %v4882
      %v5221 = vunpack.c.h.b16 %v4882
      %v5222 = vunpack.c.l.b16 %v4883
      %v5223 = vunpack.c.h.b16 %v4883
      %v5224 = vunpack.c.l.b16 %v4884
      %v5225 = vunpack.c.h.b16 %v4884
      %v5226 = vpack.c.b16 %v5166, %v5162
      %v5227 = vpack.c.b16 %v5167, %v5163
      %v5228 = vpack.c.b16 %v5168, %v5164
      %v5229 = vpack.c.b16 %v5169, %v5165
      %v5230 = vpack.c.b16 %v5174, %v5170
      %v5231 = vpack.c.b16 %v5175, %v5171
      %v5232 = vpack.c.b16 %v5176, %v5172
      %v5233 = vpack.c.b16 %v5177, %v5173
      %v5234 = vpack.c.b16 %v5182, %v5178
      %v5235 = vpack.c.b16 %v5183, %v5179
      %v5236 = vpack.c.b16 %v5184, %v5180
      %v5237 = vpack.c.b16 %v5185, %v5181
      %v5238 = vpack.c.b16 %v5190, %v5186
      %v5239 = vpack.c.b16 %v5191, %v5187
      %v5240 = vpack.c.b16 %v5192, %v5188
      %v5241 = vpack.c.b16 %v5193, %v5189
      %v5242 = vpack.c.b16 %v5198, %v5194
      %v5243 = vpack.c.b16 %v5199, %v5195
      %v5244 = vpack.c.b16 %v5200, %v5196
      %v5245 = vpack.c.b16 %v5201, %v5197
      %v5246 = vpack.c.b16 %v5206, %v5202
      %v5247 = vpack.c.b16 %v5207, %v5203
      %v5248 = vpack.c.b16 %v5208, %v5204
      %v5249 = vpack.c.b16 %v5209, %v5205
      %v5250 = vpack.c.b16 %v5214, %v5210
      %v5251 = vpack.c.b16 %v5215, %v5211
      %v5252 = vpack.c.b16 %v5216, %v5212
      %v5253 = vpack.c.b16 %v5217, %v5213
      %v5254 = vpack.c.b16 %v5222, %v5218
      %v5255 = vpack.c.b16 %v5223, %v5219
      %v5256 = vpack.c.b16 %v5224, %v5220
      %v5257 = vpack.c.b16 %v5225, %v5221
      %5290 = vmatpush.bf16.msra.mxu0 %v5254
      %5291 = vmatpush.bf16.msra.mxu0 %v5250
      %5292 = vmatpush.bf16.msra.mxu0 %v5246
      %5293 = vmatpush.bf16.msra.mxu0 %v5242
      %5294 = vmatpush.bf16.msra.mxu0 %v5238
      %5295 = vmatpush.bf16.msra.mxu0 %v5234
      %5296 = vmatpush.bf16.msra.mxu0 %v5230
      %5297 = vmatpush.bf16.msra.mxu0 %v5226
      %5298 = vmatmul.bf16.gmra.mxu0 %v4852
      %v5299 = vpop.f32.mrf.mxu0
      %v5300 = vadd.f32 %v5088, %v5299
      %v5301 = vpop.f32.mrf.mxu0
      %5302 = vdwg.mxu0
      %5303 = vmatpush.bf16.msra.mxu0 %v5255
      %5304 = vmatpush.bf16.msra.mxu0 %v5251
      %5305 = vmatpush.bf16.msra.mxu0 %v5247
      %5306 = vmatpush.bf16.msra.mxu0 %v5243
      %5307 = vmatpush.bf16.msra.mxu0 %v5239
      %5308 = vmatpush.bf16.msra.mxu0 %v5235
      %5309 = vmatpush.bf16.msra.mxu0 %v5231
      %5310 = vmatpush.bf16.msra.mxu0 %v5227
      %5311 = vmatmul.bf16.gmra.mxu0 %v4852
      %v5312 = vpop.f32.mrf.mxu0
      %v5313 = vadd.f32 %v5101, %v5312
      %v5314 = vpop.f32.mrf.mxu0
      %5315 = vdwg.mxu0
      %5316 = vmatpush.bf16.msra.mxu0 %v5256
      %5317 = vmatpush.bf16.msra.mxu0 %v5252
      %5318 = vmatpush.bf16.msra.mxu0 %v5248
      %5319 = vmatpush.bf16.msra.mxu0 %v5244
      %5320 = vmatpush.bf16.msra.mxu0 %v5240
      %5321 = vmatpush.bf16.msra.mxu0 %v5236
      %5322 = vmatpush.bf16.msra.mxu0 %v5232
      %5323 = vmatpush.bf16.msra.mxu0 %v5228
      %5324 = vmatmul.bf16.gmra.mxu0 %v4852
      %v5325 = vpop.f32.mrf.mxu0
      %v5326 = vadd.f32 %v5114, %v5325
      %v5327 = vpop.f32.mrf.mxu0
      %5328 = vdwg.mxu0
      %5329 = vmatpush.bf16.msra.mxu0 %v5257
      %5330 = vmatpush.bf16.msra.mxu0 %v5253
      %5331 = vmatpush.bf16.msra.mxu0 %v5249
      %5332 = vmatpush.bf16.msra.mxu0 %v5245
      %5333 = vmatpush.bf16.msra.mxu0 %v5241
      %5334 = vmatpush.bf16.msra.mxu0 %v5237
      %5335 = vmatpush.bf16.msra.mxu0 %v5233
      %5336 = vmatpush.bf16.msra.mxu0 %v5229
      %5337 = vmatmul.bf16.gmra.mxu0 %v4852
      %v5338 = vpop.f32.mrf.mxu0
      %v5339 = vadd.f32 %v5127, %v5338
      %v5340 = vpop.f32.mrf.mxu0
      %5341 = vdwg.mxu0
      %v5342 = vadd.f32 %v5300, %v630
      %v5343 = vadd.f32 %v5313, %v631
      %v5344 = vadd.f32 %v5326, %v632
      %v5345 = vadd.f32 %v5339, %v633
      %v5346 = vmul.f32 %v5342, 0.5
      %v5347 = vtanh.pop %v5346
      %v5348 = vmul.f32 %v5347, 0.5
      %v5349 = vadd.f32 %v5348, 0.5
      %v5350 = vmul.f32 %v5343, 0.5
      %v5351 = vtanh.pop %v5350
      %v5352 = vmul.f32 %v5351, 0.5
      %v5353 = vadd.f32 %v5352, 0.5
      %v5354 = vtanh.pop %v5344
      %v5355 = vmul.f32 %v5345, 0.5
      %v5356 = vtanh.pop %v5355
      %v5357 = vmul.f32 %v5356, 0.5
      %v5358 = vadd.f32 %v5357, 0.5
      %v5359 = vmul.f32 %v5353, %v4848
      %v5360 = vmul.f32 %v5349, %v5354
      %v5361 = vadd.f32 %v5359, %v5360
      %v5362 = vtanh.pop %v5361
      %v5363 = vmul.f32 %v5358, %v5362
      %5364 = vst [vmem:[#allocation2 + $0x2] sm:$0x1] %v5361
      %v5365 = vpack.c.bf16 %v5361, %v5361
      %v5366 = vld [vmem:[#allocation10] sm:$0xff]
      %v5367 = vld [vmem:[#allocation10 + $0x8] sm:$0xff]
      %v5368 = vld [vmem:[#allocation10 + $0x10] sm:$0xff]
      %v5369 = vld [vmem:[#allocation10 + $0x18] sm:$0xff]
      %v5370 = vld [vmem:[#allocation10 + $0x20] sm:$0xff]
      %v5371 = vld [vmem:[#allocation10 + $0x28] sm:$0xff]
      %v5372 = vld [vmem:[#allocation10 + $0x30] sm:$0xff]
      %v5373 = vld [vmem:[#allocation10 + $0x38] sm:$0xff]
      %v5374 = vld [vmem:[#allocation10 + $0x40] sm:$0xff]
      %v5375 = vld [vmem:[#allocation10 + $0x48] sm:$0xff]
      %v5376 = vld [vmem:[#allocation10 + $0x50] sm:$0xff]
      %v5377 = vld [vmem:[#allocation10 + $0x58] sm:$0xff]
      %v5378 = vld [vmem:[#allocation10 + $0x60] sm:$0xff]
      %v5379 = vld [vmem:[#allocation10 + $0x68] sm:$0xff]
      %v5380 = vld [vmem:[#allocation10 + $0x70] sm:$0xff]
      %v5381 = vld [vmem:[#allocation10 + $0x78] sm:$0xff]
      %v5382 = vld [vmem:[#allocation10 + $0x80] sm:$0xff]
      %v5383 = vld [vmem:[#allocation10 + $0x88] sm:$0xff]
      %v5384 = vld [vmem:[#allocation10 + $0x90] sm:$0xff]
      %v5385 = vld [vmem:[#allocation10 + $0x98] sm:$0xff]
      %v5386 = vld [vmem:[#allocation10 + $0xa0] sm:$0xff]
      %v5387 = vld [vmem:[#allocation10 + $0xa8] sm:$0xff]
      %v5388 = vld [vmem:[#allocation10 + $0xb0] sm:$0xff]
      %v5389 = vld [vmem:[#allocation10 + $0xb8] sm:$0xff]
      %v5390 = vld [vmem:[#allocation10 + $0xc0] sm:$0xff]
      %v5391 = vld [vmem:[#allocation10 + $0xc8] sm:$0xff]
      %v5392 = vld [vmem:[#allocation10 + $0xd0] sm:$0xff]
      %v5393 = vld [vmem:[#allocation10 + $0xd8] sm:$0xff]
      %v5394 = vld [vmem:[#allocation10 + $0xe0] sm:$0xff]
      %v5395 = vld [vmem:[#allocation10 + $0xe8] sm:$0xff]
      %v5396 = vld [vmem:[#allocation10 + $0xf0] sm:$0xff]
      %v5397 = vld [vmem:[#allocation10 + $0xf8] sm:$0xff]
      %v5398 = vpack.c.bf16 %v5363, %v5363
      %v5399 = vld [vmem:[#allocation12] sm:$0xff]
      %v5400 = vld [vmem:[#allocation12 + $0x8] sm:$0xff]
      %v5401 = vld [vmem:[#allocation12 + $0x10] sm:$0xff]
      %v5402 = vld [vmem:[#allocation12 + $0x18] sm:$0xff]
      %v5403 = vld [vmem:[#allocation12 + $0x20] sm:$0xff]
      %v5404 = vld [vmem:[#allocation12 + $0x28] sm:$0xff]
      %v5405 = vld [vmem:[#allocation12 + $0x30] sm:$0xff]
      %v5406 = vld [vmem:[#allocation12 + $0x38] sm:$0xff]
      %v5407 = vld [vmem:[#allocation12 + $0x40] sm:$0xff]
      %v5408 = vld [vmem:[#allocation12 + $0x48] sm:$0xff]
      %v5409 = vld [vmem:[#allocation12 + $0x50] sm:$0xff]
      %v5410 = vld [vmem:[#allocation12 + $0x58] sm:$0xff]
      %v5411 = vld [vmem:[#allocation12 + $0x60] sm:$0xff]
      %v5412 = vld [vmem:[#allocation12 + $0x68] sm:$0xff]
      %v5413 = vld [vmem:[#allocation12 + $0x70] sm:$0xff]
      %v5414 = vld [vmem:[#allocation12 + $0x78] sm:$0xff]
      %v5415 = vld [vmem:[#allocation12 + $0x80] sm:$0xff]
      %v5416 = vld [vmem:[#allocation12 + $0x88] sm:$0xff]
      %v5417 = vld [vmem:[#allocation12 + $0x90] sm:$0xff]
      %v5418 = vld [vmem:[#allocation12 + $0x98] sm:$0xff]
      %v5419 = vld [vmem:[#allocation12 + $0xa0] sm:$0xff]
      %v5420 = vld [vmem:[#allocation12 + $0xa8] sm:$0xff]
      %v5421 = vld [vmem:[#allocation12 + $0xb0] sm:$0xff]
      %v5422 = vld [vmem:[#allocation12 + $0xb8] sm:$0xff]
      %v5423 = vld [vmem:[#allocation12 + $0xc0] sm:$0xff]
      %v5424 = vld [vmem:[#allocation12 + $0xc8] sm:$0xff]
      %v5425 = vld [vmem:[#allocation12 + $0xd0] sm:$0xff]
      %v5426 = vld [vmem:[#allocation12 + $0xd8] sm:$0xff]
      %v5427 = vld [vmem:[#allocation12 + $0xe0] sm:$0xff]
      %v5428 = vld [vmem:[#allocation12 + $0xe8] sm:$0xff]
      %v5429 = vld [vmem:[#allocation12 + $0xf0] sm:$0xff]
      %v5430 = vld [vmem:[#allocation12 + $0xf8] sm:$0xff]
      %v5463 = vunpack.c.l.b16 %v5399
      %v5464 = vunpack.c.h.b16 %v5399
      %v5465 = vunpack.c.l.b16 %v5400
      %v5466 = vunpack.c.h.b16 %v5400
      %v5467 = vunpack.c.l.b16 %v5401
      %v5468 = vunpack.c.h.b16 %v5401
      %v5469 = vunpack.c.l.b16 %v5402
      %v5470 = vunpack.c.h.b16 %v5402
      %v5471 = vunpack.c.l.b16 %v5403
      %v5472 = vunpack.c.h.b16 %v5403
      %v5473 = vunpack.c.l.b16 %v5404
      %v5474 = vunpack.c.h.b16 %v5404
      %v5475 = vunpack.c.l.b16 %v5405
      %v5476 = vunpack.c.h.b16 %v5405
      %v5477 = vunpack.c.l.b16 %v5406
      %v5478 = vunpack.c.h.b16 %v5406
      %v5479 = vunpack.c.l.b16 %v5407
      %v5480 = vunpack.c.h.b16 %v5407
      %v5481 = vunpack.c.l.b16 %v5408
      %v5482 = vunpack.c.h.b16 %v5408
      %v5483 = vunpack.c.l.b16 %v5409
      %v5484 = vunpack.c.h.b16 %v5409
      %v5485 = vunpack.c.l.b16 %v5410
      %v5486 = vunpack.c.h.b16 %v5410
      %v5487 = vunpack.c.l.b16 %v5411
      %v5488 = vunpack.c.h.b16 %v5411
      %v5489 = vunpack.c.l.b16 %v5412
      %v5490 = vunpack.c.h.b16 %v5412
      %v5491 = vunpack.c.l.b16 %v5413
      %v5492 = vunpack.c.h.b16 %v5413
      %v5493 = vunpack.c.l.b16 %v5414
      %v5494 = vunpack.c.h.b16 %v5414
      %v5495 = vunpack.c.l.b16 %v5415
      %v5496 = vunpack.c.h.b16 %v5415
      %v5497 = vunpack.c.l.b16 %v5416
      %v5498 = vunpack.c.h.b16 %v5416
      %v5499 = vunpack.c.l.b16 %v5417
      %v5500 = vunpack.c.h.b16 %v5417
      %v5501 = vunpack.c.l.b16 %v5418
      %v5502 = vunpack.c.h.b16 %v5418
      %v5503 = vunpack.c.l.b16 %v5419
      %v5504 = vunpack.c.h.b16 %v5419
      %v5505 = vunpack.c.l.b16 %v5420
      %v5506 = vunpack.c.h.b16 %v5420
      %v5507 = vunpack.c.l.b16 %v5421
      %v5508 = vunpack.c.h.b16 %v5421
      %v5509 = vunpack.c.l.b16 %v5422
      %v5510 = vunpack.c.h.b16 %v5422
      %v5511 = vunpack.c.l.b16 %v5423
      %v5512 = vunpack.c.h.b16 %v5423
      %v5513 = vunpack.c.l.b16 %v5424
      %v5514 = vunpack.c.h.b16 %v5424
      %v5515 = vunpack.c.l.b16 %v5425
      %v5516 = vunpack.c.h.b16 %v5425
      %v5517 = vunpack.c.l.b16 %v5426
      %v5518 = vunpack.c.h.b16 %v5426
      %v5519 = vunpack.c.l.b16 %v5427
      %v5520 = vunpack.c.h.b16 %v5427
      %v5521 = vunpack.c.l.b16 %v5428
      %v5522 = vunpack.c.h.b16 %v5428
      %v5523 = vunpack.c.l.b16 %v5429
      %v5524 = vunpack.c.h.b16 %v5429
      %v5525 = vunpack.c.l.b16 %v5430
      %v5526 = vunpack.c.h.b16 %v5430
      %v5527 = vpack.c.b16 %v5467, %v5463
      %v5528 = vpack.c.b16 %v5468, %v5464
      %v5529 = vpack.c.b16 %v5469, %v5465
      %v5530 = vpack.c.b16 %v5470, %v5466
      %v5531 = vpack.c.b16 %v5475, %v5471
      %v5532 = vpack.c.b16 %v5476, %v5472
      %v5533 = vpack.c.b16 %v5477, %v5473
      %v5534 = vpack.c.b16 %v5478, %v5474
      %v5535 = vpack.c.b16 %v5483, %v5479
      %v5536 = vpack.c.b16 %v5484, %v5480
      %v5537 = vpack.c.b16 %v5485, %v5481
      %v5538 = vpack.c.b16 %v5486, %v5482
      %v5539 = vpack.c.b16 %v5491, %v5487
      %v5540 = vpack.c.b16 %v5492, %v5488
      %v5541 = vpack.c.b16 %v5493, %v5489
      %v5542 = vpack.c.b16 %v5494, %v5490
      %v5543 = vpack.c.b16 %v5499, %v5495
      %v5544 = vpack.c.b16 %v5500, %v5496
      %v5545 = vpack.c.b16 %v5501, %v5497
      %v5546 = vpack.c.b16 %v5502, %v5498
      %v5547 = vpack.c.b16 %v5507, %v5503
      %v5548 = vpack.c.b16 %v5508, %v5504
      %v5549 = vpack.c.b16 %v5509, %v5505
      %v5550 = vpack.c.b16 %v5510, %v5506
      %v5551 = vpack.c.b16 %v5515, %v5511
      %v5552 = vpack.c.b16 %v5516, %v5512
      %v5553 = vpack.c.b16 %v5517, %v5513
      %v5554 = vpack.c.b16 %v5518, %v5514
      %v5555 = vpack.c.b16 %v5523, %v5519
      %v5556 = vpack.c.b16 %v5524, %v5520
      %v5557 = vpack.c.b16 %v5525, %v5521
      %v5558 = vpack.c.b16 %v5526, %v5522
      %5591 = vmatpush.bf16.msra.mxu0 %v5555
      %5592 = vmatpush.bf16.msra.mxu0 %v5551
      %5593 = vmatpush.bf16.msra.mxu0 %v5547
      %5594 = vmatpush.bf16.msra.mxu0 %v5543
      %5595 = vmatpush.bf16.msra.mxu0 %v5539
      %5596 = vmatpush.bf16.msra.mxu0 %v5535
      %5597 = vmatpush.bf16.msra.mxu0 %v5531
      %5598 = vmatpush.bf16.msra.mxu0 %v5527
      %5599 = vmatmul.bf16.gmra.mxu0 %v5398
      %v5600 = vpop.f32.mrf.mxu0
      %v5601 = vadd.f32 0.0, %v5600
      %v5602 = vpop.f32.mrf.mxu0
      %5603 = vdwg.mxu0
      %5604 = vmatpush.bf16.msra.mxu0 %v5556
      %5605 = vmatpush.bf16.msra.mxu0 %v5552
      %5606 = vmatpush.bf16.msra.mxu0 %v5548
      %5607 = vmatpush.bf16.msra.mxu0 %v5544
      %5608 = vmatpush.bf16.msra.mxu0 %v5540
      %5609 = vmatpush.bf16.msra.mxu0 %v5536
      %5610 = vmatpush.bf16.msra.mxu0 %v5532
      %5611 = vmatpush.bf16.msra.mxu0 %v5528
      %5612 = vmatmul.bf16.gmra.mxu0 %v5398
      %v5613 = vpop.f32.mrf.mxu0
      %v5614 = vadd.f32 0.0, %v5613
      %v5615 = vpop.f32.mrf.mxu0
      %5616 = vdwg.mxu0
      %5617 = vmatpush.bf16.msra.mxu0 %v5557
      %5618 = vmatpush.bf16.msra.mxu0 %v5553
      %5619 = vmatpush.bf16.msra.mxu0 %v5549
      %5620 = vmatpush.bf16.msra.mxu0 %v5545
      %5621 = vmatpush.bf16.msra.mxu0 %v5541
      %5622 = vmatpush.bf16.msra.mxu0 %v5537
      %5623 = vmatpush.bf16.msra.mxu0 %v5533
      %5624 = vmatpush.bf16.msra.mxu0 %v5529
      %5625 = vmatmul.bf16.gmra.mxu0 %v5398
      %v5626 = vpop.f32.mrf.mxu0
      %v5627 = vadd.f32 0.0, %v5626
      %v5628 = vpop.f32.mrf.mxu0
      %5629 = vdwg.mxu0
      %5630 = vmatpush.bf16.msra.mxu0 %v5558
      %5631 = vmatpush.bf16.msra.mxu0 %v5554
      %5632 = vmatpush.bf16.msra.mxu0 %v5550
      %5633 = vmatpush.bf16.msra.mxu0 %v5546
      %5634 = vmatpush.bf16.msra.mxu0 %v5542
      %5635 = vmatpush.bf16.msra.mxu0 %v5538
      %5636 = vmatpush.bf16.msra.mxu0 %v5534
      %5637 = vmatpush.bf16.msra.mxu0 %v5530
      %5638 = vmatmul.bf16.gmra.mxu0 %v5398
      %v5639 = vpop.f32.mrf.mxu0
      %v5640 = vadd.f32 0.0, %v5639
      %v5641 = vpop.f32.mrf.mxu0
      %5642 = vdwg.mxu0
      %v5675 = vunpack.c.l.b16 %v5366
      %v5676 = vunpack.c.h.b16 %v5366
      %v5677 = vunpack.c.l.b16 %v5367
      %v5678 = vunpack.c.h.b16 %v5367
      %v5679 = vunpack.c.l.b16 %v5368
      %v5680 = vunpack.c.h.b16 %v5368
      %v5681 = vunpack.c.l.b16 %v5369
      %v5682 = vunpack.c.h.b16 %v5369
      %v5683 = vunpack.c.l.b16 %v5370
      %v5684 = vunpack.c.h.b16 %v5370
      %v5685 = vunpack.c.l.b16 %v5371
      %v5686 = vunpack.c.h.b16 %v5371
      %v5687 = vunpack.c.l.b16 %v5372
      %v5688 = vunpack.c.h.b16 %v5372
      %v5689 = vunpack.c.l.b16 %v5373
      %v5690 = vunpack.c.h.b16 %v5373
      %v5691 = vunpack.c.l.b16 %v5374
      %v5692 = vunpack.c.h.b16 %v5374
      %v5693 = vunpack.c.l.b16 %v5375
      %v5694 = vunpack.c.h.b16 %v5375
      %v5695 = vunpack.c.l.b16 %v5376
      %v5696 = vunpack.c.h.b16 %v5376
      %v5697 = vunpack.c.l.b16 %v5377
      %v5698 = vunpack.c.h.b16 %v5377
      %v5699 = vunpack.c.l.b16 %v5378
      %v5700 = vunpack.c.h.b16 %v5378
      %v5701 = vunpack.c.l.b16 %v5379
      %v5702 = vunpack.c.h.b16 %v5379
      %v5703 = vunpack.c.l.b16 %v5380
      %v5704 = vunpack.c.h.b16 %v5380
      %v5705 = vunpack.c.l.b16 %v5381
      %v5706 = vunpack.c.h.b16 %v5381
      %v5707 = vunpack.c.l.b16 %v5382
      %v5708 = vunpack.c.h.b16 %v5382
      %v5709 = vunpack.c.l.b16 %v5383
      %v5710 = vunpack.c.h.b16 %v5383
      %v5711 = vunpack.c.l.b16 %v5384
      %v5712 = vunpack.c.h.b16 %v5384
      %v5713 = vunpack.c.l.b16 %v5385
      %v5714 = vunpack.c.h.b16 %v5385
      %v5715 = vunpack.c.l.b16 %v5386
      %v5716 = vunpack.c.h.b16 %v5386
      %v5717 = vunpack.c.l.b16 %v5387
      %v5718 = vunpack.c.h.b16 %v5387
      %v5719 = vunpack.c.l.b16 %v5388
      %v5720 = vunpack.c.h.b16 %v5388
      %v5721 = vunpack.c.l.b16 %v5389
      %v5722 = vunpack.c.h.b16 %v5389
      %v5723 = vunpack.c.l.b16 %v5390
      %v5724 = vunpack.c.h.b16 %v5390
      %v5725 = vunpack.c.l.b16 %v5391
      %v5726 = vunpack.c.h.b16 %v5391
      %v5727 = vunpack.c.l.b16 %v5392
      %v5728 = vunpack.c.h.b16 %v5392
      %v5729 = vunpack.c.l.b16 %v5393
      %v5730 = vunpack.c.h.b16 %v5393
      %v5731 = vunpack.c.l.b16 %v5394
      %v5732 = vunpack.c.h.b16 %v5394
      %v5733 = vunpack.c.l.b16 %v5395
      %v5734 = vunpack.c.h.b16 %v5395
      %v5735 = vunpack.c.l.b16 %v5396
      %v5736 = vunpack.c.h.b16 %v5396
      %v5737 = vunpack.c.l.b16 %v5397
      %v5738 = vunpack.c.h.b16 %v5397
      %v5739 = vpack.c.b16 %v5679, %v5675
      %v5740 = vpack.c.b16 %v5680, %v5676
      %v5741 = vpack.c.b16 %v5681, %v5677
      %v5742 = vpack.c.b16 %v5682, %v5678
      %v5743 = vpack.c.b16 %v5687, %v5683
      %v5744 = vpack.c.b16 %v5688, %v5684
      %v5745 = vpack.c.b16 %v5689, %v5685
      %v5746 = vpack.c.b16 %v5690, %v5686
      %v5747 = vpack.c.b16 %v5695, %v5691
      %v5748 = vpack.c.b16 %v5696, %v5692
      %v5749 = vpack.c.b16 %v5697, %v5693
      %v5750 = vpack.c.b16 %v5698, %v5694
      %v5751 = vpack.c.b16 %v5703, %v5699
      %v5752 = vpack.c.b16 %v5704, %v5700
      %v5753 = vpack.c.b16 %v5705, %v5701
      %v5754 = vpack.c.b16 %v5706, %v5702
      %v5755 = vpack.c.b16 %v5711, %v5707
      %v5756 = vpack.c.b16 %v5712, %v5708
      %v5757 = vpack.c.b16 %v5713, %v5709
      %v5758 = vpack.c.b16 %v5714, %v5710
      %v5759 = vpack.c.b16 %v5719, %v5715
      %v5760 = vpack.c.b16 %v5720, %v5716
      %v5761 = vpack.c.b16 %v5721, %v5717
      %v5762 = vpack.c.b16 %v5722, %v5718
      %v5763 = vpack.c.b16 %v5727, %v5723
      %v5764 = vpack.c.b16 %v5728, %v5724
      %v5765 = vpack.c.b16 %v5729, %v5725
      %v5766 = vpack.c.b16 %v5730, %v5726
      %v5767 = vpack.c.b16 %v5735, %v5731
      %v5768 = vpack.c.b16 %v5736, %v5732
      %v5769 = vpack.c.b16 %v5737, %v5733
      %v5770 = vpack.c.b16 %v5738, %v5734
      %5803 = vmatpush.bf16.msra.mxu0 %v5767
      %5804 = vmatpush.bf16.msra.mxu0 %v5763
      %5805 = vmatpush.bf16.msra.mxu0 %v5759
      %5806 = vmatpush.bf16.msra.mxu0 %v5755
      %5807 = vmatpush.bf16.msra.mxu0 %v5751
      %5808 = vmatpush.bf16.msra.mxu0 %v5747
      %5809 = vmatpush.bf16.msra.mxu0 %v5743
      %5810 = vmatpush.bf16.msra.mxu0 %v5739
      %5811 = vmatmul.bf16.gmra.mxu0 %v5365
      %v5812 = vpop.f32.mrf.mxu0
      %v5813 = vadd.f32 %v5601, %v5812
      %v5814 = vpop.f32.mrf.mxu0
      %5815 = vdwg.mxu0
      %5816 = vmatpush.bf16.msra.mxu0 %v5768
      %5817 = vmatpush.bf16.msra.mxu0 %v5764
      %5818 = vmatpush.bf16.msra.mxu0 %v5760
      %5819 = vmatpush.bf16.msra.mxu0 %v5756
      %5820 = vmatpush.bf16.msra.mxu0 %v5752
      %5821 = vmatpush.bf16.msra.mxu0 %v5748
      %5822 = vmatpush.bf16.msra.mxu0 %v5744
      %5823 = vmatpush.bf16.msra.mxu0 %v5740
      %5824 = vmatmul.bf16.gmra.mxu0 %v5365
      %v5825 = vpop.f32.mrf.mxu0
      %v5826 = vadd.f32 %v5614, %v5825
      %v5827 = vpop.f32.mrf.mxu0
      %5828 = vdwg.mxu0
      %5829 = vmatpush.bf16.msra.mxu0 %v5769
      %5830 = vmatpush.bf16.msra.mxu0 %v5765
      %5831 = vmatpush.bf16.msra.mxu0 %v5761
      %5832 = vmatpush.bf16.msra.mxu0 %v5757
      %5833 = vmatpush.bf16.msra.mxu0 %v5753
      %5834 = vmatpush.bf16.msra.mxu0 %v5749
      %5835 = vmatpush.bf16.msra.mxu0 %v5745
      %5836 = vmatpush.bf16.msra.mxu0 %v5741
      %5837 = vmatmul.bf16.gmra.mxu0 %v5365
      %v5838 = vpop.f32.mrf.mxu0
      %v5839 = vadd.f32 %v5627, %v5838
      %v5840 = vpop.f32.mrf.mxu0
      %5841 = vdwg.mxu0
      %5842 = vmatpush.bf16.msra.mxu0 %v5770
      %5843 = vmatpush.bf16.msra.mxu0 %v5766
      %5844 = vmatpush.bf16.msra.mxu0 %v5762
      %5845 = vmatpush.bf16.msra.mxu0 %v5758
      %5846 = vmatpush.bf16.msra.mxu0 %v5754
      %5847 = vmatpush.bf16.msra.mxu0 %v5750
      %5848 = vmatpush.bf16.msra.mxu0 %v5746
      %5849 = vmatpush.bf16.msra.mxu0 %v5742
      %5850 = vmatmul.bf16.gmra.mxu0 %v5365
      %v5851 = vpop.f32.mrf.mxu0
      %v5852 = vadd.f32 %v5640, %v5851
      %v5853 = vpop.f32.mrf.mxu0
      %5854 = vdwg.mxu0
      %v5855 = vadd.f32 %v5813, %v630
      %v5856 = vadd.f32 %v5826, %v631
      %v5857 = vadd.f32 %v5839, %v632
      %v5858 = vadd.f32 %v5852, %v633
      %v5859 = vmul.f32 %v5855, 0.5
      %v5860 = vtanh.pop %v5859
      %v5861 = vmul.f32 %v5860, 0.5
      %v5862 = vadd.f32 %v5861, 0.5
      %v5863 = vmul.f32 %v5856, 0.5
      %v5864 = vtanh.pop %v5863
      %v5865 = vmul.f32 %v5864, 0.5
      %v5866 = vadd.f32 %v5865, 0.5
      %v5867 = vtanh.pop %v5857
      %v5868 = vmul.f32 %v5858, 0.5
      %v5869 = vtanh.pop %v5868
      %v5870 = vmul.f32 %v5869, 0.5
      %v5871 = vadd.f32 %v5870, 0.5
      %v5872 = vmul.f32 %v5866, %v5361
      %v5873 = vmul.f32 %v5862, %v5867
      %v5874 = vadd.f32 %v5872, %v5873
      %v5875 = vtanh.pop %v5874
      %v5876 = vmul.f32 %v5871, %v5875
      %5877 = vst [vmem:[#allocation2 + $0x3] sm:$0x1] %v5874
      %v5878 = vpack.c.bf16 %v5874, %v5874
      %v5879 = vld [vmem:[#allocation10] sm:$0xff]
      %v5880 = vld [vmem:[#allocation10 + $0x8] sm:$0xff]
      %v5881 = vld [vmem:[#allocation10 + $0x10] sm:$0xff]
      %v5882 = vld [vmem:[#allocation10 + $0x18] sm:$0xff]
      %v5883 = vld [vmem:[#allocation10 + $0x20] sm:$0xff]
      %v5884 = vld [vmem:[#allocation10 + $0x28] sm:$0xff]
      %v5885 = vld [vmem:[#allocation10 + $0x30] sm:$0xff]
      %v5886 = vld [vmem:[#allocation10 + $0x38] sm:$0xff]
      %v5887 = vld [vmem:[#allocation10 + $0x40] sm:$0xff]
      %v5888 = vld [vmem:[#allocation10 + $0x48] sm:$0xff]
      %v5889 = vld [vmem:[#allocation10 + $0x50] sm:$0xff]
      %v5890 = vld [vmem:[#allocation10 + $0x58] sm:$0xff]
      %v5891 = vld [vmem:[#allocation10 + $0x60] sm:$0xff]
      %v5892 = vld [vmem:[#allocation10 + $0x68] sm:$0xff]
      %v5893 = vld [vmem:[#allocation10 + $0x70] sm:$0xff]
      %v5894 = vld [vmem:[#allocation10 + $0x78] sm:$0xff]
      %v5895 = vld [vmem:[#allocation10 + $0x80] sm:$0xff]
      %v5896 = vld [vmem:[#allocation10 + $0x88] sm:$0xff]
      %v5897 = vld [vmem:[#allocation10 + $0x90] sm:$0xff]
      %v5898 = vld [vmem:[#allocation10 + $0x98] sm:$0xff]
      %v5899 = vld [vmem:[#allocation10 + $0xa0] sm:$0xff]
      %v5900 = vld [vmem:[#allocation10 + $0xa8] sm:$0xff]
      %v5901 = vld [vmem:[#allocation10 + $0xb0] sm:$0xff]
      %v5902 = vld [vmem:[#allocation10 + $0xb8] sm:$0xff]
      %v5903 = vld [vmem:[#allocation10 + $0xc0] sm:$0xff]
      %v5904 = vld [vmem:[#allocation10 + $0xc8] sm:$0xff]
      %v5905 = vld [vmem:[#allocation10 + $0xd0] sm:$0xff]
      %v5906 = vld [vmem:[#allocation10 + $0xd8] sm:$0xff]
      %v5907 = vld [vmem:[#allocation10 + $0xe0] sm:$0xff]
      %v5908 = vld [vmem:[#allocation10 + $0xe8] sm:$0xff]
      %v5909 = vld [vmem:[#allocation10 + $0xf0] sm:$0xff]
      %v5910 = vld [vmem:[#allocation10 + $0xf8] sm:$0xff]
      %v5911 = vpack.c.bf16 %v5876, %v5876
      %v5912 = vld [vmem:[#allocation12] sm:$0xff]
      %v5913 = vld [vmem:[#allocation12 + $0x8] sm:$0xff]
      %v5914 = vld [vmem:[#allocation12 + $0x10] sm:$0xff]
      %v5915 = vld [vmem:[#allocation12 + $0x18] sm:$0xff]
      %v5916 = vld [vmem:[#allocation12 + $0x20] sm:$0xff]
      %v5917 = vld [vmem:[#allocation12 + $0x28] sm:$0xff]
      %v5918 = vld [vmem:[#allocation12 + $0x30] sm:$0xff]
      %v5919 = vld [vmem:[#allocation12 + $0x38] sm:$0xff]
      %v5920 = vld [vmem:[#allocation12 + $0x40] sm:$0xff]
      %v5921 = vld [vmem:[#allocation12 + $0x48] sm:$0xff]
      %v5922 = vld [vmem:[#allocation12 + $0x50] sm:$0xff]
      %v5923 = vld [vmem:[#allocation12 + $0x58] sm:$0xff]
      %v5924 = vld [vmem:[#allocation12 + $0x60] sm:$0xff]
      %v5925 = vld [vmem:[#allocation12 + $0x68] sm:$0xff]
      %v5926 = vld [vmem:[#allocation12 + $0x70] sm:$0xff]
      %v5927 = vld [vmem:[#allocation12 + $0x78] sm:$0xff]
      %v5928 = vld [vmem:[#allocation12 + $0x80] sm:$0xff]
      %v5929 = vld [vmem:[#allocation12 + $0x88] sm:$0xff]
      %v5930 = vld [vmem:[#allocation12 + $0x90] sm:$0xff]
      %v5931 = vld [vmem:[#allocation12 + $0x98] sm:$0xff]
      %v5932 = vld [vmem:[#allocation12 + $0xa0] sm:$0xff]
      %v5933 = vld [vmem:[#allocation12 + $0xa8] sm:$0xff]
      %v5934 = vld [vmem:[#allocation12 + $0xb0] sm:$0xff]
      %v5935 = vld [vmem:[#allocation12 + $0xb8] sm:$0xff]
      %v5936 = vld [vmem:[#allocation12 + $0xc0] sm:$0xff]
      %v5937 = vld [vmem:[#allocation12 + $0xc8] sm:$0xff]
      %v5938 = vld [vmem:[#allocation12 + $0xd0] sm:$0xff]
      %v5939 = vld [vmem:[#allocation12 + $0xd8] sm:$0xff]
      %v5940 = vld [vmem:[#allocation12 + $0xe0] sm:$0xff]
      %v5941 = vld [vmem:[#allocation12 + $0xe8] sm:$0xff]
      %v5942 = vld [vmem:[#allocation12 + $0xf0] sm:$0xff]
      %v5943 = vld [vmem:[#allocation12 + $0xf8] sm:$0xff]
      %v5976 = vunpack.c.l.b16 %v5912
      %v5977 = vunpack.c.h.b16 %v5912
      %v5978 = vunpack.c.l.b16 %v5913
      %v5979 = vunpack.c.h.b16 %v5913
      %v5980 = vunpack.c.l.b16 %v5914
      %v5981 = vunpack.c.h.b16 %v5914
      %v5982 = vunpack.c.l.b16 %v5915
      %v5983 = vunpack.c.h.b16 %v5915
      %v5984 = vunpack.c.l.b16 %v5916
      %v5985 = vunpack.c.h.b16 %v5916
      %v5986 = vunpack.c.l.b16 %v5917
      %v5987 = vunpack.c.h.b16 %v5917
      %v5988 = vunpack.c.l.b16 %v5918
      %v5989 = vunpack.c.h.b16 %v5918
      %v5990 = vunpack.c.l.b16 %v5919
      %v5991 = vunpack.c.h.b16 %v5919
      %v5992 = vunpack.c.l.b16 %v5920
      %v5993 = vunpack.c.h.b16 %v5920
      %v5994 = vunpack.c.l.b16 %v5921
      %v5995 = vunpack.c.h.b16 %v5921
      %v5996 = vunpack.c.l.b16 %v5922
      %v5997 = vunpack.c.h.b16 %v5922
      %v5998 = vunpack.c.l.b16 %v5923
      %v5999 = vunpack.c.h.b16 %v5923
      %v6000 = vunpack.c.l.b16 %v5924
      %v6001 = vunpack.c.h.b16 %v5924
      %v6002 = vunpack.c.l.b16 %v5925
      %v6003 = vunpack.c.h.b16 %v5925
      %v6004 = vunpack.c.l.b16 %v5926
      %v6005 = vunpack.c.h.b16 %v5926
      %v6006 = vunpack.c.l.b16 %v5927
      %v6007 = vunpack.c.h.b16 %v5927
      %v6008 = vunpack.c.l.b16 %v5928
      %v6009 = vunpack.c.h.b16 %v5928
      %v6010 = vunpack.c.l.b16 %v5929
      %v6011 = vunpack.c.h.b16 %v5929
      %v6012 = vunpack.c.l.b16 %v5930
      %v6013 = vunpack.c.h.b16 %v5930
      %v6014 = vunpack.c.l.b16 %v5931
      %v6015 = vunpack.c.h.b16 %v5931
      %v6016 = vunpack.c.l.b16 %v5932
      %v6017 = vunpack.c.h.b16 %v5932
      %v6018 = vunpack.c.l.b16 %v5933
      %v6019 = vunpack.c.h.b16 %v5933
      %v6020 = vunpack.c.l.b16 %v5934
      %v6021 = vunpack.c.h.b16 %v5934
      %v6022 = vunpack.c.l.b16 %v5935
      %v6023 = vunpack.c.h.b16 %v5935
      %v6024 = vunpack.c.l.b16 %v5936
      %v6025 = vunpack.c.h.b16 %v5936
      %v6026 = vunpack.c.l.b16 %v5937
      %v6027 = vunpack.c.h.b16 %v5937
      %v6028 = vunpack.c.l.b16 %v5938
      %v6029 = vunpack.c.h.b16 %v5938
      %v6030 = vunpack.c.l.b16 %v5939
      %v6031 = vunpack.c.h.b16 %v5939
      %v6032 = vunpack.c.l.b16 %v5940
      %v6033 = vunpack.c.h.b16 %v5940
      %v6034 = vunpack.c.l.b16 %v5941
      %v6035 = vunpack.c.h.b16 %v5941
      %v6036 = vunpack.c.l.b16 %v5942
      %v6037 = vunpack.c.h.b16 %v5942
      %v6038 = vunpack.c.l.b16 %v5943
      %v6039 = vunpack.c.h.b16 %v5943
      %v6040 = vpack.c.b16 %v5980, %v5976
      %v6041 = vpack.c.b16 %v5981, %v5977
      %v6042 = vpack.c.b16 %v5982, %v5978
      %v6043 = vpack.c.b16 %v5983, %v5979
      %v6044 = vpack.c.b16 %v5988, %v5984
      %v6045 = vpack.c.b16 %v5989, %v5985
      %v6046 = vpack.c.b16 %v5990, %v5986
      %v6047 = vpack.c.b16 %v5991, %v5987
      %v6048 = vpack.c.b16 %v5996, %v5992
      %v6049 = vpack.c.b16 %v5997, %v5993
      %v6050 = vpack.c.b16 %v5998, %v5994
      %v6051 = vpack.c.b16 %v5999, %v5995
      %v6052 = vpack.c.b16 %v6004, %v6000
      %v6053 = vpack.c.b16 %v6005, %v6001
      %v6054 = vpack.c.b16 %v6006, %v6002
      %v6055 = vpack.c.b16 %v6007, %v6003
      %v6056 = vpack.c.b16 %v6012, %v6008
      %v6057 = vpack.c.b16 %v6013, %v6009
      %v6058 = vpack.c.b16 %v6014, %v6010
      %v6059 = vpack.c.b16 %v6015, %v6011
      %v6060 = vpack.c.b16 %v6020, %v6016
      %v6061 = vpack.c.b16 %v6021, %v6017
      %v6062 = vpack.c.b16 %v6022, %v6018
      %v6063 = vpack.c.b16 %v6023, %v6019
      %v6064 = vpack.c.b16 %v6028, %v6024
      %v6065 = vpack.c.b16 %v6029, %v6025
      %v6066 = vpack.c.b16 %v6030, %v6026
      %v6067 = vpack.c.b16 %v6031, %v6027
      %v6068 = vpack.c.b16 %v6036, %v6032
      %v6069 = vpack.c.b16 %v6037, %v6033
      %v6070 = vpack.c.b16 %v6038, %v6034
      %v6071 = vpack.c.b16 %v6039, %v6035
      %6104 = vmatpush.bf16.msra.mxu0 %v6068
      %6105 = vmatpush.bf16.msra.mxu0 %v6064
      %6106 = vmatpush.bf16.msra.mxu0 %v6060
      %6107 = vmatpush.bf16.msra.mxu0 %v6056
      %6108 = vmatpush.bf16.msra.mxu0 %v6052
      %6109 = vmatpush.bf16.msra.mxu0 %v6048
      %6110 = vmatpush.bf16.msra.mxu0 %v6044
      %6111 = vmatpush.bf16.msra.mxu0 %v6040
      %6112 = vmatmul.bf16.gmra.mxu0 %v5911
      %v6113 = vpop.f32.mrf.mxu0
      %v6114 = vadd.f32 0.0, %v6113
      %v6115 = vpop.f32.mrf.mxu0
      %6116 = vdwg.mxu0
      %6117 = vmatpush.bf16.msra.mxu0 %v6069
      %6118 = vmatpush.bf16.msra.mxu0 %v6065
      %6119 = vmatpush.bf16.msra.mxu0 %v6061
      %6120 = vmatpush.bf16.msra.mxu0 %v6057
      %6121 = vmatpush.bf16.msra.mxu0 %v6053
      %6122 = vmatpush.bf16.msra.mxu0 %v6049
      %6123 = vmatpush.bf16.msra.mxu0 %v6045
      %6124 = vmatpush.bf16.msra.mxu0 %v6041
      %6125 = vmatmul.bf16.gmra.mxu0 %v5911
      %v6126 = vpop.f32.mrf.mxu0
      %v6127 = vadd.f32 0.0, %v6126
      %v6128 = vpop.f32.mrf.mxu0
      %6129 = vdwg.mxu0
      %6130 = vmatpush.bf16.msra.mxu0 %v6070
      %6131 = vmatpush.bf16.msra.mxu0 %v6066
      %6132 = vmatpush.bf16.msra.mxu0 %v6062
      %6133 = vmatpush.bf16.msra.mxu0 %v6058
      %6134 = vmatpush.bf16.msra.mxu0 %v6054
      %6135 = vmatpush.bf16.msra.mxu0 %v6050
      %6136 = vmatpush.bf16.msra.mxu0 %v6046
      %6137 = vmatpush.bf16.msra.mxu0 %v6042
      %6138 = vmatmul.bf16.gmra.mxu0 %v5911
      %v6139 = vpop.f32.mrf.mxu0
      %v6140 = vadd.f32 0.0, %v6139
      %v6141 = vpop.f32.mrf.mxu0
      %6142 = vdwg.mxu0
      %6143 = vmatpush.bf16.msra.mxu0 %v6071
      %6144 = vmatpush.bf16.msra.mxu0 %v6067
      %6145 = vmatpush.bf16.msra.mxu0 %v6063
      %6146 = vmatpush.bf16.msra.mxu0 %v6059
      %6147 = vmatpush.bf16.msra.mxu0 %v6055
      %6148 = vmatpush.bf16.msra.mxu0 %v6051
      %6149 = vmatpush.bf16.msra.mxu0 %v6047
      %6150 = vmatpush.bf16.msra.mxu0 %v6043
      %6151 = vmatmul.bf16.gmra.mxu0 %v5911
      %v6152 = vpop.f32.mrf.mxu0
      %v6153 = vadd.f32 0.0, %v6152
      %v6154 = vpop.f32.mrf.mxu0
      %6155 = vdwg.mxu0
      %v6188 = vunpack.c.l.b16 %v5879
      %v6189 = vunpack.c.h.b16 %v5879
      %v6190 = vunpack.c.l.b16 %v5880
      %v6191 = vunpack.c.h.b16 %v5880
      %v6192 = vunpack.c.l.b16 %v5881
      %v6193 = vunpack.c.h.b16 %v5881
      %v6194 = vunpack.c.l.b16 %v5882
      %v6195 = vunpack.c.h.b16 %v5882
      %v6196 = vunpack.c.l.b16 %v5883
      %v6197 = vunpack.c.h.b16 %v5883
      %v6198 = vunpack.c.l.b16 %v5884
      %v6199 = vunpack.c.h.b16 %v5884
      %v6200 = vunpack.c.l.b16 %v5885
      %v6201 = vunpack.c.h.b16 %v5885
      %v6202 = vunpack.c.l.b16 %v5886
      %v6203 = vunpack.c.h.b16 %v5886
      %v6204 = vunpack.c.l.b16 %v5887
      %v6205 = vunpack.c.h.b16 %v5887
      %v6206 = vunpack.c.l.b16 %v5888
      %v6207 = vunpack.c.h.b16 %v5888
      %v6208 = vunpack.c.l.b16 %v5889
      %v6209 = vunpack.c.h.b16 %v5889
      %v6210 = vunpack.c.l.b16 %v5890
      %v6211 = vunpack.c.h.b16 %v5890
      %v6212 = vunpack.c.l.b16 %v5891
      %v6213 = vunpack.c.h.b16 %v5891
      %v6214 = vunpack.c.l.b16 %v5892
      %v6215 = vunpack.c.h.b16 %v5892
      %v6216 = vunpack.c.l.b16 %v5893
      %v6217 = vunpack.c.h.b16 %v5893
      %v6218 = vunpack.c.l.b16 %v5894
      %v6219 = vunpack.c.h.b16 %v5894
      %v6220 = vunpack.c.l.b16 %v5895
      %v6221 = vunpack.c.h.b16 %v5895
      %v6222 = vunpack.c.l.b16 %v5896
      %v6223 = vunpack.c.h.b16 %v5896
      %v6224 = vunpack.c.l.b16 %v5897
      %v6225 = vunpack.c.h.b16 %v5897
      %v6226 = vunpack.c.l.b16 %v5898
      %v6227 = vunpack.c.h.b16 %v5898
      %v6228 = vunpack.c.l.b16 %v5899
      %v6229 = vunpack.c.h.b16 %v5899
      %v6230 = vunpack.c.l.b16 %v5900
      %v6231 = vunpack.c.h.b16 %v5900
      %v6232 = vunpack.c.l.b16 %v5901
      %v6233 = vunpack.c.h.b16 %v5901
      %v6234 = vunpack.c.l.b16 %v5902
      %v6235 = vunpack.c.h.b16 %v5902
      %v6236 = vunpack.c.l.b16 %v5903
      %v6237 = vunpack.c.h.b16 %v5903
      %v6238 = vunpack.c.l.b16 %v5904
      %v6239 = vunpack.c.h.b16 %v5904
      %v6240 = vunpack.c.l.b16 %v5905
      %v6241 = vunpack.c.h.b16 %v5905
      %v6242 = vunpack.c.l.b16 %v5906
      %v6243 = vunpack.c.h.b16 %v5906
      %v6244 = vunpack.c.l.b16 %v5907
      %v6245 = vunpack.c.h.b16 %v5907
      %v6246 = vunpack.c.l.b16 %v5908
      %v6247 = vunpack.c.h.b16 %v5908
      %v6248 = vunpack.c.l.b16 %v5909
      %v6249 = vunpack.c.h.b16 %v5909
      %v6250 = vunpack.c.l.b16 %v5910
      %v6251 = vunpack.c.h.b16 %v5910
      %v6252 = vpack.c.b16 %v6192, %v6188
      %v6253 = vpack.c.b16 %v6193, %v6189
      %v6254 = vpack.c.b16 %v6194, %v6190
      %v6255 = vpack.c.b16 %v6195, %v6191
      %v6256 = vpack.c.b16 %v6200, %v6196
      %v6257 = vpack.c.b16 %v6201, %v6197
      %v6258 = vpack.c.b16 %v6202, %v6198
      %v6259 = vpack.c.b16 %v6203, %v6199
      %v6260 = vpack.c.b16 %v6208, %v6204
      %v6261 = vpack.c.b16 %v6209, %v6205
      %v6262 = vpack.c.b16 %v6210, %v6206
      %v6263 = vpack.c.b16 %v6211, %v6207
      %v6264 = vpack.c.b16 %v6216, %v6212
      %v6265 = vpack.c.b16 %v6217, %v6213
      %v6266 = vpack.c.b16 %v6218, %v6214
      %v6267 = vpack.c.b16 %v6219, %v6215
      %v6268 = vpack.c.b16 %v6224, %v6220
      %v6269 = vpack.c.b16 %v6225, %v6221
      %v6270 = vpack.c.b16 %v6226, %v6222
      %v6271 = vpack.c.b16 %v6227, %v6223
      %v6272 = vpack.c.b16 %v6232, %v6228
      %v6273 = vpack.c.b16 %v6233, %v6229
      %v6274 = vpack.c.b16 %v6234, %v6230
      %v6275 = vpack.c.b16 %v6235, %v6231
      %v6276 = vpack.c.b16 %v6240, %v6236
      %v6277 = vpack.c.b16 %v6241, %v6237
      %v6278 = vpack.c.b16 %v6242, %v6238
      %v6279 = vpack.c.b16 %v6243, %v6239
      %v6280 = vpack.c.b16 %v6248, %v6244
      %v6281 = vpack.c.b16 %v6249, %v6245
      %v6282 = vpack.c.b16 %v6250, %v6246
      %v6283 = vpack.c.b16 %v6251, %v6247
      %6316 = vmatpush.bf16.msra.mxu0 %v6280
      %6317 = vmatpush.bf16.msra.mxu0 %v6276
      %6318 = vmatpush.bf16.msra.mxu0 %v6272
      %6319 = vmatpush.bf16.msra.mxu0 %v6268
      %6320 = vmatpush.bf16.msra.mxu0 %v6264
      %6321 = vmatpush.bf16.msra.mxu0 %v6260
      %6322 = vmatpush.bf16.msra.mxu0 %v6256
      %6323 = vmatpush.bf16.msra.mxu0 %v6252
      %6324 = vmatmul.bf16.gmra.mxu0 %v5878
      %v6325 = vpop.f32.mrf.mxu0
      %v6326 = vadd.f32 %v6114, %v6325
      %v6327 = vpop.f32.mrf.mxu0
      %6328 = vdwg.mxu0
      %6329 = vmatpush.bf16.msra.mxu0 %v6281
      %6330 = vmatpush.bf16.msra.mxu0 %v6277
      %6331 = vmatpush.bf16.msra.mxu0 %v6273
      %6332 = vmatpush.bf16.msra.mxu0 %v6269
      %6333 = vmatpush.bf16.msra.mxu0 %v6265
      %6334 = vmatpush.bf16.msra.mxu0 %v6261
      %6335 = vmatpush.bf16.msra.mxu0 %v6257
      %6336 = vmatpush.bf16.msra.mxu0 %v6253
      %6337 = vmatmul.bf16.gmra.mxu0 %v5878
      %v6338 = vpop.f32.mrf.mxu0
      %v6339 = vadd.f32 %v6127, %v6338
      %v6340 = vpop.f32.mrf.mxu0
      %6341 = vdwg.mxu0
      %6342 = vmatpush.bf16.msra.mxu0 %v6282
      %6343 = vmatpush.bf16.msra.mxu0 %v6278
      %6344 = vmatpush.bf16.msra.mxu0 %v6274
      %6345 = vmatpush.bf16.msra.mxu0 %v6270
      %6346 = vmatpush.bf16.msra.mxu0 %v6266
      %6347 = vmatpush.bf16.msra.mxu0 %v6262
      %6348 = vmatpush.bf16.msra.mxu0 %v6258
      %6349 = vmatpush.bf16.msra.mxu0 %v6254
      %6350 = vmatmul.bf16.gmra.mxu0 %v5878
      %v6351 = vpop.f32.mrf.mxu0
      %v6352 = vadd.f32 %v6140, %v6351
      %v6353 = vpop.f32.mrf.mxu0
      %6354 = vdwg.mxu0
      %6355 = vmatpush.bf16.msra.mxu0 %v6283
      %6356 = vmatpush.bf16.msra.mxu0 %v6279
      %6357 = vmatpush.bf16.msra.mxu0 %v6275
      %6358 = vmatpush.bf16.msra.mxu0 %v6271
      %6359 = vmatpush.bf16.msra.mxu0 %v6267
      %6360 = vmatpush.bf16.msra.mxu0 %v6263
      %6361 = vmatpush.bf16.msra.mxu0 %v6259
      %6362 = vmatpush.bf16.msra.mxu0 %v6255
      %6363 = vmatmul.bf16.gmra.mxu0 %v5878
      %v6364 = vpop.f32.mrf.mxu0
      %v6365 = vadd.f32 %v6153, %v6364
      %v6366 = vpop.f32.mrf.mxu0
      %6367 = vdwg.mxu0
      %v6368 = vadd.f32 %v6326, %v630
      %v6369 = vadd.f32 %v6339, %v631
      %v6370 = vadd.f32 %v6352, %v632
      %v6371 = vadd.f32 %v6365, %v633
      %v6372 = vmul.f32 %v6368, 0.5
      %v6373 = vtanh.pop %v6372
      %v6374 = vmul.f32 %v6373, 0.5
      %v6375 = vadd.f32 %v6374, 0.5
      %v6376 = vmul.f32 %v6369, 0.5
      %v6377 = vtanh.pop %v6376
      %v6378 = vmul.f32 %v6377, 0.5
      %v6379 = vadd.f32 %v6378, 0.5
      %v6380 = vtanh.pop %v6370
      %v6381 = vmul.f32 %v6371, 0.5
      %v6382 = vtanh.pop %v6381
      %v6383 = vmul.f32 %v6382, 0.5
      %v6384 = vadd.f32 %v6383, 0.5
      %v6385 = vmul.f32 %v6379, %v5874
      %v6386 = vmul.f32 %v6375, %v6380
      %v6387 = vadd.f32 %v6385, %v6386
      %v6388 = vtanh.pop %v6387
      %v6389 = vmul.f32 %v6384, %v6388
      %6390 = vst [vmem:[#allocation2 + $0x4] sm:$0x1] %v6387
      %v6391 = vpack.c.bf16 %v6387, %v6387
      %v6392 = vld [vmem:[#allocation10] sm:$0xff]
      %v6393 = vld [vmem:[#allocation10 + $0x8] sm:$0xff]
      %v6394 = vld [vmem:[#allocation10 + $0x10] sm:$0xff]
      %v6395 = vld [vmem:[#allocation10 + $0x18] sm:$0xff]
      %v6396 = vld [vmem:[#allocation10 + $0x20] sm:$0xff]
      %v6397 = vld [vmem:[#allocation10 + $0x28] sm:$0xff]
      %v6398 = vld [vmem:[#allocation10 + $0x30] sm:$0xff]
      %v6399 = vld [vmem:[#allocation10 + $0x38] sm:$0xff]
      %v6400 = vld [vmem:[#allocation10 + $0x40] sm:$0xff]
      %v6401 = vld [vmem:[#allocation10 + $0x48] sm:$0xff]
      %v6402 = vld [vmem:[#allocation10 + $0x50] sm:$0xff]
      %v6403 = vld [vmem:[#allocation10 + $0x58] sm:$0xff]
      %v6404 = vld [vmem:[#allocation10 + $0x60] sm:$0xff]
      %v6405 = vld [vmem:[#allocation10 + $0x68] sm:$0xff]
      %v6406 = vld [vmem:[#allocation10 + $0x70] sm:$0xff]
      %v6407 = vld [vmem:[#allocation10 + $0x78] sm:$0xff]
      %v6408 = vld [vmem:[#allocation10 + $0x80] sm:$0xff]
      %v6409 = vld [vmem:[#allocation10 + $0x88] sm:$0xff]
      %v6410 = vld [vmem:[#allocation10 + $0x90] sm:$0xff]
      %v6411 = vld [vmem:[#allocation10 + $0x98] sm:$0xff]
      %v6412 = vld [vmem:[#allocation10 + $0xa0] sm:$0xff]
      %v6413 = vld [vmem:[#allocation10 + $0xa8] sm:$0xff]
      %v6414 = vld [vmem:[#allocation10 + $0xb0] sm:$0xff]
      %v6415 = vld [vmem:[#allocation10 + $0xb8] sm:$0xff]
      %v6416 = vld [vmem:[#allocation10 + $0xc0] sm:$0xff]
      %v6417 = vld [vmem:[#allocation10 + $0xc8] sm:$0xff]
      %v6418 = vld [vmem:[#allocation10 + $0xd0] sm:$0xff]
      %v6419 = vld [vmem:[#allocation10 + $0xd8] sm:$0xff]
      %v6420 = vld [vmem:[#allocation10 + $0xe0] sm:$0xff]
      %v6421 = vld [vmem:[#allocation10 + $0xe8] sm:$0xff]
      %v6422 = vld [vmem:[#allocation10 + $0xf0] sm:$0xff]
      %v6423 = vld [vmem:[#allocation10 + $0xf8] sm:$0xff]
      %v6424 = vpack.c.bf16 %v6389, %v6389
      %v6425 = vld [vmem:[#allocation12] sm:$0xff]
      %v6426 = vld [vmem:[#allocation12 + $0x8] sm:$0xff]
      %v6427 = vld [vmem:[#allocation12 + $0x10] sm:$0xff]
      %v6428 = vld [vmem:[#allocation12 + $0x18] sm:$0xff]
      %v6429 = vld [vmem:[#allocation12 + $0x20] sm:$0xff]
      %v6430 = vld [vmem:[#allocation12 + $0x28] sm:$0xff]
      %v6431 = vld [vmem:[#allocation12 + $0x30] sm:$0xff]
      %v6432 = vld [vmem:[#allocation12 + $0x38] sm:$0xff]
      %v6433 = vld [vmem:[#allocation12 + $0x40] sm:$0xff]
      %v6434 = vld [vmem:[#allocation12 + $0x48] sm:$0xff]
      %v6435 = vld [vmem:[#allocation12 + $0x50] sm:$0xff]
      %v6436 = vld [vmem:[#allocation12 + $0x58] sm:$0xff]
      %v6437 = vld [vmem:[#allocation12 + $0x60] sm:$0xff]
      %v6438 = vld [vmem:[#allocation12 + $0x68] sm:$0xff]
      %v6439 = vld [vmem:[#allocation12 + $0x70] sm:$0xff]
      %v6440 = vld [vmem:[#allocation12 + $0x78] sm:$0xff]
      %v6441 = vld [vmem:[#allocation12 + $0x80] sm:$0xff]
      %v6442 = vld [vmem:[#allocation12 + $0x88] sm:$0xff]
      %v6443 = vld [vmem:[#allocation12 + $0x90] sm:$0xff]
      %v6444 = vld [vmem:[#allocation12 + $0x98] sm:$0xff]
      %v6445 = vld [vmem:[#allocation12 + $0xa0] sm:$0xff]
      %v6446 = vld [vmem:[#allocation12 + $0xa8] sm:$0xff]
      %v6447 = vld [vmem:[#allocation12 + $0xb0] sm:$0xff]
      %v6448 = vld [vmem:[#allocation12 + $0xb8] sm:$0xff]
      %v6449 = vld [vmem:[#allocation12 + $0xc0] sm:$0xff]
      %v6450 = vld [vmem:[#allocation12 + $0xc8] sm:$0xff]
      %v6451 = vld [vmem:[#allocation12 + $0xd0] sm:$0xff]
      %v6452 = vld [vmem:[#allocation12 + $0xd8] sm:$0xff]
      %v6453 = vld [vmem:[#allocation12 + $0xe0] sm:$0xff]
      %v6454 = vld [vmem:[#allocation12 + $0xe8] sm:$0xff]
      %v6455 = vld [vmem:[#allocation12 + $0xf0] sm:$0xff]
      %v6456 = vld [vmem:[#allocation12 + $0xf8] sm:$0xff]
      %v6489 = vunpack.c.l.b16 %v6425
      %v6490 = vunpack.c.h.b16 %v6425
      %v6491 = vunpack.c.l.b16 %v6426
      %v6492 = vunpack.c.h.b16 %v6426
      %v6493 = vunpack.c.l.b16 %v6427
      %v6494 = vunpack.c.h.b16 %v6427
      %v6495 = vunpack.c.l.b16 %v6428
      %v6496 = vunpack.c.h.b16 %v6428
      %v6497 = vunpack.c.l.b16 %v6429
      %v6498 = vunpack.c.h.b16 %v6429
      %v6499 = vunpack.c.l.b16 %v6430
      %v6500 = vunpack.c.h.b16 %v6430
      %v6501 = vunpack.c.l.b16 %v6431
      %v6502 = vunpack.c.h.b16 %v6431
      %v6503 = vunpack.c.l.b16 %v6432
      %v6504 = vunpack.c.h.b16 %v6432
      %v6505 = vunpack.c.l.b16 %v6433
      %v6506 = vunpack.c.h.b16 %v6433
      %v6507 = vunpack.c.l.b16 %v6434
      %v6508 = vunpack.c.h.b16 %v6434
      %v6509 = vunpack.c.l.b16 %v6435
      %v6510 = vunpack.c.h.b16 %v6435
      %v6511 = vunpack.c.l.b16 %v6436
      %v6512 = vunpack.c.h.b16 %v6436
      %v6513 = vunpack.c.l.b16 %v6437
      %v6514 = vunpack.c.h.b16 %v6437
      %v6515 = vunpack.c.l.b16 %v6438
      %v6516 = vunpack.c.h.b16 %v6438
      %v6517 = vunpack.c.l.b16 %v6439
      %v6518 = vunpack.c.h.b16 %v6439
      %v6519 = vunpack.c.l.b16 %v6440
      %v6520 = vunpack.c.h.b16 %v6440
      %v6521 = vunpack.c.l.b16 %v6441
      %v6522 = vunpack.c.h.b16 %v6441
      %v6523 = vunpack.c.l.b16 %v6442
      %v6524 = vunpack.c.h.b16 %v6442
      %v6525 = vunpack.c.l.b16 %v6443
      %v6526 = vunpack.c.h.b16 %v6443
      %v6527 = vunpack.c.l.b16 %v6444
      %v6528 = vunpack.c.h.b16 %v6444
      %v6529 = vunpack.c.l.b16 %v6445
      %v6530 = vunpack.c.h.b16 %v6445
      %v6531 = vunpack.c.l.b16 %v6446
      %v6532 = vunpack.c.h.b16 %v6446
      %v6533 = vunpack.c.l.b16 %v6447
      %v6534 = vunpack.c.h.b16 %v6447
      %v6535 = vunpack.c.l.b16 %v6448
      %v6536 = vunpack.c.h.b16 %v6448
      %v6537 = vunpack.c.l.b16 %v6449
      %v6538 = vunpack.c.h.b16 %v6449
      %v6539 = vunpack.c.l.b16 %v6450
      %v6540 = vunpack.c.h.b16 %v6450
      %v6541 = vunpack.c.l.b16 %v6451
      %v6542 = vunpack.c.h.b16 %v6451
      %v6543 = vunpack.c.l.b16 %v6452
      %v6544 = vunpack.c.h.b16 %v6452
      %v6545 = vunpack.c.l.b16 %v6453
      %v6546 = vunpack.c.h.b16 %v6453
      %v6547 = vunpack.c.l.b16 %v6454
      %v6548 = vunpack.c.h.b16 %v6454
      %v6549 = vunpack.c.l.b16 %v6455
      %v6550 = vunpack.c.h.b16 %v6455
      %v6551 = vunpack.c.l.b16 %v6456
      %v6552 = vunpack.c.h.b16 %v6456
      %v6553 = vpack.c.b16 %v6493, %v6489
      %v6554 = vpack.c.b16 %v6494, %v6490
      %v6555 = vpack.c.b16 %v6495, %v6491
      %v6556 = vpack.c.b16 %v6496, %v6492
      %v6557 = vpack.c.b16 %v6501, %v6497
      %v6558 = vpack.c.b16 %v6502, %v6498
      %v6559 = vpack.c.b16 %v6503, %v6499
      %v6560 = vpack.c.b16 %v6504, %v6500
      %v6561 = vpack.c.b16 %v6509, %v6505
      %v6562 = vpack.c.b16 %v6510, %v6506
      %v6563 = vpack.c.b16 %v6511, %v6507
      %v6564 = vpack.c.b16 %v6512, %v6508
      %v6565 = vpack.c.b16 %v6517, %v6513
      %v6566 = vpack.c.b16 %v6518, %v6514
      %v6567 = vpack.c.b16 %v6519, %v6515
      %v6568 = vpack.c.b16 %v6520, %v6516
      %v6569 = vpack.c.b16 %v6525, %v6521
      %v6570 = vpack.c.b16 %v6526, %v6522
      %v6571 = vpack.c.b16 %v6527, %v6523
      %v6572 = vpack.c.b16 %v6528, %v6524
      %v6573 = vpack.c.b16 %v6533, %v6529
      %v6574 = vpack.c.b16 %v6534, %v6530
      %v6575 = vpack.c.b16 %v6535, %v6531
      %v6576 = vpack.c.b16 %v6536, %v6532
      %v6577 = vpack.c.b16 %v6541, %v6537
      %v6578 = vpack.c.b16 %v6542, %v6538
      %v6579 = vpack.c.b16 %v6543, %v6539
      %v6580 = vpack.c.b16 %v6544, %v6540
      %v6581 = vpack.c.b16 %v6549, %v6545
      %v6582 = vpack.c.b16 %v6550, %v6546
      %v6583 = vpack.c.b16 %v6551, %v6547
      %v6584 = vpack.c.b16 %v6552, %v6548
      %6617 = vmatpush.bf16.msra.mxu0 %v6581
      %6618 = vmatpush.bf16.msra.mxu0 %v6577
      %6619 = vmatpush.bf16.msra.mxu0 %v6573
      %6620 = vmatpush.bf16.msra.mxu0 %v6569
      %6621 = vmatpush.bf16.msra.mxu0 %v6565
      %6622 = vmatpush.bf16.msra.mxu0 %v6561
      %6623 = vmatpush.bf16.msra.mxu0 %v6557
      %6624 = vmatpush.bf16.msra.mxu0 %v6553
      %6625 = vmatmul.bf16.gmra.mxu0 %v6424
      %v6626 = vpop.f32.mrf.mxu0
      %v6627 = vadd.f32 0.0, %v6626
      %v6628 = vpop.f32.mrf.mxu0
      %6629 = vdwg.mxu0
      %6630 = vmatpush.bf16.msra.mxu0 %v6582
      %6631 = vmatpush.bf16.msra.mxu0 %v6578
      %6632 = vmatpush.bf16.msra.mxu0 %v6574
      %6633 = vmatpush.bf16.msra.mxu0 %v6570
      %6634 = vmatpush.bf16.msra.mxu0 %v6566
      %6635 = vmatpush.bf16.msra.mxu0 %v6562
      %6636 = vmatpush.bf16.msra.mxu0 %v6558
      %6637 = vmatpush.bf16.msra.mxu0 %v6554
      %6638 = vmatmul.bf16.gmra.mxu0 %v6424
      %v6639 = vpop.f32.mrf.mxu0
      %v6640 = vadd.f32 0.0, %v6639
      %v6641 = vpop.f32.mrf.mxu0
      %6642 = vdwg.mxu0
      %6643 = vmatpush.bf16.msra.mxu0 %v6583
      %6644 = vmatpush.bf16.msra.mxu0 %v6579
      %6645 = vmatpush.bf16.msra.mxu0 %v6575
      %6646 = vmatpush.bf16.msra.mxu0 %v6571
      %6647 = vmatpush.bf16.msra.mxu0 %v6567
      %6648 = vmatpush.bf16.msra.mxu0 %v6563
      %6649 = vmatpush.bf16.msra.mxu0 %v6559
      %6650 = vmatpush.bf16.msra.mxu0 %v6555
      %6651 = vmatmul.bf16.gmra.mxu0 %v6424
      %v6652 = vpop.f32.mrf.mxu0
      %v6653 = vadd.f32 0.0, %v6652
      %v6654 = vpop.f32.mrf.mxu0
      %6655 = vdwg.mxu0
      %6656 = vmatpush.bf16.msra.mxu0 %v6584
      %6657 = vmatpush.bf16.msra.mxu0 %v6580
      %6658 = vmatpush.bf16.msra.mxu0 %v6576
      %6659 = vmatpush.bf16.msra.mxu0 %v6572
      %6660 = vmatpush.bf16.msra.mxu0 %v6568
      %6661 = vmatpush.bf16.msra.mxu0 %v6564
      %6662 = vmatpush.bf16.msra.mxu0 %v6560
      %6663 = vmatpush.bf16.msra.mxu0 %v6556
      %6664 = vmatmul.bf16.gmra.mxu0 %v6424
      %v6665 = vpop.f32.mrf.mxu0
      %v6666 = vadd.f32 0.0, %v6665
      %v6667 = vpop.f32.mrf.mxu0
      %6668 = vdwg.mxu0
      %v6701 = vunpack.c.l.b16 %v6392
      %v6702 = vunpack.c.h.b16 %v6392
      %v6703 = vunpack.c.l.b16 %v6393
      %v6704 = vunpack.c.h.b16 %v6393
      %v6705 = vunpack.c.l.b16 %v6394
      %v6706 = vunpack.c.h.b16 %v6394
      %v6707 = vunpack.c.l.b16 %v6395
      %v6708 = vunpack.c.h.b16 %v6395
      %v6709 = vunpack.c.l.b16 %v6396
      %v6710 = vunpack.c.h.b16 %v6396
      %v6711 = vunpack.c.l.b16 %v6397
      %v6712 = vunpack.c.h.b16 %v6397
      %v6713 = vunpack.c.l.b16 %v6398
      %v6714 = vunpack.c.h.b16 %v6398
      %v6715 = vunpack.c.l.b16 %v6399
      %v6716 = vunpack.c.h.b16 %v6399
      %v6717 = vunpack.c.l.b16 %v6400
      %v6718 = vunpack.c.h.b16 %v6400
      %v6719 = vunpack.c.l.b16 %v6401
      %v6720 = vunpack.c.h.b16 %v6401
      %v6721 = vunpack.c.l.b16 %v6402
      %v6722 = vunpack.c.h.b16 %v6402
      %v6723 = vunpack.c.l.b16 %v6403
      %v6724 = vunpack.c.h.b16 %v6403
      %v6725 = vunpack.c.l.b16 %v6404
      %v6726 = vunpack.c.h.b16 %v6404
      %v6727 = vunpack.c.l.b16 %v6405
      %v6728 = vunpack.c.h.b16 %v6405
      %v6729 = vunpack.c.l.b16 %v6406
      %v6730 = vunpack.c.h.b16 %v6406
      %v6731 = vunpack.c.l.b16 %v6407
      %v6732 = vunpack.c.h.b16 %v6407
      %v6733 = vunpack.c.l.b16 %v6408
      %v6734 = vunpack.c.h.b16 %v6408
      %v6735 = vunpack.c.l.b16 %v6409
      %v6736 = vunpack.c.h.b16 %v6409
      %v6737 = vunpack.c.l.b16 %v6410
      %v6738 = vunpack.c.h.b16 %v6410
      %v6739 = vunpack.c.l.b16 %v6411
      %v6740 = vunpack.c.h.b16 %v6411
      %v6741 = vunpack.c.l.b16 %v6412
      %v6742 = vunpack.c.h.b16 %v6412
      %v6743 = vunpack.c.l.b16 %v6413
      %v6744 = vunpack.c.h.b16 %v6413
      %v6745 = vunpack.c.l.b16 %v6414
      %v6746 = vunpack.c.h.b16 %v6414
      %v6747 = vunpack.c.l.b16 %v6415
      %v6748 = vunpack.c.h.b16 %v6415
      %v6749 = vunpack.c.l.b16 %v6416
      %v6750 = vunpack.c.h.b16 %v6416
      %v6751 = vunpack.c.l.b16 %v6417
      %v6752 = vunpack.c.h.b16 %v6417
      %v6753 = vunpack.c.l.b16 %v6418
      %v6754 = vunpack.c.h.b16 %v6418
      %v6755 = vunpack.c.l.b16 %v6419
      %v6756 = vunpack.c.h.b16 %v6419
      %v6757 = vunpack.c.l.b16 %v6420
      %v6758 = vunpack.c.h.b16 %v6420
      %v6759 = vunpack.c.l.b16 %v6421
      %v6760 = vunpack.c.h.b16 %v6421
      %v6761 = vunpack.c.l.b16 %v6422
      %v6762 = vunpack.c.h.b16 %v6422
      %v6763 = vunpack.c.l.b16 %v6423
      %v6764 = vunpack.c.h.b16 %v6423
      %v6765 = vpack.c.b16 %v6705, %v6701
      %v6766 = vpack.c.b16 %v6706, %v6702
      %v6767 = vpack.c.b16 %v6707, %v6703
      %v6768 = vpack.c.b16 %v6708, %v6704
      %v6769 = vpack.c.b16 %v6713, %v6709
      %v6770 = vpack.c.b16 %v6714, %v6710
      %v6771 = vpack.c.b16 %v6715, %v6711
      %v6772 = vpack.c.b16 %v6716, %v6712
      %v6773 = vpack.c.b16 %v6721, %v6717
      %v6774 = vpack.c.b16 %v6722, %v6718
      %v6775 = vpack.c.b16 %v6723, %v6719
      %v6776 = vpack.c.b16 %v6724, %v6720
      %v6777 = vpack.c.b16 %v6729, %v6725
      %v6778 = vpack.c.b16 %v6730, %v6726
      %v6779 = vpack.c.b16 %v6731, %v6727
      %v6780 = vpack.c.b16 %v6732, %v6728
      %v6781 = vpack.c.b16 %v6737, %v6733
      %v6782 = vpack.c.b16 %v6738, %v6734
      %v6783 = vpack.c.b16 %v6739, %v6735
      %v6784 = vpack.c.b16 %v6740, %v6736
      %v6785 = vpack.c.b16 %v6745, %v6741
      %v6786 = vpack.c.b16 %v6746, %v6742
      %v6787 = vpack.c.b16 %v6747, %v6743
      %v6788 = vpack.c.b16 %v6748, %v6744
      %v6789 = vpack.c.b16 %v6753, %v6749
      %v6790 = vpack.c.b16 %v6754, %v6750
      %v6791 = vpack.c.b16 %v6755, %v6751
      %v6792 = vpack.c.b16 %v6756, %v6752
      %v6793 = vpack.c.b16 %v6761, %v6757
      %v6794 = vpack.c.b16 %v6762, %v6758
      %v6795 = vpack.c.b16 %v6763, %v6759
      %v6796 = vpack.c.b16 %v6764, %v6760
      %6829 = vmatpush.bf16.msra.mxu0 %v6793
      %6830 = vmatpush.bf16.msra.mxu0 %v6789
      %6831 = vmatpush.bf16.msra.mxu0 %v6785
      %6832 = vmatpush.bf16.msra.mxu0 %v6781
      %6833 = vmatpush.bf16.msra.mxu0 %v6777
      %6834 = vmatpush.bf16.msra.mxu0 %v6773
      %6835 = vmatpush.bf16.msra.mxu0 %v6769
      %6836 = vmatpush.bf16.msra.mxu0 %v6765
      %6837 = vmatmul.bf16.gmra.mxu0 %v6391
      %v6838 = vpop.f32.mrf.mxu0
      %v6839 = vadd.f32 %v6627, %v6838
      %v6840 = vpop.f32.mrf.mxu0
      %6841 = vdwg.mxu0
      %6842 = vmatpush.bf16.msra.mxu0 %v6794
      %6843 = vmatpush.bf16.msra.mxu0 %v6790
      %6844 = vmatpush.bf16.msra.mxu0 %v6786
      %6845 = vmatpush.bf16.msra.mxu0 %v6782
      %6846 = vmatpush.bf16.msra.mxu0 %v6778
      %6847 = vmatpush.bf16.msra.mxu0 %v6774
      %6848 = vmatpush.bf16.msra.mxu0 %v6770
      %6849 = vmatpush.bf16.msra.mxu0 %v6766
      %6850 = vmatmul.bf16.gmra.mxu0 %v6391
      %v6851 = vpop.f32.mrf.mxu0
      %v6852 = vadd.f32 %v6640, %v6851
      %v6853 = vpop.f32.mrf.mxu0
      %6854 = vdwg.mxu0
      %6855 = vmatpush.bf16.msra.mxu0 %v6795
      %6856 = vmatpush.bf16.msra.mxu0 %v6791
      %6857 = vmatpush.bf16.msra.mxu0 %v6787
      %6858 = vmatpush.bf16.msra.mxu0 %v6783
      %6859 = vmatpush.bf16.msra.mxu0 %v6779
      %6860 = vmatpush.bf16.msra.mxu0 %v6775
      %6861 = vmatpush.bf16.msra.mxu0 %v6771
      %6862 = vmatpush.bf16.msra.mxu0 %v6767
      %6863 = vmatmul.bf16.gmra.mxu0 %v6391
      %v6864 = vpop.f32.mrf.mxu0
      %v6865 = vadd.f32 %v6653, %v6864
      %v6866 = vpop.f32.mrf.mxu0
      %6867 = vdwg.mxu0
      %6868 = vmatpush.bf16.msra.mxu0 %v6796
      %6869 = vmatpush.bf16.msra.mxu0 %v6792
      %6870 = vmatpush.bf16.msra.mxu0 %v6788
      %6871 = vmatpush.bf16.msra.mxu0 %v6784
      %6872 = vmatpush.bf16.msra.mxu0 %v6780
      %6873 = vmatpush.bf16.msra.mxu0 %v6776
      %6874 = vmatpush.bf16.msra.mxu0 %v6772
      %6875 = vmatpush.bf16.msra.mxu0 %v6768
      %6876 = vmatmul.bf16.gmra.mxu0 %v6391
      %v6877 = vpop.f32.mrf.mxu0
      %v6878 = vadd.f32 %v6666, %v6877
      %v6879 = vpop.f32.mrf.mxu0
      %6880 = vdwg.mxu0
      %v6881 = vadd.f32 %v6839, %v630
      %v6882 = vadd.f32 %v6852, %v631
      %v6883 = vadd.f32 %v6865, %v632
      %v6884 = vadd.f32 %v6878, %v633
      %v6885 = vmul.f32 %v6881, 0.5
      %v6886 = vtanh.pop %v6885
      %v6887 = vmul.f32 %v6886, 0.5
      %v6888 = vadd.f32 %v6887, 0.5
      %v6889 = vmul.f32 %v6882, 0.5
      %v6890 = vtanh.pop %v6889
      %v6891 = vmul.f32 %v6890, 0.5
      %v6892 = vadd.f32 %v6891, 0.5
      %v6893 = vtanh.pop %v6883
      %v6894 = vmul.f32 %v6884, 0.5
      %v6895 = vtanh.pop %v6894
      %v6896 = vmul.f32 %v6895, 0.5
      %v6897 = vadd.f32 %v6896, 0.5
      %v6898 = vmul.f32 %v6892, %v6387
      %v6899 = vmul.f32 %v6888, %v6893
      %v6900 = vadd.f32 %v6898, %v6899
      %v6901 = vtanh.pop %v6900
      %v6902 = vmul.f32 %v6897, %v6901
      %6903 = vst [vmem:[#allocation2 + $0x5] sm:$0x1] %v6900
      %v6904 = vpack.c.bf16 %v6900, %v6900
      %v6905 = vld [vmem:[#allocation10] sm:$0xff]
      %v6906 = vld [vmem:[#allocation10 + $0x8] sm:$0xff]
      %v6907 = vld [vmem:[#allocation10 + $0x10] sm:$0xff]
      %v6908 = vld [vmem:[#allocation10 + $0x18] sm:$0xff]
      %v6909 = vld [vmem:[#allocation10 + $0x20] sm:$0xff]
      %v6910 = vld [vmem:[#allocation10 + $0x28] sm:$0xff]
      %v6911 = vld [vmem:[#allocation10 + $0x30] sm:$0xff]
      %v6912 = vld [vmem:[#allocation10 + $0x38] sm:$0xff]
      %v6913 = vld [vmem:[#allocation10 + $0x40] sm:$0xff]
      %v6914 = vld [vmem:[#allocation10 + $0x48] sm:$0xff]
      %v6915 = vld [vmem:[#allocation10 + $0x50] sm:$0xff]
      %v6916 = vld [vmem:[#allocation10 + $0x58] sm:$0xff]
      %v6917 = vld [vmem:[#allocation10 + $0x60] sm:$0xff]
      %v6918 = vld [vmem:[#allocation10 + $0x68] sm:$0xff]
      %v6919 = vld [vmem:[#allocation10 + $0x70] sm:$0xff]
      %v6920 = vld [vmem:[#allocation10 + $0x78] sm:$0xff]
      %v6921 = vld [vmem:[#allocation10 + $0x80] sm:$0xff]
      %v6922 = vld [vmem:[#allocation10 + $0x88] sm:$0xff]
      %v6923 = vld [vmem:[#allocation10 + $0x90] sm:$0xff]
      %v6924 = vld [vmem:[#allocation10 + $0x98] sm:$0xff]
      %v6925 = vld [vmem:[#allocation10 + $0xa0] sm:$0xff]
      %v6926 = vld [vmem:[#allocation10 + $0xa8] sm:$0xff]
      %v6927 = vld [vmem:[#allocation10 + $0xb0] sm:$0xff]
      %v6928 = vld [vmem:[#allocation10 + $0xb8] sm:$0xff]
      %v6929 = vld [vmem:[#allocation10 + $0xc0] sm:$0xff]
      %v6930 = vld [vmem:[#allocation10 + $0xc8] sm:$0xff]
      %v6931 = vld [vmem:[#allocation10 + $0xd0] sm:$0xff]
      %v6932 = vld [vmem:[#allocation10 + $0xd8] sm:$0xff]
      %v6933 = vld [vmem:[#allocation10 + $0xe0] sm:$0xff]
      %v6934 = vld [vmem:[#allocation10 + $0xe8] sm:$0xff]
      %v6935 = vld [vmem:[#allocation10 + $0xf0] sm:$0xff]
      %v6936 = vld [vmem:[#allocation10 + $0xf8] sm:$0xff]
      %v6937 = vpack.c.bf16 %v6902, %v6902
      %v6938 = vld [vmem:[#allocation12] sm:$0xff]
      %v6939 = vld [vmem:[#allocation12 + $0x8] sm:$0xff]
      %v6940 = vld [vmem:[#allocation12 + $0x10] sm:$0xff]
      %v6941 = vld [vmem:[#allocation12 + $0x18] sm:$0xff]
      %v6942 = vld [vmem:[#allocation12 + $0x20] sm:$0xff]
      %v6943 = vld [vmem:[#allocation12 + $0x28] sm:$0xff]
      %v6944 = vld [vmem:[#allocation12 + $0x30] sm:$0xff]
      %v6945 = vld [vmem:[#allocation12 + $0x38] sm:$0xff]
      %v6946 = vld [vmem:[#allocation12 + $0x40] sm:$0xff]
      %v6947 = vld [vmem:[#allocation12 + $0x48] sm:$0xff]
      %v6948 = vld [vmem:[#allocation12 + $0x50] sm:$0xff]
      %v6949 = vld [vmem:[#allocation12 + $0x58] sm:$0xff]
      %v6950 = vld [vmem:[#allocation12 + $0x60] sm:$0xff]
      %v6951 = vld [vmem:[#allocation12 + $0x68] sm:$0xff]
      %v6952 = vld [vmem:[#allocation12 + $0x70] sm:$0xff]
      %v6953 = vld [vmem:[#allocation12 + $0x78] sm:$0xff]
      %v6954 = vld [vmem:[#allocation12 + $0x80] sm:$0xff]
      %v6955 = vld [vmem:[#allocation12 + $0x88] sm:$0xff]
      %v6956 = vld [vmem:[#allocation12 + $0x90] sm:$0xff]
      %v6957 = vld [vmem:[#allocation12 + $0x98] sm:$0xff]
      %v6958 = vld [vmem:[#allocation12 + $0xa0] sm:$0xff]
      %v6959 = vld [vmem:[#allocation12 + $0xa8] sm:$0xff]
      %v6960 = vld [vmem:[#allocation12 + $0xb0] sm:$0xff]
      %v6961 = vld [vmem:[#allocation12 + $0xb8] sm:$0xff]
      %v6962 = vld [vmem:[#allocation12 + $0xc0] sm:$0xff]
      %v6963 = vld [vmem:[#allocation12 + $0xc8] sm:$0xff]
      %v6964 = vld [vmem:[#allocation12 + $0xd0] sm:$0xff]
      %v6965 = vld [vmem:[#allocation12 + $0xd8] sm:$0xff]
      %v6966 = vld [vmem:[#allocation12 + $0xe0] sm:$0xff]
      %v6967 = vld [vmem:[#allocation12 + $0xe8] sm:$0xff]
      %v6968 = vld [vmem:[#allocation12 + $0xf0] sm:$0xff]
      %v6969 = vld [vmem:[#allocation12 + $0xf8] sm:$0xff]
      %v7002 = vunpack.c.l.b16 %v6938
      %v7003 = vunpack.c.h.b16 %v6938
      %v7004 = vunpack.c.l.b16 %v6939
      %v7005 = vunpack.c.h.b16 %v6939
      %v7006 = vunpack.c.l.b16 %v6940
      %v7007 = vunpack.c.h.b16 %v6940
      %v7008 = vunpack.c.l.b16 %v6941
      %v7009 = vunpack.c.h.b16 %v6941
      %v7010 = vunpack.c.l.b16 %v6942
      %v7011 = vunpack.c.h.b16 %v6942
      %v7012 = vunpack.c.l.b16 %v6943
      %v7013 = vunpack.c.h.b16 %v6943
      %v7014 = vunpack.c.l.b16 %v6944
      %v7015 = vunpack.c.h.b16 %v6944
      %v7016 = vunpack.c.l.b16 %v6945
      %v7017 = vunpack.c.h.b16 %v6945
      %v7018 = vunpack.c.l.b16 %v6946
      %v7019 = vunpack.c.h.b16 %v6946
      %v7020 = vunpack.c.l.b16 %v6947
      %v7021 = vunpack.c.h.b16 %v6947
      %v7022 = vunpack.c.l.b16 %v6948
      %v7023 = vunpack.c.h.b16 %v6948
      %v7024 = vunpack.c.l.b16 %v6949
      %v7025 = vunpack.c.h.b16 %v6949
      %v7026 = vunpack.c.l.b16 %v6950
      %v7027 = vunpack.c.h.b16 %v6950
      %v7028 = vunpack.c.l.b16 %v6951
      %v7029 = vunpack.c.h.b16 %v6951
      %v7030 = vunpack.c.l.b16 %v6952
      %v7031 = vunpack.c.h.b16 %v6952
      %v7032 = vunpack.c.l.b16 %v6953
      %v7033 = vunpack.c.h.b16 %v6953
      %v7034 = vunpack.c.l.b16 %v6954
      %v7035 = vunpack.c.h.b16 %v6954
      %v7036 = vunpack.c.l.b16 %v6955
      %v7037 = vunpack.c.h.b16 %v6955
      %v7038 = vunpack.c.l.b16 %v6956
      %v7039 = vunpack.c.h.b16 %v6956
      %v7040 = vunpack.c.l.b16 %v6957
      %v7041 = vunpack.c.h.b16 %v6957
      %v7042 = vunpack.c.l.b16 %v6958
      %v7043 = vunpack.c.h.b16 %v6958
      %v7044 = vunpack.c.l.b16 %v6959
      %v7045 = vunpack.c.h.b16 %v6959
      %v7046 = vunpack.c.l.b16 %v6960
      %v7047 = vunpack.c.h.b16 %v6960
      %v7048 = vunpack.c.l.b16 %v6961
      %v7049 = vunpack.c.h.b16 %v6961
      %v7050 = vunpack.c.l.b16 %v6962
      %v7051 = vunpack.c.h.b16 %v6962
      %v7052 = vunpack.c.l.b16 %v6963
      %v7053 = vunpack.c.h.b16 %v6963
      %v7054 = vunpack.c.l.b16 %v6964
      %v7055 = vunpack.c.h.b16 %v6964
      %v7056 = vunpack.c.l.b16 %v6965
      %v7057 = vunpack.c.h.b16 %v6965
      %v7058 = vunpack.c.l.b16 %v6966
      %v7059 = vunpack.c.h.b16 %v6966
      %v7060 = vunpack.c.l.b16 %v6967
      %v7061 = vunpack.c.h.b16 %v6967
      %v7062 = vunpack.c.l.b16 %v6968
      %v7063 = vunpack.c.h.b16 %v6968
      %v7064 = vunpack.c.l.b16 %v6969
      %v7065 = vunpack.c.h.b16 %v6969
      %v7066 = vpack.c.b16 %v7006, %v7002
      %v7067 = vpack.c.b16 %v7007, %v7003
      %v7068 = vpack.c.b16 %v7008, %v7004
      %v7069 = vpack.c.b16 %v7009, %v7005
      %v7070 = vpack.c.b16 %v7014, %v7010
      %v7071 = vpack.c.b16 %v7015, %v7011
      %v7072 = vpack.c.b16 %v7016, %v7012
      %v7073 = vpack.c.b16 %v7017, %v7013
      %v7074 = vpack.c.b16 %v7022, %v7018
      %v7075 = vpack.c.b16 %v7023, %v7019
      %v7076 = vpack.c.b16 %v7024, %v7020
      %v7077 = vpack.c.b16 %v7025, %v7021
      %v7078 = vpack.c.b16 %v7030, %v7026
      %v7079 = vpack.c.b16 %v7031, %v7027
      %v7080 = vpack.c.b16 %v7032, %v7028
      %v7081 = vpack.c.b16 %v7033, %v7029
      %v7082 = vpack.c.b16 %v7038, %v7034
      %v7083 = vpack.c.b16 %v7039, %v7035
      %v7084 = vpack.c.b16 %v7040, %v7036
      %v7085 = vpack.c.b16 %v7041, %v7037
      %v7086 = vpack.c.b16 %v7046, %v7042
      %v7087 = vpack.c.b16 %v7047, %v7043
      %v7088 = vpack.c.b16 %v7048, %v7044
      %v7089 = vpack.c.b16 %v7049, %v7045
      %v7090 = vpack.c.b16 %v7054, %v7050
      %v7091 = vpack.c.b16 %v7055, %v7051
      %v7092 = vpack.c.b16 %v7056, %v7052
      %v7093 = vpack.c.b16 %v7057, %v7053
      %v7094 = vpack.c.b16 %v7062, %v7058
      %v7095 = vpack.c.b16 %v7063, %v7059
      %v7096 = vpack.c.b16 %v7064, %v7060
      %v7097 = vpack.c.b16 %v7065, %v7061
      %7130 = vmatpush.bf16.msra.mxu0 %v7094
      %7131 = vmatpush.bf16.msra.mxu0 %v7090
      %7132 = vmatpush.bf16.msra.mxu0 %v7086
      %7133 = vmatpush.bf16.msra.mxu0 %v7082
      %7134 = vmatpush.bf16.msra.mxu0 %v7078
      %7135 = vmatpush.bf16.msra.mxu0 %v7074
      %7136 = vmatpush.bf16.msra.mxu0 %v7070
      %7137 = vmatpush.bf16.msra.mxu0 %v7066
      %7138 = vmatmul.bf16.gmra.mxu0 %v6937
      %v7139 = vpop.f32.mrf.mxu0
      %v7140 = vadd.f32 0.0, %v7139
      %v7141 = vpop.f32.mrf.mxu0
      %7142 = vdwg.mxu0
      %7143 = vmatpush.bf16.msra.mxu0 %v7095
      %7144 = vmatpush.bf16.msra.mxu0 %v7091
      %7145 = vmatpush.bf16.msra.mxu0 %v7087
      %7146 = vmatpush.bf16.msra.mxu0 %v7083
      %7147 = vmatpush.bf16.msra.mxu0 %v7079
      %7148 = vmatpush.bf16.msra.mxu0 %v7075
      %7149 = vmatpush.bf16.msra.mxu0 %v7071
      %7150 = vmatpush.bf16.msra.mxu0 %v7067
      %7151 = vmatmul.bf16.gmra.mxu0 %v6937
      %v7152 = vpop.f32.mrf.mxu0
      %v7153 = vadd.f32 0.0, %v7152
      %v7154 = vpop.f32.mrf.mxu0
      %7155 = vdwg.mxu0
      %7156 = vmatpush.bf16.msra.mxu0 %v7096
      %7157 = vmatpush.bf16.msra.mxu0 %v7092
      %7158 = vmatpush.bf16.msra.mxu0 %v7088
      %7159 = vmatpush.bf16.msra.mxu0 %v7084
      %7160 = vmatpush.bf16.msra.mxu0 %v7080
      %7161 = vmatpush.bf16.msra.mxu0 %v7076
      %7162 = vmatpush.bf16.msra.mxu0 %v7072
      %7163 = vmatpush.bf16.msra.mxu0 %v7068
      %7164 = vmatmul.bf16.gmra.mxu0 %v6937
      %v7165 = vpop.f32.mrf.mxu0
      %v7166 = vadd.f32 0.0, %v7165
      %v7167 = vpop.f32.mrf.mxu0
      %7168 = vdwg.mxu0
      %7169 = vmatpush.bf16.msra.mxu0 %v7097
      %7170 = vmatpush.bf16.msra.mxu0 %v7093
      %7171 = vmatpush.bf16.msra.mxu0 %v7089
      %7172 = vmatpush.bf16.msra.mxu0 %v7085
      %7173 = vmatpush.bf16.msra.mxu0 %v7081
      %7174 = vmatpush.bf16.msra.mxu0 %v7077
      %7175 = vmatpush.bf16.msra.mxu0 %v7073
      %7176 = vmatpush.bf16.msra.mxu0 %v7069
      %7177 = vmatmul.bf16.gmra.mxu0 %v6937
      %v7178 = vpop.f32.mrf.mxu0
      %v7179 = vadd.f32 0.0, %v7178
      %v7180 = vpop.f32.mrf.mxu0
      %7181 = vdwg.mxu0
      %v7214 = vunpack.c.l.b16 %v6905
      %v7215 = vunpack.c.h.b16 %v6905
      %v7216 = vunpack.c.l.b16 %v6906
      %v7217 = vunpack.c.h.b16 %v6906
      %v7218 = vunpack.c.l.b16 %v6907
      %v7219 = vunpack.c.h.b16 %v6907
      %v7220 = vunpack.c.l.b16 %v6908
      %v7221 = vunpack.c.h.b16 %v6908
      %v7222 = vunpack.c.l.b16 %v6909
      %v7223 = vunpack.c.h.b16 %v6909
      %v7224 = vunpack.c.l.b16 %v6910
      %v7225 = vunpack.c.h.b16 %v6910
      %v7226 = vunpack.c.l.b16 %v6911
      %v7227 = vunpack.c.h.b16 %v6911
      %v7228 = vunpack.c.l.b16 %v6912
      %v7229 = vunpack.c.h.b16 %v6912
      %v7230 = vunpack.c.l.b16 %v6913
      %v7231 = vunpack.c.h.b16 %v6913
      %v7232 = vunpack.c.l.b16 %v6914
      %v7233 = vunpack.c.h.b16 %v6914
      %v7234 = vunpack.c.l.b16 %v6915
      %v7235 = vunpack.c.h.b16 %v6915
      %v7236 = vunpack.c.l.b16 %v6916
      %v7237 = vunpack.c.h.b16 %v6916
      %v7238 = vunpack.c.l.b16 %v6917
      %v7239 = vunpack.c.h.b16 %v6917
      %v7240 = vunpack.c.l.b16 %v6918
      %v7241 = vunpack.c.h.b16 %v6918
      %v7242 = vunpack.c.l.b16 %v6919
      %v7243 = vunpack.c.h.b16 %v6919
      %v7244 = vunpack.c.l.b16 %v6920
      %v7245 = vunpack.c.h.b16 %v6920
      %v7246 = vunpack.c.l.b16 %v6921
      %v7247 = vunpack.c.h.b16 %v6921
      %v7248 = vunpack.c.l.b16 %v6922
      %v7249 = vunpack.c.h.b16 %v6922
      %v7250 = vunpack.c.l.b16 %v6923
      %v7251 = vunpack.c.h.b16 %v6923
      %v7252 = vunpack.c.l.b16 %v6924
      %v7253 = vunpack.c.h.b16 %v6924
      %v7254 = vunpack.c.l.b16 %v6925
      %v7255 = vunpack.c.h.b16 %v6925
      %v7256 = vunpack.c.l.b16 %v6926
      %v7257 = vunpack.c.h.b16 %v6926
      %v7258 = vunpack.c.l.b16 %v6927
      %v7259 = vunpack.c.h.b16 %v6927
      %v7260 = vunpack.c.l.b16 %v6928
      %v7261 = vunpack.c.h.b16 %v6928
      %v7262 = vunpack.c.l.b16 %v6929
      %v7263 = vunpack.c.h.b16 %v6929
      %v7264 = vunpack.c.l.b16 %v6930
      %v7265 = vunpack.c.h.b16 %v6930
      %v7266 = vunpack.c.l.b16 %v6931
      %v7267 = vunpack.c.h.b16 %v6931
      %v7268 = vunpack.c.l.b16 %v6932
      %v7269 = vunpack.c.h.b16 %v6932
      %v7270 = vunpack.c.l.b16 %v6933
      %v7271 = vunpack.c.h.b16 %v6933
      %v7272 = vunpack.c.l.b16 %v6934
      %v7273 = vunpack.c.h.b16 %v6934
      %v7274 = vunpack.c.l.b16 %v6935
      %v7275 = vunpack.c.h.b16 %v6935
      %v7276 = vunpack.c.l.b16 %v6936
      %v7277 = vunpack.c.h.b16 %v6936
      %v7278 = vpack.c.b16 %v7218, %v7214
      %v7279 = vpack.c.b16 %v7219, %v7215
      %v7280 = vpack.c.b16 %v7220, %v7216
      %v7281 = vpack.c.b16 %v7221, %v7217
      %v7282 = vpack.c.b16 %v7226, %v7222
      %v7283 = vpack.c.b16 %v7227, %v7223
      %v7284 = vpack.c.b16 %v7228, %v7224
      %v7285 = vpack.c.b16 %v7229, %v7225
      %v7286 = vpack.c.b16 %v7234, %v7230
      %v7287 = vpack.c.b16 %v7235, %v7231
      %v7288 = vpack.c.b16 %v7236, %v7232
      %v7289 = vpack.c.b16 %v7237, %v7233
      %v7290 = vpack.c.b16 %v7242, %v7238
      %v7291 = vpack.c.b16 %v7243, %v7239
      %v7292 = vpack.c.b16 %v7244, %v7240
      %v7293 = vpack.c.b16 %v7245, %v7241
      %v7294 = vpack.c.b16 %v7250, %v7246
      %v7295 = vpack.c.b16 %v7251, %v7247
      %v7296 = vpack.c.b16 %v7252, %v7248
      %v7297 = vpack.c.b16 %v7253, %v7249
      %v7298 = vpack.c.b16 %v7258, %v7254
      %v7299 = vpack.c.b16 %v7259, %v7255
      %v7300 = vpack.c.b16 %v7260, %v7256
      %v7301 = vpack.c.b16 %v7261, %v7257
      %v7302 = vpack.c.b16 %v7266, %v7262
      %v7303 = vpack.c.b16 %v7267, %v7263
      %v7304 = vpack.c.b16 %v7268, %v7264
      %v7305 = vpack.c.b16 %v7269, %v7265
      %v7306 = vpack.c.b16 %v7274, %v7270
      %v7307 = vpack.c.b16 %v7275, %v7271
      %v7308 = vpack.c.b16 %v7276, %v7272
      %v7309 = vpack.c.b16 %v7277, %v7273
      %7342 = vmatpush.bf16.msra.mxu0 %v7306
      %7343 = vmatpush.bf16.msra.mxu0 %v7302
      %7344 = vmatpush.bf16.msra.mxu0 %v7298
      %7345 = vmatpush.bf16.msra.mxu0 %v7294
      %7346 = vmatpush.bf16.msra.mxu0 %v7290
      %7347 = vmatpush.bf16.msra.mxu0 %v7286
      %7348 = vmatpush.bf16.msra.mxu0 %v7282
      %7349 = vmatpush.bf16.msra.mxu0 %v7278
      %7350 = vmatmul.bf16.gmra.mxu0 %v6904
      %v7351 = vpop.f32.mrf.mxu0
      %v7352 = vadd.f32 %v7140, %v7351
      %v7353 = vpop.f32.mrf.mxu0
      %7354 = vdwg.mxu0
      %7355 = vmatpush.bf16.msra.mxu0 %v7307
      %7356 = vmatpush.bf16.msra.mxu0 %v7303
      %7357 = vmatpush.bf16.msra.mxu0 %v7299
      %7358 = vmatpush.bf16.msra.mxu0 %v7295
      %7359 = vmatpush.bf16.msra.mxu0 %v7291
      %7360 = vmatpush.bf16.msra.mxu0 %v7287
      %7361 = vmatpush.bf16.msra.mxu0 %v7283
      %7362 = vmatpush.bf16.msra.mxu0 %v7279
      %7363 = vmatmul.bf16.gmra.mxu0 %v6904
      %v7364 = vpop.f32.mrf.mxu0
      %v7365 = vadd.f32 %v7153, %v7364
      %v7366 = vpop.f32.mrf.mxu0
      %7367 = vdwg.mxu0
      %7368 = vmatpush.bf16.msra.mxu0 %v7308
      %7369 = vmatpush.bf16.msra.mxu0 %v7304
      %7370 = vmatpush.bf16.msra.mxu0 %v7300
      %7371 = vmatpush.bf16.msra.mxu0 %v7296
      %7372 = vmatpush.bf16.msra.mxu0 %v7292
      %7373 = vmatpush.bf16.msra.mxu0 %v7288
      %7374 = vmatpush.bf16.msra.mxu0 %v7284
      %7375 = vmatpush.bf16.msra.mxu0 %v7280
      %7376 = vmatmul.bf16.gmra.mxu0 %v6904
      %v7377 = vpop.f32.mrf.mxu0
      %v7378 = vadd.f32 %v7166, %v7377
      %v7379 = vpop.f32.mrf.mxu0
      %7380 = vdwg.mxu0
      %7381 = vmatpush.bf16.msra.mxu0 %v7309
      %7382 = vmatpush.bf16.msra.mxu0 %v7305
      %7383 = vmatpush.bf16.msra.mxu0 %v7301
      %7384 = vmatpush.bf16.msra.mxu0 %v7297
      %7385 = vmatpush.bf16.msra.mxu0 %v7293
      %7386 = vmatpush.bf16.msra.mxu0 %v7289
      %7387 = vmatpush.bf16.msra.mxu0 %v7285
      %7388 = vmatpush.bf16.msra.mxu0 %v7281
      %7389 = vmatmul.bf16.gmra.mxu0 %v6904
      %v7390 = vpop.f32.mrf.mxu0
      %v7391 = vadd.f32 %v7179, %v7390
      %v7392 = vpop.f32.mrf.mxu0
      %7393 = vdwg.mxu0
      %v7394 = vadd.f32 %v7352, %v630
      %v7395 = vadd.f32 %v7365, %v631
      %v7396 = vadd.f32 %v7378, %v632
      %v7397 = vadd.f32 %v7391, %v633
      %v7398 = vmul.f32 %v7394, 0.5
      %v7399 = vtanh.pop %v7398
      %v7400 = vmul.f32 %v7399, 0.5
      %v7401 = vadd.f32 %v7400, 0.5
      %v7402 = vmul.f32 %v7395, 0.5
      %v7403 = vtanh.pop %v7402
      %v7404 = vmul.f32 %v7403, 0.5
      %v7405 = vadd.f32 %v7404, 0.5
      %v7406 = vtanh.pop %v7396
      %v7407 = vmul.f32 %v7397, 0.5
      %v7408 = vtanh.pop %v7407
      %v7409 = vmul.f32 %v7408, 0.5
      %v7410 = vadd.f32 %v7409, 0.5
      %v7411 = vmul.f32 %v7405, %v6900
      %v7412 = vmul.f32 %v7401, %v7406
      %v7413 = vadd.f32 %v7411, %v7412
      %v7414 = vtanh.pop %v7413
      %v7415 = vmul.f32 %v7410, %v7414
      %7416 = vst [vmem:[#allocation2 + $0x6] sm:$0x1] %v7413
      %v7417 = vpack.c.bf16 %v7413, %v7413
      %v7418 = vld [vmem:[#allocation10] sm:$0xff]
      %v7419 = vld [vmem:[#allocation10 + $0x8] sm:$0xff]
      %v7420 = vld [vmem:[#allocation10 + $0x10] sm:$0xff]
      %v7421 = vld [vmem:[#allocation10 + $0x18] sm:$0xff]
      %v7422 = vld [vmem:[#allocation10 + $0x20] sm:$0xff]
      %v7423 = vld [vmem:[#allocation10 + $0x28] sm:$0xff]
      %v7424 = vld [vmem:[#allocation10 + $0x30] sm:$0xff]
      %v7425 = vld [vmem:[#allocation10 + $0x38] sm:$0xff]
      %v7426 = vld [vmem:[#allocation10 + $0x40] sm:$0xff]
      %v7427 = vld [vmem:[#allocation10 + $0x48] sm:$0xff]
      %v7428 = vld [vmem:[#allocation10 + $0x50] sm:$0xff]
      %v7429 = vld [vmem:[#allocation10 + $0x58] sm:$0xff]
      %v7430 = vld [vmem:[#allocation10 + $0x60] sm:$0xff]
      %v7431 = vld [vmem:[#allocation10 + $0x68] sm:$0xff]
      %v7432 = vld [vmem:[#allocation10 + $0x70] sm:$0xff]
      %v7433 = vld [vmem:[#allocation10 + $0x78] sm:$0xff]
      %v7434 = vld [vmem:[#allocation10 + $0x80] sm:$0xff]
      %v7435 = vld [vmem:[#allocation10 + $0x88] sm:$0xff]
      %v7436 = vld [vmem:[#allocation10 + $0x90] sm:$0xff]
      %v7437 = vld [vmem:[#allocation10 + $0x98] sm:$0xff]
      %v7438 = vld [vmem:[#allocation10 + $0xa0] sm:$0xff]
      %v7439 = vld [vmem:[#allocation10 + $0xa8] sm:$0xff]
      %v7440 = vld [vmem:[#allocation10 + $0xb0] sm:$0xff]
      %v7441 = vld [vmem:[#allocation10 + $0xb8] sm:$0xff]
      %v7442 = vld [vmem:[#allocation10 + $0xc0] sm:$0xff]
      %v7443 = vld [vmem:[#allocation10 + $0xc8] sm:$0xff]
      %v7444 = vld [vmem:[#allocation10 + $0xd0] sm:$0xff]
      %v7445 = vld [vmem:[#allocation10 + $0xd8] sm:$0xff]
      %v7446 = vld [vmem:[#allocation10 + $0xe0] sm:$0xff]
      %v7447 = vld [vmem:[#allocation10 + $0xe8] sm:$0xff]
      %v7448 = vld [vmem:[#allocation10 + $0xf0] sm:$0xff]
      %v7449 = vld [vmem:[#allocation10 + $0xf8] sm:$0xff]
      %v7450 = vpack.c.bf16 %v7415, %v7415
      %v7451 = vld [vmem:[#allocation12] sm:$0xff]
      %v7452 = vld [vmem:[#allocation12 + $0x8] sm:$0xff]
      %v7453 = vld [vmem:[#allocation12 + $0x10] sm:$0xff]
      %v7454 = vld [vmem:[#allocation12 + $0x18] sm:$0xff]
      %v7455 = vld [vmem:[#allocation12 + $0x20] sm:$0xff]
      %v7456 = vld [vmem:[#allocation12 + $0x28] sm:$0xff]
      %v7457 = vld [vmem:[#allocation12 + $0x30] sm:$0xff]
      %v7458 = vld [vmem:[#allocation12 + $0x38] sm:$0xff]
      %v7459 = vld [vmem:[#allocation12 + $0x40] sm:$0xff]
      %v7460 = vld [vmem:[#allocation12 + $0x48] sm:$0xff]
      %v7461 = vld [vmem:[#allocation12 + $0x50] sm:$0xff]
      %v7462 = vld [vmem:[#allocation12 + $0x58] sm:$0xff]
      %v7463 = vld [vmem:[#allocation12 + $0x60] sm:$0xff]
      %v7464 = vld [vmem:[#allocation12 + $0x68] sm:$0xff]
      %v7465 = vld [vmem:[#allocation12 + $0x70] sm:$0xff]
      %v7466 = vld [vmem:[#allocation12 + $0x78] sm:$0xff]
      %v7467 = vld [vmem:[#allocation12 + $0x80] sm:$0xff]
      %v7468 = vld [vmem:[#allocation12 + $0x88] sm:$0xff]
      %v7469 = vld [vmem:[#allocation12 + $0x90] sm:$0xff]
      %v7470 = vld [vmem:[#allocation12 + $0x98] sm:$0xff]
      %v7471 = vld [vmem:[#allocation12 + $0xa0] sm:$0xff]
      %v7472 = vld [vmem:[#allocation12 + $0xa8] sm:$0xff]
      %v7473 = vld [vmem:[#allocation12 + $0xb0] sm:$0xff]
      %v7474 = vld [vmem:[#allocation12 + $0xb8] sm:$0xff]
      %v7475 = vld [vmem:[#allocation12 + $0xc0] sm:$0xff]
      %v7476 = vld [vmem:[#allocation12 + $0xc8] sm:$0xff]
      %v7477 = vld [vmem:[#allocation12 + $0xd0] sm:$0xff]
      %v7478 = vld [vmem:[#allocation12 + $0xd8] sm:$0xff]
      %v7479 = vld [vmem:[#allocation12 + $0xe0] sm:$0xff]
      %v7480 = vld [vmem:[#allocation12 + $0xe8] sm:$0xff]
      %v7481 = vld [vmem:[#allocation12 + $0xf0] sm:$0xff]
      %v7482 = vld [vmem:[#allocation12 + $0xf8] sm:$0xff]
      %v7515 = vunpack.c.l.b16 %v7451
      %v7516 = vunpack.c.h.b16 %v7451
      %v7517 = vunpack.c.l.b16 %v7452
      %v7518 = vunpack.c.h.b16 %v7452
      %v7519 = vunpack.c.l.b16 %v7453
      %v7520 = vunpack.c.h.b16 %v7453
      %v7521 = vunpack.c.l.b16 %v7454
      %v7522 = vunpack.c.h.b16 %v7454
      %v7523 = vunpack.c.l.b16 %v7455
      %v7524 = vunpack.c.h.b16 %v7455
      %v7525 = vunpack.c.l.b16 %v7456
      %v7526 = vunpack.c.h.b16 %v7456
      %v7527 = vunpack.c.l.b16 %v7457
      %v7528 = vunpack.c.h.b16 %v7457
      %v7529 = vunpack.c.l.b16 %v7458
      %v7530 = vunpack.c.h.b16 %v7458
      %v7531 = vunpack.c.l.b16 %v7459
      %v7532 = vunpack.c.h.b16 %v7459
      %v7533 = vunpack.c.l.b16 %v7460
      %v7534 = vunpack.c.h.b16 %v7460
      %v7535 = vunpack.c.l.b16 %v7461
      %v7536 = vunpack.c.h.b16 %v7461
      %v7537 = vunpack.c.l.b16 %v7462
      %v7538 = vunpack.c.h.b16 %v7462
      %v7539 = vunpack.c.l.b16 %v7463
      %v7540 = vunpack.c.h.b16 %v7463
      %v7541 = vunpack.c.l.b16 %v7464
      %v7542 = vunpack.c.h.b16 %v7464
      %v7543 = vunpack.c.l.b16 %v7465
      %v7544 = vunpack.c.h.b16 %v7465
      %v7545 = vunpack.c.l.b16 %v7466
      %v7546 = vunpack.c.h.b16 %v7466
      %v7547 = vunpack.c.l.b16 %v7467
      %v7548 = vunpack.c.h.b16 %v7467
      %v7549 = vunpack.c.l.b16 %v7468
      %v7550 = vunpack.c.h.b16 %v7468
      %v7551 = vunpack.c.l.b16 %v7469
      %v7552 = vunpack.c.h.b16 %v7469
      %v7553 = vunpack.c.l.b16 %v7470
      %v7554 = vunpack.c.h.b16 %v7470
      %v7555 = vunpack.c.l.b16 %v7471
      %v7556 = vunpack.c.h.b16 %v7471
      %v7557 = vunpack.c.l.b16 %v7472
      %v7558 = vunpack.c.h.b16 %v7472
      %v7559 = vunpack.c.l.b16 %v7473
      %v7560 = vunpack.c.h.b16 %v7473
      %v7561 = vunpack.c.l.b16 %v7474
      %v7562 = vunpack.c.h.b16 %v7474
      %v7563 = vunpack.c.l.b16 %v7475
      %v7564 = vunpack.c.h.b16 %v7475
      %v7565 = vunpack.c.l.b16 %v7476
      %v7566 = vunpack.c.h.b16 %v7476
      %v7567 = vunpack.c.l.b16 %v7477
      %v7568 = vunpack.c.h.b16 %v7477
      %v7569 = vunpack.c.l.b16 %v7478
      %v7570 = vunpack.c.h.b16 %v7478
      %v7571 = vunpack.c.l.b16 %v7479
      %v7572 = vunpack.c.h.b16 %v7479
      %v7573 = vunpack.c.l.b16 %v7480
      %v7574 = vunpack.c.h.b16 %v7480
      %v7575 = vunpack.c.l.b16 %v7481
      %v7576 = vunpack.c.h.b16 %v7481
      %v7577 = vunpack.c.l.b16 %v7482
      %v7578 = vunpack.c.h.b16 %v7482
      %v7579 = vpack.c.b16 %v7519, %v7515
      %v7580 = vpack.c.b16 %v7520, %v7516
      %v7581 = vpack.c.b16 %v7521, %v7517
      %v7582 = vpack.c.b16 %v7522, %v7518
      %v7583 = vpack.c.b16 %v7527, %v7523
      %v7584 = vpack.c.b16 %v7528, %v7524
      %v7585 = vpack.c.b16 %v7529, %v7525
      %v7586 = vpack.c.b16 %v7530, %v7526
      %v7587 = vpack.c.b16 %v7535, %v7531
      %v7588 = vpack.c.b16 %v7536, %v7532
      %v7589 = vpack.c.b16 %v7537, %v7533
      %v7590 = vpack.c.b16 %v7538, %v7534
      %v7591 = vpack.c.b16 %v7543, %v7539
      %v7592 = vpack.c.b16 %v7544, %v7540
      %v7593 = vpack.c.b16 %v7545, %v7541
      %v7594 = vpack.c.b16 %v7546, %v7542
      %v7595 = vpack.c.b16 %v7551, %v7547
      %v7596 = vpack.c.b16 %v7552, %v7548
      %v7597 = vpack.c.b16 %v7553, %v7549
      %v7598 = vpack.c.b16 %v7554, %v7550
      %v7599 = vpack.c.b16 %v7559, %v7555
      %v7600 = vpack.c.b16 %v7560, %v7556
      %v7601 = vpack.c.b16 %v7561, %v7557
      %v7602 = vpack.c.b16 %v7562, %v7558
      %v7603 = vpack.c.b16 %v7567, %v7563
      %v7604 = vpack.c.b16 %v7568, %v7564
      %v7605 = vpack.c.b16 %v7569, %v7565
      %v7606 = vpack.c.b16 %v7570, %v7566
      %v7607 = vpack.c.b16 %v7575, %v7571
      %v7608 = vpack.c.b16 %v7576, %v7572
      %v7609 = vpack.c.b16 %v7577, %v7573
      %v7610 = vpack.c.b16 %v7578, %v7574
      %7643 = vmatpush.bf16.msra.mxu0 %v7607
      %7644 = vmatpush.bf16.msra.mxu0 %v7603
      %7645 = vmatpush.bf16.msra.mxu0 %v7599
      %7646 = vmatpush.bf16.msra.mxu0 %v7595
      %7647 = vmatpush.bf16.msra.mxu0 %v7591
      %7648 = vmatpush.bf16.msra.mxu0 %v7587
      %7649 = vmatpush.bf16.msra.mxu0 %v7583
      %7650 = vmatpush.bf16.msra.mxu0 %v7579
      %7651 = vmatmul.bf16.gmra.mxu0 %v7450
      %v7652 = vpop.f32.mrf.mxu0
      %v7653 = vadd.f32 0.0, %v7652
      %v7654 = vpop.f32.mrf.mxu0
      %7655 = vdwg.mxu0
      %7656 = vmatpush.bf16.msra.mxu0 %v7608
      %7657 = vmatpush.bf16.msra.mxu0 %v7604
      %7658 = vmatpush.bf16.msra.mxu0 %v7600
      %7659 = vmatpush.bf16.msra.mxu0 %v7596
      %7660 = vmatpush.bf16.msra.mxu0 %v7592
      %7661 = vmatpush.bf16.msra.mxu0 %v7588
      %7662 = vmatpush.bf16.msra.mxu0 %v7584
      %7663 = vmatpush.bf16.msra.mxu0 %v7580
      %7664 = vmatmul.bf16.gmra.mxu0 %v7450
      %v7665 = vpop.f32.mrf.mxu0
      %v7666 = vadd.f32 0.0, %v7665
      %v7667 = vpop.f32.mrf.mxu0
      %7668 = vdwg.mxu0
      %7669 = vmatpush.bf16.msra.mxu0 %v7609
      %7670 = vmatpush.bf16.msra.mxu0 %v7605
      %7671 = vmatpush.bf16.msra.mxu0 %v7601
      %7672 = vmatpush.bf16.msra.mxu0 %v7597
      %7673 = vmatpush.bf16.msra.mxu0 %v7593
      %7674 = vmatpush.bf16.msra.mxu0 %v7589
      %7675 = vmatpush.bf16.msra.mxu0 %v7585
      %7676 = vmatpush.bf16.msra.mxu0 %v7581
      %7677 = vmatmul.bf16.gmra.mxu0 %v7450
      %v7678 = vpop.f32.mrf.mxu0
      %v7679 = vadd.f32 0.0, %v7678
      %v7680 = vpop.f32.mrf.mxu0
      %7681 = vdwg.mxu0
      %7682 = vmatpush.bf16.msra.mxu0 %v7610
      %7683 = vmatpush.bf16.msra.mxu0 %v7606
      %7684 = vmatpush.bf16.msra.mxu0 %v7602
      %7685 = vmatpush.bf16.msra.mxu0 %v7598
      %7686 = vmatpush.bf16.msra.mxu0 %v7594
      %7687 = vmatpush.bf16.msra.mxu0 %v7590
      %7688 = vmatpush.bf16.msra.mxu0 %v7586
      %7689 = vmatpush.bf16.msra.mxu0 %v7582
      %7690 = vmatmul.bf16.gmra.mxu0 %v7450
      %v7691 = vpop.f32.mrf.mxu0
      %v7692 = vadd.f32 0.0, %v7691
      %v7693 = vpop.f32.mrf.mxu0
      %7694 = vdwg.mxu0
      %v7727 = vunpack.c.l.b16 %v7418
      %v7728 = vunpack.c.h.b16 %v7418
      %v7729 = vunpack.c.l.b16 %v7419
      %v7730 = vunpack.c.h.b16 %v7419
      %v7731 = vunpack.c.l.b16 %v7420
      %v7732 = vunpack.c.h.b16 %v7420
      %v7733 = vunpack.c.l.b16 %v7421
      %v7734 = vunpack.c.h.b16 %v7421
      %v7735 = vunpack.c.l.b16 %v7422
      %v7736 = vunpack.c.h.b16 %v7422
      %v7737 = vunpack.c.l.b16 %v7423
      %v7738 = vunpack.c.h.b16 %v7423
      %v7739 = vunpack.c.l.b16 %v7424
      %v7740 = vunpack.c.h.b16 %v7424
      %v7741 = vunpack.c.l.b16 %v7425
      %v7742 = vunpack.c.h.b16 %v7425
      %v7743 = vunpack.c.l.b16 %v7426
      %v7744 = vunpack.c.h.b16 %v7426
      %v7745 = vunpack.c.l.b16 %v7427
      %v7746 = vunpack.c.h.b16 %v7427
      %v7747 = vunpack.c.l.b16 %v7428
      %v7748 = vunpack.c.h.b16 %v7428
      %v7749 = vunpack.c.l.b16 %v7429
      %v7750 = vunpack.c.h.b16 %v7429
      %v7751 = vunpack.c.l.b16 %v7430
      %v7752 = vunpack.c.h.b16 %v7430
      %v7753 = vunpack.c.l.b16 %v7431
      %v7754 = vunpack.c.h.b16 %v7431
      %v7755 = vunpack.c.l.b16 %v7432
      %v7756 = vunpack.c.h.b16 %v7432
      %v7757 = vunpack.c.l.b16 %v7433
      %v7758 = vunpack.c.h.b16 %v7433
      %v7759 = vunpack.c.l.b16 %v7434
      %v7760 = vunpack.c.h.b16 %v7434
      %v7761 = vunpack.c.l.b16 %v7435
      %v7762 = vunpack.c.h.b16 %v7435
      %v7763 = vunpack.c.l.b16 %v7436
      %v7764 = vunpack.c.h.b16 %v7436
      %v7765 = vunpack.c.l.b16 %v7437
      %v7766 = vunpack.c.h.b16 %v7437
      %v7767 = vunpack.c.l.b16 %v7438
      %v7768 = vunpack.c.h.b16 %v7438
      %v7769 = vunpack.c.l.b16 %v7439
      %v7770 = vunpack.c.h.b16 %v7439
      %v7771 = vunpack.c.l.b16 %v7440
      %v7772 = vunpack.c.h.b16 %v7440
      %v7773 = vunpack.c.l.b16 %v7441
      %v7774 = vunpack.c.h.b16 %v7441
      %v7775 = vunpack.c.l.b16 %v7442
      %v7776 = vunpack.c.h.b16 %v7442
      %v7777 = vunpack.c.l.b16 %v7443
      %v7778 = vunpack.c.h.b16 %v7443
      %v7779 = vunpack.c.l.b16 %v7444
      %v7780 = vunpack.c.h.b16 %v7444
      %v7781 = vunpack.c.l.b16 %v7445
      %v7782 = vunpack.c.h.b16 %v7445
      %v7783 = vunpack.c.l.b16 %v7446
      %v7784 = vunpack.c.h.b16 %v7446
      %v7785 = vunpack.c.l.b16 %v7447
      %v7786 = vunpack.c.h.b16 %v7447
      %v7787 = vunpack.c.l.b16 %v7448
      %v7788 = vunpack.c.h.b16 %v7448
      %v7789 = vunpack.c.l.b16 %v7449
      %v7790 = vunpack.c.h.b16 %v7449
      %v7791 = vpack.c.b16 %v7731, %v7727
      %v7792 = vpack.c.b16 %v7732, %v7728
      %v7793 = vpack.c.b16 %v7733, %v7729
      %v7794 = vpack.c.b16 %v7734, %v7730
      %v7795 = vpack.c.b16 %v7739, %v7735
      %v7796 = vpack.c.b16 %v7740, %v7736
      %v7797 = vpack.c.b16 %v7741, %v7737
      %v7798 = vpack.c.b16 %v7742, %v7738
      %v7799 = vpack.c.b16 %v7747, %v7743
      %v7800 = vpack.c.b16 %v7748, %v7744
      %v7801 = vpack.c.b16 %v7749, %v7745
      %v7802 = vpack.c.b16 %v7750, %v7746
      %v7803 = vpack.c.b16 %v7755, %v7751
      %v7804 = vpack.c.b16 %v7756, %v7752
      %v7805 = vpack.c.b16 %v7757, %v7753
      %v7806 = vpack.c.b16 %v7758, %v7754
      %v7807 = vpack.c.b16 %v7763, %v7759
      %v7808 = vpack.c.b16 %v7764, %v7760
      %v7809 = vpack.c.b16 %v7765, %v7761
      %v7810 = vpack.c.b16 %v7766, %v7762
      %v7811 = vpack.c.b16 %v7771, %v7767
      %v7812 = vpack.c.b16 %v7772, %v7768
      %v7813 = vpack.c.b16 %v7773, %v7769
      %v7814 = vpack.c.b16 %v7774, %v7770
      %v7815 = vpack.c.b16 %v7779, %v7775
      %v7816 = vpack.c.b16 %v7780, %v7776
      %v7817 = vpack.c.b16 %v7781, %v7777
      %v7818 = vpack.c.b16 %v7782, %v7778
      %v7819 = vpack.c.b16 %v7787, %v7783
      %v7820 = vpack.c.b16 %v7788, %v7784
      %v7821 = vpack.c.b16 %v7789, %v7785
      %v7822 = vpack.c.b16 %v7790, %v7786
      %7855 = vmatpush.bf16.msra.mxu0 %v7819
      %7856 = vmatpush.bf16.msra.mxu0 %v7815
      %7857 = vmatpush.bf16.msra.mxu0 %v7811
      %7858 = vmatpush.bf16.msra.mxu0 %v7807
      %7859 = vmatpush.bf16.msra.mxu0 %v7803
      %7860 = vmatpush.bf16.msra.mxu0 %v7799
      %7861 = vmatpush.bf16.msra.mxu0 %v7795
      %7862 = vmatpush.bf16.msra.mxu0 %v7791
      %7863 = vmatmul.bf16.gmra.mxu0 %v7417
      %v7864 = vpop.f32.mrf.mxu0
      %v7865 = vadd.f32 %v7653, %v7864
      %v7866 = vpop.f32.mrf.mxu0
      %7867 = vdwg.mxu0
      %7868 = vmatpush.bf16.msra.mxu0 %v7820
      %7869 = vmatpush.bf16.msra.mxu0 %v7816
      %7870 = vmatpush.bf16.msra.mxu0 %v7812
      %7871 = vmatpush.bf16.msra.mxu0 %v7808
      %7872 = vmatpush.bf16.msra.mxu0 %v7804
      %7873 = vmatpush.bf16.msra.mxu0 %v7800
      %7874 = vmatpush.bf16.msra.mxu0 %v7796
      %7875 = vmatpush.bf16.msra.mxu0 %v7792
      %7876 = vmatmul.bf16.gmra.mxu0 %v7417
      %v7877 = vpop.f32.mrf.mxu0
      %v7878 = vadd.f32 %v7666, %v7877
      %v7879 = vpop.f32.mrf.mxu0
      %7880 = vdwg.mxu0
      %7881 = vmatpush.bf16.msra.mxu0 %v7821
      %7882 = vmatpush.bf16.msra.mxu0 %v7817
      %7883 = vmatpush.bf16.msra.mxu0 %v7813
      %7884 = vmatpush.bf16.msra.mxu0 %v7809
      %7885 = vmatpush.bf16.msra.mxu0 %v7805
      %7886 = vmatpush.bf16.msra.mxu0 %v7801
      %7887 = vmatpush.bf16.msra.mxu0 %v7797
      %7888 = vmatpush.bf16.msra.mxu0 %v7793
      %7889 = vmatmul.bf16.gmra.mxu0 %v7417
      %v7890 = vpop.f32.mrf.mxu0
      %v7891 = vadd.f32 %v7679, %v7890
      %v7892 = vpop.f32.mrf.mxu0
      %7893 = vdwg.mxu0
      %7894 = vmatpush.bf16.msra.mxu0 %v7822
      %7895 = vmatpush.bf16.msra.mxu0 %v7818
      %7896 = vmatpush.bf16.msra.mxu0 %v7814
      %7897 = vmatpush.bf16.msra.mxu0 %v7810
      %7898 = vmatpush.bf16.msra.mxu0 %v7806
      %7899 = vmatpush.bf16.msra.mxu0 %v7802
      %7900 = vmatpush.bf16.msra.mxu0 %v7798
      %7901 = vmatpush.bf16.msra.mxu0 %v7794
      %7902 = vmatmul.bf16.gmra.mxu0 %v7417
      %v7903 = vpop.f32.mrf.mxu0
      %v7904 = vadd.f32 %v7692, %v7903
      %v7905 = vpop.f32.mrf.mxu0
      %7906 = vdwg.mxu0
      %v7907 = vadd.f32 %v7865, %v630
      %v7908 = vadd.f32 %v7878, %v631
      %v7909 = vadd.f32 %v7891, %v632
      %v7910 = vadd.f32 %v7904, %v633
      %v7911 = vmul.f32 %v7907, 0.5
      %v7912 = vtanh.pop %v7911
      %v7913 = vmul.f32 %v7912, 0.5
      %v7914 = vadd.f32 %v7913, 0.5
      %v7915 = vmul.f32 %v7908, 0.5
      %v7916 = vtanh.pop %v7915
      %v7917 = vmul.f32 %v7916, 0.5
      %v7918 = vadd.f32 %v7917, 0.5
      %v7919 = vtanh.pop %v7909
      %v7920 = vmul.f32 %v7910, 0.5
      %v7921 = vtanh.pop %v7920
      %v7922 = vmul.f32 %v7921, 0.5
      %v7923 = vadd.f32 %v7922, 0.5
      %v7924 = vmul.f32 %v7918, %v7413
      %v7925 = vmul.f32 %v7914, %v7919
      %v7926 = vadd.f32 %v7924, %v7925
      %v7927 = vtanh.pop %v7926
      %v7928 = vmul.f32 %v7923, %v7927
      %7929 = vst [vmem:[#allocation2 + $0x7] sm:$0x1] %v7926
      %s7930 = smul.u32 %s3742, 8
      %v7931 = vld [vmem:[#allocation2] sm:$0xff]
      %s7932 = scalar_lea.vmem [#allocation13], %s7930
      %7933 = vst [vmem:[%s7932] sm:$0xff] %v7931
      %s7934 = sadd.s32 %s3742, 1
      %p7935 = por %p3745, %p3825
    $region50: #{tpu_custom_call.1} parent=1 // loop_footer
      _
    $region51: #{tpu_custom_call.1} parent=1 // loop_footer_branch
      %3741 = sbr.rel target = $region47
    $region52: #{tpu_custom_call.1} parent=1 // loop_exit
      _
    %v7936 = vld [vmem:[#allocation13] sm:$0xff]
    %v7937 = vld [vmem:[#allocation13 + $0x8] sm:$0xff]
    %v7938 = vld [vmem:[#allocation13 + $0x10] sm:$0xff]
    %v7939 = vld [vmem:[#allocation13 + $0x18] sm:$0xff]
    %v7940 = vld [vmem:[#allocation13 + $0x20] sm:$0xff]
    %v7941 = vld [vmem:[#allocation13 + $0x28] sm:$0xff]
    %v7942 = vld [vmem:[#allocation13 + $0x30] sm:$0xff]
    %v7943 = vld [vmem:[#allocation13 + $0x38] sm:$0xff]
    %v7944 = vld [vmem:[#allocation3] sm:$0xff]
    %v7945 = vld [vmem:[#allocation3 + $0x8] sm:$0xff]
    %v7946 = vld [vmem:[#allocation3 + $0x10] sm:$0xff]
    %v7947 = vld [vmem:[#allocation3 + $0x18] sm:$0xff]
    %v7948 = vld [vmem:[#allocation3 + $0x20] sm:$0xff]
    %v7949 = vld [vmem:[#allocation3 + $0x28] sm:$0xff]
    %v7950 = vld [vmem:[#allocation3 + $0x30] sm:$0xff]
    %v7951 = vld [vmem:[#allocation3 + $0x38] sm:$0xff]
    %v7952 = vld [vmem:[#allocation3 + $0x40] sm:$0xff]
    %v7953 = vld [vmem:[#allocation3 + $0x48] sm:$0xff]
    %v7954 = vld [vmem:[#allocation3 + $0x50] sm:$0xff]
    %v7955 = vld [vmem:[#allocation3 + $0x58] sm:$0xff]
    %v7956 = vld [vmem:[#allocation3 + $0x60] sm:$0xff]
    %v7957 = vld [vmem:[#allocation3 + $0x68] sm:$0xff]
    %v7958 = vld [vmem:[#allocation3 + $0x70] sm:$0xff]
    %v7959 = vld [vmem:[#allocation3 + $0x78] sm:$0xff]
    %7960 = vmatpush.msra.mxu0 %v7959
    %7961 = vmatpush.msra.mxu0 %v7958
    %7962 = vmatpush.msra.mxu0 %v7957
    %7963 = vmatpush.msra.mxu0 %v7956
    %7964 = vmatpush.msra.mxu0 %v7955
    %7965 = vmatpush.msra.mxu0 %v7954
    %7966 = vmatpush.msra.mxu0 %v7953
    %7967 = vmatpush.msra.mxu0 %v7952
    %7968 = vmatpush.msra.mxu0 %v7951
    %7969 = vmatpush.msra.mxu0 %v7950
    %7970 = vmatpush.msra.mxu0 %v7949
    %7971 = vmatpush.msra.mxu0 %v7948
    %7972 = vmatpush.msra.mxu0 %v7947
    %7973 = vmatpush.msra.mxu0 %v7946
    %7974 = vmatpush.msra.mxu0 %v7945
    %7975 = vmatpush.msra.mxu0 %v7944
    %7976 = vmatmul.f32.gmra.mxu0 %v7936
    %v7977 = vpop.f32.mrf.mxu0
    %v7978 = vadd.f32 0.0, %v7977
    %7979 = vmatmul.f32.gmra.mxu0 %v7937
    %v7980 = vpop.f32.mrf.mxu0
    %v7981 = vadd.f32 0.0, %v7980
    %7982 = vmatmul.f32.gmra.mxu0 %v7938
    %v7983 = vpop.f32.mrf.mxu0
    %v7984 = vadd.f32 0.0, %v7983
    %7985 = vmatmul.f32.gmra.mxu0 %v7939
    %v7986 = vpop.f32.mrf.mxu0
    %v7987 = vadd.f32 0.0, %v7986
    %7988 = vmatmul.f32.gmra.mxu0 %v7940
    %v7989 = vpop.f32.mrf.mxu0
    %v7990 = vadd.f32 0.0, %v7989
    %7991 = vmatmul.f32.gmra.mxu0 %v7941
    %v7992 = vpop.f32.mrf.mxu0
    %v7993 = vadd.f32 0.0, %v7992
    %7994 = vmatmul.f32.gmra.mxu0 %v7942
    %v7995 = vpop.f32.mrf.mxu0
    %v7996 = vadd.f32 0.0, %v7995
    %7997 = vmatmul.f32.gmra.mxu0 %v7943
    %v7998 = vpop.f32.mrf.mxu0
    %v7999 = vadd.f32 0.0, %v7998
    %8000 = vdwg.mxu0
    %v8002 = vperm.slane %v111, 0
    %v8004 = vmul.f32 %v7978, %v8002
    %v8005 = vmul.f32 %v7981, %v8002
    %v8006 = vmul.f32 %v7984, %v8002
    %v8007 = vmul.f32 %v7987, %v8002
    %v8008 = vmul.f32 %v7990, %v8002
    %v8009 = vmul.f32 %v7993, %v8002
    %v8010 = vmul.f32 %v7996, %v8002
    %v8011 = vmul.f32 %v7999, %v8002
    %8012 = vmax.xlane.f32.xlu0 %v8004
    %v8013 = vpop.xlane.xlu0 %8012
    %8014 = vmax.xlane.f32.xlu0 %v8005
    %v8015 = vpop.xlane.xlu0 %8014
    %8016 = vmax.xlane.f32.xlu0 %v8006
    %v8017 = vpop.xlane.xlu0 %8016
    %8018 = vmax.xlane.f32.xlu0 %v8007
    %v8019 = vpop.xlane.xlu0 %8018
    %8020 = vmax.xlane.f32.xlu0 %v8008
    %v8021 = vpop.xlane.xlu0 %8020
    %8022 = vmax.xlane.f32.xlu0 %v8009
    %v8023 = vpop.xlane.xlu0 %8022
    %8024 = vmax.xlane.f32.xlu0 %v8010
    %v8025 = vpop.xlane.xlu0 %8024
    %8026 = vmax.xlane.f32.xlu0 %v8011
    %v8027 = vpop.xlane.xlu0 %8026
    %v8028 = vlaneseq
    %v8029 = vand.u32 %v8028, 127
    %vm8030 = vcmp.eq.f32.partialorder %v8004, %v8013
    %vm8031 = vcmp.eq.f32.partialorder %v8005, %v8015
    %vm8032 = vcmp.eq.f32.partialorder %v8006, %v8017
    %vm8033 = vcmp.eq.f32.partialorder %v8007, %v8019
    %vm8034 = vcmp.eq.f32.partialorder %v8008, %v8021
    %vm8035 = vcmp.eq.f32.partialorder %v8009, %v8023
    %vm8036 = vcmp.eq.f32.partialorder %v8010, %v8025
    %vm8037 = vcmp.eq.f32.partialorder %v8011, %v8027
    %v8038 = vsel %vm8030, %v8029, 128
    %v8039 = vsel %vm8031, %v8029, 128
    %v8040 = vsel %vm8032, %v8029, 128
    %v8041 = vsel %vm8033, %v8029, 128
    %v8042 = vsel %vm8034, %v8029, 128
    %v8043 = vsel %vm8035, %v8029, 128
    %v8044 = vsel %vm8036, %v8029, 128
    %v8045 = vsel %vm8037, %v8029, 128
    %v8046 = vand.u32 %v8038, 65535
    %v8047 = vshra.s32 %v8038, 16
    %v8048 = vcvt.s32.f32 %v8046
    %v8049 = vcvt.s32.f32 %v8047
    %8050 = vmin.xlane.f32.xlu0 %v8049
    %v8051 = vpop.xlane.xlu0 %8050
    %vm8052 = vcmp.eq.f32.partialorder %v8049, %v8051
    %v8053 = vsel %vm8052, %v8048, inf
    %8054 = vmin.xlane.f32.xlu0 %v8053
    %v8055 = vpop.xlane.xlu0 %8054
    %v8056 = vcvt.f32.s32 %v8055
    %v8057 = vcvt.f32.s32 %v8051
    %v8058 = vshll.u32 %v8057, 16
    %v8059 = vadd.s32 %v8058, %v8056
    %v8060 = vand.u32 %v8039, 65535
    %v8061 = vshra.s32 %v8039, 16
    %v8062 = vcvt.s32.f32 %v8060
    %v8063 = vcvt.s32.f32 %v8061
    %8064 = vmin.xlane.f32.xlu0 %v8063
    %v8065 = vpop.xlane.xlu0 %8064
    %vm8066 = vcmp.eq.f32.partialorder %v8063, %v8065
    %v8067 = vsel %vm8066, %v8062, inf
    %8068 = vmin.xlane.f32.xlu0 %v8067
    %v8069 = vpop.xlane.xlu0 %8068
    %v8070 = vcvt.f32.s32 %v8069
    %v8071 = vcvt.f32.s32 %v8065
    %v8072 = vshll.u32 %v8071, 16
    %v8073 = vadd.s32 %v8072, %v8070
    %v8074 = vand.u32 %v8040, 65535
    %v8075 = vshra.s32 %v8040, 16
    %v8076 = vcvt.s32.f32 %v8074
    %v8077 = vcvt.s32.f32 %v8075
    %8078 = vmin.xlane.f32.xlu0 %v8077
    %v8079 = vpop.xlane.xlu0 %8078
    %vm8080 = vcmp.eq.f32.partialorder %v8077, %v8079
    %v8081 = vsel %vm8080, %v8076, inf
    %8082 = vmin.xlane.f32.xlu0 %v8081
    %v8083 = vpop.xlane.xlu0 %8082
    %v8084 = vcvt.f32.s32 %v8083
    %v8085 = vcvt.f32.s32 %v8079
    %v8086 = vshll.u32 %v8085, 16
    %v8087 = vadd.s32 %v8086, %v8084
    %v8088 = vand.u32 %v8041, 65535
    %v8089 = vshra.s32 %v8041, 16
    %v8090 = vcvt.s32.f32 %v8088
    %v8091 = vcvt.s32.f32 %v8089
    %8092 = vmin.xlane.f32.xlu0 %v8091
    %v8093 = vpop.xlane.xlu0 %8092
    %vm8094 = vcmp.eq.f32.partialorder %v8091, %v8093
    %v8095 = vsel %vm8094, %v8090, inf
    %8096 = vmin.xlane.f32.xlu0 %v8095
    %v8097 = vpop.xlane.xlu0 %8096
    %v8098 = vcvt.f32.s32 %v8097
    %v8099 = vcvt.f32.s32 %v8093
    %v8100 = vshll.u32 %v8099, 16
    %v8101 = vadd.s32 %v8100, %v8098
    %v8102 = vand.u32 %v8042, 65535
    %v8103 = vshra.s32 %v8042, 16
    %v8104 = vcvt.s32.f32 %v8102
    %v8105 = vcvt.s32.f32 %v8103
    %8106 = vmin.xlane.f32.xlu0 %v8105
    %v8107 = vpop.xlane.xlu0 %8106
    %vm8108 = vcmp.eq.f32.partialorder %v8105, %v8107
    %v8109 = vsel %vm8108, %v8104, inf
    %8110 = vmin.xlane.f32.xlu0 %v8109
    %v8111 = vpop.xlane.xlu0 %8110
    %v8112 = vcvt.f32.s32 %v8111
    %v8113 = vcvt.f32.s32 %v8107
    %v8114 = vshll.u32 %v8113, 16
    %v8115 = vadd.s32 %v8114, %v8112
    %v8116 = vand.u32 %v8043, 65535
    %v8117 = vshra.s32 %v8043, 16
    %v8118 = vcvt.s32.f32 %v8116
    %v8119 = vcvt.s32.f32 %v8117
    %8120 = vmin.xlane.f32.xlu0 %v8119
    %v8121 = vpop.xlane.xlu0 %8120
    %vm8122 = vcmp.eq.f32.partialorder %v8119, %v8121
    %v8123 = vsel %vm8122, %v8118, inf
    %8124 = vmin.xlane.f32.xlu0 %v8123
    %v8125 = vpop.xlane.xlu0 %8124
    %v8126 = vcvt.f32.s32 %v8125
    %v8127 = vcvt.f32.s32 %v8121
    %v8128 = vshll.u32 %v8127, 16
    %v8129 = vadd.s32 %v8128, %v8126
    %v8130 = vand.u32 %v8044, 65535
    %v8131 = vshra.s32 %v8044, 16
    %v8132 = vcvt.s32.f32 %v8130
    %v8133 = vcvt.s32.f32 %v8131
    %8134 = vmin.xlane.f32.xlu0 %v8133
    %v8135 = vpop.xlane.xlu0 %8134
    %vm8136 = vcmp.eq.f32.partialorder %v8133, %v8135
    %v8137 = vsel %vm8136, %v8132, inf
    %8138 = vmin.xlane.f32.xlu0 %v8137
    %v8139 = vpop.xlane.xlu0 %8138
    %v8140 = vcvt.f32.s32 %v8139
    %v8141 = vcvt.f32.s32 %v8135
    %v8142 = vshll.u32 %v8141, 16
    %v8143 = vadd.s32 %v8142, %v8140
    %v8144 = vand.u32 %v8045, 65535
    %v8145 = vshra.s32 %v8045, 16
    %v8146 = vcvt.s32.f32 %v8144
    %v8147 = vcvt.s32.f32 %v8145
    %8148 = vmin.xlane.f32.xlu0 %v8147
    %v8149 = vpop.xlane.xlu0 %8148
    %vm8150 = vcmp.eq.f32.partialorder %v8147, %v8149
    %v8151 = vsel %vm8150, %v8146, inf
    %8152 = vmin.xlane.f32.xlu0 %v8151
    %v8153 = vpop.xlane.xlu0 %8152
    %v8154 = vcvt.f32.s32 %v8153
    %v8155 = vcvt.f32.s32 %v8149
    %v8156 = vshll.u32 %v8155, 16
    %v8157 = vadd.s32 %v8156, %v8154
    %v8158 = vlaneseq
    %v8159 = vshrl.u32 %v8158, 7
    %v8160 = vadd.s32 %v8159, 8
    %v8161 = vadd.s32 %v8159, 16
    %v8162 = vadd.s32 %v8159, 24
    %v8163 = vadd.s32 %v8159, 32
    %v8164 = vadd.s32 %v8159, 40
    %v8165 = vadd.s32 %v8159, 48
    %v8166 = vadd.s32 %v8159, 56
    %vm8167 = vcmp.eq.s32.totalorder %v8059, 1
    %vm8168 = vcmp.eq.s32.totalorder %v8073, 1
    %vm8169 = vcmp.eq.s32.totalorder %v8087, 1
    %vm8170 = vcmp.eq.s32.totalorder %v8101, 1
    %vm8171 = vcmp.eq.s32.totalorder %v8115, 1
    %vm8172 = vcmp.eq.s32.totalorder %v8129, 1
    %vm8173 = vcmp.eq.s32.totalorder %v8143, 1
    %vm8174 = vcmp.eq.s32.totalorder %v8157, 1
    %v8175 = vsel %vm8167, %v8159, 64
    %v8176 = vsel %vm8168, %v8160, 64
    %v8177 = vsel %vm8169, %v8161, 64
    %v8178 = vsel %vm8170, %v8162, 64
    %v8179 = vsel %vm8171, %v8163, 64
    %v8180 = vsel %vm8172, %v8164, 64
    %v8181 = vsel %vm8173, %v8165, 64
    %v8182 = vsel %vm8174, %v8166, 64
    %vm8183 = vcmp.lt.s32.totalorder %v8175, %v8179
    %v8184 = vsel %vm8183, %v8175, %v8179
    %vm8185 = vcmp.lt.s32.totalorder %v8176, %v8180
    %v8186 = vsel %vm8185, %v8176, %v8180
    %vm8187 = vcmp.lt.s32.totalorder %v8177, %v8181
    %v8188 = vsel %vm8187, %v8177, %v8181
    %vm8189 = vcmp.lt.s32.totalorder %v8178, %v8182
    %v8190 = vsel %vm8189, %v8178, %v8182
    %vm8191 = vcmp.lt.s32.totalorder %v8184, %v8186
    %v8192 = vsel %vm8191, %v8184, %v8186
    %vm8193 = vcmp.lt.s32.totalorder %v8188, %v8190
    %v8194 = vsel %vm8193, %v8188, %v8190
    %vm8195 = vcmp.lt.s32.totalorder %v8192, %v8194
    %v8196 = vsel %vm8195, %v8192, %v8194
    %v8197 = vrot.slane %v8196, 4
    %vm8198 = vcmp.lt.s32.totalorder %v8196, %v8197
    %v8199 = vsel %vm8198, %v8196, %v8197
    %v8200 = vrot.slane %v8199, 2
    %vm8201 = vcmp.lt.s32.totalorder %v8199, %v8200
    %v8202 = vsel %vm8201, %v8199, %v8200
    %v8203 = vrot.slane %v8202, 1
    %vm8204 = vcmp.lt.s32.totalorder %v8202, %v8203
    %v8205 = vsel %vm8204, %v8202, %v8203
    %s8206 = vtos %v8205
    %p8207 = scmp.lt.s32.totalorder %s8206, 63
    %s8208 = scalar_select %p8207, %s8206, 63
    %s8209 = sadd.s32 %s8208, 1
    %v8210 = vstv %s8209
    %vm8211 = vcmp.lt.s32.totalorder %v8159, %v8210
    %vm8212 = vcmp.lt.s32.totalorder %v8160, %v8210
    %vm8213 = vcmp.lt.s32.totalorder %v8161, %v8210
    %vm8214 = vcmp.lt.s32.totalorder %v8162, %v8210
    %vm8215 = vcmp.lt.s32.totalorder %v8163, %v8210
    %vm8216 = vcmp.lt.s32.totalorder %v8164, %v8210
    %vm8217 = vcmp.lt.s32.totalorder %v8165, %v8210
    %vm8218 = vcmp.lt.s32.totalorder %v8166, %v8210
    %v8219 = vsel %vm8211, 1, 0
    %v8220 = vsel %vm8212, 1, 0
    %v8221 = vsel %vm8213, 1, 0
    %v8222 = vsel %vm8214, 1, 0
    %v8223 = vsel %vm8215, 1, 0
    %v8224 = vsel %vm8216, 1, 0
    %v8225 = vsel %vm8217, 1, 0
    %v8226 = vsel %vm8218, 1, 0
    %vm8227 = vcmp.eq.s32.totalorder %v8219, 1
    %vm8228 = vcmp.eq.s32.totalorder %v8220, 1
    %vm8229 = vcmp.eq.s32.totalorder %v8221, 1
    %vm8230 = vcmp.eq.s32.totalorder %v8222, 1
    %vm8231 = vcmp.eq.s32.totalorder %v8223, 1
    %vm8232 = vcmp.eq.s32.totalorder %v8224, 1
    %vm8233 = vcmp.eq.s32.totalorder %v8225, 1
    %vm8234 = vcmp.eq.s32.totalorder %v8226, 1
    %v8235 = vsel %vm8227, %v7936, 0.0
    %v8236 = vsel %vm8228, %v7937, 0.0
    %v8237 = vsel %vm8229, %v7938, 0.0
    %v8238 = vsel %vm8230, %v7939, 0.0
    %v8239 = vsel %vm8231, %v7940, 0.0
    %v8240 = vsel %vm8232, %v7941, 0.0
    %v8241 = vsel %vm8233, %v7942, 0.0
    %v8242 = vsel %vm8234, %v7943, 0.0
    %8243 = vst [vmem:[#allocation13] sm:$0xff] %v8235
    %8244 = vst [vmem:[#allocation13 + $0x8] sm:$0xff] %v8236
    %8245 = vst [vmem:[#allocation13 + $0x10] sm:$0xff] %v8237
    %8246 = vst [vmem:[#allocation13 + $0x18] sm:$0xff] %v8238
    %8247 = vst [vmem:[#allocation13 + $0x20] sm:$0xff] %v8239
    %8248 = vst [vmem:[#allocation13 + $0x28] sm:$0xff] %v8240
    %8249 = vst [vmem:[#allocation13 + $0x30] sm:$0xff] %v8241
    %8250 = vst [vmem:[#allocation13 + $0x38] sm:$0xff] %v8242
    %v8251 = vsel %vm8211, %v8059, 4294967295
    %v8252 = vsel %vm8212, %v8073, 4294967295
    %v8253 = vsel %vm8213, %v8087, 4294967295
    %v8254 = vsel %vm8214, %v8101, 4294967295
    %v8255 = vsel %vm8215, %v8115, 4294967295
    %v8256 = vsel %vm8216, %v8129, 4294967295
    %v8257 = vsel %vm8217, %v8143, 4294967295
    %v8258 = vsel %vm8218, %v8157, 4294967295
    %vm8259 = vcmask 7168
    %8260 = vst.msk [vmem:[%s7] sm:$0xff] %vm8259, %v8251
    %8261 = vst.msk [vmem:[%s7 + $0x8] sm:$0xff] %vm8259, %v8252
    %8262 = vst.msk [vmem:[%s7 + $0x10] sm:$0xff] %vm8259, %v8253
    %8263 = vst.msk [vmem:[%s7 + $0x18] sm:$0xff] %vm8259, %v8254
    %8264 = vst.msk [vmem:[%s7 + $0x20] sm:$0xff] %vm8259, %v8255
    %8265 = vst.msk [vmem:[%s7 + $0x28] sm:$0xff] %vm8259, %v8256
    %8266 = vst.msk [vmem:[%s7 + $0x30] sm:$0xff] %vm8259, %v8257
    %8267 = vst.msk [vmem:[%s7 + $0x38] sm:$0xff] %vm8259, %v8258
    %s8268 = scalar_lea.smem [#allocation14], 0
    %8269 = sst [smem:[%s8268]] %s8209
    // Predicated region
    $region53: #{tpu_custom_call.1} parent=1 // pred_check
      _
    $region54: #{tpu_custom_call.1} parent=1 // pred_check_branch
      %8271 = sbr.rel (0) target = $region56
    $region55: #{tpu_custom_call.1} parent=1 // pred_region
      %8273 = vsyncadd [#allocation5], 0
      %s8274 = sshll.u32 [#allocation13], 4
      %s8275 = int_to_ptr.vmem [resolvable:$true] %s8274
      %s8276 = sshll.u32 %s6, 4
      %s8277 = int_to_ptr.hbm [resolvable:$true] %s8276
      %8282 = dma.vmem_to_hbm [thread:$0]  %s8275, 1024, %s8277, [#allocation5], 128, 128, 8
    $region56: #{tpu_custom_call.1} parent=1 // pred_fallthru
      _
    // Predicated region
    $region57: #{tpu_custom_call.1} parent=1 // pred_check
      _
    $region58: #{tpu_custom_call.1} parent=1 // pred_check_branch
      %8284 = sbr.rel (0) target = $region60
    $region59: #{tpu_custom_call.1} parent=1 // pred_region
      _
    $region60: #{tpu_custom_call.1} parent=1 // pred_fallthru
      _
    // Predicated region
    $region61: #{tpu_custom_call.1} parent=1 // pred_check
      _
    $region62: #{tpu_custom_call.1} parent=1 // pred_check_branch
      %8286 = sbr.rel (0) target = $region64
    $region63: #{tpu_custom_call.1} parent=1 // pred_region
      %8288 = vsyncadd [#allocation6], 0
      %s8290 = sshll.u32 %s8, 4
      %s8291 = int_to_ptr.hbm [resolvable:$true] %s8290
      %8293 = dma.smem_to_hbm [#allocation14], 16, %s8291, [#allocation6]
    $region64: #{tpu_custom_call.1} parent=1 // pred_fallthru
      _
    // Predicated region
    $region65: #{tpu_custom_call.1} parent=1 // pred_check
      _
    $region66: #{tpu_custom_call.1} parent=1 // pred_check_branch
      %8295 = sbr.rel (0) target = $region68
    $region67: #{tpu_custom_call.1} parent=1 // pred_region
      %8297 = dma.done [#allocation5], 1024
    $region68: #{tpu_custom_call.1} parent=1 // pred_fallthru
      _
    // Predicated region
    $region69: #{tpu_custom_call.1} parent=1 // pred_check
      _
    $region70: #{tpu_custom_call.1} parent=1 // pred_check_branch
      %8299 = sbr.rel (0) target = $region72
    $region71: #{tpu_custom_call.1} parent=1 // pred_region
      _
    $region72: #{tpu_custom_call.1} parent=1 // pred_fallthru
      _
    // Predicated region
    $region73: #{tpu_custom_call.1} parent=1 // pred_check
      _
    $region74: #{tpu_custom_call.1} parent=1 // pred_check_branch
      %8301 = sbr.rel (0) target = $region76
    $region75: #{tpu_custom_call.1} parent=1 // pred_region
      %8303 = dma.done [#allocation6], 16
    $region76: #{tpu_custom_call.1} parent=1 // pred_fallthru
      _
    %8304 = sfence
    %8305 = vsyncpa [#allocation4], 1
    %8306 = vsyncpa [#allocation8], 1
    %8307 = vsyncpa [#allocation11], 1
    %8308 = vsyncpa [#allocation5], 1
    %8309 = vsyncpa [#allocation6], 1

</llo_original>
